<compile_context>
chip_gen: v6e
topology: v6e:2x2x1
jax: 0.10.0
libtpu: 0.0.40
codegen_flags: <defaults>
</compile_context>

<pallas_src>
import functools
import math

import numpy as np
import jax
import jax.numpy as jnp
from jax import lax
from jax.experimental import pallas as pl
from jax.experimental.pallas import tpu as pltpu

_BN_EPS = 1e-5


# ----------------------------- small helpers --------------------------------

def prime_factorize(n, is_ascending_order=False):
    factors = []
    m = n
    d = 2
    while d * d <= m:
        while m % d == 0:
            factors.append(d)
            m //= d
        d += 1
    if m > 1:
        factors.append(m)
    if not factors:
        factors = [1]
    return sorted(factors, reverse=not is_ascending_order)


def _build_scatter(H, W, OH, OW, kh, kw, sh, sw, ph, pw):
    """S[t, iy*W+ix, oy*OW+ox] = 1 iff tap t=(ky,kx) routes input (iy,ix) to (oy,ox).

    Per-tap col2im overlap-add of a transposed conv as a plain matmul:
        Y += C_t @ S_t   with C_t = W_t @ X  the per-tap contribution.
    Host-built compile-time constant (tiny at these sizes).
    """
    T = kh * kw
    S = np.zeros((T, H * W, OH * OW), np.float32)
    for ky in range(kh):
        for kx in range(kw):
            t = ky * kw + kx
            for iy in range(H):
                oy = iy * sh + ky - ph
                if oy < 0 or oy >= OH:
                    continue
                for ix in range(W):
                    ox = ix * sw + kx - pw
                    if ox < 0 or ox >= OW:
                        continue
                    S[t, iy * W + ix, oy * OW + ox] = 1.0
    return S


# ----------------------------- Pallas kernels --------------------------------

def _accumulate_taps(w1_ref, w2_ref, s_ref, x1, x2, taps, hw_in):
    """sum_t (W1_t @ x1 + W2_t @ x2) @ S_t  for one batch element -> (cout, OH*OW) f32.

    The contraction is split prev/seg so no activation concat is ever built.
    For the degenerate 1x1-input first layer (hw_in == 1) the matmuls collapse
    to broadcast-multiply + lane-reduce (VPU/XLU), avoiding K=1 / N=1 MXU dots.
    """
    y = None
    for t in range(taps):
        if hw_in == 1:
            c = (jnp.sum(w1_ref[t] * x1, axis=1, keepdims=True)
                 + jnp.sum(w2_ref[t] * x2, axis=1, keepdims=True))   # (cout, 1) f32
            yt = c * s_ref[t]                                        # (cout, OHW)
        else:
            c = (jnp.dot(w1_ref[t], x1, preferred_element_type=jnp.float32)
                 + jnp.dot(w2_ref[t], x2, preferred_element_type=jnp.float32))
            yt = jnp.dot(c, s_ref[t], preferred_element_type=jnp.float32)
        y = yt if y is None else y + yt
    return y


def _fused_bn_relu_layer_kernel(w1_ref, w2_ref, s_ref, x1_ref, x2_ref, g_ref, b_ref,
                                o_ref, *, batch, taps, hw_in, count, eps):
    """ConvTranspose2d -> training-mode BatchNorm2d -> ReLU, fully VMEM-resident.

    Single grid step: per-batch tap accumulation, batch statistics on the
    resident result (shifted variance), one store.  The ConvTranspose bias is
    dropped (cancelled exactly by the BN mean subtraction).
    """
    in_dt = jnp.float32 if hw_in == 1 else jnp.bfloat16
    ys = []
    ch_sum = None
    for b in range(batch):
        x1 = x1_ref[b].astype(in_dt)
        x2 = x2_ref[b].astype(in_dt)
        y = _accumulate_taps(w1_ref, w2_ref, s_ref, x1, x2, taps, hw_in)
        ys.append(y)
        ps = jnp.sum(y, axis=1, keepdims=True)
        ch_sum = ps if ch_sum is None else ch_sum + ps
    inv = 1.0 / count
    mean = ch_sum * inv
    ch_sq = None
    for b in range(batch):
        d = ys[b] - mean
        ps = jnp.sum(d * d, axis=1, keepdims=True)
        ch_sq = ps if ch_sq is None else ch_sq + ps
    var = ch_sq * inv
    scale = g_ref[...] * lax.rsqrt(var + eps)
    shift = b_ref[...] - mean * scale
    for b in range(batch):
        o_ref[b] = jnp.maximum(ys[b] * scale + shift, 0.0).astype(o_ref.dtype)


def _fused_tanh_layer_kernel(w1_ref, w2_ref, s_ref, x1_ref, x2_ref, bias_ref, o_ref,
                             *, taps, hw_in):
    """ConvTranspose2d -> bias -> Tanh for one batch element (batch-parallel grid)."""
    in_dt = jnp.float32 if hw_in == 1 else jnp.bfloat16
    x1 = x1_ref[0].astype(in_dt)
    x2 = x2_ref[0].astype(in_dt)
    y = _accumulate_taps(w1_ref, w2_ref, s_ref, x1, x2, taps, hw_in)
    o_ref[0] = jnp.tanh(y + bias_ref[...]).astype(o_ref.dtype)


# ------------------------------ layer wrapper --------------------------------

def _fused_deconv_layer(x_prev, seg, layer, cfg, H, W, out_dtype):
    """One fused deconv layer.

    x_prev : (B, C_prev, H*W) channels-second activation (bf16 handoff)
    seg    : (B, C_seg, H, W) NCHW seg feature (consumed via free reshapes only)
    returns ((B, Cout, OH*OW), OH, OW)
    """
    B, c1, hw_in = x_prev.shape
    c2 = seg.shape[1]
    w = layer["w"]                                   # torch layout (Cin, Cout, kH, kW)
    cin, cout, kh, kw = w.shape
    assert cin == c1 + c2
    sh, sw = cfg["stride"]
    ph = pw = cfg["padding"]
    OH = (H - 1) * sh - 2 * ph + kh
    OW = (W - 1) * sw - 2 * pw + kw
    T = kh * kw

    # Per-tap weights, contraction split prev/seg (kills the activation concat).
    # Constant-folded under jit (params are closed over).
    w_dtype = jnp.float32 if hw_in == 1 else jnp.bfloat16
    w_t = jnp.transpose(w, (2, 3, 1, 0)).reshape(T, cout, cin)
    w1 = w_t[:, :, :c1].astype(w_dtype)
    w2 = w_t[:, :, c1:].astype(w_dtype)
    scat = jnp.asarray(_build_scatter(H, W, OH, OW, kh, kw, sh, sw, ph, pw))

    if hw_in == 1:
        # (B, C, 1) / (B, C, 1, 1) -> (B, 1, C): pure metadata reshapes.
        x1_in = x_prev.reshape(B, 1, c1)
        x2_in = seg.reshape(B, 1, c2)
    else:
        x1_in = x_prev
        x2_in = seg.reshape(B, c2, hw_in)            # free reshape, no transpose/copy

    if cfg["mode"] == "bn_relu":
        gamma = layer["gamma"].reshape(cout, 1)
        beta = layer["beta"].reshape(cout, 1)
        out = pl.pallas_call(
            functools.partial(_fused_bn_relu_layer_kernel, batch=B, taps=T,
                              hw_in=hw_in, count=float(B * OH * OW), eps=_BN_EPS),
            out_shape=jax.ShapeDtypeStruct((B, cout, OH * OW), out_dtype),
            grid=(1,),
            in_specs=[
                pl.BlockSpec(w1.shape, lambda i: (0, 0, 0)),
                pl.BlockSpec(w2.shape, lambda i: (0, 0, 0)),
                pl.BlockSpec(scat.shape, lambda i: (0, 0, 0)),
                pl.BlockSpec(x1_in.shape, lambda i: (0, 0, 0)),
                pl.BlockSpec(x2_in.shape, lambda i: (0, 0, 0)),
                pl.BlockSpec((cout, 1), lambda i: (0, 0)),
                pl.BlockSpec((cout, 1), lambda i: (0, 0)),
            ],
            out_specs=pl.BlockSpec((B, cout, OH * OW), lambda i: (0, 0, 0)),
            compiler_params=pltpu.CompilerParams(
                dimension_semantics=("arbitrary",)),
        )(w1, w2, scat, x1_in, x2_in, gamma, beta)
    else:
        bias = layer["b"].reshape(cout, 1)
        out = pl.pallas_call(
            functools.partial(_fused_tanh_layer_kernel, taps=T, hw_in=hw_in),
            out_shape=jax.ShapeDtypeStruct((B, cout, OH * OW), out_dtype),
            grid=(B,),                               # batch-parallel -> both v7x cores
            in_specs=[
                pl.BlockSpec(w1.shape, lambda b: (0, 0, 0)),
                pl.BlockSpec(w2.shape, lambda b: (0, 0, 0)),
                pl.BlockSpec(scat.shape, lambda b: (0, 0, 0)),
                pl.BlockSpec((1,) + x1_in.shape[1:], lambda b: (b, 0, 0)),
                pl.BlockSpec((1,) + x2_in.shape[1:], lambda b: (b, 0, 0)),
                pl.BlockSpec((cout, 1), lambda b: (0, 0)),
            ],
            out_specs=pl.BlockSpec((1, cout, OH * OW), lambda b: (b, 0, 0)),
            compiler_params=pltpu.CompilerParams(
                dimension_semantics=("parallel",)),
        )(w1, w2, scat, x1_in, x2_in, bias)
    return out, OH, OW


# --------------------------- decoder construction ---------------------------

def init_decoder(key, img_height, img_width, z_dim, conv_unit_ch, deconv_unit_ch):
    hf = prime_factorize(img_height, is_ascending_order=False)
    wf = prime_factorize(img_width, is_ascending_order=False)
    while len(hf) != len(wf):
        if len(hf) < len(wf):
            hf.append(1)
        else:
            wf.append(1)
    L = len(hf)
    params, configs = [], []
    for i, (fh, fw) in enumerate(zip(hf, wf)):
        concat_ch = (L - i) * conv_unit_ch
        if i == 0:
            cin = z_dim + concat_ch
            cout = (L - 1) * deconv_unit_ch
            kh, kw, stride, pad, mode = fh, fw, (1, 1), 0, "bn_relu"
        elif i == L - 1:
            cin = (L - i) * deconv_unit_ch + concat_ch
            cout = 3
            kh, kw, stride, pad, mode = fh + 2, fw + 2, (fh, fw), 1, "tanh"
        else:
            cin = (L - i) * deconv_unit_ch + concat_ch
            cout = (L - i - 1) * deconv_unit_ch
            kh, kw, stride, pad, mode = fh + 2, fw + 2, (fh, fw), 1, "bn_relu"
        key, k1, k2, k3, k4 = jax.random.split(key, 5)
        scale = 1.0 / math.sqrt(cin * kh * kw)
        params.append({
            # ConvTranspose2d weight layout: (Cin, Cout, kH, kW)
            "w": jax.random.normal(k1, (cin, cout, kh, kw), jnp.float32) * scale,
            "b": jax.random.normal(k2, (cout,), jnp.float32) * 0.01,
            "gamma": 1.0 + 0.1 * jax.random.normal(k3, (cout,), jnp.float32),
            "beta": 0.1 * jax.random.normal(k4, (cout,), jnp.float32),
        })
        configs.append({"stride": stride, "padding": pad, "mode": mode})
    return params, configs, hf, wf


def rgbseg_decoder_forward(params, configs, rgb_feature, seg_feature_list):
    """Matches RgbSegDecoder.forward (seg_feature_list is reversed internally)."""
    B = rgb_feature.shape[0]
    x = rgb_feature.reshape(B, -1, 1).astype(jnp.float32)   # (B, z_dim, 1) == NC(HW)
    H = W = 1
    seg_rev = list(seg_feature_list)[::-1]
    n_layers = len(params)
    for i, (layer, cfg, seg) in enumerate(zip(params, configs, seg_rev)):
        out_dtype = jnp.float32 if i == n_layers - 1 else jnp.bfloat16
        x, H, W = _fused_deconv_layer(x, seg.astype(jnp.float32), layer, cfg, H, W,
                                      out_dtype)
    return x.reshape(B, x.shape[1], H, W)                   # already NCHW, free reshape


# --------------------- independent pure-JAX reference ------------------------

def _reference_forward(params, configs, rgb_feature, seg_feature_list):
    x = rgb_feature.reshape(rgb_feature.shape[0], -1, 1, 1)
    seg_rev = list(seg_feature_list)[::-1]
    out = x
    for layer, cfg, seg in zip(params, configs, seg_rev):
        inp = jnp.concatenate([out, seg], axis=1)
        w = layer["w"]
        kh, kw = w.shape[2], w.shape[3]
        p = cfg["padding"]
        sh, sw = cfg["stride"]
        w_conv = jnp.transpose(w[:, :, ::-1, ::-1], (1, 0, 2, 3))   # (Cout, Cin, kh, kw)
        y = lax.conv_general_dilated(
            inp, w_conv, window_strides=(1, 1),
            padding=((kh - 1 - p, kh - 1 - p), (kw - 1 - p, kw - 1 - p)),
            lhs_dilation=(sh, sw), rhs_dilation=(1, 1),
            dimension_numbers=("NCHW", "OIHW", "NCHW"),
            precision=lax.Precision.HIGHEST)
        y = y + layer["b"][None, :, None, None]
        if cfg["mode"] == "bn_relu":
            mean = jnp.mean(y, axis=(0, 2, 3), keepdims=True)
            var = jnp.var(y, axis=(0, 2, 3), keepdims=True)
            y = (y - mean) * lax.rsqrt(var + _BN_EPS)
            y = y * layer["gamma"][None, :, None, None] + layer["beta"][None, :, None, None]
            out = jnp.maximum(y, 0.0)
        else:
            out = jnp.tanh(y)
    return out


# --------------------------------- demo --------------------------------------

if __name__ == "__main__":
    img_height, img_width = 8, 8          # prime factors: [2, 2, 2] -> 3 layers
    z_dim, conv_unit_ch, deconv_unit_ch = 16, 4, 4
    batch = 2

    key = jax.random.PRNGKey(0)
    key, pkey = jax.random.split(key)
    params, configs, hf, wf = init_decoder(
        pkey, img_height, img_width, z_dim, conv_unit_ch, deconv_unit_ch)
    L = len(hf)

    key, rkey = jax.random.split(key)
    rgb_feature = jax.random.normal(rkey, (batch, z_dim), jnp.float32)

    # seg features (NCHW): after the in-forward reversal, element i feeds
    # deconv layer i and must have (L - i) * conv_unit_ch channels at that
    # layer's input resolution.
    seg_rev = []
    h_acc, w_acc = 1, 1
    for i in range(L):
        ch = (L - i) * conv_unit_ch
        key, skey = jax.random.split(key)
        seg_rev.append(jax.random.normal(skey, (batch, ch, h_acc, w_acc), jnp.float32))
        h_acc *= hf[i]
        w_acc *= wf[i]
    seg_feature_list = seg_rev[::-1]      # shallow -> deep, as an encoder would emit

    fwd = jax.jit(lambda rgb, *segs: rgbseg_decoder_forward(params, configs, rgb, list(segs)))
    out = fwd(rgb_feature, *seg_feature_list)
    jax.block_until_ready(out)
    assert out.shape == (batch, 3, img_height, img_width), out.shape

    # cross-check against an independent pure-JAX (lhs-dilated conv) reference;
    # tolerance covers bf16 matmul operands and bf16 inter-layer handoff.
    ref = _reference_forward(params, configs, rgb_feature, seg_feature_list)
    max_err = float(jnp.max(jnp.abs(out.astype(jnp.float32) - ref)))
    assert max_err < 5e-2, max_err

    print("KERNEL_OK")
</pallas_src>

<mosaic_0001>
module attributes {stable_mosaic.version = 11 : i64} {
  func.func @_fused_bn_relu_layer_kernel(%arg0: i32, %arg1: memref<4x8x16xf32, #tpu.memory_space<vmem>>, %arg2: memref<4x8x12xf32, #tpu.memory_space<vmem>>, %arg3: memref<4x1x4xf32, #tpu.memory_space<vmem>>, %arg4: memref<2x1x16xf32, #tpu.memory_space<vmem>>, %arg5: memref<2x1x12xf32, #tpu.memory_space<vmem>>, %arg6: memref<8x1xf32, #tpu.memory_space<vmem>>, %arg7: memref<8x1xf32, #tpu.memory_space<vmem>>, %arg8: memref<2x8x4xbf16, #tpu.memory_space<vmem>>) attributes {dimension_semantics = [#tpu.dimension_semantics<arbitrary>], iteration_bounds = array<i64: 1>, scalar_prefetch = 0 : i64, scratch_operands = 0 : i64, tpu.core_type = #tpu.core_type<tc>, window_params = [{pipeline_mode = #tpu.pipeline_mode<synchronous>, transform_indices = @transform_0, window_bounds = array<i64: 4, 8, 16>}, {pipeline_mode = #tpu.pipeline_mode<synchronous>, transform_indices = @transform_1, window_bounds = array<i64: 4, 8, 12>}, {pipeline_mode = #tpu.pipeline_mode<synchronous>, transform_indices = @transform_2, window_bounds = array<i64: 4, 1, 4>}, {pipeline_mode = #tpu.pipeline_mode<synchronous>, transform_indices = @transform_3, window_bounds = array<i64: 2, 1, 16>}, {pipeline_mode = #tpu.pipeline_mode<synchronous>, transform_indices = @transform_4, window_bounds = array<i64: 2, 1, 12>}, {pipeline_mode = #tpu.pipeline_mode<synchronous>, transform_indices = @transform_5, window_bounds = array<i64: 8, 1>}, {pipeline_mode = #tpu.pipeline_mode<synchronous>, transform_indices = @transform_6, window_bounds = array<i64: 8, 1>}, {pipeline_mode = #tpu.pipeline_mode<synchronous>, transform_indices = @transform_7, window_bounds = array<i64: 2, 8, 4>}]} {
    %c0 = arith.constant 0 : index
    %c0_0 = arith.constant 0 : index
    %c0_1 = arith.constant 0 : index
    %0 = vector.load %arg4[%c0, %c0_0, %c0_1] : memref<2x1x16xf32, #tpu.memory_space<vmem>>, vector<1x1x16xf32>
    %1 = vector.shape_cast %0 : vector<1x1x16xf32> to vector<1x16xf32>
    %c0_2 = arith.constant 0 : index
    %c0_3 = arith.constant 0 : index
    %c0_4 = arith.constant 0 : index
    %2 = vector.load %arg5[%c0_2, %c0_3, %c0_4] : memref<2x1x12xf32, #tpu.memory_space<vmem>>, vector<1x1x12xf32>
    %3 = vector.shape_cast %2 : vector<1x1x12xf32> to vector<1x12xf32>
    %c0_5 = arith.constant 0 : index
    %c0_6 = arith.constant 0 : index
    %c0_7 = arith.constant 0 : index
    %4 = vector.load %arg1[%c0_5, %c0_6, %c0_7] : memref<4x8x16xf32, #tpu.memory_space<vmem>>, vector<1x8x16xf32>
    %5 = vector.shape_cast %4 : vector<1x8x16xf32> to vector<8x16xf32>
    %6 = vector.broadcast %1 : vector<1x16xf32> to vector<8x16xf32>
    %7 = arith.mulf %5, %6 : vector<8x16xf32>
    %cst = arith.constant dense<0.000000e+00> : vector<8xf32>
    %8 = vector.multi_reduction <add>, %7, %cst [1] : vector<8x16xf32> to vector<8xf32>
    %9 = vector.shape_cast %8 : vector<8xf32> to vector<8x1xf32>
    %c0_8 = arith.constant 0 : index
    %c0_9 = arith.constant 0 : index
    %c0_10 = arith.constant 0 : index
    %10 = vector.load %arg2[%c0_8, %c0_9, %c0_10] : memref<4x8x12xf32, #tpu.memory_space<vmem>>, vector<1x8x12xf32>
    %11 = vector.shape_cast %10 : vector<1x8x12xf32> to vector<8x12xf32>
    %12 = vector.broadcast %3 : vector<1x12xf32> to vector<8x12xf32>
    %13 = arith.mulf %11, %12 : vector<8x12xf32>
    %cst_11 = arith.constant dense<0.000000e+00> : vector<8xf32>
    %14 = vector.multi_reduction <add>, %13, %cst_11 [1] : vector<8x12xf32> to vector<8xf32>
    %15 = vector.shape_cast %14 : vector<8xf32> to vector<8x1xf32>
    %16 = arith.addf %9, %15 : vector<8x1xf32>
    %c0_12 = arith.constant 0 : index
    %c0_13 = arith.constant 0 : index
    %c0_14 = arith.constant 0 : index
    %17 = vector.load %arg3[%c0_12, %c0_13, %c0_14] : memref<4x1x4xf32, #tpu.memory_space<vmem>>, vector<1x1x4xf32>
    %18 = vector.shape_cast %17 : vector<1x1x4xf32> to vector<1x4xf32>
    %19 = vector.broadcast %16 : vector<8x1xf32> to vector<8x4xf32>
    %20 = vector.broadcast %18 : vector<1x4xf32> to vector<8x4xf32>
    %21 = arith.mulf %19, %20 : vector<8x4xf32>
    %c1 = arith.constant 1 : index
    %c0_15 = arith.constant 0 : index
    %c0_16 = arith.constant 0 : index
    %22 = vector.load %arg1[%c1, %c0_15, %c0_16] : memref<4x8x16xf32, #tpu.memory_space<vmem>>, vector<1x8x16xf32>
    %23 = vector.shape_cast %22 : vector<1x8x16xf32> to vector<8x16xf32>
    %24 = vector.broadcast %1 : vector<1x16xf32> to vector<8x16xf32>
    %25 = arith.mulf %23, %24 : vector<8x16xf32>
    %cst_17 = arith.constant dense<0.000000e+00> : vector<8xf32>
    %26 = vector.multi_reduction <add>, %25, %cst_17 [1] : vector<8x16xf32> to vector<8xf32>
    %27 = vector.shape_cast %26 : vector<8xf32> to vector<8x1xf32>
    %c1_18 = arith.constant 1 : index
    %c0_19 = arith.constant 0 : index
    %c0_20 = arith.constant 0 : index
    %28 = vector.load %arg2[%c1_18, %c0_19, %c0_20] : memref<4x8x12xf32, #tpu.memory_space<vmem>>, vector<1x8x12xf32>
    %29 = vector.shape_cast %28 : vector<1x8x12xf32> to vector<8x12xf32>
    %30 = vector.broadcast %3 : vector<1x12xf32> to vector<8x12xf32>
    %31 = arith.mulf %29, %30 : vector<8x12xf32>
    %cst_21 = arith.constant dense<0.000000e+00> : vector<8xf32>
    %32 = vector.multi_reduction <add>, %31, %cst_21 [1] : vector<8x12xf32> to vector<8xf32>
    %33 = vector.shape_cast %32 : vector<8xf32> to vector<8x1xf32>
    %34 = arith.addf %27, %33 : vector<8x1xf32>
    %c1_22 = arith.constant 1 : index
    %c0_23 = arith.constant 0 : index
    %c0_24 = arith.constant 0 : index
    %35 = vector.load %arg3[%c1_22, %c0_23, %c0_24] : memref<4x1x4xf32, #tpu.memory_space<vmem>>, vector<1x1x4xf32>
    %36 = vector.shape_cast %35 : vector<1x1x4xf32> to vector<1x4xf32>
    %37 = vector.broadcast %34 : vector<8x1xf32> to vector<8x4xf32>
    %38 = vector.broadcast %36 : vector<1x4xf32> to vector<8x4xf32>
    %39 = arith.mulf %37, %38 : vector<8x4xf32>
    %40 = arith.addf %21, %39 : vector<8x4xf32>
    %c2 = arith.constant 2 : index
    %c0_25 = arith.constant 0 : index
    %c0_26 = arith.constant 0 : index
    %41 = vector.load %arg1[%c2, %c0_25, %c0_26] : memref<4x8x16xf32, #tpu.memory_space<vmem>>, vector<1x8x16xf32>
    %42 = vector.shape_cast %41 : vector<1x8x16xf32> to vector<8x16xf32>
    %43 = vector.broadcast %1 : vector<1x16xf32> to vector<8x16xf32>
    %44 = arith.mulf %42, %43 : vector<8x16xf32>
    %cst_27 = arith.constant dense<0.000000e+00> : vector<8xf32>
    %45 = vector.multi_reduction <add>, %44, %cst_27 [1] : vector<8x16xf32> to vector<8xf32>
    %46 = vector.shape_cast %45 : vector<8xf32> to vector<8x1xf32>
    %c2_28 = arith.constant 2 : index
    %c0_29 = arith.constant 0 : index
    %c0_30 = arith.constant 0 : index
    %47 = vector.load %arg2[%c2_28, %c0_29, %c0_30] : memref<4x8x12xf32, #tpu.memory_space<vmem>>, vector<1x8x12xf32>
    %48 = vector.shape_cast %47 : vector<1x8x12xf32> to vector<8x12xf32>
    %49 = vector.broadcast %3 : vector<1x12xf32> to vector<8x12xf32>
    %50 = arith.mulf %48, %49 : vector<8x12xf32>
    %cst_31 = arith.constant dense<0.000000e+00> : vector<8xf32>
    %51 = vector.multi_reduction <add>, %50, %cst_31 [1] : vector<8x12xf32> to vector<8xf32>
    %52 = vector.shape_cast %51 : vector<8xf32> to vector<8x1xf32>
    %53 = arith.addf %46, %52 : vector<8x1xf32>
    %c2_32 = arith.constant 2 : index
    %c0_33 = arith.constant 0 : index
    %c0_34 = arith.constant 0 : index
    %54 = vector.load %arg3[%c2_32, %c0_33, %c0_34] : memref<4x1x4xf32, #tpu.memory_space<vmem>>, vector<1x1x4xf32>
    %55 = vector.shape_cast %54 : vector<1x1x4xf32> to vector<1x4xf32>
    %56 = vector.broadcast %53 : vector<8x1xf32> to vector<8x4xf32>
    %57 = vector.broadcast %55 : vector<1x4xf32> to vector<8x4xf32>
    %58 = arith.mulf %56, %57 : vector<8x4xf32>
    %59 = arith.addf %40, %58 : vector<8x4xf32>
    %c3 = arith.constant 3 : index
    %c0_35 = arith.constant 0 : index
    %c0_36 = arith.constant 0 : index
    %60 = vector.load %arg1[%c3, %c0_35, %c0_36] : memref<4x8x16xf32, #tpu.memory_space<vmem>>, vector<1x8x16xf32>
    %61 = vector.shape_cast %60 : vector<1x8x16xf32> to vector<8x16xf32>
    %62 = vector.broadcast %1 : vector<1x16xf32> to vector<8x16xf32>
    %63 = arith.mulf %61, %62 : vector<8x16xf32>
    %cst_37 = arith.constant dense<0.000000e+00> : vector<8xf32>
    %64 = vector.multi_reduction <add>, %63, %cst_37 [1] : vector<8x16xf32> to vector<8xf32>
    %65 = vector.shape_cast %64 : vector<8xf32> to vector<8x1xf32>
    %c3_38 = arith.constant 3 : index
    %c0_39 = arith.constant 0 : index
    %c0_40 = arith.constant 0 : index
    %66 = vector.load %arg2[%c3_38, %c0_39, %c0_40] : memref<4x8x12xf32, #tpu.memory_space<vmem>>, vector<1x8x12xf32>
    %67 = vector.shape_cast %66 : vector<1x8x12xf32> to vector<8x12xf32>
    %68 = vector.broadcast %3 : vector<1x12xf32> to vector<8x12xf32>
    %69 = arith.mulf %67, %68 : vector<8x12xf32>
    %cst_41 = arith.constant dense<0.000000e+00> : vector<8xf32>
    %70 = vector.multi_reduction <add>, %69, %cst_41 [1] : vector<8x12xf32> to vector<8xf32>
    %71 = vector.shape_cast %70 : vector<8xf32> to vector<8x1xf32>
    %72 = arith.addf %65, %71 : vector<8x1xf32>
    %c3_42 = arith.constant 3 : index
    %c0_43 = arith.constant 0 : index
    %c0_44 = arith.constant 0 : index
    %73 = vector.load %arg3[%c3_42, %c0_43, %c0_44] : memref<4x1x4xf32, #tpu.memory_space<vmem>>, vector<1x1x4xf32>
    %74 = vector.shape_cast %73 : vector<1x1x4xf32> to vector<1x4xf32>
    %75 = vector.broadcast %72 : vector<8x1xf32> to vector<8x4xf32>
    %76 = vector.broadcast %74 : vector<1x4xf32> to vector<8x4xf32>
    %77 = arith.mulf %75, %76 : vector<8x4xf32>
    %78 = arith.addf %59, %77 : vector<8x4xf32>
    %cst_45 = arith.constant dense<0.000000e+00> : vector<8xf32>
    %79 = vector.multi_reduction <add>, %78, %cst_45 [1] : vector<8x4xf32> to vector<8xf32>
    %80 = vector.shape_cast %79 : vector<8xf32> to vector<8x1xf32>
    %c1_46 = arith.constant 1 : index
    %c0_47 = arith.constant 0 : index
    %c0_48 = arith.constant 0 : index
    %81 = vector.load %arg4[%c1_46, %c0_47, %c0_48] : memref<2x1x16xf32, #tpu.memory_space<vmem>>, vector<1x1x16xf32>
    %82 = vector.shape_cast %81 : vector<1x1x16xf32> to vector<1x16xf32>
    %c1_49 = arith.constant 1 : index
    %c0_50 = arith.constant 0 : index
    %c0_51 = arith.constant 0 : index
    %83 = vector.load %arg5[%c1_49, %c0_50, %c0_51] : memref<2x1x12xf32, #tpu.memory_space<vmem>>, vector<1x1x12xf32>
    %84 = vector.shape_cast %83 : vector<1x1x12xf32> to vector<1x12xf32>
    %c0_52 = arith.constant 0 : index
    %c0_53 = arith.constant 0 : index
    %c0_54 = arith.constant 0 : index
    %85 = vector.load %arg1[%c0_52, %c0_53, %c0_54] : memref<4x8x16xf32, #tpu.memory_space<vmem>>, vector<1x8x16xf32>
    %86 = vector.shape_cast %85 : vector<1x8x16xf32> to vector<8x16xf32>
    %87 = vector.broadcast %82 : vector<1x16xf32> to vector<8x16xf32>
    %88 = arith.mulf %86, %87 : vector<8x16xf32>
    %cst_55 = arith.constant dense<0.000000e+00> : vector<8xf32>
    %89 = vector.multi_reduction <add>, %88, %cst_55 [1] : vector<8x16xf32> to vector<8xf32>
    %90 = vector.shape_cast %89 : vector<8xf32> to vector<8x1xf32>
    %c0_56 = arith.constant 0 : index
    %c0_57 = arith.constant 0 : index
    %c0_58 = arith.constant 0 : index
    %91 = vector.load %arg2[%c0_56, %c0_57, %c0_58] : memref<4x8x12xf32, #tpu.memory_space<vmem>>, vector<1x8x12xf32>
    %92 = vector.shape_cast %91 : vector<1x8x12xf32> to vector<8x12xf32>
    %93 = vector.broadcast %84 : vector<1x12xf32> to vector<8x12xf32>
    %94 = arith.mulf %92, %93 : vector<8x12xf32>
    %cst_59 = arith.constant dense<0.000000e+00> : vector<8xf32>
    %95 = vector.multi_reduction <add>, %94, %cst_59 [1] : vector<8x12xf32> to vector<8xf32>
    %96 = vector.shape_cast %95 : vector<8xf32> to vector<8x1xf32>
    %97 = arith.addf %90, %96 : vector<8x1xf32>
    %c0_60 = arith.constant 0 : index
    %c0_61 = arith.constant 0 : index
    %c0_62 = arith.constant 0 : index
    %98 = vector.load %arg3[%c0_60, %c0_61, %c0_62] : memref<4x1x4xf32, #tpu.memory_space<vmem>>, vector<1x1x4xf32>
    %99 = vector.shape_cast %98 : vector<1x1x4xf32> to vector<1x4xf32>
    %100 = vector.broadcast %97 : vector<8x1xf32> to vector<8x4xf32>
    %101 = vector.broadcast %99 : vector<1x4xf32> to vector<8x4xf32>
    %102 = arith.mulf %100, %101 : vector<8x4xf32>
    %c1_63 = arith.constant 1 : index
    %c0_64 = arith.constant 0 : index
    %c0_65 = arith.constant 0 : index
    %103 = vector.load %arg1[%c1_63, %c0_64, %c0_65] : memref<4x8x16xf32, #tpu.memory_space<vmem>>, vector<1x8x16xf32>
    %104 = vector.shape_cast %103 : vector<1x8x16xf32> to vector<8x16xf32>
    %105 = vector.broadcast %82 : vector<1x16xf32> to vector<8x16xf32>
    %106 = arith.mulf %104, %105 : vector<8x16xf32>
    %cst_66 = arith.constant dense<0.000000e+00> : vector<8xf32>
    %107 = vector.multi_reduction <add>, %106, %cst_66 [1] : vector<8x16xf32> to vector<8xf32>
    %108 = vector.shape_cast %107 : vector<8xf32> to vector<8x1xf32>
    %c1_67 = arith.constant 1 : index
    %c0_68 = arith.constant 0 : index
    %c0_69 = arith.constant 0 : index
    %109 = vector.load %arg2[%c1_67, %c0_68, %c0_69] : memref<4x8x12xf32, #tpu.memory_space<vmem>>, vector<1x8x12xf32>
    %110 = vector.shape_cast %109 : vector<1x8x12xf32> to vector<8x12xf32>
    %111 = vector.broadcast %84 : vector<1x12xf32> to vector<8x12xf32>
    %112 = arith.mulf %110, %111 : vector<8x12xf32>
    %cst_70 = arith.constant dense<0.000000e+00> : vector<8xf32>
    %113 = vector.multi_reduction <add>, %112, %cst_70 [1] : vector<8x12xf32> to vector<8xf32>
    %114 = vector.shape_cast %113 : vector<8xf32> to vector<8x1xf32>
    %115 = arith.addf %108, %114 : vector<8x1xf32>
    %c1_71 = arith.constant 1 : index
    %c0_72 = arith.constant 0 : index
    %c0_73 = arith.constant 0 : index
    %116 = vector.load %arg3[%c1_71, %c0_72, %c0_73] : memref<4x1x4xf32, #tpu.memory_space<vmem>>, vector<1x1x4xf32>
    %117 = vector.shape_cast %116 : vector<1x1x4xf32> to vector<1x4xf32>
    %118 = vector.broadcast %115 : vector<8x1xf32> to vector<8x4xf32>
    %119 = vector.broadcast %117 : vector<1x4xf32> to vector<8x4xf32>
    %120 = arith.mulf %118, %119 : vector<8x4xf32>
    %121 = arith.addf %102, %120 : vector<8x4xf32>
    %c2_74 = arith.constant 2 : index
    %c0_75 = arith.constant 0 : index
    %c0_76 = arith.constant 0 : index
    %122 = vector.load %arg1[%c2_74, %c0_75, %c0_76] : memref<4x8x16xf32, #tpu.memory_space<vmem>>, vector<1x8x16xf32>
    %123 = vector.shape_cast %122 : vector<1x8x16xf32> to vector<8x16xf32>
    %124 = vector.broadcast %82 : vector<1x16xf32> to vector<8x16xf32>
    %125 = arith.mulf %123, %124 : vector<8x16xf32>
    %cst_77 = arith.constant dense<0.000000e+00> : vector<8xf32>
    %126 = vector.multi_reduction <add>, %125, %cst_77 [1] : vector<8x16xf32> to vector<8xf32>
    %127 = vector.shape_cast %126 : vector<8xf32> to vector<8x1xf32>
    %c2_78 = arith.constant 2 : index
    %c0_79 = arith.constant 0 : index
    %c0_80 = arith.constant 0 : index
    %128 = vector.load %arg2[%c2_78, %c0_79, %c0_80] : memref<4x8x12xf32, #tpu.memory_space<vmem>>, vector<1x8x12xf32>
    %129 = vector.shape_cast %128 : vector<1x8x12xf32> to vector<8x12xf32>
    %130 = vector.broadcast %84 : vector<1x12xf32> to vector<8x12xf32>
    %131 = arith.mulf %129, %130 : vector<8x12xf32>
    %cst_81 = arith.constant dense<0.000000e+00> : vector<8xf32>
    %132 = vector.multi_reduction <add>, %131, %cst_81 [1] : vector<8x12xf32> to vector<8xf32>
    %133 = vector.shape_cast %132 : vector<8xf32> to vector<8x1xf32>
    %134 = arith.addf %127, %133 : vector<8x1xf32>
    %c2_82 = arith.constant 2 : index
    %c0_83 = arith.constant 0 : index
    %c0_84 = arith.constant 0 : index
    %135 = vector.load %arg3[%c2_82, %c0_83, %c0_84] : memref<4x1x4xf32, #tpu.memory_space<vmem>>, vector<1x1x4xf32>
    %136 = vector.shape_cast %135 : vector<1x1x4xf32> to vector<1x4xf32>
    %137 = vector.broadcast %134 : vector<8x1xf32> to vector<8x4xf32>
    %138 = vector.broadcast %136 : vector<1x4xf32> to vector<8x4xf32>
    %139 = arith.mulf %137, %138 : vector<8x4xf32>
    %140 = arith.addf %121, %139 : vector<8x4xf32>
    %c3_85 = arith.constant 3 : index
    %c0_86 = arith.constant 0 : index
    %c0_87 = arith.constant 0 : index
    %141 = vector.load %arg1[%c3_85, %c0_86, %c0_87] : memref<4x8x16xf32, #tpu.memory_space<vmem>>, vector<1x8x16xf32>
    %142 = vector.shape_cast %141 : vector<1x8x16xf32> to vector<8x16xf32>
    %143 = vector.broadcast %82 : vector<1x16xf32> to vector<8x16xf32>
    %144 = arith.mulf %142, %143 : vector<8x16xf32>
    %cst_88 = arith.constant dense<0.000000e+00> : vector<8xf32>
    %145 = vector.multi_reduction <add>, %144, %cst_88 [1] : vector<8x16xf32> to vector<8xf32>
    %146 = vector.shape_cast %145 : vector<8xf32> to vector<8x1xf32>
    %c3_89 = arith.constant 3 : index
    %c0_90 = arith.constant 0 : index
    %c0_91 = arith.constant 0 : index
    %147 = vector.load %arg2[%c3_89, %c0_90, %c0_91] : memref<4x8x12xf32, #tpu.memory_space<vmem>>, vector<1x8x12xf32>
    %148 = vector.shape_cast %147 : vector<1x8x12xf32> to vector<8x12xf32>
    %149 = vector.broadcast %84 : vector<1x12xf32> to vector<8x12xf32>
    %150 = arith.mulf %148, %149 : vector<8x12xf32>
    %cst_92 = arith.constant dense<0.000000e+00> : vector<8xf32>
    %151 = vector.multi_reduction <add>, %150, %cst_92 [1] : vector<8x12xf32> to vector<8xf32>
    %152 = vector.shape_cast %151 : vector<8xf32> to vector<8x1xf32>
    %153 = arith.addf %146, %152 : vector<8x1xf32>
    %c3_93 = arith.constant 3 : index
    %c0_94 = arith.constant 0 : index
    %c0_95 = arith.constant 0 : index
    %154 = vector.load %arg3[%c3_93, %c0_94, %c0_95] : memref<4x1x4xf32, #tpu.memory_space<vmem>>, vector<1x1x4xf32>
    %155 = vector.shape_cast %154 : vector<1x1x4xf32> to vector<1x4xf32>
    %156 = vector.broadcast %153 : vector<8x1xf32> to vector<8x4xf32>
    %157 = vector.broadcast %155 : vector<1x4xf32> to vector<8x4xf32>
    %158 = arith.mulf %156, %157 : vector<8x4xf32>
    %159 = arith.addf %140, %158 : vector<8x4xf32>
    %cst_96 = arith.constant dense<0.000000e+00> : vector<8xf32>
    %160 = vector.multi_reduction <add>, %159, %cst_96 [1] : vector<8x4xf32> to vector<8xf32>
    %161 = vector.shape_cast %160 : vector<8xf32> to vector<8x1xf32>
    %162 = arith.addf %80, %161 : vector<8x1xf32>
    %cst_97 = arith.constant 1.250000e-01 : f32
    %163 = vector.broadcast %cst_97 : f32 to vector<8x1xf32>
    %164 = arith.mulf %162, %163 : vector<8x1xf32>
    %165 = vector.broadcast %164 : vector<8x1xf32> to vector<8x4xf32>
    %166 = arith.subf %78, %165 : vector<8x4xf32>
    %167 = arith.mulf %166, %166 : vector<8x4xf32>
    %cst_98 = arith.constant dense<0.000000e+00> : vector<8xf32>
    %168 = vector.multi_reduction <add>, %167, %cst_98 [1] : vector<8x4xf32> to vector<8xf32>
    %169 = vector.shape_cast %168 : vector<8xf32> to vector<8x1xf32>
    %170 = vector.broadcast %164 : vector<8x1xf32> to vector<8x4xf32>
    %171 = arith.subf %159, %170 : vector<8x4xf32>
    %172 = arith.mulf %171, %171 : vector<8x4xf32>
    %cst_99 = arith.constant dense<0.000000e+00> : vector<8xf32>
    %173 = vector.multi_reduction <add>, %172, %cst_99 [1] : vector<8x4xf32> to vector<8xf32>
    %174 = vector.shape_cast %173 : vector<8xf32> to vector<8x1xf32>
    %175 = arith.addf %169, %174 : vector<8x1xf32>
    %cst_100 = arith.constant 1.250000e-01 : f32
    %176 = vector.broadcast %cst_100 : f32 to vector<8x1xf32>
    %177 = arith.mulf %175, %176 : vector<8x1xf32>
    %c0_101 = arith.constant 0 : index
    %c0_102 = arith.constant 0 : index
    %178 = vector.load %arg6[%c0_101, %c0_102] : memref<8x1xf32, #tpu.memory_space<vmem>>, vector<8x1xf32>
    %cst_103 = arith.constant 9.99999974E-6 : f32
    %179 = vector.broadcast %cst_103 : f32 to vector<8x1xf32>
    %180 = arith.addf %177, %179 : vector<8x1xf32>
    %181 = math.rsqrt %180 : vector<8x1xf32>
    %182 = arith.mulf %178, %181 : vector<8x1xf32>
    %c0_104 = arith.constant 0 : index
    %c0_105 = arith.constant 0 : index
    %183 = vector.load %arg7[%c0_104, %c0_105] : memref<8x1xf32, #tpu.memory_space<vmem>>, vector<8x1xf32>
    %184 = arith.mulf %164, %182 : vector<8x1xf32>
    %185 = arith.subf %183, %184 : vector<8x1xf32>
    %186 = vector.broadcast %182 : vector<8x1xf32> to vector<8x4xf32>
    %187 = arith.mulf %78, %186 : vector<8x4xf32>
    %188 = vector.broadcast %185 : vector<8x1xf32> to vector<8x4xf32>
    %189 = arith.addf %187, %188 : vector<8x4xf32>
    %cst_106 = arith.constant 0.000000e+00 : f32
    %190 = vector.broadcast %cst_106 : f32 to vector<8x4xf32>
    %191 = arith.maximumf %189, %190 : vector<8x4xf32>
    %192 = arith.truncf %191 : vector<8x4xf32> to vector<8x4xbf16>
    %c0_107 = arith.constant 0 : index
    %c0_108 = arith.constant 0 : index
    %c0_109 = arith.constant 0 : index
    %193 = vector.load %arg8[%c0_107, %c0_108, %c0_109] : memref<2x8x4xbf16, #tpu.memory_space<vmem>>, vector<1x8x4xbf16>
    %194 = vector.shape_cast %193 : vector<1x8x4xbf16> to vector<8x4xbf16>
    %195 = vector.shape_cast %192 : vector<8x4xbf16> to vector<1x8x4xbf16>
    tpu.vector_store %arg8[%c0_107, %c0_108, %c0_109], %195 {strides = array<i32>} : memref<2x8x4xbf16, #tpu.memory_space<vmem>>, vector<1x8x4xbf16>,
    %196 = vector.broadcast %182 : vector<8x1xf32> to vector<8x4xf32>
    %197 = arith.mulf %159, %196 : vector<8x4xf32>
    %198 = vector.broadcast %185 : vector<8x1xf32> to vector<8x4xf32>
    %199 = arith.addf %197, %198 : vector<8x4xf32>
    %cst_110 = arith.constant 0.000000e+00 : f32
    %200 = vector.broadcast %cst_110 : f32 to vector<8x4xf32>
    %201 = arith.maximumf %199, %200 : vector<8x4xf32>
    %202 = arith.truncf %201 : vector<8x4xf32> to vector<8x4xbf16>
    %c1_111 = arith.constant 1 : index
    %c0_112 = arith.constant 0 : index
    %c0_113 = arith.constant 0 : index
    %203 = vector.load %arg8[%c1_111, %c0_112, %c0_113] : memref<2x8x4xbf16, #tpu.memory_space<vmem>>, vector<1x8x4xbf16>
    %204 = vector.shape_cast %203 : vector<1x8x4xbf16> to vector<8x4xbf16>
    %205 = vector.shape_cast %202 : vector<8x4xbf16> to vector<1x8x4xbf16>
    tpu.vector_store %arg8[%c1_111, %c0_112, %c0_113], %205 {strides = array<i32>} : memref<2x8x4xbf16, #tpu.memory_space<vmem>>, vector<1x8x4xbf16>,
    return
  }
  func.func @transform_0(%arg0: i32) -> (i32, i32, i32) {
    %c0_i32 = arith.constant 0 : i32
    %c0_i32_0 = arith.constant 0 : i32
    %c0_i32_1 = arith.constant 0 : i32
    %c0_i32_2 = arith.constant 0 : i32
    return %c0_i32, %c0_i32_0, %c0_i32_1 : i32, i32, i32
  }
  func.func @transform_1(%arg0: i32) -> (i32, i32, i32) {
    %c0_i32 = arith.constant 0 : i32
    %c0_i32_0 = arith.constant 0 : i32
    %c0_i32_1 = arith.constant 0 : i32
    %c0_i32_2 = arith.constant 0 : i32
    return %c0_i32, %c0_i32_0, %c0_i32_1 : i32, i32, i32
  }
  func.func @transform_2(%arg0: i32) -> (i32, i32, i32) {
    %c0_i32 = arith.constant 0 : i32
    %c0_i32_0 = arith.constant 0 : i32
    %c0_i32_1 = arith.constant 0 : i32
    %c0_i32_2 = arith.constant 0 : i32
    return %c0_i32, %c0_i32_0, %c0_i32_1 : i32, i32, i32
  }
  func.func @transform_3(%arg0: i32) -> (i32, i32, i32) {
    %c0_i32 = arith.constant 0 : i32
    %c0_i32_0 = arith.constant 0 : i32
    %c0_i32_1 = arith.constant 0 : i32
    %c0_i32_2 = arith.constant 0 : i32
    return %c0_i32, %c0_i32_0, %c0_i32_1 : i32, i32, i32
  }
  func.func @transform_4(%arg0: i32) -> (i32, i32, i32) {
    %c0_i32 = arith.constant 0 : i32
    %c0_i32_0 = arith.constant 0 : i32
    %c0_i32_1 = arith.constant 0 : i32
    %c0_i32_2 = arith.constant 0 : i32
    return %c0_i32, %c0_i32_0, %c0_i32_1 : i32, i32, i32
  }
  func.func @transform_5(%arg0: i32) -> (i32, i32) {
    %c0_i32 = arith.constant 0 : i32
    %c0_i32_0 = arith.constant 0 : i32
    %c0_i32_1 = arith.constant 0 : i32
    return %c0_i32, %c0_i32_0 : i32, i32
  }
  func.func @transform_6(%arg0: i32) -> (i32, i32) {
    %c0_i32 = arith.constant 0 : i32
    %c0_i32_0 = arith.constant 0 : i32
    %c0_i32_1 = arith.constant 0 : i32
    return %c0_i32, %c0_i32_0 : i32, i32
  }
  func.func @transform_7(%arg0: i32) -> (i32, i32, i32) {
    %c0_i32 = arith.constant 0 : i32
    %c0_i32_0 = arith.constant 0 : i32
    %c0_i32_1 = arith.constant 0 : i32
    %c0_i32_2 = arith.constant 0 : i32
    return %c0_i32, %c0_i32_0, %c0_i32_1 : i32, i32, i32
  }
}

module attributes {stable_mosaic.version = 11 : i64} {
  func.func @_fused_bn_relu_layer_kernel(%arg0: i32, %arg1: memref<16x4x8xbf16, #tpu.memory_space<vmem>>, %arg2: memref<16x4x8xbf16, #tpu.memory_space<vmem>>, %arg3: memref<16x4x16xf32, #tpu.memory_space<vmem>>, %arg4: memref<2x8x4xbf16, #tpu.memory_space<vmem>>, %arg5: memref<2x8x4xf32, #tpu.memory_space<vmem>>, %arg6: memref<4x1xf32, #tpu.memory_space<vmem>>, %arg7: memref<4x1xf32, #tpu.memory_space<vmem>>, %arg8: memref<2x4x16xbf16, #tpu.memory_space<vmem>>) attributes {dimension_semantics = [#tpu.dimension_semantics<arbitrary>], iteration_bounds = array<i64: 1>, scalar_prefetch = 0 : i64, scratch_operands = 0 : i64, tpu.core_type = #tpu.core_type<tc>, window_params = [{pipeline_mode = #tpu.pipeline_mode<synchronous>, transform_indices = @transform_0, window_bounds = array<i64: 16, 4, 8>}, {pipeline_mode = #tpu.pipeline_mode<synchronous>, transform_indices = @transform_1, window_bounds = array<i64: 16, 4, 8>}, {pipeline_mode = #tpu.pipeline_mode<synchronous>, transform_indices = @transform_2, window_bounds = array<i64: 16, 4, 16>}, {pipeline_mode = #tpu.pipeline_mode<synchronous>, transform_indices = @transform_3, window_bounds = array<i64: 2, 8, 4>}, {pipeline_mode = #tpu.pipeline_mode<synchronous>, transform_indices = @transform_4, window_bounds = array<i64: 2, 8, 4>}, {pipeline_mode = #tpu.pipeline_mode<synchronous>, transform_indices = @transform_5, window_bounds = array<i64: 4, 1>}, {pipeline_mode = #tpu.pipeline_mode<synchronous>, transform_indices = @transform_6, window_bounds = array<i64: 4, 1>}, {pipeline_mode = #tpu.pipeline_mode<synchronous>, transform_indices = @transform_7, window_bounds = array<i64: 2, 4, 16>}]} {
    %c0 = arith.constant 0 : index
    %c0_0 = arith.constant 0 : index
    %c0_1 = arith.constant 0 : index
    %0 = vector.load %arg4[%c0, %c0_0, %c0_1] : memref<2x8x4xbf16, #tpu.memory_space<vmem>>, vector<1x8x4xbf16>
    %1 = vector.shape_cast %0 : vector<1x8x4xbf16> to vector<8x4xbf16>
    %c0_2 = arith.constant 0 : index
    %c0_3 = arith.constant 0 : index
    %c0_4 = arith.constant 0 : index
    %2 = vector.load %arg5[%c0_2, %c0_3, %c0_4] : memref<2x8x4xf32, #tpu.memory_space<vmem>>, vector<1x8x4xf32>
    %3 = vector.shape_cast %2 : vector<1x8x4xf32> to vector<8x4xf32>
    %4 = arith.truncf %3 : vector<8x4xf32> to vector<8x4xbf16>
    %c0_5 = arith.constant 0 : index
    %c0_6 = arith.constant 0 : index
    %c0_7 = arith.constant 0 : index
    %5 = vector.load %arg1[%c0_5, %c0_6, %c0_7] : memref<16x4x8xbf16, #tpu.memory_space<vmem>>, vector<1x4x8xbf16>
    %6 = vector.shape_cast %5 : vector<1x4x8xbf16> to vector<4x8xbf16>
    %cst = arith.constant dense<0.000000e+00> : vector<4x4xf32>
    %7 = tpu.matmul %6, %1, %cst {dimension_numbers = #tpu.dot_dimension_numbers<[1], [0], [0], [1], [0, 0, 1, 1], [], []>} : vector<4x8xbf16>, vector<8x4xbf16>, vector<4x4xf32> -> vector<4x4xf32>
    %c0_8 = arith.constant 0 : index
    %c0_9 = arith.constant 0 : index
    %c0_10 = arith.constant 0 : index
    %8 = vector.load %arg2[%c0_8, %c0_9, %c0_10] : memref<16x4x8xbf16, #tpu.memory_space<vmem>>, vector<1x4x8xbf16>
    %9 = vector.shape_cast %8 : vector<1x4x8xbf16> to vector<4x8xbf16>
    %cst_11 = arith.constant dense<0.000000e+00> : vector<4x4xf32>
    %10 = tpu.matmul %9, %4, %cst_11 {dimension_numbers = #tpu.dot_dimension_numbers<[1], [0], [0], [1], [0, 0, 1, 1], [], []>} : vector<4x8xbf16>, vector<8x4xbf16>, vector<4x4xf32> -> vector<4x4xf32>
    %11 = arith.addf %7, %10 : vector<4x4xf32>
    %c0_12 = arith.constant 0 : index
    %c0_13 = arith.constant 0 : index
    %c0_14 = arith.constant 0 : index
    %12 = vector.load %arg3[%c0_12, %c0_13, %c0_14] : memref<16x4x16xf32, #tpu.memory_space<vmem>>, vector<1x4x16xf32>
    %13 = vector.shape_cast %12 : vector<1x4x16xf32> to vector<4x16xf32>
    %cst_15 = arith.constant dense<0.000000e+00> : vector<4x16xf32>
    %14 = tpu.matmul %11, %13, %cst_15 {dimension_numbers = #tpu.dot_dimension_numbers<[1], [0], [0], [1], [0, 0, 1, 1], [], []>} : vector<4x4xf32>, vector<4x16xf32>, vector<4x16xf32> -> vector<4x16xf32>
    %c1 = arith.constant 1 : index
    %c0_16 = arith.constant 0 : index
    %c0_17 = arith.constant 0 : index
    %15 = vector.load %arg1[%c1, %c0_16, %c0_17] : memref<16x4x8xbf16, #tpu.memory_space<vmem>>, vector<1x4x8xbf16>
    %16 = vector.shape_cast %15 : vector<1x4x8xbf16> to vector<4x8xbf16>
    %cst_18 = arith.constant dense<0.000000e+00> : vector<4x4xf32>
    %17 = tpu.matmul %16, %1, %cst_18 {dimension_numbers = #tpu.dot_dimension_numbers<[1], [0], [0], [1], [0, 0, 1, 1], [], []>} : vector<4x8xbf16>, vector<8x4xbf16>, vector<4x4xf32> -> vector<4x4xf32>
    %c1_19 = arith.constant 1 : index
    %c0_20 = arith.constant 0 : index
    %c0_21 = arith.constant 0 : index
    %18 = vector.load %arg2[%c1_19, %c0_20, %c0_21] : memref<16x4x8xbf16, #tpu.memory_space<vmem>>, vector<1x4x8xbf16>
    %19 = vector.shape_cast %18 : vector<1x4x8xbf16> to vector<4x8xbf16>
    %cst_22 = arith.constant dense<0.000000e+00> : vector<4x4xf32>
    %20 = tpu.matmul %19, %4, %cst_22 {dimension_numbers = #tpu.dot_dimension_numbers<[1], [0], [0], [1], [0, 0, 1, 1], [], []>} : vector<4x8xbf16>, vector<8x4xbf16>, vector<4x4xf32> -> vector<4x4xf32>
    %21 = arith.addf %17, %20 : vector<4x4xf32>
    %c1_23 = arith.constant 1 : index
    %c0_24 = arith.constant 0 : index
    %c0_25 = arith.constant 0 : index
    %22 = vector.load %arg3[%c1_23, %c0_24, %c0_25] : memref<16x4x16xf32, #tpu.memory_space<vmem>>, vector<1x4x16xf32>
    %23 = vector.shape_cast %22 : vector<1x4x16xf32> to vector<4x16xf32>
    %cst_26 = arith.constant dense<0.000000e+00> : vector<4x16xf32>
    %24 = tpu.matmul %21, %23, %cst_26 {dimension_numbers = #tpu.dot_dimension_numbers<[1], [0], [0], [1], [0, 0, 1, 1], [], []>} : vector<4x4xf32>, vector<4x16xf32>, vector<4x16xf32> -> vector<4x16xf32>
    %25 = arith.addf %14, %24 : vector<4x16xf32>
    %c2 = arith.constant 2 : index
    %c0_27 = arith.constant 0 : index
    %c0_28 = arith.constant 0 : index
    %26 = vector.load %arg1[%c2, %c0_27, %c0_28] : memref<16x4x8xbf16, #tpu.memory_space<vmem>>, vector<1x4x8xbf16>
    %27 = vector.shape_cast %26 : vector<1x4x8xbf16> to vector<4x8xbf16>
    %cst_29 = arith.constant dense<0.000000e+00> : vector<4x4xf32>
    %28 = tpu.matmul %27, %1, %cst_29 {dimension_numbers = #tpu.dot_dimension_numbers<[1], [0], [0], [1], [0, 0, 1, 1], [], []>} : vector<4x8xbf16>, vector<8x4xbf16>, vector<4x4xf32> -> vector<4x4xf32>
    %c2_30 = arith.constant 2 : index
    %c0_31 = arith.constant 0 : index
    %c0_32 = arith.constant 0 : index
    %29 = vector.load %arg2[%c2_30, %c0_31, %c0_32] : memref<16x4x8xbf16, #tpu.memory_space<vmem>>, vector<1x4x8xbf16>
    %30 = vector.shape_cast %29 : vector<1x4x8xbf16> to vector<4x8xbf16>
    %cst_33 = arith.constant dense<0.000000e+00> : vector<4x4xf32>
    %31 = tpu.matmul %30, %4, %cst_33 {dimension_numbers = #tpu.dot_dimension_numbers<[1], [0], [0], [1], [0, 0, 1, 1], [], []>} : vector<4x8xbf16>, vector<8x4xbf16>, vector<4x4xf32> -> vector<4x4xf32>
    %32 = arith.addf %28, %31 : vector<4x4xf32>
    %c2_34 = arith.constant 2 : index
    %c0_35 = arith.constant 0 : index
    %c0_36 = arith.constant 0 : index
    %33 = vector.load %arg3[%c2_34, %c0_35, %c0_36] : memref<16x4x16xf32, #tpu.memory_space<vmem>>, vector<1x4x16xf32>
    %34 = vector.shape_cast %33 : vector<1x4x16xf32> to vector<4x16xf32>
    %cst_37 = arith.constant dense<0.000000e+00> : vector<4x16xf32>
    %35 = tpu.matmul %32, %34, %cst_37 {dimension_numbers = #tpu.dot_dimension_numbers<[1], [0], [0], [1], [0, 0, 1, 1], [], []>} : vector<4x4xf32>, vector<4x16xf32>, vector<4x16xf32> -> vector<4x16xf32>
    %36 = arith.addf %25, %35 : vector<4x16xf32>
    %c3 = arith.constant 3 : index
    %c0_38 = arith.constant 0 : index
    %c0_39 = arith.constant 0 : index
    %37 = vector.load %arg1[%c3, %c0_38, %c0_39] : memref<16x4x8xbf16, #tpu.memory_space<vmem>>, vector<1x4x8xbf16>
    %38 = vector.shape_cast %37 : vector<1x4x8xbf16> to vector<4x8xbf16>
    %cst_40 = arith.constant dense<0.000000e+00> : vector<4x4xf32>
    %39 = tpu.matmul %38, %1, %cst_40 {dimension_numbers = #tpu.dot_dimension_numbers<[1], [0], [0], [1], [0, 0, 1, 1], [], []>} : vector<4x8xbf16>, vector<8x4xbf16>, vector<4x4xf32> -> vector<4x4xf32>
    %c3_41 = arith.constant 3 : index
    %c0_42 = arith.constant 0 : index
    %c0_43 = arith.constant 0 : index
    %40 = vector.load %arg2[%c3_41, %c0_42, %c0_43] : memref<16x4x8xbf16, #tpu.memory_space<vmem>>, vector<1x4x8xbf16>
    %41 = vector.shape_cast %40 : vector<1x4x8xbf16> to vector<4x8xbf16>
    %cst_44 = arith.constant dense<0.000000e+00> : vector<4x4xf32>
    %42 = tpu.matmul %41, %4, %cst_44 {dimension_numbers = #tpu.dot_dimension_numbers<[1], [0], [0], [1], [0, 0, 1, 1], [], []>} : vector<4x8xbf16>, vector<8x4xbf16>, vector<4x4xf32> -> vector<4x4xf32>
    %43 = arith.addf %39, %42 : vector<4x4xf32>
    %c3_45 = arith.constant 3 : index
    %c0_46 = arith.constant 0 : index
    %c0_47 = arith.constant 0 : index
    %44 = vector.load %arg3[%c3_45, %c0_46, %c0_47] : memref<16x4x16xf32, #tpu.memory_space<vmem>>, vector<1x4x16xf32>
    %45 = vector.shape_cast %44 : vector<1x4x16xf32> to vector<4x16xf32>
    %cst_48 = arith.constant dense<0.000000e+00> : vector<4x16xf32>
    %46 = tpu.matmul %43, %45, %cst_48 {dimension_numbers = #tpu.dot_dimension_numbers<[1], [0], [0], [1], [0, 0, 1, 1], [], []>} : vector<4x4xf32>, vector<4x16xf32>, vector<4x16xf32> -> vector<4x16xf32>
    %47 = arith.addf %36, %46 : vector<4x16xf32>
    %c4 = arith.constant 4 : index
    %c0_49 = arith.constant 0 : index
    %c0_50 = arith.constant 0 : index
    %48 = vector.load %arg1[%c4, %c0_49, %c0_50] : memref<16x4x8xbf16, #tpu.memory_space<vmem>>, vector<1x4x8xbf16>
    %49 = vector.shape_cast %48 : vector<1x4x8xbf16> to vector<4x8xbf16>
    %cst_51 = arith.constant dense<0.000000e+00> : vector<4x4xf32>
    %50 = tpu.matmul %49, %1, %cst_51 {dimension_numbers = #tpu.dot_dimension_numbers<[1], [0], [0], [1], [0, 0, 1, 1], [], []>} : vector<4x8xbf16>, vector<8x4xbf16>, vector<4x4xf32> -> vector<4x4xf32>
    %c4_52 = arith.constant 4 : index
    %c0_53 = arith.constant 0 : index
    %c0_54 = arith.constant 0 : index
    %51 = vector.load %arg2[%c4_52, %c0_53, %c0_54] : memref<16x4x8xbf16, #tpu.memory_space<vmem>>, vector<1x4x8xbf16>
    %52 = vector.shape_cast %51 : vector<1x4x8xbf16> to vector<4x8xbf16>
    %cst_55 = arith.constant dense<0.000000e+00> : vector<4x4xf32>
    %53 = tpu.matmul %52, %4, %cst_55 {dimension_numbers = #tpu.dot_dimension_numbers<[1], [0], [0], [1], [0, 0, 1, 1], [], []>} : vector<4x8xbf16>, vector<8x4xbf16>, vector<4x4xf32> -> vector<4x4xf32>
    %54 = arith.addf %50, %53 : vector<4x4xf32>
    %c4_56 = arith.constant 4 : index
    %c0_57 = arith.constant 0 : index
    %c0_58 = arith.constant 0 : index
    %55 = vector.load %arg3[%c4_56, %c0_57, %c0_58] : memref<16x4x16xf32, #tpu.memory_space<vmem>>, vector<1x4x16xf32>
    %56 = vector.shape_cast %55 : vector<1x4x16xf32> to vector<4x16xf32>
    %cst_59 = arith.constant dense<0.000000e+00> : vector<4x16xf32>
    %57 = tpu.matmul %54, %56, %cst_59 {dimension_numbers = #tpu.dot_dimension_numbers<[1], [0], [0], [1], [0, 0, 1, 1], [], []>} : vector<4x4xf32>, vector<4x16xf32>, vector<4x16xf32> -> vector<4x16xf32>
    %58 = arith.addf %47, %57 : vector<4x16xf32>
    %c5 = arith.constant 5 : index
    %c0_60 = arith.constant 0 : index
    %c0_61 = arith.constant 0 : index
    %59 = vector.load %arg1[%c5, %c0_60, %c0_61] : memref<16x4x8xbf16, #tpu.memory_space<vmem>>, vector<1x4x8xbf16>
    %60 = vector.shape_cast %59 : vector<1x4x8xbf16> to vector<4x8xbf16>
    %cst_62 = arith.constant dense<0.000000e+00> : vector<4x4xf32>
    %61 = tpu.matmul %60, %1, %cst_62 {dimension_numbers = #tpu.dot_dimension_numbers<[1], [0], [0], [1], [0, 0, 1, 1], [], []>} : vector<4x8xbf16>, vector<8x4xbf16>, vector<4x4xf32> -> vector<4x4xf32>
    %c5_63 = arith.constant 5 : index
    %c0_64 = arith.constant 0 : index
    %c0_65 = arith.constant 0 : index
    %62 = vector.load %arg2[%c5_63, %c0_64, %c0_65] : memref<16x4x8xbf16, #tpu.memory_space<vmem>>, vector<1x4x8xbf16>
    %63 = vector.shape_cast %62 : vector<1x4x8xbf16> to vector<4x8xbf16>
    %cst_66 = arith.constant dense<0.000000e+00> : vector<4x4xf32>
    %64 = tpu.matmul %63, %4, %cst_66 {dimension_numbers = #tpu.dot_dimension_numbers<[1], [0], [0], [1], [0, 0, 1, 1], [], []>} : vector<4x8xbf16>, vector<8x4xbf16>, vector<4x4xf32> -> vector<4x4xf32>
    %65 = arith.addf %61, %64 : vector<4x4xf32>
    %c5_67 = arith.constant 5 : index
    %c0_68 = arith.constant 0 : index
    %c0_69 = arith.constant 0 : index
    %66 = vector.load %arg3[%c5_67, %c0_68, %c0_69] : memref<16x4x16xf32, #tpu.memory_space<vmem>>, vector<1x4x16xf32>
    %67 = vector.shape_cast %66 : vector<1x4x16xf32> to vector<4x16xf32>
    %cst_70 = arith.constant dense<0.000000e+00> : vector<4x16xf32>
    %68 = tpu.matmul %65, %67, %cst_70 {dimension_numbers = #tpu.dot_dimension_numbers<[1], [0], [0], [1], [0, 0, 1, 1], [], []>} : vector<4x4xf32>, vector<4x16xf32>, vector<4x16xf32> -> vector<4x16xf32>
    %69 = arith.addf %58, %68 : vector<4x16xf32>
    %c6 = arith.constant 6 : index
    %c0_71 = arith.constant 0 : index
    %c0_72 = arith.constant 0 : index
    %70 = vector.load %arg1[%c6, %c0_71, %c0_72] : memref<16x4x8xbf16, #tpu.memory_space<vmem>>, vector<1x4x8xbf16>
    %71 = vector.shape_cast %70 : vector<1x4x8xbf16> to vector<4x8xbf16>
    %cst_73 = arith.constant dense<0.000000e+00> : vector<4x4xf32>
    %72 = tpu.matmul %71, %1, %cst_73 {dimension_numbers = #tpu.dot_dimension_numbers<[1], [0], [0], [1], [0, 0, 1, 1], [], []>} : vector<4x8xbf16>, vector<8x4xbf16>, vector<4x4xf32> -> vector<4x4xf32>
    %c6_74 = arith.constant 6 : index
    %c0_75 = arith.constant 0 : index
    %c0_76 = arith.constant 0 : index
    %73 = vector.load %arg2[%c6_74, %c0_75, %c0_76] : memref<16x4x8xbf16, #tpu.memory_space<vmem>>, vector<1x4x8xbf16>
    %74 = vector.shape_cast %73 : vector<1x4x8xbf16> to vector<4x8xbf16>
    %cst_77 = arith.constant dense<0.000000e+00> : vector<4x4xf32>
    %75 = tpu.matmul %74, %4, %cst_77 {dimension_numbers = #tpu.dot_dimension_numbers<[1], [0], [0], [1], [0, 0, 1, 1], [], []>} : vector<4x8xbf16>, vector<8x4xbf16>, vector<4x4xf32> -> vector<4x4xf32>
    %76 = arith.addf %72, %75 : vector<4x4xf32>
    %c6_78 = arith.constant 6 : index
    %c0_79 = arith.constant 0 : index
    %c0_80 = arith.constant 0 : index
    %77 = vector.load %arg3[%c6_78, %c0_79, %c0_80] : memref<16x4x16xf32, #tpu.memory_space<vmem>>, vector<1x4x16xf32>
    %78 = vector.shape_cast %77 : vector<1x4x16xf32> to vector<4x16xf32>
    %cst_81 = arith.constant dense<0.000000e+00> : vector<4x16xf32>
    %79 = tpu.matmul %76, %78, %cst_81 {dimension_numbers = #tpu.dot_dimension_numbers<[1], [0], [0], [1], [0, 0, 1, 1], [], []>} : vector<4x4xf32>, vector<4x16xf32>, vector<4x16xf32> -> vector<4x16xf32>
    %80 = arith.addf %69, %79 : vector<4x16xf32>
    %c7 = arith.constant 7 : index
    %c0_82 = arith.constant 0 : index
    %c0_83 = arith.constant 0 : index
    %81 = vector.load %arg1[%c7, %c0_82, %c0_83] : memref<16x4x8xbf16, #tpu.memory_space<vmem>>, vector<1x4x8xbf16>
    %82 = vector.shape_cast %81 : vector<1x4x8xbf16> to vector<4x8xbf16>
    %cst_84 = arith.constant dense<0.000000e+00> : vector<4x4xf32>
    %83 = tpu.matmul %82, %1, %cst_84 {dimension_numbers = #tpu.dot_dimension_numbers<[1], [0], [0], [1], [0, 0, 1, 1], [], []>} : vector<4x8xbf16>, vector<8x4xbf16>, vector<4x4xf32> -> vector<4x4xf32>
    %c7_85 = arith.constant 7 : index
    %c0_86 = arith.constant 0 : index
    %c0_87 = arith.constant 0 : index
    %84 = vector.load %arg2[%c7_85, %c0_86, %c0_87] : memref<16x4x8xbf16, #tpu.memory_space<vmem>>, vector<1x4x8xbf16>
    %85 = vector.shape_cast %84 : vector<1x4x8xbf16> to vector<4x8xbf16>
    %cst_88 = arith.constant dense<0.000000e+00> : vector<4x4xf32>
    %86 = tpu.matmul %85, %4, %cst_88 {dimension_numbers = #tpu.dot_dimension_numbers<[1], [0], [0], [1], [0, 0, 1, 1], [], []>} : vector<4x8xbf16>, vector<8x4xbf16>, vector<4x4xf32> -> vector<4x4xf32>
    %87 = arith.addf %83, %86 : vector<4x4xf32>
    %c7_89 = arith.constant 7 : index
    %c0_90 = arith.constant 0 : index
    %c0_91 = arith.constant 0 : index
    %88 = vector.load %arg3[%c7_89, %c0_90, %c0_91] : memref<16x4x16xf32, #tpu.memory_space<vmem>>, vector<1x4x16xf32>
    %89 = vector.shape_cast %88 : vector<1x4x16xf32> to vector<4x16xf32>
    %cst_92 = arith.constant dense<0.000000e+00> : vector<4x16xf32>
    %90 = tpu.matmul %87, %89, %cst_92 {dimension_numbers = #tpu.dot_dimension_numbers<[1], [0], [0], [1], [0, 0, 1, 1], [], []>} : vector<4x4xf32>, vector<4x16xf32>, vector<4x16xf32> -> vector<4x16xf32>
    %91 = arith.addf %80, %90 : vector<4x16xf32>
    %c8 = arith.constant 8 : index
    %c0_93 = arith.constant 0 : index
    %c0_94 = arith.constant 0 : index
    %92 = vector.load %arg1[%c8, %c0_93, %c0_94] : memref<16x4x8xbf16, #tpu.memory_space<vmem>>, vector<1x4x8xbf16>
    %93 = vector.shape_cast %92 : vector<1x4x8xbf16> to vector<4x8xbf16>
    %cst_95 = arith.constant dense<0.000000e+00> : vector<4x4xf32>
    %94 = tpu.matmul %93, %1, %cst_95 {dimension_numbers = #tpu.dot_dimension_numbers<[1], [0], [0], [1], [0, 0, 1, 1], [], []>} : vector<4x8xbf16>, vector<8x4xbf16>, vector<4x4xf32> -> vector<4x4xf32>
    %c8_96 = arith.constant 8 : index
    %c0_97 = arith.constant 0 : index
    %c0_98 = arith.constant 0 : index
    %95 = vector.load %arg2[%c8_96, %c0_97, %c0_98] : memref<16x4x8xbf16, #tpu.memory_space<vmem>>, vector<1x4x8xbf16>
    %96 = vector.shape_cast %95 : vector<1x4x8xbf16> to vector<4x8xbf16>
    %cst_99 = arith.constant dense<0.000000e+00> : vector<4x4xf32>
    %97 = tpu.matmul %96, %4, %cst_99 {dimension_numbers = #tpu.dot_dimension_numbers<[1], [0], [0], [1], [0, 0, 1, 1], [], []>} : vector<4x8xbf16>, vector<8x4xbf16>, vector<4x4xf32> -> vector<4x4xf32>
    %98 = arith.addf %94, %97 : vector<4x4xf32>
    %c8_100 = arith.constant 8 : index
    %c0_101 = arith.constant 0 : index
    %c0_102 = arith.constant 0 : index
    %99 = vector.load %arg3[%c8_100, %c0_101, %c0_102] : memref<16x4x16xf32, #tpu.memory_space<vmem>>, vector<1x4x16xf32>
    %100 = vector.shape_cast %99 : vector<1x4x16xf32> to vector<4x16xf32>
    %cst_103 = arith.constant dense<0.000000e+00> : vector<4x16xf32>
    %101 = tpu.matmul %98, %100, %cst_103 {dimension_numbers = #tpu.dot_dimension_numbers<[1], [0], [0], [1], [0, 0, 1, 1], [], []>} : vector<4x4xf32>, vector<4x16xf32>, vector<4x16xf32> -> vector<4x16xf32>
    %102 = arith.addf %91, %101 : vector<4x16xf32>
    %c9 = arith.constant 9 : index
    %c0_104 = arith.constant 0 : index
    %c0_105 = arith.constant 0 : index
    %103 = vector.load %arg1[%c9, %c0_104, %c0_105] : memref<16x4x8xbf16, #tpu.memory_space<vmem>>, vector<1x4x8xbf16>
    %104 = vector.shape_cast %103 : vector<1x4x8xbf16> to vector<4x8xbf16>
    %cst_106 = arith.constant dense<0.000000e+00> : vector<4x4xf32>
    %105 = tpu.matmul %104, %1, %cst_106 {dimension_numbers = #tpu.dot_dimension_numbers<[1], [0], [0], [1], [0, 0, 1, 1], [], []>} : vector<4x8xbf16>, vector<8x4xbf16>, vector<4x4xf32> -> vector<4x4xf32>
    %c9_107 = arith.constant 9 : index
    %c0_108 = arith.constant 0 : index
    %c0_109 = arith.constant 0 : index
    %106 = vector.load %arg2[%c9_107, %c0_108, %c0_109] : memref<16x4x8xbf16, #tpu.memory_space<vmem>>, vector<1x4x8xbf16>
    %107 = vector.shape_cast %106 : vector<1x4x8xbf16> to vector<4x8xbf16>
    %cst_110 = arith.constant dense<0.000000e+00> : vector<4x4xf32>
    %108 = tpu.matmul %107, %4, %cst_110 {dimension_numbers = #tpu.dot_dimension_numbers<[1], [0], [0], [1], [0, 0, 1, 1], [], []>} : vector<4x8xbf16>, vector<8x4xbf16>, vector<4x4xf32> -> vector<4x4xf32>
    %109 = arith.addf %105, %108 : vector<4x4xf32>
    %c9_111 = arith.constant 9 : index
    %c0_112 = arith.constant 0 : index
    %c0_113 = arith.constant 0 : index
    %110 = vector.load %arg3[%c9_111, %c0_112, %c0_113] : memref<16x4x16xf32, #tpu.memory_space<vmem>>, vector<1x4x16xf32>
    %111 = vector.shape_cast %110 : vector<1x4x16xf32> to vector<4x16xf32>
    %cst_114 = arith.constant dense<0.000000e+00> : vector<4x16xf32>
    %112 = tpu.matmul %109, %111, %cst_114 {dimension_numbers = #tpu.dot_dimension_numbers<[1], [0], [0], [1], [0, 0, 1, 1], [], []>} : vector<4x4xf32>, vector<4x16xf32>, vector<4x16xf32> -> vector<4x16xf32>
    %113 = arith.addf %102, %112 : vector<4x16xf32>
    %c10 = arith.constant 10 : index
    %c0_115 = arith.constant 0 : index
    %c0_116 = arith.constant 0 : index
    %114 = vector.load %arg1[%c10, %c0_115, %c0_116] : memref<16x4x8xbf16, #tpu.memory_space<vmem>>, vector<1x4x8xbf16>
    %115 = vector.shape_cast %114 : vector<1x4x8xbf16> to vector<4x8xbf16>
    %cst_117 = arith.constant dense<0.000000e+00> : vector<4x4xf32>
    %116 = tpu.matmul %115, %1, %cst_117 {dimension_numbers = #tpu.dot_dimension_numbers<[1], [0], [0], [1], [0, 0, 1, 1], [], []>} : vector<4x8xbf16>, vector<8x4xbf16>, vector<4x4xf32> -> vector<4x4xf32>
    %c10_118 = arith.constant 10 : index
    %c0_119 = arith.constant 0 : index
    %c0_120 = arith.constant 0 : index
    %117 = vector.load %arg2[%c10_118, %c0_119, %c0_120] : memref<16x4x8xbf16, #tpu.memory_space<vmem>>, vector<1x4x8xbf16>
    %118 = vector.shape_cast %117 : vector<1x4x8xbf16> to vector<4x8xbf16>
    %cst_121 = arith.constant dense<0.000000e+00> : vector<4x4xf32>
    %119 = tpu.matmul %118, %4, %cst_121 {dimension_numbers = #tpu.dot_dimension_numbers<[1], [0], [0], [1], [0, 0, 1, 1], [], []>} : vector<4x8xbf16>, vector<8x4xbf16>, vector<4x4xf32> -> vector<4x4xf32>
    %120 = arith.addf %116, %119 : vector<4x4xf32>
    %c10_122 = arith.constant 10 : index
    %c0_123 = arith.constant 0 : index
    %c0_124 = arith.constant 0 : index
    %121 = vector.load %arg3[%c10_122, %c0_123, %c0_124] : memref<16x4x16xf32, #tpu.memory_space<vmem>>, vector<1x4x16xf32>
    %122 = vector.shape_cast %121 : vector<1x4x16xf32> to vector<4x16xf32>
    %cst_125 = arith.constant dense<0.000000e+00> : vector<4x16xf32>
    %123 = tpu.matmul %120, %122, %cst_125 {dimension_numbers = #tpu.dot_dimension_numbers<[1], [0], [0], [1], [0, 0, 1, 1], [], []>} : vector<4x4xf32>, vector<4x16xf32>, vector<4x16xf32> -> vector<4x16xf32>
    %124 = arith.addf %113, %123 : vector<4x16xf32>
    %c11 = arith.constant 11 : index
    %c0_126 = arith.constant 0 : index
    %c0_127 = arith.constant 0 : index
    %125 = vector.load %arg1[%c11, %c0_126, %c0_127] : memref<16x4x8xbf16, #tpu.memory_space<vmem>>, vector<1x4x8xbf16>
    %126 = vector.shape_cast %125 : vector<1x4x8xbf16> to vector<4x8xbf16>
    %cst_128 = arith.constant dense<0.000000e+00> : vector<4x4xf32>
    %127 = tpu.matmul %126, %1, %cst_128 {dimension_numbers = #tpu.dot_dimension_numbers<[1], [0], [0], [1], [0, 0, 1, 1], [], []>} : vector<4x8xbf16>, vector<8x4xbf16>, vector<4x4xf32> -> vector<4x4xf32>
    %c11_129 = arith.constant 11 : index
    %c0_130 = arith.constant 0 : index
    %c0_131 = arith.constant 0 : index
    %128 = vector.load %arg2[%c11_129, %c0_130, %c0_131] : memref<16x4x8xbf16, #tpu.memory_space<vmem>>, vector<1x4x8xbf16>
    %129 = vector.shape_cast %128 : vector<1x4x8xbf16> to vector<4x8xbf16>
    %cst_132 = arith.constant dense<0.000000e+00> : vector<4x4xf32>
    %130 = tpu.matmul %129, %4, %cst_132 {dimension_numbers = #tpu.dot_dimension_numbers<[1], [0], [0], [1], [0, 0, 1, 1], [], []>} : vector<4x8xbf16>, vector<8x4xbf16>, vector<4x4xf32> -> vector<4x4xf32>
    %131 = arith.addf %127, %130 : vector<4x4xf32>
    %c11_133 = arith.constant 11 : index
    %c0_134 = arith.constant 0 : index
    %c0_135 = arith.constant 0 : index
    %132 = vector.load %arg3[%c11_133, %c0_134, %c0_135] : memref<16x4x16xf32, #tpu.memory_space<vmem>>, vector<1x4x16xf32>
    %133 = vector.shape_cast %132 : vector<1x4x16xf32> to vector<4x16xf32>
    %cst_136 = arith.constant dense<0.000000e+00> : vector<4x16xf32>
    %134 = tpu.matmul %131, %133, %cst_136 {dimension_numbers = #tpu.dot_dimension_numbers<[1], [0], [0], [1], [0, 0, 1, 1], [], []>} : vector<4x4xf32>, vector<4x16xf32>, vector<4x16xf32> -> vector<4x16xf32>
    %135 = arith.addf %124, %134 : vector<4x16xf32>
    %c12 = arith.constant 12 : index
    %c0_137 = arith.constant 0 : index
    %c0_138 = arith.constant 0 : index
    %136 = vector.load %arg1[%c12, %c0_137, %c0_138] : memref<16x4x8xbf16, #tpu.memory_space<vmem>>, vector<1x4x8xbf16>
    %137 = vector.shape_cast %136 : vector<1x4x8xbf16> to vector<4x8xbf16>
    %cst_139 = arith.constant dense<0.000000e+00> : vector<4x4xf32>
    %138 = tpu.matmul %137, %1, %cst_139 {dimension_numbers = #tpu.dot_dimension_numbers<[1], [0], [0], [1], [0, 0, 1, 1], [], []>} : vector<4x8xbf16>, vector<8x4xbf16>, vector<4x4xf32> -> vector<4x4xf32>
    %c12_140 = arith.constant 12 : index
    %c0_141 = arith.constant 0 : index
    %c0_142 = arith.constant 0 : index
    %139 = vector.load %arg2[%c12_140, %c0_141, %c0_142] : memref<16x4x8xbf16, #tpu.memory_space<vmem>>, vector<1x4x8xbf16>
    %140 = vector.shape_cast %139 : vector<1x4x8xbf16> to vector<4x8xbf16>
    %cst_143 = arith.constant dense<0.000000e+00> : vector<4x4xf32>
    %141 = tpu.matmul %140, %4, %cst_143 {dimension_numbers = #tpu.dot_dimension_numbers<[1], [0], [0], [1], [0, 0, 1, 1], [], []>} : vector<4x8xbf16>, vector<8x4xbf16>, vector<4x4xf32> -> vector<4x4xf32>
    %142 = arith.addf %138, %141 : vector<4x4xf32>
    %c12_144 = arith.constant 12 : index
    %c0_145 = arith.constant 0 : index
    %c0_146 = arith.constant 0 : index
    %143 = vector.load %arg3[%c12_144, %c0_145, %c0_146] : memref<16x4x16xf32, #tpu.memory_space<vmem>>, vector<1x4x16xf32>
    %144 = vector.shape_cast %143 : vector<1x4x16xf32> to vector<4x16xf32>
    %cst_147 = arith.constant dense<0.000000e+00> : vector<4x16xf32>
    %145 = tpu.matmul %142, %144, %cst_147 {dimension_numbers = #tpu.dot_dimension_numbers<[1], [0], [0], [1], [0, 0, 1, 1], [], []>} : vector<4x4xf32>, vector<4x16xf32>, vector<4x16xf32> -> vector<4x16xf32>
    %146 = arith.addf %135, %145 : vector<4x16xf32>
    %c13 = arith.constant 13 : index
    %c0_148 = arith.constant 0 : index
    %c0_149 = arith.constant 0 : index
    %147 = vector.load %arg1[%c13, %c0_148, %c0_149] : memref<16x4x8xbf16, #tpu.memory_space<vmem>>, vector<1x4x8xbf16>
    %148 = vector.shape_cast %147 : vector<1x4x8xbf16> to vector<4x8xbf16>
    %cst_150 = arith.constant dense<0.000000e+00> : vector<4x4xf32>
    %149 = tpu.matmul %148, %1, %cst_150 {dimension_numbers = #tpu.dot_dimension_numbers<[1], [0], [0], [1], [0, 0, 1, 1], [], []>} : vector<4x8xbf16>, vector<8x4xbf16>, vector<4x4xf32> -> vector<4x4xf32>
    %c13_151 = arith.constant 13 : index
    %c0_152 = arith.constant 0 : index
    %c0_153 = arith.constant 0 : index
    %150 = vector.load %arg2[%c13_151, %c0_152, %c0_153] : memref<16x4x8xbf16, #tpu.memory_space<vmem>>, vector<1x4x8xbf16>
    %151 = vector.shape_cast %150 : vector<1x4x8xbf16> to vector<4x8xbf16>
    %cst_154 = arith.constant dense<0.000000e+00> : vector<4x4xf32>
    %152 = tpu.matmul %151, %4, %cst_154 {dimension_numbers = #tpu.dot_dimension_numbers<[1], [0], [0], [1], [0, 0, 1, 1], [], []>} : vector<4x8xbf16>, vector<8x4xbf16>, vector<4x4xf32> -> vector<4x4xf32>
    %153 = arith.addf %149, %152 : vector<4x4xf32>
    %c13_155 = arith.constant 13 : index
    %c0_156 = arith.constant 0 : index
    %c0_157 = arith.constant 0 : index
    %154 = vector.load %arg3[%c13_155, %c0_156, %c0_157] : memref<16x4x16xf32, #tpu.memory_space<vmem>>, vector<1x4x16xf32>
    %155 = vector.shape_cast %154 : vector<1x4x16xf32> to vector<4x16xf32>
    %cst_158 = arith.constant dense<0.000000e+00> : vector<4x16xf32>
    %156 = tpu.matmul %153, %155, %cst_158 {dimension_numbers = #tpu.dot_dimension_numbers<[1], [0], [0], [1], [0, 0, 1, 1], [], []>} : vector<4x4xf32>, vector<4x16xf32>, vector<4x16xf32> -> vector<4x16xf32>
    %157 = arith.addf %146, %156 : vector<4x16xf32>
    %c14 = arith.constant 14 : index
    %c0_159 = arith.constant 0 : index
    %c0_160 = arith.constant 0 : index
    %158 = vector.load %arg1[%c14, %c0_159, %c0_160] : memref<16x4x8xbf16, #tpu.memory_space<vmem>>, vector<1x4x8xbf16>
    %159 = vector.shape_cast %158 : vector<1x4x8xbf16> to vector<4x8xbf16>
    %cst_161 = arith.constant dense<0.000000e+00> : vector<4x4xf32>
    %160 = tpu.matmul %159, %1, %cst_161 {dimension_numbers = #tpu.dot_dimension_numbers<[1], [0], [0], [1], [0, 0, 1, 1], [], []>} : vector<4x8xbf16>, vector<8x4xbf16>, vector<4x4xf32> -> vector<4x4xf32>
    %c14_162 = arith.constant 14 : index
    %c0_163 = arith.constant 0 : index
    %c0_164 = arith.constant 0 : index
    %161 = vector.load %arg2[%c14_162, %c0_163, %c0_164] : memref<16x4x8xbf16, #tpu.memory_space<vmem>>, vector<1x4x8xbf16>
    %162 = vector.shape_cast %161 : vector<1x4x8xbf16> to vector<4x8xbf16>
    %cst_165 = arith.constant dense<0.000000e+00> : vector<4x4xf32>
    %163 = tpu.matmul %162, %4, %cst_165 {dimension_numbers = #tpu.dot_dimension_numbers<[1], [0], [0], [1], [0, 0, 1, 1], [], []>} : vector<4x8xbf16>, vector<8x4xbf16>, vector<4x4xf32> -> vector<4x4xf32>
    %164 = arith.addf %160, %163 : vector<4x4xf32>
    %c14_166 = arith.constant 14 : index
    %c0_167 = arith.constant 0 : index
    %c0_168 = arith.constant 0 : index
    %165 = vector.load %arg3[%c14_166, %c0_167, %c0_168] : memref<16x4x16xf32, #tpu.memory_space<vmem>>, vector<1x4x16xf32>
    %166 = vector.shape_cast %165 : vector<1x4x16xf32> to vector<4x16xf32>
    %cst_169 = arith.constant dense<0.000000e+00> : vector<4x16xf32>
    %167 = tpu.matmul %164, %166, %cst_169 {dimension_numbers = #tpu.dot_dimension_numbers<[1], [0], [0], [1], [0, 0, 1, 1], [], []>} : vector<4x4xf32>, vector<4x16xf32>, vector<4x16xf32> -> vector<4x16xf32>
    %168 = arith.addf %157, %167 : vector<4x16xf32>
    %c15 = arith.constant 15 : index
    %c0_170 = arith.constant 0 : index
    %c0_171 = arith.constant 0 : index
    %169 = vector.load %arg1[%c15, %c0_170, %c0_171] : memref<16x4x8xbf16, #tpu.memory_space<vmem>>, vector<1x4x8xbf16>
    %170 = vector.shape_cast %169 : vector<1x4x8xbf16> to vector<4x8xbf16>
    %cst_172 = arith.constant dense<0.000000e+00> : vector<4x4xf32>
    %171 = tpu.matmul %170, %1, %cst_172 {dimension_numbers = #tpu.dot_dimension_numbers<[1], [0], [0], [1], [0, 0, 1, 1], [], []>} : vector<4x8xbf16>, vector<8x4xbf16>, vector<4x4xf32> -> vector<4x4xf32>
    %c15_173 = arith.constant 15 : index
    %c0_174 = arith.constant 0 : index
    %c0_175 = arith.constant 0 : index
    %172 = vector.load %arg2[%c15_173, %c0_174, %c0_175] : memref<16x4x8xbf16, #tpu.memory_space<vmem>>, vector<1x4x8xbf16>
    %173 = vector.shape_cast %172 : vector<1x4x8xbf16> to vector<4x8xbf16>
    %cst_176 = arith.constant dense<0.000000e+00> : vector<4x4xf32>
    %174 = tpu.matmul %173, %4, %cst_176 {dimension_numbers = #tpu.dot_dimension_numbers<[1], [0], [0], [1], [0, 0, 1, 1], [], []>} : vector<4x8xbf16>, vector<8x4xbf16>, vector<4x4xf32> -> vector<4x4xf32>
    %175 = arith.addf %171, %174 : vector<4x4xf32>
    %c15_177 = arith.constant 15 : index
    %c0_178 = arith.constant 0 : index
    %c0_179 = arith.constant 0 : index
    %176 = vector.load %arg3[%c15_177, %c0_178, %c0_179] : memref<16x4x16xf32, #tpu.memory_space<vmem>>, vector<1x4x16xf32>
    %177 = vector.shape_cast %176 : vector<1x4x16xf32> to vector<4x16xf32>
    %cst_180 = arith.constant dense<0.000000e+00> : vector<4x16xf32>
    %178 = tpu.matmul %175, %177, %cst_180 {dimension_numbers = #tpu.dot_dimension_numbers<[1], [0], [0], [1], [0, 0, 1, 1], [], []>} : vector<4x4xf32>, vector<4x16xf32>, vector<4x16xf32> -> vector<4x16xf32>
    %179 = arith.addf %168, %178 : vector<4x16xf32>
    %cst_181 = arith.constant dense<0.000000e+00> : vector<4xf32>
    %180 = vector.multi_reduction <add>, %179, %cst_181 [1] : vector<4x16xf32> to vector<4xf32>
    %181 = vector.shape_cast %180 : vector<4xf32> to vector<4x1xf32>
    %c1_182 = arith.constant 1 : index
    %c0_183 = arith.constant 0 : index
    %c0_184 = arith.constant 0 : index
    %182 = vector.load %arg4[%c1_182, %c0_183, %c0_184] : memref<2x8x4xbf16, #tpu.memory_space<vmem>>, vector<1x8x4xbf16>
    %183 = vector.shape_cast %182 : vector<1x8x4xbf16> to vector<8x4xbf16>
    %c1_185 = arith.constant 1 : index
    %c0_186 = arith.constant 0 : index
    %c0_187 = arith.constant 0 : index
    %184 = vector.load %arg5[%c1_185, %c0_186, %c0_187] : memref<2x8x4xf32, #tpu.memory_space<vmem>>, vector<1x8x4xf32>
    %185 = vector.shape_cast %184 : vector<1x8x4xf32> to vector<8x4xf32>
    %186 = arith.truncf %185 : vector<8x4xf32> to vector<8x4xbf16>
    %c0_188 = arith.constant 0 : index
    %c0_189 = arith.constant 0 : index
    %c0_190 = arith.constant 0 : index
    %187 = vector.load %arg1[%c0_188, %c0_189, %c0_190] : memref<16x4x8xbf16, #tpu.memory_space<vmem>>, vector<1x4x8xbf16>
    %188 = vector.shape_cast %187 : vector<1x4x8xbf16> to vector<4x8xbf16>
    %cst_191 = arith.constant dense<0.000000e+00> : vector<4x4xf32>
    %189 = tpu.matmul %188, %183, %cst_191 {dimension_numbers = #tpu.dot_dimension_numbers<[1], [0], [0], [1], [0, 0, 1, 1], [], []>} : vector<4x8xbf16>, vector<8x4xbf16>, vector<4x4xf32> -> vector<4x4xf32>
    %c0_192 = arith.constant 0 : index
    %c0_193 = arith.constant 0 : index
    %c0_194 = arith.constant 0 : index
    %190 = vector.load %arg2[%c0_192, %c0_193, %c0_194] : memref<16x4x8xbf16, #tpu.memory_space<vmem>>, vector<1x4x8xbf16>
    %191 = vector.shape_cast %190 : vector<1x4x8xbf16> to vector<4x8xbf16>
    %cst_195 = arith.constant dense<0.000000e+00> : vector<4x4xf32>
    %192 = tpu.matmul %191, %186, %cst_195 {dimension_numbers = #tpu.dot_dimension_numbers<[1], [0], [0], [1], [0, 0, 1, 1], [], []>} : vector<4x8xbf16>, vector<8x4xbf16>, vector<4x4xf32> -> vector<4x4xf32>
    %193 = arith.addf %189, %192 : vector<4x4xf32>
    %c0_196 = arith.constant 0 : index
    %c0_197 = arith.constant 0 : index
    %c0_198 = arith.constant 0 : index
    %194 = vector.load %arg3[%c0_196, %c0_197, %c0_198] : memref<16x4x16xf32, #tpu.memory_space<vmem>>, vector<1x4x16xf32>
    %195 = vector.shape_cast %194 : vector<1x4x16xf32> to vector<4x16xf32>
    %cst_199 = arith.constant dense<0.000000e+00> : vector<4x16xf32>
    %196 = tpu.matmul %193, %195, %cst_199 {dimension_numbers = #tpu.dot_dimension_numbers<[1], [0], [0], [1], [0, 0, 1, 1], [], []>} : vector<4x4xf32>, vector<4x16xf32>, vector<4x16xf32> -> vector<4x16xf32>
    %c1_200 = arith.constant 1 : index
    %c0_201 = arith.constant 0 : index
    %c0_202 = arith.constant 0 : index
    %197 = vector.load %arg1[%c1_200, %c0_201, %c0_202] : memref<16x4x8xbf16, #tpu.memory_space<vmem>>, vector<1x4x8xbf16>
    %198 = vector.shape_cast %197 : vector<1x4x8xbf16> to vector<4x8xbf16>
    %cst_203 = arith.constant dense<0.000000e+00> : vector<4x4xf32>
    %199 = tpu.matmul %198, %183, %cst_203 {dimension_numbers = #tpu.dot_dimension_numbers<[1], [0], [0], [1], [0, 0, 1, 1], [], []>} : vector<4x8xbf16>, vector<8x4xbf16>, vector<4x4xf32> -> vector<4x4xf32>
    %c1_204 = arith.constant 1 : index
    %c0_205 = arith.constant 0 : index
    %c0_206 = arith.constant 0 : index
    %200 = vector.load %arg2[%c1_204, %c0_205, %c0_206] : memref<16x4x8xbf16, #tpu.memory_space<vmem>>, vector<1x4x8xbf16>
    %201 = vector.shape_cast %200 : vector<1x4x8xbf16> to vector<4x8xbf16>
    %cst_207 = arith.constant dense<0.000000e+00> : vector<4x4xf32>
    %202 = tpu.matmul %201, %186, %cst_207 {dimension_numbers = #tpu.dot_dimension_numbers<[1], [0], [0], [1], [0, 0, 1, 1], [], []>} : vector<4x8xbf16>, vector<8x4xbf16>, vector<4x4xf32> -> vector<4x4xf32>
    %203 = arith.addf %199, %202 : vector<4x4xf32>
    %c1_208 = arith.constant 1 : index
    %c0_209 = arith.constant 0 : index
    %c0_210 = arith.constant 0 : index
    %204 = vector.load %arg3[%c1_208, %c0_209, %c0_210] : memref<16x4x16xf32, #tpu.memory_space<vmem>>, vector<1x4x16xf32>
    %205 = vector.shape_cast %204 : vector<1x4x16xf32> to vector<4x16xf32>
    %cst_211 = arith.constant dense<0.000000e+00> : vector<4x16xf32>
    %206 = tpu.matmul %203, %205, %cst_211 {dimension_numbers = #tpu.dot_dimension_numbers<[1], [0], [0], [1], [0, 0, 1, 1], [], []>} : vector<4x4xf32>, vector<4x16xf32>, vector<4x16xf32> -> vector<4x16xf32>
    %207 = arith.addf %196, %206 : vector<4x16xf32>
    %c2_212 = arith.constant 2 : index
    %c0_213 = arith.constant 0 : index
    %c0_214 = arith.constant 0 : index
    %208 = vector.load %arg1[%c2_212, %c0_213, %c0_214] : memref<16x4x8xbf16, #tpu.memory_space<vmem>>, vector<1x4x8xbf16>
    %209 = vector.shape_cast %208 : vector<1x4x8xbf16> to vector<4x8xbf16>
    %cst_215 = arith.constant dense<0.000000e+00> : vector<4x4xf32>
    %210 = tpu.matmul %209, %183, %cst_215 {dimension_numbers = #tpu.dot_dimension_numbers<[1], [0], [0], [1], [0, 0, 1, 1], [], []>} : vector<4x8xbf16>, vector<8x4xbf16>, vector<4x4xf32> -> vector<4x4xf32>
    %c2_216 = arith.constant 2 : index
    %c0_217 = arith.constant 0 : index
    %c0_218 = arith.constant 0 : index
    %211 = vector.load %arg2[%c2_216, %c0_217, %c0_218] : memref<16x4x8xbf16, #tpu.memory_space<vmem>>, vector<1x4x8xbf16>
    %212 = vector.shape_cast %211 : vector<1x4x8xbf16> to vector<4x8xbf16>
    %cst_219 = arith.constant dense<0.000000e+00> : vector<4x4xf32>
    %213 = tpu.matmul %212, %186, %cst_219 {dimension_numbers = #tpu.dot_dimension_numbers<[1], [0], [0], [1], [0, 0, 1, 1], [], []>} : vector<4x8xbf16>, vector<8x4xbf16>, vector<4x4xf32> -> vector<4x4xf32>
    %214 = arith.addf %210, %213 : vector<4x4xf32>
    %c2_220 = arith.constant 2 : index
    %c0_221 = arith.constant 0 : index
    %c0_222 = arith.constant 0 : index
    %215 = vector.load %arg3[%c2_220, %c0_221, %c0_222] : memref<16x4x16xf32, #tpu.memory_space<vmem>>, vector<1x4x16xf32>
    %216 = vector.shape_cast %215 : vector<1x4x16xf32> to vector<4x16xf32>
    %cst_223 = arith.constant dense<0.000000e+00> : vector<4x16xf32>
    %217 = tpu.matmul %214, %216, %cst_223 {dimension_numbers = #tpu.dot_dimension_numbers<[1], [0], [0], [1], [0, 0, 1, 1], [], []>} : vector<4x4xf32>, vector<4x16xf32>, vector<4x16xf32> -> vector<4x16xf32>
    %218 = arith.addf %207, %217 : vector<4x16xf32>
    %c3_224 = arith.constant 3 : index
    %c0_225 = arith.constant 0 : index
    %c0_226 = arith.constant 0 : index
    %219 = vector.load %arg1[%c3_224, %c0_225, %c0_226] : memref<16x4x8xbf16, #tpu.memory_space<vmem>>, vector<1x4x8xbf16>
    %220 = vector.shape_cast %219 : vector<1x4x8xbf16> to vector<4x8xbf16>
    %cst_227 = arith.constant dense<0.000000e+00> : vector<4x4xf32>
    %221 = tpu.matmul %220, %183, %cst_227 {dimension_numbers = #tpu.dot_dimension_numbers<[1], [0], [0], [1], [0, 0, 1, 1], [], []>} : vector<4x8xbf16>, vector<8x4xbf16>, vector<4x4xf32> -> vector<4x4xf32>
    %c3_228 = arith.constant 3 : index
    %c0_229 = arith.constant 0 : index
    %c0_230 = arith.constant 0 : index
    %222 = vector.load %arg2[%c3_228, %c0_229, %c0_230] : memref<16x4x8xbf16, #tpu.memory_space<vmem>>, vector<1x4x8xbf16>
    %223 = vector.shape_cast %222 : vector<1x4x8xbf16> to vector<4x8xbf16>
    %cst_231 = arith.constant dense<0.000000e+00> : vector<4x4xf32>
    %224 = tpu.matmul %223, %186, %cst_231 {dimension_numbers = #tpu.dot_dimension_numbers<[1], [0], [0], [1], [0, 0, 1, 1], [], []>} : vector<4x8xbf16>, vector<8x4xbf16>, vector<4x4xf32> -> vector<4x4xf32>
    %225 = arith.addf %221, %224 : vector<4x4xf32>
    %c3_232 = arith.constant 3 : index
    %c0_233 = arith.constant 0 : index
    %c0_234 = arith.constant 0 : index
    %226 = vector.load %arg3[%c3_232, %c0_233, %c0_234] : memref<16x4x16xf32, #tpu.memory_space<vmem>>, vector<1x4x16xf32>
    %227 = vector.shape_cast %226 : vector<1x4x16xf32> to vector<4x16xf32>
    %cst_235 = arith.constant dense<0.000000e+00> : vector<4x16xf32>
    %228 = tpu.matmul %225, %227, %cst_235 {dimension_numbers = #tpu.dot_dimension_numbers<[1], [0], [0], [1], [0, 0, 1, 1], [], []>} : vector<4x4xf32>, vector<4x16xf32>, vector<4x16xf32> -> vector<4x16xf32>
    %229 = arith.addf %218, %228 : vector<4x16xf32>
    %c4_236 = arith.constant 4 : index
    %c0_237 = arith.constant 0 : index
    %c0_238 = arith.constant 0 : index
    %230 = vector.load %arg1[%c4_236, %c0_237, %c0_238] : memref<16x4x8xbf16, #tpu.memory_space<vmem>>, vector<1x4x8xbf16>
    %231 = vector.shape_cast %230 : vector<1x4x8xbf16> to vector<4x8xbf16>
    %cst_239 = arith.constant dense<0.000000e+00> : vector<4x4xf32>
    %232 = tpu.matmul %231, %183, %cst_239 {dimension_numbers = #tpu.dot_dimension_numbers<[1], [0], [0], [1], [0, 0, 1, 1], [], []>} : vector<4x8xbf16>, vector<8x4xbf16>, vector<4x4xf32> -> vector<4x4xf32>
    %c4_240 = arith.constant 4 : index
    %c0_241 = arith.constant 0 : index
    %c0_242 = arith.constant 0 : index
    %233 = vector.load %arg2[%c4_240, %c0_241, %c0_242] : memref<16x4x8xbf16, #tpu.memory_space<vmem>>, vector<1x4x8xbf16>
    %234 = vector.shape_cast %233 : vector<1x4x8xbf16> to vector<4x8xbf16>
    %cst_243 = arith.constant dense<0.000000e+00> : vector<4x4xf32>
    %235 = tpu.matmul %234, %186, %cst_243 {dimension_numbers = #tpu.dot_dimension_numbers<[1], [0], [0], [1], [0, 0, 1, 1], [], []>} : vector<4x8xbf16>, vector<8x4xbf16>, vector<4x4xf32> -> vector<4x4xf32>
    %236 = arith.addf %232, %235 : vector<4x4xf32>
    %c4_244 = arith.constant 4 : index
    %c0_245 = arith.constant 0 : index
    %c0_246 = arith.constant 0 : index
    %237 = vector.load %arg3[%c4_244, %c0_245, %c0_246] : memref<16x4x16xf32, #tpu.memory_space<vmem>>, vector<1x4x16xf32>
    %238 = vector.shape_cast %237 : vector<1x4x16xf32> to vector<4x16xf32>
    %cst_247 = arith.constant dense<0.000000e+00> : vector<4x16xf32>
    %239 = tpu.matmul %236, %238, %cst_247 {dimension_numbers = #tpu.dot_dimension_numbers<[1], [0], [0], [1], [0, 0, 1, 1], [], []>} : vector<4x4xf32>, vector<4x16xf32>, vector<4x16xf32> -> vector<4x16xf32>
    %240 = arith.addf %229, %239 : vector<4x16xf32>
    %c5_248 = arith.constant 5 : index
    %c0_249 = arith.constant 0 : index
    %c0_250 = arith.constant 0 : index
    %241 = vector.load %arg1[%c5_248, %c0_249, %c0_250] : memref<16x4x8xbf16, #tpu.memory_space<vmem>>, vector<1x4x8xbf16>
    %242 = vector.shape_cast %241 : vector<1x4x8xbf16> to vector<4x8xbf16>
    %cst_251 = arith.constant dense<0.000000e+00> : vector<4x4xf32>
    %243 = tpu.matmul %242, %183, %cst_251 {dimension_numbers = #tpu.dot_dimension_numbers<[1], [0], [0], [1], [0, 0, 1, 1], [], []>} : vector<4x8xbf16>, vector<8x4xbf16>, vector<4x4xf32> -> vector<4x4xf32>
    %c5_252 = arith.constant 5 : index
    %c0_253 = arith.constant 0 : index
    %c0_254 = arith.constant 0 : index
    %244 = vector.load %arg2[%c5_252, %c0_253, %c0_254] : memref<16x4x8xbf16, #tpu.memory_space<vmem>>, vector<1x4x8xbf16>
    %245 = vector.shape_cast %244 : vector<1x4x8xbf16> to vector<4x8xbf16>
    %cst_255 = arith.constant dense<0.000000e+00> : vector<4x4xf32>
    %246 = tpu.matmul %245, %186, %cst_255 {dimension_numbers = #tpu.dot_dimension_numbers<[1], [0], [0], [1], [0, 0, 1, 1], [], []>} : vector<4x8xbf16>, vector<8x4xbf16>, vector<4x4xf32> -> vector<4x4xf32>
    %247 = arith.addf %243, %246 : vector<4x4xf32>
    %c5_256 = arith.constant 5 : index
    %c0_257 = arith.constant 0 : index
    %c0_258 = arith.constant 0 : index
    %248 = vector.load %arg3[%c5_256, %c0_257, %c0_258] : memref<16x4x16xf32, #tpu.memory_space<vmem>>, vector<1x4x16xf32>
    %249 = vector.shape_cast %248 : vector<1x4x16xf32> to vector<4x16xf32>
    %cst_259 = arith.constant dense<0.000000e+00> : vector<4x16xf32>
    %250 = tpu.matmul %247, %249, %cst_259 {dimension_numbers = #tpu.dot_dimension_numbers<[1], [0], [0], [1], [0, 0, 1, 1], [], []>} : vector<4x4xf32>, vector<4x16xf32>, vector<4x16xf32> -> vector<4x16xf32>
    %251 = arith.addf %240, %250 : vector<4x16xf32>
    %c6_260 = arith.constant 6 : index
    %c0_261 = arith.constant 0 : index
    %c0_262 = arith.constant 0 : index
    %252 = vector.load %arg1[%c6_260, %c0_261, %c0_262] : memref<16x4x8xbf16, #tpu.memory_space<vmem>>, vector<1x4x8xbf16>
    %253 = vector.shape_cast %252 : vector<1x4x8xbf16> to vector<4x8xbf16>
    %cst_263 = arith.constant dense<0.000000e+00> : vector<4x4xf32>
    %254 = tpu.matmul %253, %183, %cst_263 {dimension_numbers = #tpu.dot_dimension_numbers<[1], [0], [0], [1], [0, 0, 1, 1], [], []>} : vector<4x8xbf16>, vector<8x4xbf16>, vector<4x4xf32> -> vector<4x4xf32>
    %c6_264 = arith.constant 6 : index
    %c0_265 = arith.constant 0 : index
    %c0_266 = arith.constant 0 : index
    %255 = vector.load %arg2[%c6_264, %c0_265, %c0_266] : memref<16x4x8xbf16, #tpu.memory_space<vmem>>, vector<1x4x8xbf16>
    %256 = vector.shape_cast %255 : vector<1x4x8xbf16> to vector<4x8xbf16>
    %cst_267 = arith.constant dense<0.000000e+00> : vector<4x4xf32>
    %257 = tpu.matmul %256, %186, %cst_267 {dimension_numbers = #tpu.dot_dimension_numbers<[1], [0], [0], [1], [0, 0, 1, 1], [], []>} : vector<4x8xbf16>, vector<8x4xbf16>, vector<4x4xf32> -> vector<4x4xf32>
    %258 = arith.addf %254, %257 : vector<4x4xf32>
    %c6_268 = arith.constant 6 : index
    %c0_269 = arith.constant 0 : index
    %c0_270 = arith.constant 0 : index
    %259 = vector.load %arg3[%c6_268, %c0_269, %c0_270] : memref<16x4x16xf32, #tpu.memory_space<vmem>>, vector<1x4x16xf32>
    %260 = vector.shape_cast %259 : vector<1x4x16xf32> to vector<4x16xf32>
    %cst_271 = arith.constant dense<0.000000e+00> : vector<4x16xf32>
    %261 = tpu.matmul %258, %260, %cst_271 {dimension_numbers = #tpu.dot_dimension_numbers<[1], [0], [0], [1], [0, 0, 1, 1], [], []>} : vector<4x4xf32>, vector<4x16xf32>, vector<4x16xf32> -> vector<4x16xf32>
    %262 = arith.addf %251, %261 : vector<4x16xf32>
    %c7_272 = arith.constant 7 : index
    %c0_273 = arith.constant 0 : index
    %c0_274 = arith.constant 0 : index
    %263 = vector.load %arg1[%c7_272, %c0_273, %c0_274] : memref<16x4x8xbf16, #tpu.memory_space<vmem>>, vector<1x4x8xbf16>
    %264 = vector.shape_cast %263 : vector<1x4x8xbf16> to vector<4x8xbf16>
    %cst_275 = arith.constant dense<0.000000e+00> : vector<4x4xf32>
    %265 = tpu.matmul %264, %183, %cst_275 {dimension_numbers = #tpu.dot_dimension_numbers<[1], [0], [0], [1], [0, 0, 1, 1], [], []>} : vector<4x8xbf16>, vector<8x4xbf16>, vector<4x4xf32> -> vector<4x4xf32>
    %c7_276 = arith.constant 7 : index
    %c0_277 = arith.constant 0 : index
    %c0_278 = arith.constant 0 : index
    %266 = vector.load %arg2[%c7_276, %c0_277, %c0_278] : memref<16x4x8xbf16, #tpu.memory_space<vmem>>, vector<1x4x8xbf16>
    %267 = vector.shape_cast %266 : vector<1x4x8xbf16> to vector<4x8xbf16>
    %cst_279 = arith.constant dense<0.000000e+00> : vector<4x4xf32>
    %268 = tpu.matmul %267, %186, %cst_279 {dimension_numbers = #tpu.dot_dimension_numbers<[1], [0], [0], [1], [0, 0, 1, 1], [], []>} : vector<4x8xbf16>, vector<8x4xbf16>, vector<4x4xf32> -> vector<4x4xf32>
    %269 = arith.addf %265, %268 : vector<4x4xf32>
    %c7_280 = arith.constant 7 : index
    %c0_281 = arith.constant 0 : index
    %c0_282 = arith.constant 0 : index
    %270 = vector.load %arg3[%c7_280, %c0_281, %c0_282] : memref<16x4x16xf32, #tpu.memory_space<vmem>>, vector<1x4x16xf32>
    %271 = vector.shape_cast %270 : vector<1x4x16xf32> to vector<4x16xf32>
    %cst_283 = arith.constant dense<0.000000e+00> : vector<4x16xf32>
    %272 = tpu.matmul %269, %271, %cst_283 {dimension_numbers = #tpu.dot_dimension_numbers<[1], [0], [0], [1], [0, 0, 1, 1], [], []>} : vector<4x4xf32>, vector<4x16xf32>, vector<4x16xf32> -> vector<4x16xf32>
    %273 = arith.addf %262, %272 : vector<4x16xf32>
    %c8_284 = arith.constant 8 : index
    %c0_285 = arith.constant 0 : index
    %c0_286 = arith.constant 0 : index
    %274 = vector.load %arg1[%c8_284, %c0_285, %c0_286] : memref<16x4x8xbf16, #tpu.memory_space<vmem>>, vector<1x4x8xbf16>
    %275 = vector.shape_cast %274 : vector<1x4x8xbf16> to vector<4x8xbf16>
    %cst_287 = arith.constant dense<0.000000e+00> : vector<4x4xf32>
    %276 = tpu.matmul %275, %183, %cst_287 {dimension_numbers = #tpu.dot_dimension_numbers<[1], [0], [0], [1], [0, 0, 1, 1], [], []>} : vector<4x8xbf16>, vector<8x4xbf16>, vector<4x4xf32> -> vector<4x4xf32>
    %c8_288 = arith.constant 8 : index
    %c0_289 = arith.constant 0 : index
    %c0_290 = arith.constant 0 : index
    %277 = vector.load %arg2[%c8_288, %c0_289, %c0_290] : memref<16x4x8xbf16, #tpu.memory_space<vmem>>, vector<1x4x8xbf16>
    %278 = vector.shape_cast %277 : vector<1x4x8xbf16> to vector<4x8xbf16>
    %cst_291 = arith.constant dense<0.000000e+00> : vector<4x4xf32>
    %279 = tpu.matmul %278, %186, %cst_291 {dimension_numbers = #tpu.dot_dimension_numbers<[1], [0], [0], [1], [0, 0, 1, 1], [], []>} : vector<4x8xbf16>, vector<8x4xbf16>, vector<4x4xf32> -> vector<4x4xf32>
    %280 = arith.addf %276, %279 : vector<4x4xf32>
    %c8_292 = arith.constant 8 : index
    %c0_293 = arith.constant 0 : index
    %c0_294 = arith.constant 0 : index
    %281 = vector.load %arg3[%c8_292, %c0_293, %c0_294] : memref<16x4x16xf32, #tpu.memory_space<vmem>>, vector<1x4x16xf32>
    %282 = vector.shape_cast %281 : vector<1x4x16xf32> to vector<4x16xf32>
    %cst_295 = arith.constant dense<0.000000e+00> : vector<4x16xf32>
    %283 = tpu.matmul %280, %282, %cst_295 {dimension_numbers = #tpu.dot_dimension_numbers<[1], [0], [0], [1], [0, 0, 1, 1], [], []>} : vector<4x4xf32>, vector<4x16xf32>, vector<4x16xf32> -> vector<4x16xf32>
    %284 = arith.addf %273, %283 : vector<4x16xf32>
    %c9_296 = arith.constant 9 : index
    %c0_297 = arith.constant 0 : index
    %c0_298 = arith.constant 0 : index
    %285 = vector.load %arg1[%c9_296, %c0_297, %c0_298] : memref<16x4x8xbf16, #tpu.memory_space<vmem>>, vector<1x4x8xbf16>
    %286 = vector.shape_cast %285 : vector<1x4x8xbf16> to vector<4x8xbf16>
    %cst_299 = arith.constant dense<0.000000e+00> : vector<4x4xf32>
    %287 = tpu.matmul %286, %183, %cst_299 {dimension_numbers = #tpu.dot_dimension_numbers<[1], [0], [0], [1], [0, 0, 1, 1], [], []>} : vector<4x8xbf16>, vector<8x4xbf16>, vector<4x4xf32> -> vector<4x4xf32>
    %c9_300 = arith.constant 9 : index
    %c0_301 = arith.constant 0 : index
    %c0_302 = arith.constant 0 : index
    %288 = vector.load %arg2[%c9_300, %c0_301, %c0_302] : memref<16x4x8xbf16, #tpu.memory_space<vmem>>, vector<1x4x8xbf16>
    %289 = vector.shape_cast %288 : vector<1x4x8xbf16> to vector<4x8xbf16>
    %cst_303 = arith.constant dense<0.000000e+00> : vector<4x4xf32>
    %290 = tpu.matmul %289, %186, %cst_303 {dimension_numbers = #tpu.dot_dimension_numbers<[1], [0], [0], [1], [0, 0, 1, 1], [], []>} : vector<4x8xbf16>, vector<8x4xbf16>, vector<4x4xf32> -> vector<4x4xf32>
    %291 = arith.addf %287, %290 : vector<4x4xf32>
    %c9_304 = arith.constant 9 : index
    %c0_305 = arith.constant 0 : index
    %c0_306 = arith.constant 0 : index
    %292 = vector.load %arg3[%c9_304, %c0_305, %c0_306] : memref<16x4x16xf32, #tpu.memory_space<vmem>>, vector<1x4x16xf32>
    %293 = vector.shape_cast %292 : vector<1x4x16xf32> to vector<4x16xf32>
    %cst_307 = arith.constant dense<0.000000e+00> : vector<4x16xf32>
    %294 = tpu.matmul %291, %293, %cst_307 {dimension_numbers = #tpu.dot_dimension_numbers<[1], [0], [0], [1], [0, 0, 1, 1], [], []>} : vector<4x4xf32>, vector<4x16xf32>, vector<4x16xf32> -> vector<4x16xf32>
    %295 = arith.addf %284, %294 : vector<4x16xf32>
    %c10_308 = arith.constant 10 : index
    %c0_309 = arith.constant 0 : index
    %c0_310 = arith.constant 0 : index
    %296 = vector.load %arg1[%c10_308, %c0_309, %c0_310] : memref<16x4x8xbf16, #tpu.memory_space<vmem>>, vector<1x4x8xbf16>
    %297 = vector.shape_cast %296 : vector<1x4x8xbf16> to vector<4x8xbf16>
    %cst_311 = arith.constant dense<0.000000e+00> : vector<4x4xf32>
    %298 = tpu.matmul %297, %183, %cst_311 {dimension_numbers = #tpu.dot_dimension_numbers<[1], [0], [0], [1], [0, 0, 1, 1], [], []>} : vector<4x8xbf16>, vector<8x4xbf16>, vector<4x4xf32> -> vector<4x4xf32>
    %c10_312 = arith.constant 10 : index
    %c0_313 = arith.constant 0 : index
    %c0_314 = arith.constant 0 : index
    %299 = vector.load %arg2[%c10_312, %c0_313, %c0_314] : memref<16x4x8xbf16, #tpu.memory_space<vmem>>, vector<1x4x8xbf16>
    %300 = vector.shape_cast %299 : vector<1x4x8xbf16> to vector<4x8xbf16>
    %cst_315 = arith.constant dense<0.000000e+00> : vector<4x4xf32>
    %301 = tpu.matmul %300, %186, %cst_315 {dimension_numbers = #tpu.dot_dimension_numbers<[1], [0], [0], [1], [0, 0, 1, 1], [], []>} : vector<4x8xbf16>, vector<8x4xbf16>, vector<4x4xf32> -> vector<4x4xf32>
    %302 = arith.addf %298, %301 : vector<4x4xf32>
    %c10_316 = arith.constant 10 : index
    %c0_317 = arith.constant 0 : index
    %c0_318 = arith.constant 0 : index
    %303 = vector.load %arg3[%c10_316, %c0_317, %c0_318] : memref<16x4x16xf32, #tpu.memory_space<vmem>>, vector<1x4x16xf32>
    %304 = vector.shape_cast %303 : vector<1x4x16xf32> to vector<4x16xf32>
    %cst_319 = arith.constant dense<0.000000e+00> : vector<4x16xf32>
    %305 = tpu.matmul %302, %304, %cst_319 {dimension_numbers = #tpu.dot_dimension_numbers<[1], [0], [0], [1], [0, 0, 1, 1], [], []>} : vector<4x4xf32>, vector<4x16xf32>, vector<4x16xf32> -> vector<4x16xf32>
    %306 = arith.addf %295, %305 : vector<4x16xf32>
    %c11_320 = arith.constant 11 : index
    %c0_321 = arith.constant 0 : index
    %c0_322 = arith.constant 0 : index
    %307 = vector.load %arg1[%c11_320, %c0_321, %c0_322] : memref<16x4x8xbf16, #tpu.memory_space<vmem>>, vector<1x4x8xbf16>
    %308 = vector.shape_cast %307 : vector<1x4x8xbf16> to vector<4x8xbf16>
    %cst_323 = arith.constant dense<0.000000e+00> : vector<4x4xf32>
    %309 = tpu.matmul %308, %183, %cst_323 {dimension_numbers = #tpu.dot_dimension_numbers<[1], [0], [0], [1], [0, 0, 1, 1], [], []>} : vector<4x8xbf16>, vector<8x4xbf16>, vector<4x4xf32> -> vector<4x4xf32>
    %c11_324 = arith.constant 11 : index
    %c0_325 = arith.constant 0 : index
    %c0_326 = arith.constant 0 : index
    %310 = vector.load %arg2[%c11_324, %c0_325, %c0_326] : memref<16x4x8xbf16, #tpu.memory_space<vmem>>, vector<1x4x8xbf16>
    %311 = vector.shape_cast %310 : vector<1x4x8xbf16> to vector<4x8xbf16>
    %cst_327 = arith.constant dense<0.000000e+00> : vector<4x4xf32>
    %312 = tpu.matmul %311, %186, %cst_327 {dimension_numbers = #tpu.dot_dimension_numbers<[1], [0], [0], [1], [0, 0, 1, 1], [], []>} : vector<4x8xbf16>, vector<8x4xbf16>, vector<4x4xf32> -> vector<4x4xf32>
    %313 = arith.addf %309, %312 : vector<4x4xf32>
    %c11_328 = arith.constant 11 : index
    %c0_329 = arith.constant 0 : index
    %c0_330 = arith.constant 0 : index
    %314 = vector.load %arg3[%c11_328, %c0_329, %c0_330] : memref<16x4x16xf32, #tpu.memory_space<vmem>>, vector<1x4x16xf32>
    %315 = vector.shape_cast %314 : vector<1x4x16xf32> to vector<4x16xf32>
    %cst_331 = arith.constant dense<0.000000e+00> : vector<4x16xf32>
    %316 = tpu.matmul %313, %315, %cst_331 {dimension_numbers = #tpu.dot_dimension_numbers<[1], [0], [0], [1], [0, 0, 1, 1], [], []>} : vector<4x4xf32>, vector<4x16xf32>, vector<4x16xf32> -> vector<4x16xf32>
    %317 = arith.addf %306, %316 : vector<4x16xf32>
    %c12_332 = arith.constant 12 : index
    %c0_333 = arith.constant 0 : index
    %c0_334 = arith.constant 0 : index
    %318 = vector.load %arg1[%c12_332, %c0_333, %c0_334] : memref<16x4x8xbf16, #tpu.memory_space<vmem>>, vector<1x4x8xbf16>
    %319 = vector.shape_cast %318 : vector<1x4x8xbf16> to vector<4x8xbf16>
    %cst_335 = arith.constant dense<0.000000e+00> : vector<4x4xf32>
    %320 = tpu.matmul %319, %183, %cst_335 {dimension_numbers = #tpu.dot_dimension_numbers<[1], [0], [0], [1], [0, 0, 1, 1], [], []>} : vector<4x8xbf16>, vector<8x4xbf16>, vector<4x4xf32> -> vector<4x4xf32>
    %c12_336 = arith.constant 12 : index
    %c0_337 = arith.constant 0 : index
    %c0_338 = arith.constant 0 : index
    %321 = vector.load %arg2[%c12_336, %c0_337, %c0_338] : memref<16x4x8xbf16, #tpu.memory_space<vmem>>, vector<1x4x8xbf16>
    %322 = vector.shape_cast %321 : vector<1x4x8xbf16> to vector<4x8xbf16>
    %cst_339 = arith.constant dense<0.000000e+00> : vector<4x4xf32>
    %323 = tpu.matmul %322, %186, %cst_339 {dimension_numbers = #tpu.dot_dimension_numbers<[1], [0], [0], [1], [0, 0, 1, 1], [], []>} : vector<4x8xbf16>, vector<8x4xbf16>, vector<4x4xf32> -> vector<4x4xf32>
    %324 = arith.addf %320, %323 : vector<4x4xf32>
    %c12_340 = arith.constant 12 : index
    %c0_341 = arith.constant 0 : index
    %c0_342 = arith.constant 0 : index
    %325 = vector.load %arg3[%c12_340, %c0_341, %c0_342] : memref<16x4x16xf32, #tpu.memory_space<vmem>>, vector<1x4x16xf32>
    %326 = vector.shape_cast %325 : vector<1x4x16xf32> to vector<4x16xf32>
    %cst_343 = arith.constant dense<0.000000e+00> : vector<4x16xf32>
    %327 = tpu.matmul %324, %326, %cst_343 {dimension_numbers = #tpu.dot_dimension_numbers<[1], [0], [0], [1], [0, 0, 1, 1], [], []>} : vector<4x4xf32>, vector<4x16xf32>, vector<4x16xf32> -> vector<4x16xf32>
    %328 = arith.addf %317, %327 : vector<4x16xf32>
    %c13_344 = arith.constant 13 : index
    %c0_345 = arith.constant 0 : index
    %c0_346 = arith.constant 0 : index
    %329 = vector.load %arg1[%c13_344, %c0_345, %c0_346] : memref<16x4x8xbf16, #tpu.memory_space<vmem>>, vector<1x4x8xbf16>
    %330 = vector.shape_cast %329 : vector<1x4x8xbf16> to vector<4x8xbf16>
    %cst_347 = arith.constant dense<0.000000e+00> : vector<4x4xf32>
    %331 = tpu.matmul %330, %183, %cst_347 {dimension_numbers = #tpu.dot_dimension_numbers<[1], [0], [0], [1], [0, 0, 1, 1], [], []>} : vector<4x8xbf16>, vector<8x4xbf16>, vector<4x4xf32> -> vector<4x4xf32>
    %c13_348 = arith.constant 13 : index
    %c0_349 = arith.constant 0 : index
    %c0_350 = arith.constant 0 : index
    %332 = vector.load %arg2[%c13_348, %c0_349, %c0_350] : memref<16x4x8xbf16, #tpu.memory_space<vmem>>, vector<1x4x8xbf16>
    %333 = vector.shape_cast %332 : vector<1x4x8xbf16> to vector<4x8xbf16>
    %cst_351 = arith.constant dense<0.000000e+00> : vector<4x4xf32>
    %334 = tpu.matmul %333, %186, %cst_351 {dimension_numbers = #tpu.dot_dimension_numbers<[1], [0], [0], [1], [0, 0, 1, 1], [], []>} : vector<4x8xbf16>, vector<8x4xbf16>, vector<4x4xf32> -> vector<4x4xf32>
    %335 = arith.addf %331, %334 : vector<4x4xf32>
    %c13_352 = arith.constant 13 : index
    %c0_353 = arith.constant 0 : index
    %c0_354 = arith.constant 0 : index
    %336 = vector.load %arg3[%c13_352, %c0_353, %c0_354] : memref<16x4x16xf32, #tpu.memory_space<vmem>>, vector<1x4x16xf32>
    %337 = vector.shape_cast %336 : vector<1x4x16xf32> to vector<4x16xf32>
    %cst_355 = arith.constant dense<0.000000e+00> : vector<4x16xf32>
    %338 = tpu.matmul %335, %337, %cst_355 {dimension_numbers = #tpu.dot_dimension_numbers<[1], [0], [0], [1], [0, 0, 1, 1], [], []>} : vector<4x4xf32>, vector<4x16xf32>, vector<4x16xf32> -> vector<4x16xf32>
    %339 = arith.addf %328, %338 : vector<4x16xf32>
    %c14_356 = arith.constant 14 : index
    %c0_357 = arith.constant 0 : index
    %c0_358 = arith.constant 0 : index
    %340 = vector.load %arg1[%c14_356, %c0_357, %c0_358] : memref<16x4x8xbf16, #tpu.memory_space<vmem>>, vector<1x4x8xbf16>
    %341 = vector.shape_cast %340 : vector<1x4x8xbf16> to vector<4x8xbf16>
    %cst_359 = arith.constant dense<0.000000e+00> : vector<4x4xf32>
    %342 = tpu.matmul %341, %183, %cst_359 {dimension_numbers = #tpu.dot_dimension_numbers<[1], [0], [0], [1], [0, 0, 1, 1], [], []>} : vector<4x8xbf16>, vector<8x4xbf16>, vector<4x4xf32> -> vector<4x4xf32>
    %c14_360 = arith.constant 14 : index
    %c0_361 = arith.constant 0 : index
    %c0_362 = arith.constant 0 : index
    %343 = vector.load %arg2[%c14_360, %c0_361, %c0_362] : memref<16x4x8xbf16, #tpu.memory_space<vmem>>, vector<1x4x8xbf16>
    %344 = vector.shape_cast %343 : vector<1x4x8xbf16> to vector<4x8xbf16>
    %cst_363 = arith.constant dense<0.000000e+00> : vector<4x4xf32>
    %345 = tpu.matmul %344, %186, %cst_363 {dimension_numbers = #tpu.dot_dimension_numbers<[1], [0], [0], [1], [0, 0, 1, 1], [], []>} : vector<4x8xbf16>, vector<8x4xbf16>, vector<4x4xf32> -> vector<4x4xf32>
    %346 = arith.addf %342, %345 : vector<4x4xf32>
    %c14_364 = arith.constant 14 : index
    %c0_365 = arith.constant 0 : index
    %c0_366 = arith.constant 0 : index
    %347 = vector.load %arg3[%c14_364, %c0_365, %c0_366] : memref<16x4x16xf32, #tpu.memory_space<vmem>>, vector<1x4x16xf32>
    %348 = vector.shape_cast %347 : vector<1x4x16xf32> to vector<4x16xf32>
    %cst_367 = arith.constant dense<0.000000e+00> : vector<4x16xf32>
    %349 = tpu.matmul %346, %348, %cst_367 {dimension_numbers = #tpu.dot_dimension_numbers<[1], [0], [0], [1], [0, 0, 1, 1], [], []>} : vector<4x4xf32>, vector<4x16xf32>, vector<4x16xf32> -> vector<4x16xf32>
    %350 = arith.addf %339, %349 : vector<4x16xf32>
    %c15_368 = arith.constant 15 : index
    %c0_369 = arith.constant 0 : index
    %c0_370 = arith.constant 0 : index
    %351 = vector.load %arg1[%c15_368, %c0_369, %c0_370] : memref<16x4x8xbf16, #tpu.memory_space<vmem>>, vector<1x4x8xbf16>
    %352 = vector.shape_cast %351 : vector<1x4x8xbf16> to vector<4x8xbf16>
    %cst_371 = arith.constant dense<0.000000e+00> : vector<4x4xf32>
    %353 = tpu.matmul %352, %183, %cst_371 {dimension_numbers = #tpu.dot_dimension_numbers<[1], [0], [0], [1], [0, 0, 1, 1], [], []>} : vector<4x8xbf16>, vector<8x4xbf16>, vector<4x4xf32> -> vector<4x4xf32>
    %c15_372 = arith.constant 15 : index
    %c0_373 = arith.constant 0 : index
    %c0_374 = arith.constant 0 : index
    %354 = vector.load %arg2[%c15_372, %c0_373, %c0_374] : memref<16x4x8xbf16, #tpu.memory_space<vmem>>, vector<1x4x8xbf16>
    %355 = vector.shape_cast %354 : vector<1x4x8xbf16> to vector<4x8xbf16>
    %cst_375 = arith.constant dense<0.000000e+00> : vector<4x4xf32>
    %356 = tpu.matmul %355, %186, %cst_375 {dimension_numbers = #tpu.dot_dimension_numbers<[1], [0], [0], [1], [0, 0, 1, 1], [], []>} : vector<4x8xbf16>, vector<8x4xbf16>, vector<4x4xf32> -> vector<4x4xf32>
    %357 = arith.addf %353, %356 : vector<4x4xf32>
    %c15_376 = arith.constant 15 : index
    %c0_377 = arith.constant 0 : index
    %c0_378 = arith.constant 0 : index
    %358 = vector.load %arg3[%c15_376, %c0_377, %c0_378] : memref<16x4x16xf32, #tpu.memory_space<vmem>>, vector<1x4x16xf32>
    %359 = vector.shape_cast %358 : vector<1x4x16xf32> to vector<4x16xf32>
    %cst_379 = arith.constant dense<0.000000e+00> : vector<4x16xf32>
    %360 = tpu.matmul %357, %359, %cst_379 {dimension_numbers = #tpu.dot_dimension_numbers<[1], [0], [0], [1], [0, 0, 1, 1], [], []>} : vector<4x4xf32>, vector<4x16xf32>, vector<4x16xf32> -> vector<4x16xf32>
    %361 = arith.addf %350, %360 : vector<4x16xf32>
    %cst_380 = arith.constant dense<0.000000e+00> : vector<4xf32>
    %362 = vector.multi_reduction <add>, %361, %cst_380 [1] : vector<4x16xf32> to vector<4xf32>
    %363 = vector.shape_cast %362 : vector<4xf32> to vector<4x1xf32>
    %364 = arith.addf %181, %363 : vector<4x1xf32>
    %cst_381 = arith.constant 3.125000e-02 : f32
    %365 = vector.broadcast %cst_381 : f32 to vector<4x1xf32>
    %366 = arith.mulf %364, %365 : vector<4x1xf32>
    %367 = vector.broadcast %366 : vector<4x1xf32> to vector<4x16xf32>
    %368 = arith.subf %179, %367 : vector<4x16xf32>
    %369 = arith.mulf %368, %368 : vector<4x16xf32>
    %cst_382 = arith.constant dense<0.000000e+00> : vector<4xf32>
    %370 = vector.multi_reduction <add>, %369, %cst_382 [1] : vector<4x16xf32> to vector<4xf32>
    %371 = vector.shape_cast %370 : vector<4xf32> to vector<4x1xf32>
    %372 = vector.broadcast %366 : vector<4x1xf32> to vector<4x16xf32>
    %373 = arith.subf %361, %372 : vector<4x16xf32>
    %374 = arith.mulf %373, %373 : vector<4x16xf32>
    %cst_383 = arith.constant dense<0.000000e+00> : vector<4xf32>
    %375 = vector.multi_reduction <add>, %374, %cst_383 [1] : vector<4x16xf32> to vector<4xf32>
    %376 = vector.shape_cast %375 : vector<4xf32> to vector<4x1xf32>
    %377 = arith.addf %371, %376 : vector<4x1xf32>
    %cst_384 = arith.constant 3.125000e-02 : f32
    %378 = vector.broadcast %cst_384 : f32 to vector<4x1xf32>
    %379 = arith.mulf %377, %378 : vector<4x1xf32>
    %c0_385 = arith.constant 0 : index
    %c0_386 = arith.constant 0 : index
    %380 = vector.load %arg6[%c0_385, %c0_386] : memref<4x1xf32, #tpu.memory_space<vmem>>, vector<4x1xf32>
    %cst_387 = arith.constant 9.99999974E-6 : f32
    %381 = vector.broadcast %cst_387 : f32 to vector<4x1xf32>
    %382 = arith.addf %379, %381 : vector<4x1xf32>
    %383 = math.rsqrt %382 : vector<4x1xf32>
    %384 = arith.mulf %380, %383 : vector<4x1xf32>
    %c0_388 = arith.constant 0 : index
    %c0_389 = arith.constant 0 : index
    %385 = vector.load %arg7[%c0_388, %c0_389] : memref<4x1xf32, #tpu.memory_space<vmem>>, vector<4x1xf32>
    %386 = arith.mulf %366, %384 : vector<4x1xf32>
    %387 = arith.subf %385, %386 : vector<4x1xf32>
    %388 = vector.broadcast %384 : vector<4x1xf32> to vector<4x16xf32>
    %389 = arith.mulf %179, %388 : vector<4x16xf32>
    %390 = vector.broadcast %387 : vector<4x1xf32> to vector<4x16xf32>
    %391 = arith.addf %389, %390 : vector<4x16xf32>
    %cst_390 = arith.constant 0.000000e+00 : f32
    %392 = vector.broadcast %cst_390 : f32 to vector<4x16xf32>
    %393 = arith.maximumf %391, %392 : vector<4x16xf32>
    %394 = arith.truncf %393 : vector<4x16xf32> to vector<4x16xbf16>
    %c0_391 = arith.constant 0 : index
    %c0_392 = arith.constant 0 : index
    %c0_393 = arith.constant 0 : index
    %395 = vector.load %arg8[%c0_391, %c0_392, %c0_393] : memref<2x4x16xbf16, #tpu.memory_space<vmem>>, vector<1x4x16xbf16>
    %396 = vector.shape_cast %395 : vector<1x4x16xbf16> to vector<4x16xbf16>
    %397 = vector.shape_cast %394 : vector<4x16xbf16> to vector<1x4x16xbf16>
    tpu.vector_store %arg8[%c0_391, %c0_392, %c0_393], %397 {strides = array<i32>} : memref<2x4x16xbf16, #tpu.memory_space<vmem>>, vector<1x4x16xbf16>,
    %398 = vector.broadcast %384 : vector<4x1xf32> to vector<4x16xf32>
    %399 = arith.mulf %361, %398 : vector<4x16xf32>
    %400 = vector.broadcast %387 : vector<4x1xf32> to vector<4x16xf32>
    %401 = arith.addf %399, %400 : vector<4x16xf32>
    %cst_394 = arith.constant 0.000000e+00 : f32
    %402 = vector.broadcast %cst_394 : f32 to vector<4x16xf32>
    %403 = arith.maximumf %401, %402 : vector<4x16xf32>
    %404 = arith.truncf %403 : vector<4x16xf32> to vector<4x16xbf16>
    %c1_395 = arith.constant 1 : index
    %c0_396 = arith.constant 0 : index
    %c0_397 = arith.constant 0 : index
    %405 = vector.load %arg8[%c1_395, %c0_396, %c0_397] : memref<2x4x16xbf16, #tpu.memory_space<vmem>>, vector<1x4x16xbf16>
    %406 = vector.shape_cast %405 : vector<1x4x16xbf16> to vector<4x16xbf16>
    %407 = vector.shape_cast %404 : vector<4x16xbf16> to vector<1x4x16xbf16>
    tpu.vector_store %arg8[%c1_395, %c0_396, %c0_397], %407 {strides = array<i32>} : memref<2x4x16xbf16, #tpu.memory_space<vmem>>, vector<1x4x16xbf16>,
    return
  }
  func.func @transform_0(%arg0: i32) -> (i32, i32, i32) {
    %c0_i32 = arith.constant 0 : i32
    %c0_i32_0 = arith.constant 0 : i32
    %c0_i32_1 = arith.constant 0 : i32
    %c0_i32_2 = arith.constant 0 : i32
    return %c0_i32, %c0_i32_0, %c0_i32_1 : i32, i32, i32
  }
  func.func @transform_1(%arg0: i32) -> (i32, i32, i32) {
    %c0_i32 = arith.constant 0 : i32
    %c0_i32_0 = arith.constant 0 : i32
    %c0_i32_1 = arith.constant 0 : i32
    %c0_i32_2 = arith.constant 0 : i32
    return %c0_i32, %c0_i32_0, %c0_i32_1 : i32, i32, i32
  }
  func.func @transform_2(%arg0: i32) -> (i32, i32, i32) {
    %c0_i32 = arith.constant 0 : i32
    %c0_i32_0 = arith.constant 0 : i32
    %c0_i32_1 = arith.constant 0 : i32
    %c0_i32_2 = arith.constant 0 : i32
    return %c0_i32, %c0_i32_0, %c0_i32_1 : i32, i32, i32
  }
  func.func @transform_3(%arg0: i32) -> (i32, i32, i32) {
    %c0_i32 = arith.constant 0 : i32
    %c0_i32_0 = arith.constant 0 : i32
    %c0_i32_1 = arith.constant 0 : i32
    %c0_i32_2 = arith.constant 0 : i32
    return %c0_i32, %c0_i32_0, %c0_i32_1 : i32, i32, i32
  }
  func.func @transform_4(%arg0: i32) -> (i32, i32, i32) {
    %c0_i32 = arith.constant 0 : i32
    %c0_i32_0 = arith.constant 0 : i32
    %c0_i32_1 = arith.constant 0 : i32
    %c0_i32_2 = arith.constant 0 : i32
    return %c0_i32, %c0_i32_0, %c0_i32_1 : i32, i32, i32
  }
  func.func @transform_5(%arg0: i32) -> (i32, i32) {
    %c0_i32 = arith.constant 0 : i32
    %c0_i32_0 = arith.constant 0 : i32
    %c0_i32_1 = arith.constant 0 : i32
    return %c0_i32, %c0_i32_0 : i32, i32
  }
  func.func @transform_6(%arg0: i32) -> (i32, i32) {
    %c0_i32 = arith.constant 0 : i32
    %c0_i32_0 = arith.constant 0 : i32
    %c0_i32_1 = arith.constant 0 : i32
    return %c0_i32, %c0_i32_0 : i32, i32
  }
  func.func @transform_7(%arg0: i32) -> (i32, i32, i32) {
    %c0_i32 = arith.constant 0 : i32
    %c0_i32_0 = arith.constant 0 : i32
    %c0_i32_1 = arith.constant 0 : i32
    %c0_i32_2 = arith.constant 0 : i32
    return %c0_i32, %c0_i32_0, %c0_i32_1 : i32, i32, i32
  }
}

module attributes {stable_mosaic.version = 11 : i64} {
  func.func @_fused_tanh_layer_kernel(%arg0: i32, %arg1: memref<16x3x4xbf16, #tpu.memory_space<vmem>>, %arg2: memref<16x3x4xbf16, #tpu.memory_space<vmem>>, %arg3: memref<16x16x64xf32, #tpu.memory_space<vmem>>, %arg4: memref<1x4x16xbf16, #tpu.memory_space<vmem>>, %arg5: memref<1x4x16xf32, #tpu.memory_space<vmem>>, %arg6: memref<3x1xf32, #tpu.memory_space<vmem>>, %arg7: memref<1x3x64xf32, #tpu.memory_space<vmem>>) attributes {dimension_semantics = [#tpu.dimension_semantics<parallel>], iteration_bounds = array<i64: 2>, scalar_prefetch = 0 : i64, scratch_operands = 0 : i64, tpu.core_type = #tpu.core_type<tc>, window_params = [{pipeline_mode = #tpu.pipeline_mode<synchronous>, transform_indices = @transform_0, window_bounds = array<i64: 16, 3, 4>}, {pipeline_mode = #tpu.pipeline_mode<synchronous>, transform_indices = @transform_1, window_bounds = array<i64: 16, 3, 4>}, {pipeline_mode = #tpu.pipeline_mode<synchronous>, transform_indices = @transform_2, window_bounds = array<i64: 16, 16, 64>}, {transform_indices = @transform_3, window_bounds = array<i64: 1, 4, 16>}, {transform_indices = @transform_4, window_bounds = array<i64: 1, 4, 16>}, {pipeline_mode = #tpu.pipeline_mode<synchronous>, transform_indices = @transform_5, window_bounds = array<i64: 3, 1>}, {transform_indices = @transform_6, window_bounds = array<i64: 1, 3, 64>}]} {
    %c0 = arith.constant 0 : index
    %c0_0 = arith.constant 0 : index
    %c0_1 = arith.constant 0 : index
    %0 = vector.load %arg4[%c0, %c0_0, %c0_1] : memref<1x4x16xbf16, #tpu.memory_space<vmem>>, vector<1x4x16xbf16>
    %1 = vector.shape_cast %0 : vector<1x4x16xbf16> to vector<4x16xbf16>
    %c0_2 = arith.constant 0 : index
    %c0_3 = arith.constant 0 : index
    %c0_4 = arith.constant 0 : index
    %2 = vector.load %arg5[%c0_2, %c0_3, %c0_4] : memref<1x4x16xf32, #tpu.memory_space<vmem>>, vector<1x4x16xf32>
    %3 = vector.shape_cast %2 : vector<1x4x16xf32> to vector<4x16xf32>
    %4 = arith.truncf %3 : vector<4x16xf32> to vector<4x16xbf16>
    %c0_5 = arith.constant 0 : index
    %c0_6 = arith.constant 0 : index
    %c0_7 = arith.constant 0 : index
    %5 = vector.load %arg1[%c0_5, %c0_6, %c0_7] : memref<16x3x4xbf16, #tpu.memory_space<vmem>>, vector<1x3x4xbf16>
    %6 = vector.shape_cast %5 : vector<1x3x4xbf16> to vector<3x4xbf16>
    %cst = arith.constant dense<0.000000e+00> : vector<3x16xf32>
    %7 = tpu.matmul %6, %1, %cst {dimension_numbers = #tpu.dot_dimension_numbers<[1], [0], [0], [1], [0, 0, 1, 1], [], []>} : vector<3x4xbf16>, vector<4x16xbf16>, vector<3x16xf32> -> vector<3x16xf32>
    %c0_8 = arith.constant 0 : index
    %c0_9 = arith.constant 0 : index
    %c0_10 = arith.constant 0 : index
    %8 = vector.load %arg2[%c0_8, %c0_9, %c0_10] : memref<16x3x4xbf16, #tpu.memory_space<vmem>>, vector<1x3x4xbf16>
    %9 = vector.shape_cast %8 : vector<1x3x4xbf16> to vector<3x4xbf16>
    %cst_11 = arith.constant dense<0.000000e+00> : vector<3x16xf32>
    %10 = tpu.matmul %9, %4, %cst_11 {dimension_numbers = #tpu.dot_dimension_numbers<[1], [0], [0], [1], [0, 0, 1, 1], [], []>} : vector<3x4xbf16>, vector<4x16xbf16>, vector<3x16xf32> -> vector<3x16xf32>
    %11 = arith.addf %7, %10 : vector<3x16xf32>
    %c0_12 = arith.constant 0 : index
    %c0_13 = arith.constant 0 : index
    %c0_14 = arith.constant 0 : index
    %12 = vector.load %arg3[%c0_12, %c0_13, %c0_14] : memref<16x16x64xf32, #tpu.memory_space<vmem>>, vector<1x16x64xf32>
    %13 = vector.shape_cast %12 : vector<1x16x64xf32> to vector<16x64xf32>
    %cst_15 = arith.constant dense<0.000000e+00> : vector<3x64xf32>
    %14 = tpu.matmul %11, %13, %cst_15 {dimension_numbers = #tpu.dot_dimension_numbers<[1], [0], [0], [1], [0, 0, 1, 1], [], []>} : vector<3x16xf32>, vector<16x64xf32>, vector<3x64xf32> -> vector<3x64xf32>
    %c1 = arith.constant 1 : index
    %c0_16 = arith.constant 0 : index
    %c0_17 = arith.constant 0 : index
    %15 = vector.load %arg1[%c1, %c0_16, %c0_17] : memref<16x3x4xbf16, #tpu.memory_space<vmem>>, vector<1x3x4xbf16>
    %16 = vector.shape_cast %15 : vector<1x3x4xbf16> to vector<3x4xbf16>
    %cst_18 = arith.constant dense<0.000000e+00> : vector<3x16xf32>
    %17 = tpu.matmul %16, %1, %cst_18 {dimension_numbers = #tpu.dot_dimension_numbers<[1], [0], [0], [1], [0, 0, 1, 1], [], []>} : vector<3x4xbf16>, vector<4x16xbf16>, vector<3x16xf32> -> vector<3x16xf32>
    %c1_19 = arith.constant 1 : index
    %c0_20 = arith.constant 0 : index
    %c0_21 = arith.constant 0 : index
    %18 = vector.load %arg2[%c1_19, %c0_20, %c0_21] : memref<16x3x4xbf16, #tpu.memory_space<vmem>>, vector<1x3x4xbf16>
    %19 = vector.shape_cast %18 : vector<1x3x4xbf16> to vector<3x4xbf16>
    %cst_22 = arith.constant dense<0.000000e+00> : vector<3x16xf32>
    %20 = tpu.matmul %19, %4, %cst_22 {dimension_numbers = #tpu.dot_dimension_numbers<[1], [0], [0], [1], [0, 0, 1, 1], [], []>} : vector<3x4xbf16>, vector<4x16xbf16>, vector<3x16xf32> -> vector<3x16xf32>
    %21 = arith.addf %17, %20 : vector<3x16xf32>
    %c1_23 = arith.constant 1 : index
    %c0_24 = arith.constant 0 : index
    %c0_25 = arith.constant 0 : index
    %22 = vector.load %arg3[%c1_23, %c0_24, %c0_25] : memref<16x16x64xf32, #tpu.memory_space<vmem>>, vector<1x16x64xf32>
    %23 = vector.shape_cast %22 : vector<1x16x64xf32> to vector<16x64xf32>
    %cst_26 = arith.constant dense<0.000000e+00> : vector<3x64xf32>
    %24 = tpu.matmul %21, %23, %cst_26 {dimension_numbers = #tpu.dot_dimension_numbers<[1], [0], [0], [1], [0, 0, 1, 1], [], []>} : vector<3x16xf32>, vector<16x64xf32>, vector<3x64xf32> -> vector<3x64xf32>
    %25 = arith.addf %14, %24 : vector<3x64xf32>
    %c2 = arith.constant 2 : index
    %c0_27 = arith.constant 0 : index
    %c0_28 = arith.constant 0 : index
    %26 = vector.load %arg1[%c2, %c0_27, %c0_28] : memref<16x3x4xbf16, #tpu.memory_space<vmem>>, vector<1x3x4xbf16>
    %27 = vector.shape_cast %26 : vector<1x3x4xbf16> to vector<3x4xbf16>
    %cst_29 = arith.constant dense<0.000000e+00> : vector<3x16xf32>
    %28 = tpu.matmul %27, %1, %cst_29 {dimension_numbers = #tpu.dot_dimension_numbers<[1], [0], [0], [1], [0, 0, 1, 1], [], []>} : vector<3x4xbf16>, vector<4x16xbf16>, vector<3x16xf32> -> vector<3x16xf32>
    %c2_30 = arith.constant 2 : index
    %c0_31 = arith.constant 0 : index
    %c0_32 = arith.constant 0 : index
    %29 = vector.load %arg2[%c2_30, %c0_31, %c0_32] : memref<16x3x4xbf16, #tpu.memory_space<vmem>>, vector<1x3x4xbf16>
    %30 = vector.shape_cast %29 : vector<1x3x4xbf16> to vector<3x4xbf16>
    %cst_33 = arith.constant dense<0.000000e+00> : vector<3x16xf32>
    %31 = tpu.matmul %30, %4, %cst_33 {dimension_numbers = #tpu.dot_dimension_numbers<[1], [0], [0], [1], [0, 0, 1, 1], [], []>} : vector<3x4xbf16>, vector<4x16xbf16>, vector<3x16xf32> -> vector<3x16xf32>
    %32 = arith.addf %28, %31 : vector<3x16xf32>
    %c2_34 = arith.constant 2 : index
    %c0_35 = arith.constant 0 : index
    %c0_36 = arith.constant 0 : index
    %33 = vector.load %arg3[%c2_34, %c0_35, %c0_36] : memref<16x16x64xf32, #tpu.memory_space<vmem>>, vector<1x16x64xf32>
    %34 = vector.shape_cast %33 : vector<1x16x64xf32> to vector<16x64xf32>
    %cst_37 = arith.constant dense<0.000000e+00> : vector<3x64xf32>
    %35 = tpu.matmul %32, %34, %cst_37 {dimension_numbers = #tpu.dot_dimension_numbers<[1], [0], [0], [1], [0, 0, 1, 1], [], []>} : vector<3x16xf32>, vector<16x64xf32>, vector<3x64xf32> -> vector<3x64xf32>
    %36 = arith.addf %25, %35 : vector<3x64xf32>
    %c3 = arith.constant 3 : index
    %c0_38 = arith.constant 0 : index
    %c0_39 = arith.constant 0 : index
    %37 = vector.load %arg1[%c3, %c0_38, %c0_39] : memref<16x3x4xbf16, #tpu.memory_space<vmem>>, vector<1x3x4xbf16>
    %38 = vector.shape_cast %37 : vector<1x3x4xbf16> to vector<3x4xbf16>
    %cst_40 = arith.constant dense<0.000000e+00> : vector<3x16xf32>
    %39 = tpu.matmul %38, %1, %cst_40 {dimension_numbers = #tpu.dot_dimension_numbers<[1], [0], [0], [1], [0, 0, 1, 1], [], []>} : vector<3x4xbf16>, vector<4x16xbf16>, vector<3x16xf32> -> vector<3x16xf32>
    %c3_41 = arith.constant 3 : index
    %c0_42 = arith.constant 0 : index
    %c0_43 = arith.constant 0 : index
    %40 = vector.load %arg2[%c3_41, %c0_42, %c0_43] : memref<16x3x4xbf16, #tpu.memory_space<vmem>>, vector<1x3x4xbf16>
    %41 = vector.shape_cast %40 : vector<1x3x4xbf16> to vector<3x4xbf16>
    %cst_44 = arith.constant dense<0.000000e+00> : vector<3x16xf32>
    %42 = tpu.matmul %41, %4, %cst_44 {dimension_numbers = #tpu.dot_dimension_numbers<[1], [0], [0], [1], [0, 0, 1, 1], [], []>} : vector<3x4xbf16>, vector<4x16xbf16>, vector<3x16xf32> -> vector<3x16xf32>
    %43 = arith.addf %39, %42 : vector<3x16xf32>
    %c3_45 = arith.constant 3 : index
    %c0_46 = arith.constant 0 : index
    %c0_47 = arith.constant 0 : index
    %44 = vector.load %arg3[%c3_45, %c0_46, %c0_47] : memref<16x16x64xf32, #tpu.memory_space<vmem>>, vector<1x16x64xf32>
    %45 = vector.shape_cast %44 : vector<1x16x64xf32> to vector<16x64xf32>
    %cst_48 = arith.constant dense<0.000000e+00> : vector<3x64xf32>
    %46 = tpu.matmul %43, %45, %cst_48 {dimension_numbers = #tpu.dot_dimension_numbers<[1], [0], [0], [1], [0, 0, 1, 1], [], []>} : vector<3x16xf32>, vector<16x64xf32>, vector<3x64xf32> -> vector<3x64xf32>
    %47 = arith.addf %36, %46 : vector<3x64xf32>
    %c4 = arith.constant 4 : index
    %c0_49 = arith.constant 0 : index
    %c0_50 = arith.constant 0 : index
    %48 = vector.load %arg1[%c4, %c0_49, %c0_50] : memref<16x3x4xbf16, #tpu.memory_space<vmem>>, vector<1x3x4xbf16>
    %49 = vector.shape_cast %48 : vector<1x3x4xbf16> to vector<3x4xbf16>
    %cst_51 = arith.constant dense<0.000000e+00> : vector<3x16xf32>
    %50 = tpu.matmul %49, %1, %cst_51 {dimension_numbers = #tpu.dot_dimension_numbers<[1], [0], [0], [1], [0, 0, 1, 1], [], []>} : vector<3x4xbf16>, vector<4x16xbf16>, vector<3x16xf32> -> vector<3x16xf32>
    %c4_52 = arith.constant 4 : index
    %c0_53 = arith.constant 0 : index
    %c0_54 = arith.constant 0 : index
    %51 = vector.load %arg2[%c4_52, %c0_53, %c0_54] : memref<16x3x4xbf16, #tpu.memory_space<vmem>>, vector<1x3x4xbf16>
    %52 = vector.shape_cast %51 : vector<1x3x4xbf16> to vector<3x4xbf16>
    %cst_55 = arith.constant dense<0.000000e+00> : vector<3x16xf32>
    %53 = tpu.matmul %52, %4, %cst_55 {dimension_numbers = #tpu.dot_dimension_numbers<[1], [0], [0], [1], [0, 0, 1, 1], [], []>} : vector<3x4xbf16>, vector<4x16xbf16>, vector<3x16xf32> -> vector<3x16xf32>
    %54 = arith.addf %50, %53 : vector<3x16xf32>
    %c4_56 = arith.constant 4 : index
    %c0_57 = arith.constant 0 : index
    %c0_58 = arith.constant 0 : index
    %55 = vector.load %arg3[%c4_56, %c0_57, %c0_58] : memref<16x16x64xf32, #tpu.memory_space<vmem>>, vector<1x16x64xf32>
    %56 = vector.shape_cast %55 : vector<1x16x64xf32> to vector<16x64xf32>
    %cst_59 = arith.constant dense<0.000000e+00> : vector<3x64xf32>
    %57 = tpu.matmul %54, %56, %cst_59 {dimension_numbers = #tpu.dot_dimension_numbers<[1], [0], [0], [1], [0, 0, 1, 1], [], []>} : vector<3x16xf32>, vector<16x64xf32>, vector<3x64xf32> -> vector<3x64xf32>
    %58 = arith.addf %47, %57 : vector<3x64xf32>
    %c5 = arith.constant 5 : index
    %c0_60 = arith.constant 0 : index
    %c0_61 = arith.constant 0 : index
    %59 = vector.load %arg1[%c5, %c0_60, %c0_61] : memref<16x3x4xbf16, #tpu.memory_space<vmem>>, vector<1x3x4xbf16>
    %60 = vector.shape_cast %59 : vector<1x3x4xbf16> to vector<3x4xbf16>
    %cst_62 = arith.constant dense<0.000000e+00> : vector<3x16xf32>
    %61 = tpu.matmul %60, %1, %cst_62 {dimension_numbers = #tpu.dot_dimension_numbers<[1], [0], [0], [1], [0, 0, 1, 1], [], []>} : vector<3x4xbf16>, vector<4x16xbf16>, vector<3x16xf32> -> vector<3x16xf32>
    %c5_63 = arith.constant 5 : index
    %c0_64 = arith.constant 0 : index
    %c0_65 = arith.constant 0 : index
    %62 = vector.load %arg2[%c5_63, %c0_64, %c0_65] : memref<16x3x4xbf16, #tpu.memory_space<vmem>>, vector<1x3x4xbf16>
    %63 = vector.shape_cast %62 : vector<1x3x4xbf16> to vector<3x4xbf16>
    %cst_66 = arith.constant dense<0.000000e+00> : vector<3x16xf32>
    %64 = tpu.matmul %63, %4, %cst_66 {dimension_numbers = #tpu.dot_dimension_numbers<[1], [0], [0], [1], [0, 0, 1, 1], [], []>} : vector<3x4xbf16>, vector<4x16xbf16>, vector<3x16xf32> -> vector<3x16xf32>
    %65 = arith.addf %61, %64 : vector<3x16xf32>
    %c5_67 = arith.constant 5 : index
    %c0_68 = arith.constant 0 : index
    %c0_69 = arith.constant 0 : index
    %66 = vector.load %arg3[%c5_67, %c0_68, %c0_69] : memref<16x16x64xf32, #tpu.memory_space<vmem>>, vector<1x16x64xf32>
    %67 = vector.shape_cast %66 : vector<1x16x64xf32> to vector<16x64xf32>
    %cst_70 = arith.constant dense<0.000000e+00> : vector<3x64xf32>
    %68 = tpu.matmul %65, %67, %cst_70 {dimension_numbers = #tpu.dot_dimension_numbers<[1], [0], [0], [1], [0, 0, 1, 1], [], []>} : vector<3x16xf32>, vector<16x64xf32>, vector<3x64xf32> -> vector<3x64xf32>
    %69 = arith.addf %58, %68 : vector<3x64xf32>
    %c6 = arith.constant 6 : index
    %c0_71 = arith.constant 0 : index
    %c0_72 = arith.constant 0 : index
    %70 = vector.load %arg1[%c6, %c0_71, %c0_72] : memref<16x3x4xbf16, #tpu.memory_space<vmem>>, vector<1x3x4xbf16>
    %71 = vector.shape_cast %70 : vector<1x3x4xbf16> to vector<3x4xbf16>
    %cst_73 = arith.constant dense<0.000000e+00> : vector<3x16xf32>
    %72 = tpu.matmul %71, %1, %cst_73 {dimension_numbers = #tpu.dot_dimension_numbers<[1], [0], [0], [1], [0, 0, 1, 1], [], []>} : vector<3x4xbf16>, vector<4x16xbf16>, vector<3x16xf32> -> vector<3x16xf32>
    %c6_74 = arith.constant 6 : index
    %c0_75 = arith.constant 0 : index
    %c0_76 = arith.constant 0 : index
    %73 = vector.load %arg2[%c6_74, %c0_75, %c0_76] : memref<16x3x4xbf16, #tpu.memory_space<vmem>>, vector<1x3x4xbf16>
    %74 = vector.shape_cast %73 : vector<1x3x4xbf16> to vector<3x4xbf16>
    %cst_77 = arith.constant dense<0.000000e+00> : vector<3x16xf32>
    %75 = tpu.matmul %74, %4, %cst_77 {dimension_numbers = #tpu.dot_dimension_numbers<[1], [0], [0], [1], [0, 0, 1, 1], [], []>} : vector<3x4xbf16>, vector<4x16xbf16>, vector<3x16xf32> -> vector<3x16xf32>
    %76 = arith.addf %72, %75 : vector<3x16xf32>
    %c6_78 = arith.constant 6 : index
    %c0_79 = arith.constant 0 : index
    %c0_80 = arith.constant 0 : index
    %77 = vector.load %arg3[%c6_78, %c0_79, %c0_80] : memref<16x16x64xf32, #tpu.memory_space<vmem>>, vector<1x16x64xf32>
    %78 = vector.shape_cast %77 : vector<1x16x64xf32> to vector<16x64xf32>
    %cst_81 = arith.constant dense<0.000000e+00> : vector<3x64xf32>
    %79 = tpu.matmul %76, %78, %cst_81 {dimension_numbers = #tpu.dot_dimension_numbers<[1], [0], [0], [1], [0, 0, 1, 1], [], []>} : vector<3x16xf32>, vector<16x64xf32>, vector<3x64xf32> -> vector<3x64xf32>
    %80 = arith.addf %69, %79 : vector<3x64xf32>
    %c7 = arith.constant 7 : index
    %c0_82 = arith.constant 0 : index
    %c0_83 = arith.constant 0 : index
    %81 = vector.load %arg1[%c7, %c0_82, %c0_83] : memref<16x3x4xbf16, #tpu.memory_space<vmem>>, vector<1x3x4xbf16>
    %82 = vector.shape_cast %81 : vector<1x3x4xbf16> to vector<3x4xbf16>
    %cst_84 = arith.constant dense<0.000000e+00> : vector<3x16xf32>
    %83 = tpu.matmul %82, %1, %cst_84 {dimension_numbers = #tpu.dot_dimension_numbers<[1], [0], [0], [1], [0, 0, 1, 1], [], []>} : vector<3x4xbf16>, vector<4x16xbf16>, vector<3x16xf32> -> vector<3x16xf32>
    %c7_85 = arith.constant 7 : index
    %c0_86 = arith.constant 0 : index
    %c0_87 = arith.constant 0 : index
    %84 = vector.load %arg2[%c7_85, %c0_86, %c0_87] : memref<16x3x4xbf16, #tpu.memory_space<vmem>>, vector<1x3x4xbf16>
    %85 = vector.shape_cast %84 : vector<1x3x4xbf16> to vector<3x4xbf16>
    %cst_88 = arith.constant dense<0.000000e+00> : vector<3x16xf32>
    %86 = tpu.matmul %85, %4, %cst_88 {dimension_numbers = #tpu.dot_dimension_numbers<[1], [0], [0], [1], [0, 0, 1, 1], [], []>} : vector<3x4xbf16>, vector<4x16xbf16>, vector<3x16xf32> -> vector<3x16xf32>
    %87 = arith.addf %83, %86 : vector<3x16xf32>
    %c7_89 = arith.constant 7 : index
    %c0_90 = arith.constant 0 : index
    %c0_91 = arith.constant 0 : index
    %88 = vector.load %arg3[%c7_89, %c0_90, %c0_91] : memref<16x16x64xf32, #tpu.memory_space<vmem>>, vector<1x16x64xf32>
    %89 = vector.shape_cast %88 : vector<1x16x64xf32> to vector<16x64xf32>
    %cst_92 = arith.constant dense<0.000000e+00> : vector<3x64xf32>
    %90 = tpu.matmul %87, %89, %cst_92 {dimension_numbers = #tpu.dot_dimension_numbers<[1], [0], [0], [1], [0, 0, 1, 1], [], []>} : vector<3x16xf32>, vector<16x64xf32>, vector<3x64xf32> -> vector<3x64xf32>
    %91 = arith.addf %80, %90 : vector<3x64xf32>
    %c8 = arith.constant 8 : index
    %c0_93 = arith.constant 0 : index
    %c0_94 = arith.constant 0 : index
    %92 = vector.load %arg1[%c8, %c0_93, %c0_94] : memref<16x3x4xbf16, #tpu.memory_space<vmem>>, vector<1x3x4xbf16>
    %93 = vector.shape_cast %92 : vector<1x3x4xbf16> to vector<3x4xbf16>
    %cst_95 = arith.constant dense<0.000000e+00> : vector<3x16xf32>
    %94 = tpu.matmul %93, %1, %cst_95 {dimension_numbers = #tpu.dot_dimension_numbers<[1], [0], [0], [1], [0, 0, 1, 1], [], []>} : vector<3x4xbf16>, vector<4x16xbf16>, vector<3x16xf32> -> vector<3x16xf32>
    %c8_96 = arith.constant 8 : index
    %c0_97 = arith.constant 0 : index
    %c0_98 = arith.constant 0 : index
    %95 = vector.load %arg2[%c8_96, %c0_97, %c0_98] : memref<16x3x4xbf16, #tpu.memory_space<vmem>>, vector<1x3x4xbf16>
    %96 = vector.shape_cast %95 : vector<1x3x4xbf16> to vector<3x4xbf16>
    %cst_99 = arith.constant dense<0.000000e+00> : vector<3x16xf32>
    %97 = tpu.matmul %96, %4, %cst_99 {dimension_numbers = #tpu.dot_dimension_numbers<[1], [0], [0], [1], [0, 0, 1, 1], [], []>} : vector<3x4xbf16>, vector<4x16xbf16>, vector<3x16xf32> -> vector<3x16xf32>
    %98 = arith.addf %94, %97 : vector<3x16xf32>
    %c8_100 = arith.constant 8 : index
    %c0_101 = arith.constant 0 : index
    %c0_102 = arith.constant 0 : index
    %99 = vector.load %arg3[%c8_100, %c0_101, %c0_102] : memref<16x16x64xf32, #tpu.memory_space<vmem>>, vector<1x16x64xf32>
    %100 = vector.shape_cast %99 : vector<1x16x64xf32> to vector<16x64xf32>
    %cst_103 = arith.constant dense<0.000000e+00> : vector<3x64xf32>
    %101 = tpu.matmul %98, %100, %cst_103 {dimension_numbers = #tpu.dot_dimension_numbers<[1], [0], [0], [1], [0, 0, 1, 1], [], []>} : vector<3x16xf32>, vector<16x64xf32>, vector<3x64xf32> -> vector<3x64xf32>
    %102 = arith.addf %91, %101 : vector<3x64xf32>
    %c9 = arith.constant 9 : index
    %c0_104 = arith.constant 0 : index
    %c0_105 = arith.constant 0 : index
    %103 = vector.load %arg1[%c9, %c0_104, %c0_105] : memref<16x3x4xbf16, #tpu.memory_space<vmem>>, vector<1x3x4xbf16>
    %104 = vector.shape_cast %103 : vector<1x3x4xbf16> to vector<3x4xbf16>
    %cst_106 = arith.constant dense<0.000000e+00> : vector<3x16xf32>
    %105 = tpu.matmul %104, %1, %cst_106 {dimension_numbers = #tpu.dot_dimension_numbers<[1], [0], [0], [1], [0, 0, 1, 1], [], []>} : vector<3x4xbf16>, vector<4x16xbf16>, vector<3x16xf32> -> vector<3x16xf32>
    %c9_107 = arith.constant 9 : index
    %c0_108 = arith.constant 0 : index
    %c0_109 = arith.constant 0 : index
    %106 = vector.load %arg2[%c9_107, %c0_108, %c0_109] : memref<16x3x4xbf16, #tpu.memory_space<vmem>>, vector<1x3x4xbf16>
    %107 = vector.shape_cast %106 : vector<1x3x4xbf16> to vector<3x4xbf16>
    %cst_110 = arith.constant dense<0.000000e+00> : vector<3x16xf32>
    %108 = tpu.matmul %107, %4, %cst_110 {dimension_numbers = #tpu.dot_dimension_numbers<[1], [0], [0], [1], [0, 0, 1, 1], [], []>} : vector<3x4xbf16>, vector<4x16xbf16>, vector<3x16xf32> -> vector<3x16xf32>
    %109 = arith.addf %105, %108 : vector<3x16xf32>
    %c9_111 = arith.constant 9 : index
    %c0_112 = arith.constant 0 : index
    %c0_113 = arith.constant 0 : index
    %110 = vector.load %arg3[%c9_111, %c0_112, %c0_113] : memref<16x16x64xf32, #tpu.memory_space<vmem>>, vector<1x16x64xf32>
    %111 = vector.shape_cast %110 : vector<1x16x64xf32> to vector<16x64xf32>
    %cst_114 = arith.constant dense<0.000000e+00> : vector<3x64xf32>
    %112 = tpu.matmul %109, %111, %cst_114 {dimension_numbers = #tpu.dot_dimension_numbers<[1], [0], [0], [1], [0, 0, 1, 1], [], []>} : vector<3x16xf32>, vector<16x64xf32>, vector<3x64xf32> -> vector<3x64xf32>
    %113 = arith.addf %102, %112 : vector<3x64xf32>
    %c10 = arith.constant 10 : index
    %c0_115 = arith.constant 0 : index
    %c0_116 = arith.constant 0 : index
    %114 = vector.load %arg1[%c10, %c0_115, %c0_116] : memref<16x3x4xbf16, #tpu.memory_space<vmem>>, vector<1x3x4xbf16>
    %115 = vector.shape_cast %114 : vector<1x3x4xbf16> to vector<3x4xbf16>
    %cst_117 = arith.constant dense<0.000000e+00> : vector<3x16xf32>
    %116 = tpu.matmul %115, %1, %cst_117 {dimension_numbers = #tpu.dot_dimension_numbers<[1], [0], [0], [1], [0, 0, 1, 1], [], []>} : vector<3x4xbf16>, vector<4x16xbf16>, vector<3x16xf32> -> vector<3x16xf32>
    %c10_118 = arith.constant 10 : index
    %c0_119 = arith.constant 0 : index
    %c0_120 = arith.constant 0 : index
    %117 = vector.load %arg2[%c10_118, %c0_119, %c0_120] : memref<16x3x4xbf16, #tpu.memory_space<vmem>>, vector<1x3x4xbf16>
    %118 = vector.shape_cast %117 : vector<1x3x4xbf16> to vector<3x4xbf16>
    %cst_121 = arith.constant dense<0.000000e+00> : vector<3x16xf32>
    %119 = tpu.matmul %118, %4, %cst_121 {dimension_numbers = #tpu.dot_dimension_numbers<[1], [0], [0], [1], [0, 0, 1, 1], [], []>} : vector<3x4xbf16>, vector<4x16xbf16>, vector<3x16xf32> -> vector<3x16xf32>
    %120 = arith.addf %116, %119 : vector<3x16xf32>
    %c10_122 = arith.constant 10 : index
    %c0_123 = arith.constant 0 : index
    %c0_124 = arith.constant 0 : index
    %121 = vector.load %arg3[%c10_122, %c0_123, %c0_124] : memref<16x16x64xf32, #tpu.memory_space<vmem>>, vector<1x16x64xf32>
    %122 = vector.shape_cast %121 : vector<1x16x64xf32> to vector<16x64xf32>
    %cst_125 = arith.constant dense<0.000000e+00> : vector<3x64xf32>
    %123 = tpu.matmul %120, %122, %cst_125 {dimension_numbers = #tpu.dot_dimension_numbers<[1], [0], [0], [1], [0, 0, 1, 1], [], []>} : vector<3x16xf32>, vector<16x64xf32>, vector<3x64xf32> -> vector<3x64xf32>
    %124 = arith.addf %113, %123 : vector<3x64xf32>
    %c11 = arith.constant 11 : index
    %c0_126 = arith.constant 0 : index
    %c0_127 = arith.constant 0 : index
    %125 = vector.load %arg1[%c11, %c0_126, %c0_127] : memref<16x3x4xbf16, #tpu.memory_space<vmem>>, vector<1x3x4xbf16>
    %126 = vector.shape_cast %125 : vector<1x3x4xbf16> to vector<3x4xbf16>
    %cst_128 = arith.constant dense<0.000000e+00> : vector<3x16xf32>
    %127 = tpu.matmul %126, %1, %cst_128 {dimension_numbers = #tpu.dot_dimension_numbers<[1], [0], [0], [1], [0, 0, 1, 1], [], []>} : vector<3x4xbf16>, vector<4x16xbf16>, vector<3x16xf32> -> vector<3x16xf32>
    %c11_129 = arith.constant 11 : index
    %c0_130 = arith.constant 0 : index
    %c0_131 = arith.constant 0 : index
    %128 = vector.load %arg2[%c11_129, %c0_130, %c0_131] : memref<16x3x4xbf16, #tpu.memory_space<vmem>>, vector<1x3x4xbf16>
    %129 = vector.shape_cast %128 : vector<1x3x4xbf16> to vector<3x4xbf16>
    %cst_132 = arith.constant dense<0.000000e+00> : vector<3x16xf32>
    %130 = tpu.matmul %129, %4, %cst_132 {dimension_numbers = #tpu.dot_dimension_numbers<[1], [0], [0], [1], [0, 0, 1, 1], [], []>} : vector<3x4xbf16>, vector<4x16xbf16>, vector<3x16xf32> -> vector<3x16xf32>
    %131 = arith.addf %127, %130 : vector<3x16xf32>
    %c11_133 = arith.constant 11 : index
    %c0_134 = arith.constant 0 : index
    %c0_135 = arith.constant 0 : index
    %132 = vector.load %arg3[%c11_133, %c0_134, %c0_135] : memref<16x16x64xf32, #tpu.memory_space<vmem>>, vector<1x16x64xf32>
    %133 = vector.shape_cast %132 : vector<1x16x64xf32> to vector<16x64xf32>
    %cst_136 = arith.constant dense<0.000000e+00> : vector<3x64xf32>
    %134 = tpu.matmul %131, %133, %cst_136 {dimension_numbers = #tpu.dot_dimension_numbers<[1], [0], [0], [1], [0, 0, 1, 1], [], []>} : vector<3x16xf32>, vector<16x64xf32>, vector<3x64xf32> -> vector<3x64xf32>
    %135 = arith.addf %124, %134 : vector<3x64xf32>
    %c12 = arith.constant 12 : index
    %c0_137 = arith.constant 0 : index
    %c0_138 = arith.constant 0 : index
    %136 = vector.load %arg1[%c12, %c0_137, %c0_138] : memref<16x3x4xbf16, #tpu.memory_space<vmem>>, vector<1x3x4xbf16>
    %137 = vector.shape_cast %136 : vector<1x3x4xbf16> to vector<3x4xbf16>
    %cst_139 = arith.constant dense<0.000000e+00> : vector<3x16xf32>
    %138 = tpu.matmul %137, %1, %cst_139 {dimension_numbers = #tpu.dot_dimension_numbers<[1], [0], [0], [1], [0, 0, 1, 1], [], []>} : vector<3x4xbf16>, vector<4x16xbf16>, vector<3x16xf32> -> vector<3x16xf32>
    %c12_140 = arith.constant 12 : index
    %c0_141 = arith.constant 0 : index
    %c0_142 = arith.constant 0 : index
    %139 = vector.load %arg2[%c12_140, %c0_141, %c0_142] : memref<16x3x4xbf16, #tpu.memory_space<vmem>>, vector<1x3x4xbf16>
    %140 = vector.shape_cast %139 : vector<1x3x4xbf16> to vector<3x4xbf16>
    %cst_143 = arith.constant dense<0.000000e+00> : vector<3x16xf32>
    %141 = tpu.matmul %140, %4, %cst_143 {dimension_numbers = #tpu.dot_dimension_numbers<[1], [0], [0], [1], [0, 0, 1, 1], [], []>} : vector<3x4xbf16>, vector<4x16xbf16>, vector<3x16xf32> -> vector<3x16xf32>
    %142 = arith.addf %138, %141 : vector<3x16xf32>
    %c12_144 = arith.constant 12 : index
    %c0_145 = arith.constant 0 : index
    %c0_146 = arith.constant 0 : index
    %143 = vector.load %arg3[%c12_144, %c0_145, %c0_146] : memref<16x16x64xf32, #tpu.memory_space<vmem>>, vector<1x16x64xf32>
    %144 = vector.shape_cast %143 : vector<1x16x64xf32> to vector<16x64xf32>
    %cst_147 = arith.constant dense<0.000000e+00> : vector<3x64xf32>
    %145 = tpu.matmul %142, %144, %cst_147 {dimension_numbers = #tpu.dot_dimension_numbers<[1], [0], [0], [1], [0, 0, 1, 1], [], []>} : vector<3x16xf32>, vector<16x64xf32>, vector<3x64xf32> -> vector<3x64xf32>
    %146 = arith.addf %135, %145 : vector<3x64xf32>
    %c13 = arith.constant 13 : index
    %c0_148 = arith.constant 0 : index
    %c0_149 = arith.constant 0 : index
    %147 = vector.load %arg1[%c13, %c0_148, %c0_149] : memref<16x3x4xbf16, #tpu.memory_space<vmem>>, vector<1x3x4xbf16>
    %148 = vector.shape_cast %147 : vector<1x3x4xbf16> to vector<3x4xbf16>
    %cst_150 = arith.constant dense<0.000000e+00> : vector<3x16xf32>
    %149 = tpu.matmul %148, %1, %cst_150 {dimension_numbers = #tpu.dot_dimension_numbers<[1], [0], [0], [1], [0, 0, 1, 1], [], []>} : vector<3x4xbf16>, vector<4x16xbf16>, vector<3x16xf32> -> vector<3x16xf32>
    %c13_151 = arith.constant 13 : index
    %c0_152 = arith.constant 0 : index
    %c0_153 = arith.constant 0 : index
    %150 = vector.load %arg2[%c13_151, %c0_152, %c0_153] : memref<16x3x4xbf16, #tpu.memory_space<vmem>>, vector<1x3x4xbf16>
    %151 = vector.shape_cast %150 : vector<1x3x4xbf16> to vector<3x4xbf16>
    %cst_154 = arith.constant dense<0.000000e+00> : vector<3x16xf32>
    %152 = tpu.matmul %151, %4, %cst_154 {dimension_numbers = #tpu.dot_dimension_numbers<[1], [0], [0], [1], [0, 0, 1, 1], [], []>} : vector<3x4xbf16>, vector<4x16xbf16>, vector<3x16xf32> -> vector<3x16xf32>
    %153 = arith.addf %149, %152 : vector<3x16xf32>
    %c13_155 = arith.constant 13 : index
    %c0_156 = arith.constant 0 : index
    %c0_157 = arith.constant 0 : index
    %154 = vector.load %arg3[%c13_155, %c0_156, %c0_157] : memref<16x16x64xf32, #tpu.memory_space<vmem>>, vector<1x16x64xf32>
    %155 = vector.shape_cast %154 : vector<1x16x64xf32> to vector<16x64xf32>
    %cst_158 = arith.constant dense<0.000000e+00> : vector<3x64xf32>
    %156 = tpu.matmul %153, %155, %cst_158 {dimension_numbers = #tpu.dot_dimension_numbers<[1], [0], [0], [1], [0, 0, 1, 1], [], []>} : vector<3x16xf32>, vector<16x64xf32>, vector<3x64xf32> -> vector<3x64xf32>
    %157 = arith.addf %146, %156 : vector<3x64xf32>
    %c14 = arith.constant 14 : index
    %c0_159 = arith.constant 0 : index
    %c0_160 = arith.constant 0 : index
    %158 = vector.load %arg1[%c14, %c0_159, %c0_160] : memref<16x3x4xbf16, #tpu.memory_space<vmem>>, vector<1x3x4xbf16>
    %159 = vector.shape_cast %158 : vector<1x3x4xbf16> to vector<3x4xbf16>
    %cst_161 = arith.constant dense<0.000000e+00> : vector<3x16xf32>
    %160 = tpu.matmul %159, %1, %cst_161 {dimension_numbers = #tpu.dot_dimension_numbers<[1], [0], [0], [1], [0, 0, 1, 1], [], []>} : vector<3x4xbf16>, vector<4x16xbf16>, vector<3x16xf32> -> vector<3x16xf32>
    %c14_162 = arith.constant 14 : index
    %c0_163 = arith.constant 0 : index
    %c0_164 = arith.constant 0 : index
    %161 = vector.load %arg2[%c14_162, %c0_163, %c0_164] : memref<16x3x4xbf16, #tpu.memory_space<vmem>>, vector<1x3x4xbf16>
    %162 = vector.shape_cast %161 : vector<1x3x4xbf16> to vector<3x4xbf16>
    %cst_165 = arith.constant dense<0.000000e+00> : vector<3x16xf32>
    %163 = tpu.matmul %162, %4, %cst_165 {dimension_numbers = #tpu.dot_dimension_numbers<[1], [0], [0], [1], [0, 0, 1, 1], [], []>} : vector<3x4xbf16>, vector<4x16xbf16>, vector<3x16xf32> -> vector<3x16xf32>
    %164 = arith.addf %160, %163 : vector<3x16xf32>
    %c14_166 = arith.constant 14 : index
    %c0_167 = arith.constant 0 : index
    %c0_168 = arith.constant 0 : index
    %165 = vector.load %arg3[%c14_166, %c0_167, %c0_168] : memref<16x16x64xf32, #tpu.memory_space<vmem>>, vector<1x16x64xf32>
    %166 = vector.shape_cast %165 : vector<1x16x64xf32> to vector<16x64xf32>
    %cst_169 = arith.constant dense<0.000000e+00> : vector<3x64xf32>
    %167 = tpu.matmul %164, %166, %cst_169 {dimension_numbers = #tpu.dot_dimension_numbers<[1], [0], [0], [1], [0, 0, 1, 1], [], []>} : vector<3x16xf32>, vector<16x64xf32>, vector<3x64xf32> -> vector<3x64xf32>
    %168 = arith.addf %157, %167 : vector<3x64xf32>
    %c15 = arith.constant 15 : index
    %c0_170 = arith.constant 0 : index
    %c0_171 = arith.constant 0 : index
    %169 = vector.load %arg1[%c15, %c0_170, %c0_171] : memref<16x3x4xbf16, #tpu.memory_space<vmem>>, vector<1x3x4xbf16>
    %170 = vector.shape_cast %169 : vector<1x3x4xbf16> to vector<3x4xbf16>
    %cst_172 = arith.constant dense<0.000000e+00> : vector<3x16xf32>
    %171 = tpu.matmul %170, %1, %cst_172 {dimension_numbers = #tpu.dot_dimension_numbers<[1], [0], [0], [1], [0, 0, 1, 1], [], []>} : vector<3x4xbf16>, vector<4x16xbf16>, vector<3x16xf32> -> vector<3x16xf32>
    %c15_173 = arith.constant 15 : index
    %c0_174 = arith.constant 0 : index
    %c0_175 = arith.constant 0 : index
    %172 = vector.load %arg2[%c15_173, %c0_174, %c0_175] : memref<16x3x4xbf16, #tpu.memory_space<vmem>>, vector<1x3x4xbf16>
    %173 = vector.shape_cast %172 : vector<1x3x4xbf16> to vector<3x4xbf16>
    %cst_176 = arith.constant dense<0.000000e+00> : vector<3x16xf32>
    %174 = tpu.matmul %173, %4, %cst_176 {dimension_numbers = #tpu.dot_dimension_numbers<[1], [0], [0], [1], [0, 0, 1, 1], [], []>} : vector<3x4xbf16>, vector<4x16xbf16>, vector<3x16xf32> -> vector<3x16xf32>
    %175 = arith.addf %171, %174 : vector<3x16xf32>
    %c15_177 = arith.constant 15 : index
    %c0_178 = arith.constant 0 : index
    %c0_179 = arith.constant 0 : index
    %176 = vector.load %arg3[%c15_177, %c0_178, %c0_179] : memref<16x16x64xf32, #tpu.memory_space<vmem>>, vector<1x16x64xf32>
    %177 = vector.shape_cast %176 : vector<1x16x64xf32> to vector<16x64xf32>
    %cst_180 = arith.constant dense<0.000000e+00> : vector<3x64xf32>
    %178 = tpu.matmul %175, %177, %cst_180 {dimension_numbers = #tpu.dot_dimension_numbers<[1], [0], [0], [1], [0, 0, 1, 1], [], []>} : vector<3x16xf32>, vector<16x64xf32>, vector<3x64xf32> -> vector<3x64xf32>
    %179 = arith.addf %168, %178 : vector<3x64xf32>
    %c0_181 = arith.constant 0 : index
    %c0_182 = arith.constant 0 : index
    %180 = vector.load %arg6[%c0_181, %c0_182] : memref<3x1xf32, #tpu.memory_space<vmem>>, vector<3x1xf32>
    %181 = vector.broadcast %180 : vector<3x1xf32> to vector<3x64xf32>
    %182 = arith.addf %179, %181 : vector<3x64xf32>
    %183 = math.tanh %182 : vector<3x64xf32>
    %c0_183 = arith.constant 0 : index
    %c0_184 = arith.constant 0 : index
    %c0_185 = arith.constant 0 : index
    %184 = vector.load %arg7[%c0_183, %c0_184, %c0_185] : memref<1x3x64xf32, #tpu.memory_space<vmem>>, vector<1x3x64xf32>
    %185 = vector.shape_cast %184 : vector<1x3x64xf32> to vector<3x64xf32>
    %186 = vector.shape_cast %183 : vector<3x64xf32> to vector<1x3x64xf32>
    tpu.vector_store %arg7[%c0_183, %c0_184, %c0_185], %186 {strides = array<i32>} : memref<1x3x64xf32, #tpu.memory_space<vmem>>, vector<1x3x64xf32>,
    return
  }
  func.func @transform_0(%arg0: i32) -> (i32, i32, i32) {
    %c0_i32 = arith.constant 0 : i32
    %c0_i32_0 = arith.constant 0 : i32
    %c0_i32_1 = arith.constant 0 : i32
    %c0_i32_2 = arith.constant 0 : i32
    return %c0_i32, %c0_i32_0, %c0_i32_1 : i32, i32, i32
  }
  func.func @transform_1(%arg0: i32) -> (i32, i32, i32) {
    %c0_i32 = arith.constant 0 : i32
    %c0_i32_0 = arith.constant 0 : i32
    %c0_i32_1 = arith.constant 0 : i32
    %c0_i32_2 = arith.constant 0 : i32
    return %c0_i32, %c0_i32_0, %c0_i32_1 : i32, i32, i32
  }
  func.func @transform_2(%arg0: i32) -> (i32, i32, i32) {
    %c0_i32 = arith.constant 0 : i32
    %c0_i32_0 = arith.constant 0 : i32
    %c0_i32_1 = arith.constant 0 : i32
    %c0_i32_2 = arith.constant 0 : i32
    return %c0_i32, %c0_i32_0, %c0_i32_1 : i32, i32, i32
  }
  func.func @transform_3(%arg0: i32) -> (i32, i32, i32) {
    %c0_i32 = arith.constant 0 : i32
    %c0_i32_0 = arith.constant 0 : i32
    %c0_i32_1 = arith.constant 0 : i32
    return %arg0, %c0_i32, %c0_i32_0 : i32, i32, i32
  }
  func.func @transform_4(%arg0: i32) -> (i32, i32, i32) {
    %c0_i32 = arith.constant 0 : i32
    %c0_i32_0 = arith.constant 0 : i32
    %c0_i32_1 = arith.constant 0 : i32
    return %arg0, %c0_i32, %c0_i32_0 : i32, i32, i32
  }
  func.func @transform_5(%arg0: i32) -> (i32, i32) {
    %c0_i32 = arith.constant 0 : i32
    %c0_i32_0 = arith.constant 0 : i32
    %c0_i32_1 = arith.constant 0 : i32
    return %c0_i32, %c0_i32_0 : i32, i32
  }
  func.func @transform_6(%arg0: i32) -> (i32, i32, i32) {
    %c0_i32 = arith.constant 0 : i32
    %c0_i32_0 = arith.constant 0 : i32
    %c0_i32_1 = arith.constant 0 : i32
    return %arg0, %c0_i32, %c0_i32_0 : i32, i32, i32
  }
}

</mosaic_0001>

<llo_original>
// kernel: _lambda_.3
$region0: #{_lambda_.3}
  #allocation0 [shape = 'u32[]', space=smem, size = 0x4, offset = 0x4, fixed_abs, tag = 'smem constant byte address 0x4 - core index']
  #allocation1 [shape = 'u32[144,128]{1,0:T(1,128)}', space=vmem, size = 0x12000, scoped, tag = 'internal scratch']
  %s0 = inlined_call_operand.hbm [shape: f32[4,8,16], index: 0, kind: input, shape index: {}]
  %s1 = inlined_call_operand.vmem [shape: f32[4,8,12], index: 1, kind: input, shape index: {}]
  %s2 = inlined_call_operand.vmem [shape: f32[4,1,4], index: 2, kind: input, shape index: {}]
  %s3 = inlined_call_operand.hbm [shape: f32[2,1,16], index: 3, kind: input, shape index: {}]
  %s4 = inlined_call_operand.hbm [shape: f32[2,1,12], index: 4, kind: input, shape index: {}]
  %s5 = inlined_call_operand.hbm [shape: f32[8,1], index: 5, kind: input, shape index: {}]
  %s6 = inlined_call_operand.hbm [shape: f32[8,1], index: 6, kind: input, shape index: {}]
  %s7 = inlined_call_operand.vmem [shape: bf16[2,8,4], index: 7, kind: output, shape index: {}]
  %s8 = sld [smem:[#allocation0]]
  $region58: #{_lambda_.3} parent=0
    _
  %s10 = ssub.s32 1, %s8
  %s11 = scalar_select 0, %s10, %s8
  $region1: #{_lambda_.3} parent=0
    #allocation2 [shape = 'u8[16384]{0}', space=vmem, size = 0x4000, scoped, tag = 'input window, operand 0, single buffered']
    #allocation3 [shape = 's32[1]{0}', space=sflag, size = 0x4, scoped, tag = 'scoped memory for _lambda_.3']
    #allocation4 [shape = 'u8[1024]{0}', space=vmem, size = 0x400, scoped, tag = 'input window, operand 3, single buffered']
    #allocation5 [shape = 's32[1]{0}', space=sflag, size = 0x4, scoped, tag = 'scoped memory for _lambda_.3']
    #allocation6 [shape = 'u8[1024]{0}', space=vmem, size = 0x400, scoped, tag = 'input window, operand 4, single buffered']
    #allocation7 [shape = 'u8[4096]{0}', space=vmem, size = 0x1000, scoped, tag = 'input window, operand 5, single buffered']
    #allocation8 [shape = 's32[1]{0}', space=sflag, size = 0x4, scoped, tag = 'scoped memory for _lambda_.3']
    #allocation9 [shape = 'u8[4096]{0}', space=vmem, size = 0x1000, scoped, tag = 'input window, operand 6, single buffered']
    %12 = vsyncpa [#allocation3], 0
    %13 = vsyncpa [#allocation5], 0
    %14 = vsyncpa [#allocation8], 0
    // Predicated region
    $region2: #{_lambda_.3} parent=1 // pred_check
      _
    $region3: #{_lambda_.3} parent=1 // pred_check_branch
      %16 = sbr.rel (0) target = $region5
    $region4: #{_lambda_.3} parent=1 // pred_region
      %s18 = ssub.s32 512, 512
      %19 = vsyncadd [#allocation3], %s18
      %s20 = sshll.u32 [#allocation2], 4
      %s21 = int_to_ptr.vmem [resolvable:$true] %s20
      %26 = dma.hbm_to_vmem [thread:$0]  %s0, 512, %s21, [#allocation3], 128, 128, 8
    $region5: #{_lambda_.3} parent=1 // pred_fallthru
      _
    // Predicated region
    $region6: #{_lambda_.3} parent=1 // pred_check
      _
    $region7: #{_lambda_.3} parent=1 // pred_check_branch
      %28 = sbr.rel (0) target = $region9
    $region8: #{_lambda_.3} parent=1 // pred_region
      _
    $region9: #{_lambda_.3} parent=1 // pred_fallthru
      _
    // Predicated region
    $region10: #{_lambda_.3} parent=1 // pred_check
      _
    $region11: #{_lambda_.3} parent=1 // pred_check_branch
      %30 = sbr.rel (0) target = $region13
    $region12: #{_lambda_.3} parent=1 // pred_region
      _
    $region13: #{_lambda_.3} parent=1 // pred_fallthru
      _
    // Predicated region
    $region14: #{_lambda_.3} parent=1 // pred_check
      _
    $region15: #{_lambda_.3} parent=1 // pred_check_branch
      %32 = sbr.rel (0) target = $region17
    $region16: #{_lambda_.3} parent=1 // pred_region
      %s34 = ssub.s32 32, 32
      %35 = vsyncadd [#allocation5], %s34
      %s36 = sshll.u32 [#allocation4], 4
      %s37 = int_to_ptr.vmem [resolvable:$true] %s36
      %42 = dma.hbm_to_vmem [thread:$0]  %s3, 32, %s37, [#allocation5], 16, 16, 1
    $region17: #{_lambda_.3} parent=1 // pred_fallthru
      _
    // Predicated region
    $region18: #{_lambda_.3} parent=1 // pred_check
      _
    $region19: #{_lambda_.3} parent=1 // pred_check_branch
      %44 = sbr.rel (0) target = $region21
    $region20: #{_lambda_.3} parent=1 // pred_region
      %s46 = ssub.s32 32, 32
      %47 = vsyncadd [#allocation5], %s46
      %s48 = sshll.u32 [#allocation6], 4
      %s49 = int_to_ptr.vmem [resolvable:$true] %s48
      %54 = dma.hbm_to_vmem [thread:$0]  %s4, 32, %s49, [#allocation5], 16, 16, 1
    $region21: #{_lambda_.3} parent=1 // pred_fallthru
      _
    // Predicated region
    $region22: #{_lambda_.3} parent=1 // pred_check
      _
    $region23: #{_lambda_.3} parent=1 // pred_check_branch
      %56 = sbr.rel (0) target = $region25
    $region24: #{_lambda_.3} parent=1 // pred_region
      %s58 = ssub.s32 128, 128
      %59 = vsyncadd [#allocation8], %s58
      %s61 = sshll.u32 [#allocation7], 4
      %s62 = int_to_ptr.vmem [resolvable:$true] %s61
      %64 = dma.hbm_to_vmem [thread:$0]  %s5, 128, %s62, [#allocation8]
    $region25: #{_lambda_.3} parent=1 // pred_fallthru
      _
    // Predicated region
    $region26: #{_lambda_.3} parent=1 // pred_check
      _
    $region27: #{_lambda_.3} parent=1 // pred_check_branch
      %66 = sbr.rel (0) target = $region29
    $region28: #{_lambda_.3} parent=1 // pred_region
      %s68 = ssub.s32 128, 128
      %69 = vsyncadd [#allocation8], %s68
      %s71 = sshll.u32 [#allocation9], 4
      %s72 = int_to_ptr.vmem [resolvable:$true] %s71
      %74 = dma.hbm_to_vmem [thread:$0]  %s6, 128, %s72, [#allocation8]
    $region29: #{_lambda_.3} parent=1 // pred_fallthru
      _
    // Predicated region
    $region30: #{_lambda_.3} parent=1 // pred_check
      _
    $region31: #{_lambda_.3} parent=1 // pred_check_branch
      %76 = sbr.rel (0) target = $region33
    $region32: #{_lambda_.3} parent=1 // pred_region
      %77 = dma.done [#allocation3], 512
    $region33: #{_lambda_.3} parent=1 // pred_fallthru
      _
    // Predicated region
    $region34: #{_lambda_.3} parent=1 // pred_check
      _
    $region35: #{_lambda_.3} parent=1 // pred_check_branch
      %79 = sbr.rel (0) target = $region37
    $region36: #{_lambda_.3} parent=1 // pred_region
      %80 = dma.done [#allocation5], 32
    $region37: #{_lambda_.3} parent=1 // pred_fallthru
      _
    // Predicated region
    $region38: #{_lambda_.3} parent=1 // pred_check
      _
    $region39: #{_lambda_.3} parent=1 // pred_check_branch
      %82 = sbr.rel (0) target = $region41
    $region40: #{_lambda_.3} parent=1 // pred_region
      %83 = dma.done [#allocation5], 32
    $region41: #{_lambda_.3} parent=1 // pred_fallthru
      _
    // Predicated region
    $region42: #{_lambda_.3} parent=1 // pred_check
      _
    $region43: #{_lambda_.3} parent=1 // pred_check_branch
      %85 = sbr.rel (0) target = $region45
    $region44: #{_lambda_.3} parent=1 // pred_region
      %86 = dma.done [#allocation8], 128
    $region45: #{_lambda_.3} parent=1 // pred_fallthru
      _
    // Predicated region
    $region46: #{_lambda_.3} parent=1 // pred_check
      _
    $region47: #{_lambda_.3} parent=1 // pred_check_branch
      %88 = sbr.rel (0) target = $region49
    $region48: #{_lambda_.3} parent=1 // pred_region
      %89 = dma.done [#allocation8], 128
    $region49: #{_lambda_.3} parent=1 // pred_fallthru
      _
    %v90 = vld [vmem:[#allocation4] sm:$0x1]
    %v91 = vld [vmem:[#allocation6] sm:$0x1]
    %v92 = vld [vmem:[#allocation2] sm:$0xff]
    %v94 = vlaneseq
    %v95 = vshrl.u32 %v94, 7
    %v96 = vsub.s32 0, %v95
    %v97 = vrot.slane %v90, %v96
    %v99 = vmul.f32 %v92, %v97
    %vm100 = vcmask 130048
    %v101 = vsel %vm100, %v99, 0.0
    %102 = vadd.xlane.f32.xlu0 %v101
    %v103 = vpop.xlane.xlu0 %102
    %v104 = vld [vmem:[%s1] sm:$0xff]
    %v106 = vlaneseq
    %v107 = vshrl.u32 %v106, 7
    %v108 = vsub.s32 0, %v107
    %v109 = vrot.slane %v91, %v108
    %v111 = vmul.f32 %v104, %v109
    %vm112 = vcmask 97280
    %v113 = vsel %vm112, %v111, 0.0
    %114 = vadd.xlane.f32.xlu0 %v113
    %v115 = vpop.xlane.xlu0 %114
    %v116 = vadd.f32 %v103, %v115
    %v117 = vld [vmem:[%s2] sm:$0x1]
    %v119 = vlaneseq
    %v120 = vshrl.u32 %v119, 7
    %v121 = vsub.s32 0, %v120
    %v122 = vrot.slane %v117, %v121
    %v124 = vmul.f32 %v116, %v122
    %s125 = scalar_lea.vmem [#allocation2], 8
    %v126 = vld [vmem:[%s125] sm:$0xff]
    %v127 = vmul.f32 %v126, %v97
    %v128 = vsel %vm100, %v127, 0.0
    %129 = vadd.xlane.f32.xlu0 %v128
    %v130 = vpop.xlane.xlu0 %129
    %s131 = scalar_lea.vmem %s1, 8
    %v132 = vld [vmem:[%s131] sm:$0xff]
    %v133 = vmul.f32 %v132, %v109
    %v134 = vsel %vm112, %v133, 0.0
    %135 = vadd.xlane.f32.xlu0 %v134
    %v136 = vpop.xlane.xlu0 %135
    %v137 = vadd.f32 %v130, %v136
    %s138 = scalar_lea.vmem %s2, 1
    %v139 = vld [vmem:[%s138] sm:$0x1]
    %v141 = vlaneseq
    %v142 = vshrl.u32 %v141, 7
    %v143 = vsub.s32 0, %v142
    %v144 = vrot.slane %v139, %v143
    %v146 = vmul.f32 %v137, %v144
    %v147 = vadd.f32 %v124, %v146
    %s148 = scalar_lea.vmem [#allocation2], 16
    %v149 = vld [vmem:[%s148] sm:$0xff]
    %v150 = vmul.f32 %v149, %v97
    %v151 = vsel %vm100, %v150, 0.0
    %152 = vadd.xlane.f32.xlu0 %v151
    %v153 = vpop.xlane.xlu0 %152
    %s154 = scalar_lea.vmem %s1, 16
    %v155 = vld [vmem:[%s154] sm:$0xff]
    %v156 = vmul.f32 %v155, %v109
    %v157 = vsel %vm112, %v156, 0.0
    %158 = vadd.xlane.f32.xlu0 %v157
    %v159 = vpop.xlane.xlu0 %158
    %v160 = vadd.f32 %v153, %v159
    %s161 = scalar_lea.vmem %s2, 2
    %v162 = vld [vmem:[%s161] sm:$0x1]
    %v164 = vlaneseq
    %v165 = vshrl.u32 %v164, 7
    %v166 = vsub.s32 0, %v165
    %v167 = vrot.slane %v162, %v166
    %v169 = vmul.f32 %v160, %v167
    %v170 = vadd.f32 %v147, %v169
    %s171 = scalar_lea.vmem [#allocation2], 24
    %v172 = vld [vmem:[%s171] sm:$0xff]
    %v173 = vmul.f32 %v172, %v97
    %v174 = vsel %vm100, %v173, 0.0
    %175 = vadd.xlane.f32.xlu0 %v174
    %v176 = vpop.xlane.xlu0 %175
    %s177 = scalar_lea.vmem %s1, 24
    %v178 = vld [vmem:[%s177] sm:$0xff]
    %v179 = vmul.f32 %v178, %v109
    %v180 = vsel %vm112, %v179, 0.0
    %181 = vadd.xlane.f32.xlu0 %v180
    %v182 = vpop.xlane.xlu0 %181
    %v183 = vadd.f32 %v176, %v182
    %s184 = scalar_lea.vmem %s2, 3
    %v185 = vld [vmem:[%s184] sm:$0x1]
    %v187 = vlaneseq
    %v188 = vshrl.u32 %v187, 7
    %v189 = vsub.s32 0, %v188
    %v190 = vrot.slane %v185, %v189
    %v192 = vmul.f32 %v183, %v190
    %v193 = vadd.f32 %v170, %v192
    %vm194 = vcmask 31744
    %v195 = vsel %vm194, %v193, 0.0
    %196 = vadd.xlane.f32.xlu0 %v195
    %v197 = vpop.xlane.xlu0 %196
    %s198 = scalar_lea.vmem [#allocation4], 1
    %v199 = vld [vmem:[%s198] sm:$0x1]
    %s200 = scalar_lea.vmem [#allocation6], 1
    %v201 = vld [vmem:[%s200] sm:$0x1]
    %v203 = vlaneseq
    %v204 = vshrl.u32 %v203, 7
    %v205 = vsub.s32 0, %v204
    %v206 = vrot.slane %v199, %v205
    %v208 = vmul.f32 %v92, %v206
    %v209 = vsel %vm100, %v208, 0.0
    %210 = vadd.xlane.f32.xlu0 %v209
    %v211 = vpop.xlane.xlu0 %210
    %v213 = vlaneseq
    %v214 = vshrl.u32 %v213, 7
    %v215 = vsub.s32 0, %v214
    %v216 = vrot.slane %v201, %v215
    %v218 = vmul.f32 %v104, %v216
    %v219 = vsel %vm112, %v218, 0.0
    %220 = vadd.xlane.f32.xlu0 %v219
    %v221 = vpop.xlane.xlu0 %220
    %v222 = vadd.f32 %v211, %v221
    %v223 = vmul.f32 %v222, %v122
    %v224 = vmul.f32 %v126, %v206
    %v225 = vsel %vm100, %v224, 0.0
    %226 = vadd.xlane.f32.xlu0 %v225
    %v227 = vpop.xlane.xlu0 %226
    %v228 = vmul.f32 %v132, %v216
    %v229 = vsel %vm112, %v228, 0.0
    %230 = vadd.xlane.f32.xlu0 %v229
    %v231 = vpop.xlane.xlu0 %230
    %v232 = vadd.f32 %v227, %v231
    %v233 = vmul.f32 %v232, %v144
    %v234 = vadd.f32 %v223, %v233
    %v235 = vmul.f32 %v149, %v206
    %v236 = vsel %vm100, %v235, 0.0
    %237 = vadd.xlane.f32.xlu0 %v236
    %v238 = vpop.xlane.xlu0 %237
    %v239 = vmul.f32 %v155, %v216
    %v240 = vsel %vm112, %v239, 0.0
    %241 = vadd.xlane.f32.xlu0 %v240
    %v242 = vpop.xlane.xlu0 %241
    %v243 = vadd.f32 %v238, %v242
    %v244 = vmul.f32 %v243, %v167
    %v245 = vadd.f32 %v234, %v244
    %v246 = vmul.f32 %v172, %v206
    %v247 = vsel %vm100, %v246, 0.0
    %248 = vadd.xlane.f32.xlu0 %v247
    %v249 = vpop.xlane.xlu0 %248
    %v250 = vmul.f32 %v178, %v216
    %v251 = vsel %vm112, %v250, 0.0
    %252 = vadd.xlane.f32.xlu0 %v251
    %v253 = vpop.xlane.xlu0 %252
    %v254 = vadd.f32 %v249, %v253
    %v255 = vmul.f32 %v254, %v190
    %v256 = vadd.f32 %v245, %v255
    %v257 = vsel %vm194, %v256, 0.0
    %258 = vadd.xlane.f32.xlu0 %v257
    %v259 = vpop.xlane.xlu0 %258
    %v260 = vadd.f32 %v197, %v259
    %v261 = vmul.f32 %v260, 0.125
    %v262 = vsub.f32 %v193, %v261
    %v263 = vmul.f32 %v262, %v262
    %v264 = vsel %vm194, %v263, 0.0
    %265 = vadd.xlane.f32.xlu0 %v264
    %v266 = vpop.xlane.xlu0 %265
    %v267 = vsub.f32 %v256, %v261
    %v268 = vmul.f32 %v267, %v267
    %v269 = vsel %vm194, %v268, 0.0
    %270 = vadd.xlane.f32.xlu0 %v269
    %v271 = vpop.xlane.xlu0 %270
    %v272 = vadd.f32 %v266, %v271
    %v273 = vmul.f32 %v272, 0.125
    %v274 = vld [vmem:[#allocation7] sm:$0xff]
    %v275 = vadd.f32 %v273, 1e-05
    %v276 = vrsqrt.pop %v275
    %v277 = vmul.f32 %v274, %v276
    %v278 = vld [vmem:[#allocation9] sm:$0xff]
    %v279 = vmul.f32 %v261, %v277
    %v280 = vsub.f32 %v278, %v279
    %282 = vset.pattern.permute.xlu0 0
    %283 = vperm.xlu0 %282, %v277
    %v284 = vpop.permute.xlu0 %283
    %v286 = vmul.f32 %v193, %v284
    %288 = vset.pattern.permute.xlu0 0
    %289 = vperm.xlu0 %288, %v280
    %v290 = vpop.permute.xlu0 %289
    %v292 = vadd.f32 %v286, %v290
    %v293 = vmax.f32 %v292, 0.0
    %v294 = vpack.c.bf16 %v293, %v293
    %vm295 = vcmask 27648
    %296 = vst.msk [vmem:[%s7] sm:$0xf] %vm295, %v294
    %v297 = vmul.f32 %v256, %v284
    %v298 = vadd.f32 %v297, %v290
    %v299 = vmax.f32 %v298, 0.0
    %v300 = vpack.c.bf16 %v299, %v299
    %s301 = scalar_lea.vmem %s7, 4
    %302 = vst.msk [vmem:[%s301] sm:$0xf] %vm295, %v300
    // Predicated region
    $region50: #{_lambda_.3} parent=1 // pred_check
      _
    $region51: #{_lambda_.3} parent=1 // pred_check_branch
      %304 = sbr.rel (0) target = $region53
    $region52: #{_lambda_.3} parent=1 // pred_region
      _
    $region53: #{_lambda_.3} parent=1 // pred_fallthru
      _
    // Predicated region
    $region54: #{_lambda_.3} parent=1 // pred_check
      _
    $region55: #{_lambda_.3} parent=1 // pred_check_branch
      %306 = sbr.rel (0) target = $region57
    $region56: #{_lambda_.3} parent=1 // pred_region
      _
    $region57: #{_lambda_.3} parent=1 // pred_fallthru
      _
    %307 = vsyncpa [#allocation3], 1
    %308 = vsyncpa [#allocation5], 1
    %309 = vsyncpa [#allocation8], 1

// kernel: _lambda_.5
$region0: #{_lambda_.5}
  #allocation0 [shape = 'u32[]', space=smem, size = 0x4, offset = 0x4, fixed_abs, tag = 'smem constant byte address 0x4 - core index']
  #allocation1 [shape = 'u32[144,128]{1,0:T(1,128)}', space=vmem, size = 0x12000, scoped, tag = 'internal scratch']
  %s0 = inlined_call_operand.hbm [shape: bf16[16,3,4], index: 0, kind: input, shape index: {}]
  %s1 = inlined_call_operand.hbm [shape: bf16[16,3,4], index: 1, kind: input, shape index: {}]
  %s2 = inlined_call_operand.vmem [shape: f32[16,16,64], index: 2, kind: input, shape index: {}]
  %s3 = inlined_call_operand.vmem [shape: bf16[2,4,16], index: 3, kind: input, shape index: {}]
  %s4 = inlined_call_operand.vmem [shape: f32[2,4,16], index: 4, kind: input, shape index: {}]
  %s5 = inlined_call_operand.vmem [shape: f32[3,1], index: 5, kind: input, shape index: {}]
  %s6 = inlined_call_operand.vmem [shape: f32[2,3,64], index: 6, kind: output, shape index: {}]
  %s7 = sld [smem:[#allocation0]]
  $region65: #{_lambda_.5} parent=0
    _
  %s9 = ssub.s32 1, %s7
  %s10 = scalar_select 0, %s9, %s7
  $region1: #{_lambda_.5} parent=0
    #allocation2 [shape = 'u8[16384]{0}', space=vmem, size = 0x4000, scoped, tag = 'input window, operand 0, single buffered']
    #allocation3 [shape = 's32[2]{0}', space=sflag, size = 0x8, scoped, tag = 'scoped memory for _lambda_.5']
    #allocation4 [shape = 'u8[16384]{0}', space=vmem, size = 0x4000, scoped, tag = 'input window, operand 1, single buffered']
    #allocation5 [shape = 's32[1]{0}', space=sflag, size = 0x4, scoped, tag = 'scoped memory for _lambda_.5']
    %11 = vsyncpa [#allocation3], 0
    %12 = vsyncpa [#allocation5], 0
    loop: start=0, step=1, limit=4
    $region2: #{_lambda_.5} parent=1 // loop_pre_header
      _
    $region3: #{_lambda_.5} parent=1 // loop_header
      %s14 = sphi 0, %s18
      %p15 = scmp.ge.s32.totalorder %s14, 4
      %s22 = sphi 0, %s22
      %s24 = sphi 0, %s22
      %s25 = sphi 0, %s24
      %s39 = sphi 0, %s25
      %s43 = sphi 0, %s43
      %s45 = sphi 0, %s43
      %s46 = sphi 0, %s45
      %s60 = sphi 0, %s46
      %s64 = sphi 0, %s64
      %s66 = sphi 0, %s64
      %s67 = sphi 0, %s66
      %s81 = sphi 0, %s67
      %s87 = sphi 0, %s89
      %s90 = sphi 0, %s87
      %s91 = sphi 0, %s90
      %s107 = sphi 0, %s91
      %s113 = sphi 0, %s115
      %s116 = sphi 0, %s113
      %s117 = sphi 0, %s116
      %s133 = sphi 0, %s117
      %s137 = sphi 0, %s137
      %s139 = sphi 0, %s137
      %s140 = sphi 0, %s139
      %s154 = sphi 0, %s140
      %s160 = sphi 0, %s162
      %s163 = sphi 0, %s160
      %s164 = sphi 0, %s163
      %s180 = sphi 0, %s164
    $region4: #{_lambda_.5} parent=1 // loop_header_branch
      %17 = sbr.rel (%p15) target = $region8
    $region5: #{_lambda_.5} parent=1 // loop_body
      %s19 = ssub.s32 %s14, 1
      %s20 = ssub.s32 %s14, 2
      %s21 = sadd.s32 %s14, 1
      %s23 = sadd.s32 %s22, 1
      %p26 = scmp.eq.s32.totalorder %s14, 1
      %p27 = scmp.ne.s32.totalorder %s22, %s24
      %p28 = scmp.eq.s32.totalorder %s14, 0
      %p29 = por %p27, %p28
      %p30 = scmp.ne.s32.totalorder %s22, %s24
      %p31 = scmp.eq.s32.totalorder %s19, 1
      %p32 = por %p30, %p31
      %p33 = scmp.ne.s32.totalorder %s24, %s25
      %p34 = scmp.eq.s32.totalorder %s19, 0
      %p35 = por %p33, %p34
      %p36 = scmp.ne.s32.totalorder %s24, %s25
      %p37 = scmp.eq.s32.totalorder %s20, 1
      %p38 = por %p36, %p37
      %p40 = scmp.ne.s32.totalorder %s25, %s39
      %p41 = scmp.eq.s32.totalorder %s20, 0
      %p42 = por %p40, %p41
      %s44 = sadd.s32 %s43, 1
      %p47 = scmp.eq.s32.totalorder %s14, 1
      %p48 = scmp.ne.s32.totalorder %s43, %s45
      %p49 = scmp.eq.s32.totalorder %s14, 0
      %p50 = por %p48, %p49
      %p51 = scmp.ne.s32.totalorder %s43, %s45
      %p52 = scmp.eq.s32.totalorder %s19, 1
      %p53 = por %p51, %p52
      %p54 = scmp.ne.s32.totalorder %s45, %s46
      %p55 = scmp.eq.s32.totalorder %s19, 0
      %p56 = por %p54, %p55
      %p57 = scmp.ne.s32.totalorder %s45, %s46
      %p58 = scmp.eq.s32.totalorder %s20, 1
      %p59 = por %p57, %p58
      %p61 = scmp.ne.s32.totalorder %s46, %s60
      %p62 = scmp.eq.s32.totalorder %s20, 0
      %p63 = por %p61, %p62
      %s65 = sadd.s32 %s64, 1
      %p68 = scmp.eq.s32.totalorder %s14, 1
      %p69 = scmp.ne.s32.totalorder %s64, %s66
      %p70 = scmp.eq.s32.totalorder %s14, 0
      %p71 = por %p69, %p70
      %p72 = scmp.ne.s32.totalorder %s64, %s66
      %p73 = scmp.eq.s32.totalorder %s19, 1
      %p74 = por %p72, %p73
      %p75 = scmp.ne.s32.totalorder %s66, %s67
      %p76 = scmp.eq.s32.totalorder %s19, 0
      %p77 = por %p75, %p76
      %p78 = scmp.ne.s32.totalorder %s66, %s67
      %p79 = scmp.eq.s32.totalorder %s20, 1
      %p80 = por %p78, %p79
      %p82 = scmp.ne.s32.totalorder %s67, %s81
      %p83 = scmp.eq.s32.totalorder %s20, 0
      %p84 = por %p82, %p83
      %s85 = ssub.s32 %s14, %s21
      %p86 = scmp.eq.s32.totalorder %s85, 0
      %s88 = sadd.s32 %s87, 1
      %s89 = scalar_select %p86, %s87, %s88
      %p92 = pneg %p86
      %p93 = scmp.eq.s32.totalorder %s14, 1
      %p94 = por %p92, %p93
      %p95 = scmp.ne.s32.totalorder %s87, %s90
      %p96 = scmp.eq.s32.totalorder %s14, 0
      %p97 = por %p95, %p96
      %p98 = scmp.ne.s32.totalorder %s87, %s90
      %p99 = scmp.eq.s32.totalorder %s19, 1
      %p100 = por %p98, %p99
      %p101 = scmp.ne.s32.totalorder %s90, %s91
      %p102 = scmp.eq.s32.totalorder %s19, 0
      %p103 = por %p101, %p102
      %p104 = scmp.ne.s32.totalorder %s90, %s91
      %p105 = scmp.eq.s32.totalorder %s20, 1
      %p106 = por %p104, %p105
      %p108 = scmp.ne.s32.totalorder %s91, %s107
      %p109 = scmp.eq.s32.totalorder %s20, 0
      %p110 = por %p108, %p109
      %s111 = ssub.s32 %s14, %s21
      %p112 = scmp.eq.s32.totalorder %s111, 0
      %s114 = sadd.s32 %s113, 1
      %s115 = scalar_select %p112, %s113, %s114
      %p118 = pneg %p112
      %p119 = scmp.eq.s32.totalorder %s14, 1
      %p120 = por %p118, %p119
      %p121 = scmp.ne.s32.totalorder %s113, %s116
      %p122 = scmp.eq.s32.totalorder %s14, 0
      %p123 = por %p121, %p122
      %p124 = scmp.ne.s32.totalorder %s113, %s116
      %p125 = scmp.eq.s32.totalorder %s19, 1
      %p126 = por %p124, %p125
      %p127 = scmp.ne.s32.totalorder %s116, %s117
      %p128 = scmp.eq.s32.totalorder %s19, 0
      %p129 = por %p127, %p128
      %p130 = scmp.ne.s32.totalorder %s116, %s117
      %p131 = scmp.eq.s32.totalorder %s20, 1
      %p132 = por %p130, %p131
      %p134 = scmp.ne.s32.totalorder %s117, %s133
      %p135 = scmp.eq.s32.totalorder %s20, 0
      %p136 = por %p134, %p135
      %s138 = sadd.s32 %s137, 1
      %p141 = scmp.eq.s32.totalorder %s14, 1
      %p142 = scmp.ne.s32.totalorder %s137, %s139
      %p143 = scmp.eq.s32.totalorder %s14, 0
      %p144 = por %p142, %p143
      %p145 = scmp.ne.s32.totalorder %s137, %s139
      %p146 = scmp.eq.s32.totalorder %s19, 1
      %p147 = por %p145, %p146
      %p148 = scmp.ne.s32.totalorder %s139, %s140
      %p149 = scmp.eq.s32.totalorder %s19, 0
      %p150 = por %p148, %p149
      %p151 = scmp.ne.s32.totalorder %s139, %s140
      %p152 = scmp.eq.s32.totalorder %s20, 1
      %p153 = por %p151, %p152
      %p155 = scmp.ne.s32.totalorder %s140, %s154
      %p156 = scmp.eq.s32.totalorder %s20, 0
      %p157 = por %p155, %p156
      %s158 = ssub.s32 %s14, %s21
      %p159 = scmp.eq.s32.totalorder %s158, 0
      %s161 = sadd.s32 %s160, 1
      %s162 = scalar_select %p159, %s160, %s161
      %p165 = pneg %p159
      %p166 = scmp.eq.s32.totalorder %s14, 1
      %p167 = por %p165, %p166
      %p168 = scmp.ne.s32.totalorder %s160, %s163
      %p169 = scmp.eq.s32.totalorder %s14, 0
      %p170 = por %p168, %p169
      %p171 = scmp.ne.s32.totalorder %s160, %s163
      %p172 = scmp.eq.s32.totalorder %s19, 1
      %p173 = por %p171, %p172
      %p174 = scmp.ne.s32.totalorder %s163, %s164
      %p175 = scmp.eq.s32.totalorder %s19, 0
      %p176 = por %p174, %p175
      %p177 = scmp.ne.s32.totalorder %s163, %s164
      %p178 = scmp.eq.s32.totalorder %s20, 1
      %p179 = por %p177, %p178
      %p181 = scmp.ne.s32.totalorder %s164, %s180
      %p182 = scmp.eq.s32.totalorder %s20, 0
      %p183 = por %p181, %p182
      %p184 = scmp.le.s32.totalorder 1, %s14
      %p185 = scmp.lt.s32.totalorder %s14, 3
      %p186 = pnand %p184, %p185
      %p187 = pneg %p186
      // Predicated region
      $region9: #{_lambda_.5} parent=5 // pred_check
        _
      $region10: #{_lambda_.5} parent=5 // pred_check_branch
        %189 = sbr.rel (%p186) target = $region12
      $region11: #{_lambda_.5} parent=5 // pred_region
        %s190 = ssub.s32 %s14, 1
        // Predicated region
        $region13: #{_lambda_.5} parent=11 // pred_check
          %p191 = pneg %p35
        $region14: #{_lambda_.5} parent=11 // pred_check_branch
          %193 = sbr.rel (%p191) target = $region16
        $region15: #{_lambda_.5} parent=11 // pred_region
          %s195 = ssub.s32 512, 512
          %196 = vsyncadd [#allocation3], %s195
          %s197 = sshll.u32 [#allocation2], 4
          %s198 = int_to_ptr.vmem [resolvable:$true] %s197
          %203 = dma.hbm_to_vmem [thread:$0]  %s0, 512, %s198, [#allocation3], 32, 32, 2
        $region16: #{_lambda_.5} parent=11 // pred_fallthru
          _
        // Predicated region
        $region17: #{_lambda_.5} parent=11 // pred_check
          %p204 = pneg %p56
        $region18: #{_lambda_.5} parent=11 // pred_check_branch
          %206 = sbr.rel (%p204) target = $region20
        $region19: #{_lambda_.5} parent=11 // pred_region
          %s208 = ssub.s32 512, 512
          %209 = vsyncadd [#allocation5], %s208
          %s210 = sshll.u32 [#allocation4], 4
          %s211 = int_to_ptr.vmem [resolvable:$true] %s210
          %216 = dma.hbm_to_vmem [thread:$0]  %s1, 512, %s211, [#allocation5], 32, 32, 2
        $region20: #{_lambda_.5} parent=11 // pred_fallthru
          _
        // Predicated region
        $region21: #{_lambda_.5} parent=11 // pred_check
          %p217 = pneg %p77
        $region22: #{_lambda_.5} parent=11 // pred_check_branch
          %219 = sbr.rel (%p217) target = $region24
        $region23: #{_lambda_.5} parent=11 // pred_region
          _
        $region24: #{_lambda_.5} parent=11 // pred_fallthru
          _
        // Predicated region
        $region25: #{_lambda_.5} parent=11 // pred_check
          %p220 = pneg %p150
        $region26: #{_lambda_.5} parent=11 // pred_check_branch
          %222 = sbr.rel (%p220) target = $region28
        $region27: #{_lambda_.5} parent=11 // pred_region
          _
        $region28: #{_lambda_.5} parent=11 // pred_fallthru
          _
      $region12: #{_lambda_.5} parent=5 // pred_fallthru
        _
      %p223 = scmp.lt.s32.totalorder %s14, 2
      // Predicated region
      $region29: #{_lambda_.5} parent=5 // pred_check
        %p224 = pneg %p223
      $region30: #{_lambda_.5} parent=5 // pred_check_branch
        %226 = sbr.rel (%p224) target = $region32
      $region31: #{_lambda_.5} parent=5 // pred_region
        // Predicated region
        $region33: #{_lambda_.5} parent=31 // pred_check
          %p227 = pneg %p97
        $region34: #{_lambda_.5} parent=31 // pred_check_branch
          %229 = sbr.rel (%p227) target = $region36
        $region35: #{_lambda_.5} parent=31 // pred_region
          %p230 = scmp.lt.s32.totalorder %s14, 1
          %s231 = scalar_select %p230, %s14, 1
          %s232 = smul.addr %s231, 2
          %s233 = scalar_lea.vmem %s3, %s232
        $region36: #{_lambda_.5} parent=31 // pred_fallthru
          _
        // Predicated region
        $region37: #{_lambda_.5} parent=31 // pred_check
          %p234 = pneg %p123
        $region38: #{_lambda_.5} parent=31 // pred_check_branch
          %236 = sbr.rel (%p234) target = $region40
        $region39: #{_lambda_.5} parent=31 // pred_region
          %p237 = scmp.lt.s32.totalorder %s14, 1
          %s238 = scalar_select %p237, %s14, 1
          %s239 = smul.addr %s238, 4
          %s240 = scalar_lea.vmem %s4, %s239
        $region40: #{_lambda_.5} parent=31 // pred_fallthru
          _
      $region32: #{_lambda_.5} parent=5 // pred_fallthru
        _
      %p241 = scmp.le.s32.totalorder 1, %s14
      %p242 = scmp.lt.s32.totalorder %s14, 3
      %p243 = pnand %p241, %p242
      %p244 = pneg %p243
      // Predicated region
      $region41: #{_lambda_.5} parent=5 // pred_check
        _
      $region42: #{_lambda_.5} parent=5 // pred_check_branch
        %246 = sbr.rel (%p243) target = $region44
      $region43: #{_lambda_.5} parent=5 // pred_region
        %s247 = ssub.s32 %s14, 1
        // Predicated region
        $region45: #{_lambda_.5} parent=43 // pred_check
          %p248 = pneg %p35
        $region46: #{_lambda_.5} parent=43 // pred_check_branch
          %250 = sbr.rel (%p248) target = $region48
        $region47: #{_lambda_.5} parent=43 // pred_region
          %251 = dma.done [#allocation3], 512
        $region48: #{_lambda_.5} parent=43 // pred_fallthru
          _
        // Predicated region
        $region49: #{_lambda_.5} parent=43 // pred_check
          %p252 = pneg %p56
        $region50: #{_lambda_.5} parent=43 // pred_check_branch
          %254 = sbr.rel (%p252) target = $region52
        $region51: #{_lambda_.5} parent=43 // pred_region
          %255 = dma.done [#allocation5], 512
        $region52: #{_lambda_.5} parent=43 // pred_fallthru
          _
        %p256 = pneg %p35
        %p257 = pneg %p32
        %p258 = pneg %p56
        %p259 = pneg %p53
        %p260 = pneg %p77
        %p261 = pneg %p74
        %p262 = scmp.lt.s32.totalorder %s19, 1
        %s263 = scalar_select %p262, %s19, 1
        %s264 = smul.addr %s263, 2
        %s265 = scalar_lea.vmem %s3, %s264
        %p266 = pneg %p103
        %p267 = pneg %p100
        %p268 = scmp.lt.s32.totalorder %s19, 1
        %s269 = scalar_select %p268, %s19, 1
        %s270 = smul.addr %s269, 4
        %s271 = scalar_lea.vmem %s4, %s270
        %p272 = pneg %p129
        %p273 = pneg %p126
        %p274 = pneg %p150
        %p275 = pneg %p147
        %p276 = pneg %p176
        %p277 = pneg %p173
        %p278 = scmp.lt.s32.totalorder %s19, 1
        %s279 = scalar_select %p278, %s19, 1
        %s280 = smul.addr %s279, 4
        %s281 = scalar_lea.vmem %s6, %s280
        %p282 = scmp.lt.s32.totalorder %s19, 1
        %s283 = scalar_select %p282, %s19, 1
        %s284 = smul.addr %s283, 2
        %s285 = scalar_lea.vmem %s3, %s284
        %p286 = scmp.lt.s32.totalorder %s19, 1
        %s287 = scalar_select %p286, %s19, 1
        %s288 = smul.addr %s287, 4
        %s289 = scalar_lea.vmem %s4, %s288
        %p290 = scmp.lt.s32.totalorder %s19, 1
        %s291 = scalar_select %p290, %s19, 1
        %s292 = smul.addr %s291, 4
        %s293 = scalar_lea.vmem %s6, %s292
        %v295 = vld [vmem:[%s285] sm:$0x3]
        %v296 = vld [vmem:[%s289] sm:$0xf]
        %v297 = vpack.c.bf16 %v296, %v296
        %v298 = vld [vmem:[#allocation2] sm:$0x3]
        %v299 = vld [vmem:[#allocation4] sm:$0x3]
        %vm300 = vcmask 31744
        %v302 = vsel %vm300, %v299, 0
        %vm304 = vcmask 1041408
        %v306 = vsel %vm304, %v297, 0
        %308 = vmatprep.subr.bf16.mxu0 0
        %309 = vmatpush1.bf16.msra.mxu0 0
        %310 = vmatprep.subr.bf16.mxu0 0
        %311 = vmatpush1.bf16.msra.mxu0 0
        %312 = vmatprep.subr.bf16.mxu0 0
        %313 = vmatpush1.bf16.msra.mxu0 0
        %314 = vmatprep.subr.bf16.mxu0 0
        %315 = vmatpush1.bf16.msra.mxu0 0
        %316 = vmatprep.subr.bf16.mxu0 0
        %317 = vmatpush1.bf16.msra.mxu0 0
        %318 = vmatprep.subr.bf16.mxu0 0
        %319 = vmatpush1.bf16.msra.mxu0 0
        %320 = vmatprep.subr.bf16.mxu0 0
        %321 = vmatpush1.bf16.msra.mxu0 0
        %322 = vmatprep.subr.bf16.mxu0 0
        %323 = vmatpush1.bf16.msra.mxu0 %v306
        %324 = vmatprep.subr.bf16.mxu0 0
        %325 = vmatpush2.bf16.msra.mxu0 0
        %326 = vmatprep.subr.bf16.mxu0 0
        %327 = vmatpush2.bf16.msra.mxu0 0
        %328 = vmatprep.subr.bf16.mxu0 0
        %329 = vmatpush2.bf16.msra.mxu0 0
        %330 = vmatprep.subr.bf16.mxu0 0
        %331 = vmatpush2.bf16.msra.mxu0 0
        %332 = vmatprep.subr.bf16.mxu0 0
        %333 = vmatpush2.bf16.msra.mxu0 0
        %334 = vmatprep.subr.bf16.mxu0 0
        %335 = vmatpush2.bf16.msra.mxu0 0
        %336 = vmatprep.subr.bf16.mxu0 0
        %337 = vmatpush2.bf16.msra.mxu0 0
        %338 = vmatprep.subr.bf16.mxu0 0
        %339 = vmatpush2.bf16.msra.mxu0 0
        %340 = vmatprep.mubr.bf16.mxu0 0
        %341 = vmatmul.mubr.bf16.gmra.mxu0 %v302
        %v342 = vpop.f32.mrf.mxu0
        %v343 = vadd.f32 0.0, %v342
        %v344 = vpop.f32.mrf.mxu0
        %v345 = vpop.f32.mrf.mxu0
        %v346 = vpop.f32.mrf.mxu0
        %347 = vdwg.mxu0
        %v349 = vsel %vm300, %v298, 0
        %v352 = vsel %vm304, %v295, 0
        %354 = vmatprep.subr.bf16.mxu0 0
        %355 = vmatpush1.bf16.msra.mxu0 0
        %356 = vmatprep.subr.bf16.mxu0 0
        %357 = vmatpush1.bf16.msra.mxu0 0
        %358 = vmatprep.subr.bf16.mxu0 0
        %359 = vmatpush1.bf16.msra.mxu0 0
        %360 = vmatprep.subr.bf16.mxu0 0
        %361 = vmatpush1.bf16.msra.mxu0 0
        %362 = vmatprep.subr.bf16.mxu0 0
        %363 = vmatpush1.bf16.msra.mxu0 0
        %364 = vmatprep.subr.bf16.mxu0 0
        %365 = vmatpush1.bf16.msra.mxu0 0
        %366 = vmatprep.subr.bf16.mxu0 0
        %367 = vmatpush1.bf16.msra.mxu0 0
        %368 = vmatprep.subr.bf16.mxu0 0
        %369 = vmatpush1.bf16.msra.mxu0 %v352
        %370 = vmatprep.subr.bf16.mxu0 0
        %371 = vmatpush2.bf16.msra.mxu0 0
        %372 = vmatprep.subr.bf16.mxu0 0
        %373 = vmatpush2.bf16.msra.mxu0 0
        %374 = vmatprep.subr.bf16.mxu0 0
        %375 = vmatpush2.bf16.msra.mxu0 0
        %376 = vmatprep.subr.bf16.mxu0 0
        %377 = vmatpush2.bf16.msra.mxu0 0
        %378 = vmatprep.subr.bf16.mxu0 0
        %379 = vmatpush2.bf16.msra.mxu0 0
        %380 = vmatprep.subr.bf16.mxu0 0
        %381 = vmatpush2.bf16.msra.mxu0 0
        %382 = vmatprep.subr.bf16.mxu0 0
        %383 = vmatpush2.bf16.msra.mxu0 0
        %384 = vmatprep.subr.bf16.mxu0 0
        %385 = vmatpush2.bf16.msra.mxu0 0
        %386 = vmatprep.mubr.bf16.mxu0 0
        %387 = vmatmul.mubr.bf16.gmra.mxu0 %v349
        %v388 = vpop.f32.mrf.mxu0
        %v389 = vadd.f32 %v343, %v388
        %v390 = vpop.f32.mrf.mxu0
        %v391 = vpop.f32.mrf.mxu0
        %v392 = vpop.f32.mrf.mxu0
        %393 = vdwg.mxu0
        %v394 = vld [vmem:[%s2] sm:$0xff]
        %v395 = vld [vmem:[%s2 + $0x8] sm:$0xff]
        %s396 = scalar_lea.vmem [#allocation2], 2
        %v397 = vld [vmem:[%s396] sm:$0x3]
        %s398 = scalar_lea.vmem [#allocation4], 2
        %v399 = vld [vmem:[%s398] sm:$0x3]
        %v401 = vsel %vm300, %v399, 0
        %403 = vmatprep.subr.bf16.mxu0 0
        %404 = vmatpush1.bf16.msra.mxu0 0
        %405 = vmatprep.subr.bf16.mxu0 0
        %406 = vmatpush1.bf16.msra.mxu0 0
        %407 = vmatprep.subr.bf16.mxu0 0
        %408 = vmatpush1.bf16.msra.mxu0 0
        %409 = vmatprep.subr.bf16.mxu0 0
        %410 = vmatpush1.bf16.msra.mxu0 0
        %411 = vmatprep.subr.bf16.mxu0 0
        %412 = vmatpush1.bf16.msra.mxu0 0
        %413 = vmatprep.subr.bf16.mxu0 0
        %414 = vmatpush1.bf16.msra.mxu0 0
        %415 = vmatprep.subr.bf16.mxu0 0
        %416 = vmatpush1.bf16.msra.mxu0 0
        %417 = vmatprep.subr.bf16.mxu0 0
        %418 = vmatpush1.bf16.msra.mxu0 %v306
        %419 = vmatprep.subr.bf16.mxu0 0
        %420 = vmatpush2.bf16.msra.mxu0 0
        %421 = vmatprep.subr.bf16.mxu0 0
        %422 = vmatpush2.bf16.msra.mxu0 0
        %423 = vmatprep.subr.bf16.mxu0 0
        %424 = vmatpush2.bf16.msra.mxu0 0
        %425 = vmatprep.subr.bf16.mxu0 0
        %426 = vmatpush2.bf16.msra.mxu0 0
        %427 = vmatprep.subr.bf16.mxu0 0
        %428 = vmatpush2.bf16.msra.mxu0 0
        %429 = vmatprep.subr.bf16.mxu0 0
        %430 = vmatpush2.bf16.msra.mxu0 0
        %431 = vmatprep.subr.bf16.mxu0 0
        %432 = vmatpush2.bf16.msra.mxu0 0
        %433 = vmatprep.subr.bf16.mxu0 0
        %434 = vmatpush2.bf16.msra.mxu0 0
        %435 = vmatprep.mubr.bf16.mxu0 0
        %436 = vmatmul.mubr.bf16.gmra.mxu0 %v401
        %v437 = vpop.f32.mrf.mxu0
        %v438 = vadd.f32 0.0, %v437
        %v439 = vpop.f32.mrf.mxu0
        %v440 = vpop.f32.mrf.mxu0
        %v441 = vpop.f32.mrf.mxu0
        %442 = vdwg.mxu0
        %v444 = vsel %vm300, %v397, 0
        %446 = vmatprep.subr.bf16.mxu0 0
        %447 = vmatpush1.bf16.msra.mxu0 0
        %448 = vmatprep.subr.bf16.mxu0 0
        %449 = vmatpush1.bf16.msra.mxu0 0
        %450 = vmatprep.subr.bf16.mxu0 0
        %451 = vmatpush1.bf16.msra.mxu0 0
        %452 = vmatprep.subr.bf16.mxu0 0
        %453 = vmatpush1.bf16.msra.mxu0 0
        %454 = vmatprep.subr.bf16.mxu0 0
        %455 = vmatpush1.bf16.msra.mxu0 0
        %456 = vmatprep.subr.bf16.mxu0 0
        %457 = vmatpush1.bf16.msra.mxu0 0
        %458 = vmatprep.subr.bf16.mxu0 0
        %459 = vmatpush1.bf16.msra.mxu0 0
        %460 = vmatprep.subr.bf16.mxu0 0
        %461 = vmatpush1.bf16.msra.mxu0 %v352
        %462 = vmatprep.subr.bf16.mxu0 0
        %463 = vmatpush2.bf16.msra.mxu0 0
        %464 = vmatprep.subr.bf16.mxu0 0
        %465 = vmatpush2.bf16.msra.mxu0 0
        %466 = vmatprep.subr.bf16.mxu0 0
        %467 = vmatpush2.bf16.msra.mxu0 0
        %468 = vmatprep.subr.bf16.mxu0 0
        %469 = vmatpush2.bf16.msra.mxu0 0
        %470 = vmatprep.subr.bf16.mxu0 0
        %471 = vmatpush2.bf16.msra.mxu0 0
        %472 = vmatprep.subr.bf16.mxu0 0
        %473 = vmatpush2.bf16.msra.mxu0 0
        %474 = vmatprep.subr.bf16.mxu0 0
        %475 = vmatpush2.bf16.msra.mxu0 0
        %476 = vmatprep.subr.bf16.mxu0 0
        %477 = vmatpush2.bf16.msra.mxu0 0
        %478 = vmatprep.mubr.bf16.mxu0 0
        %479 = vmatmul.mubr.bf16.gmra.mxu0 %v444
        %v480 = vpop.f32.mrf.mxu0
        %v481 = vadd.f32 %v438, %v480
        %v482 = vpop.f32.mrf.mxu0
        %v483 = vpop.f32.mrf.mxu0
        %v484 = vpop.f32.mrf.mxu0
        %485 = vdwg.mxu0
        %s486 = scalar_lea.vmem %s2, 16
        %v487 = vld [vmem:[%s486] sm:$0xff]
        %v488 = vld [vmem:[%s486 + $0x8] sm:$0xff]
        %vm489 = vcmask 130048
        %v491 = vsel %vm489, %v481, 0
        %493 = vmatprep.subr.mxu0 0.0
        %494 = vmatpush1.msra.mxu0 0.0
        %495 = vmatprep.subr.mxu0 0.0
        %496 = vmatpush1.msra.mxu0 0.0
        %497 = vmatprep.subr.mxu0 0.0
        %498 = vmatpush1.msra.mxu0 0.0
        %499 = vmatprep.subr.mxu0 0.0
        %500 = vmatpush1.msra.mxu0 0.0
        %501 = vmatprep.subr.mxu0 0.0
        %502 = vmatpush1.msra.mxu0 0.0
        %503 = vmatprep.subr.mxu0 0.0
        %504 = vmatpush1.msra.mxu0 0.0
        %505 = vmatprep.subr.mxu0 0.0
        %506 = vmatpush1.msra.mxu0 0.0
        %507 = vmatprep.subr.mxu0 0.0
        %508 = vmatpush1.msra.mxu0 0.0
        %509 = vmatprep.subr.mxu0 0.0
        %510 = vmatpush1.msra.mxu0 0.0
        %511 = vmatprep.subr.mxu0 0.0
        %512 = vmatpush1.msra.mxu0 0.0
        %513 = vmatprep.subr.mxu0 0.0
        %514 = vmatpush1.msra.mxu0 0.0
        %515 = vmatprep.subr.mxu0 0.0
        %516 = vmatpush1.msra.mxu0 0.0
        %517 = vmatprep.subr.mxu0 0.0
        %518 = vmatpush1.msra.mxu0 0.0
        %519 = vmatprep.subr.mxu0 0.0
        %520 = vmatpush1.msra.mxu0 0.0
        %521 = vmatprep.subr.mxu0 0.0
        %522 = vmatpush1.msra.mxu0 %v488
        %523 = vmatprep.subr.mxu0 0.0
        %524 = vmatpush1.msra.mxu0 %v487
        %525 = vmatprep.subr.mxu0 0.0
        %526 = vmatpush2.msra.mxu0 0.0
        %527 = vmatprep.subr.mxu0 0.0
        %528 = vmatpush2.msra.mxu0 0.0
        %529 = vmatprep.subr.mxu0 0.0
        %530 = vmatpush2.msra.mxu0 0.0
        %531 = vmatprep.subr.mxu0 0.0
        %532 = vmatpush2.msra.mxu0 0.0
        %533 = vmatprep.subr.mxu0 0.0
        %534 = vmatpush2.msra.mxu0 0.0
        %535 = vmatprep.subr.mxu0 0.0
        %536 = vmatpush2.msra.mxu0 0.0
        %537 = vmatprep.subr.mxu0 0.0
        %538 = vmatpush2.msra.mxu0 0.0
        %539 = vmatprep.subr.mxu0 0.0
        %540 = vmatpush2.msra.mxu0 0.0
        %541 = vmatprep.subr.mxu0 0.0
        %542 = vmatpush2.msra.mxu0 0.0
        %543 = vmatprep.subr.mxu0 0.0
        %544 = vmatpush2.msra.mxu0 0.0
        %545 = vmatprep.subr.mxu0 0.0
        %546 = vmatpush2.msra.mxu0 0.0
        %547 = vmatprep.subr.mxu0 0.0
        %548 = vmatpush2.msra.mxu0 0.0
        %549 = vmatprep.subr.mxu0 0.0
        %550 = vmatpush2.msra.mxu0 0.0
        %551 = vmatprep.subr.mxu0 0.0
        %552 = vmatpush2.msra.mxu0 0.0
        %553 = vmatprep.subr.mxu0 0.0
        %554 = vmatpush2.msra.mxu0 0.0
        %555 = vmatprep.subr.mxu0 0.0
        %556 = vmatpush2.msra.mxu0 0.0
        %557 = vmatprep.mubr.f32.mxu0 0.0
        %558 = vmatmul.mubr.f32.gmra.mxu0 %v491
        %v559 = vpop.f32.mrf.mxu0
        %v560 = vadd.f32 0.0, %v559
        %v561 = vpop.f32.mrf.mxu0
        %562 = vdwg.mxu0
        %v564 = vsel %vm489, %v389, 0
        %566 = vmatprep.subr.mxu0 0.0
        %567 = vmatpush1.msra.mxu0 0.0
        %568 = vmatprep.subr.mxu0 0.0
        %569 = vmatpush1.msra.mxu0 0.0
        %570 = vmatprep.subr.mxu0 0.0
        %571 = vmatpush1.msra.mxu0 0.0
        %572 = vmatprep.subr.mxu0 0.0
        %573 = vmatpush1.msra.mxu0 0.0
        %574 = vmatprep.subr.mxu0 0.0
        %575 = vmatpush1.msra.mxu0 0.0
        %576 = vmatprep.subr.mxu0 0.0
        %577 = vmatpush1.msra.mxu0 0.0
        %578 = vmatprep.subr.mxu0 0.0
        %579 = vmatpush1.msra.mxu0 0.0
        %580 = vmatprep.subr.mxu0 0.0
        %581 = vmatpush1.msra.mxu0 0.0
        %582 = vmatprep.subr.mxu0 0.0
        %583 = vmatpush1.msra.mxu0 0.0
        %584 = vmatprep.subr.mxu0 0.0
        %585 = vmatpush1.msra.mxu0 0.0
        %586 = vmatprep.subr.mxu0 0.0
        %587 = vmatpush1.msra.mxu0 0.0
        %588 = vmatprep.subr.mxu0 0.0
        %589 = vmatpush1.msra.mxu0 0.0
        %590 = vmatprep.subr.mxu0 0.0
        %591 = vmatpush1.msra.mxu0 0.0
        %592 = vmatprep.subr.mxu0 0.0
        %593 = vmatpush1.msra.mxu0 0.0
        %594 = vmatprep.subr.mxu0 0.0
        %595 = vmatpush1.msra.mxu0 %v395
        %596 = vmatprep.subr.mxu0 0.0
        %597 = vmatpush1.msra.mxu0 %v394
        %598 = vmatprep.subr.mxu0 0.0
        %599 = vmatpush2.msra.mxu0 0.0
        %600 = vmatprep.subr.mxu0 0.0
        %601 = vmatpush2.msra.mxu0 0.0
        %602 = vmatprep.subr.mxu0 0.0
        %603 = vmatpush2.msra.mxu0 0.0
        %604 = vmatprep.subr.mxu0 0.0
        %605 = vmatpush2.msra.mxu0 0.0
        %606 = vmatprep.subr.mxu0 0.0
        %607 = vmatpush2.msra.mxu0 0.0
        %608 = vmatprep.subr.mxu0 0.0
        %609 = vmatpush2.msra.mxu0 0.0
        %610 = vmatprep.subr.mxu0 0.0
        %611 = vmatpush2.msra.mxu0 0.0
        %612 = vmatprep.subr.mxu0 0.0
        %613 = vmatpush2.msra.mxu0 0.0
        %614 = vmatprep.subr.mxu0 0.0
        %615 = vmatpush2.msra.mxu0 0.0
        %616 = vmatprep.subr.mxu0 0.0
        %617 = vmatpush2.msra.mxu0 0.0
        %618 = vmatprep.subr.mxu0 0.0
        %619 = vmatpush2.msra.mxu0 0.0
        %620 = vmatprep.subr.mxu0 0.0
        %621 = vmatpush2.msra.mxu0 0.0
        %622 = vmatprep.subr.mxu0 0.0
        %623 = vmatpush2.msra.mxu0 0.0
        %624 = vmatprep.subr.mxu0 0.0
        %625 = vmatpush2.msra.mxu0 0.0
        %626 = vmatprep.subr.mxu0 0.0
        %627 = vmatpush2.msra.mxu0 0.0
        %628 = vmatprep.subr.mxu0 0.0
        %629 = vmatpush2.msra.mxu0 0.0
        %630 = vmatprep.mubr.f32.mxu0 0.0
        %631 = vmatmul.mubr.f32.gmra.mxu0 %v564
        %v632 = vpop.f32.mrf.mxu0
        %v633 = vadd.f32 %v560, %v632
        %v634 = vpop.f32.mrf.mxu0
        %635 = vdwg.mxu0
        %s636 = scalar_lea.vmem [#allocation2], 4
        %v637 = vld [vmem:[%s636] sm:$0x3]
        %s638 = scalar_lea.vmem [#allocation4], 4
        %v639 = vld [vmem:[%s638] sm:$0x3]
        %v641 = vsel %vm300, %v639, 0
        %643 = vmatprep.subr.bf16.mxu0 0
        %644 = vmatpush1.bf16.msra.mxu0 0
        %645 = vmatprep.subr.bf16.mxu0 0
        %646 = vmatpush1.bf16.msra.mxu0 0
        %647 = vmatprep.subr.bf16.mxu0 0
        %648 = vmatpush1.bf16.msra.mxu0 0
        %649 = vmatprep.subr.bf16.mxu0 0
        %650 = vmatpush1.bf16.msra.mxu0 0
        %651 = vmatprep.subr.bf16.mxu0 0
        %652 = vmatpush1.bf16.msra.mxu0 0
        %653 = vmatprep.subr.bf16.mxu0 0
        %654 = vmatpush1.bf16.msra.mxu0 0
        %655 = vmatprep.subr.bf16.mxu0 0
        %656 = vmatpush1.bf16.msra.mxu0 0
        %657 = vmatprep.subr.bf16.mxu0 0
        %658 = vmatpush1.bf16.msra.mxu0 %v306
        %659 = vmatprep.subr.bf16.mxu0 0
        %660 = vmatpush2.bf16.msra.mxu0 0
        %661 = vmatprep.subr.bf16.mxu0 0
        %662 = vmatpush2.bf16.msra.mxu0 0
        %663 = vmatprep.subr.bf16.mxu0 0
        %664 = vmatpush2.bf16.msra.mxu0 0
        %665 = vmatprep.subr.bf16.mxu0 0
        %666 = vmatpush2.bf16.msra.mxu0 0
        %667 = vmatprep.subr.bf16.mxu0 0
        %668 = vmatpush2.bf16.msra.mxu0 0
        %669 = vmatprep.subr.bf16.mxu0 0
        %670 = vmatpush2.bf16.msra.mxu0 0
        %671 = vmatprep.subr.bf16.mxu0 0
        %672 = vmatpush2.bf16.msra.mxu0 0
        %673 = vmatprep.subr.bf16.mxu0 0
        %674 = vmatpush2.bf16.msra.mxu0 0
        %675 = vmatprep.mubr.bf16.mxu0 0
        %676 = vmatmul.mubr.bf16.gmra.mxu0 %v641
        %v677 = vpop.f32.mrf.mxu0
        %v678 = vadd.f32 0.0, %v677
        %v679 = vpop.f32.mrf.mxu0
        %v680 = vpop.f32.mrf.mxu0
        %v681 = vpop.f32.mrf.mxu0
        %682 = vdwg.mxu0
        %v684 = vsel %vm300, %v637, 0
        %686 = vmatprep.subr.bf16.mxu0 0
        %687 = vmatpush1.bf16.msra.mxu0 0
        %688 = vmatprep.subr.bf16.mxu0 0
        %689 = vmatpush1.bf16.msra.mxu0 0
        %690 = vmatprep.subr.bf16.mxu0 0
        %691 = vmatpush1.bf16.msra.mxu0 0
        %692 = vmatprep.subr.bf16.mxu0 0
        %693 = vmatpush1.bf16.msra.mxu0 0
        %694 = vmatprep.subr.bf16.mxu0 0
        %695 = vmatpush1.bf16.msra.mxu0 0
        %696 = vmatprep.subr.bf16.mxu0 0
        %697 = vmatpush1.bf16.msra.mxu0 0
        %698 = vmatprep.subr.bf16.mxu0 0
        %699 = vmatpush1.bf16.msra.mxu0 0
        %700 = vmatprep.subr.bf16.mxu0 0
        %701 = vmatpush1.bf16.msra.mxu0 %v352
        %702 = vmatprep.subr.bf16.mxu0 0
        %703 = vmatpush2.bf16.msra.mxu0 0
        %704 = vmatprep.subr.bf16.mxu0 0
        %705 = vmatpush2.bf16.msra.mxu0 0
        %706 = vmatprep.subr.bf16.mxu0 0
        %707 = vmatpush2.bf16.msra.mxu0 0
        %708 = vmatprep.subr.bf16.mxu0 0
        %709 = vmatpush2.bf16.msra.mxu0 0
        %710 = vmatprep.subr.bf16.mxu0 0
        %711 = vmatpush2.bf16.msra.mxu0 0
        %712 = vmatprep.subr.bf16.mxu0 0
        %713 = vmatpush2.bf16.msra.mxu0 0
        %714 = vmatprep.subr.bf16.mxu0 0
        %715 = vmatpush2.bf16.msra.mxu0 0
        %716 = vmatprep.subr.bf16.mxu0 0
        %717 = vmatpush2.bf16.msra.mxu0 0
        %718 = vmatprep.mubr.bf16.mxu0 0
        %719 = vmatmul.mubr.bf16.gmra.mxu0 %v684
        %v720 = vpop.f32.mrf.mxu0
        %v721 = vadd.f32 %v678, %v720
        %v722 = vpop.f32.mrf.mxu0
        %v723 = vpop.f32.mrf.mxu0
        %v724 = vpop.f32.mrf.mxu0
        %725 = vdwg.mxu0
        %s726 = scalar_lea.vmem %s2, 32
        %v727 = vld [vmem:[%s726] sm:$0xff]
        %v728 = vld [vmem:[%s726 + $0x8] sm:$0xff]
        %v730 = vsel %vm489, %v721, 0
        %732 = vmatprep.subr.mxu0 0.0
        %733 = vmatpush1.msra.mxu0 0.0
        %734 = vmatprep.subr.mxu0 0.0
        %735 = vmatpush1.msra.mxu0 0.0
        %736 = vmatprep.subr.mxu0 0.0
        %737 = vmatpush1.msra.mxu0 0.0
        %738 = vmatprep.subr.mxu0 0.0
        %739 = vmatpush1.msra.mxu0 0.0
        %740 = vmatprep.subr.mxu0 0.0
        %741 = vmatpush1.msra.mxu0 0.0
        %742 = vmatprep.subr.mxu0 0.0
        %743 = vmatpush1.msra.mxu0 0.0
        %744 = vmatprep.subr.mxu0 0.0
        %745 = vmatpush1.msra.mxu0 0.0
        %746 = vmatprep.subr.mxu0 0.0
        %747 = vmatpush1.msra.mxu0 0.0
        %748 = vmatprep.subr.mxu0 0.0
        %749 = vmatpush1.msra.mxu0 0.0
        %750 = vmatprep.subr.mxu0 0.0
        %751 = vmatpush1.msra.mxu0 0.0
        %752 = vmatprep.subr.mxu0 0.0
        %753 = vmatpush1.msra.mxu0 0.0
        %754 = vmatprep.subr.mxu0 0.0
        %755 = vmatpush1.msra.mxu0 0.0
        %756 = vmatprep.subr.mxu0 0.0
        %757 = vmatpush1.msra.mxu0 0.0
        %758 = vmatprep.subr.mxu0 0.0
        %759 = vmatpush1.msra.mxu0 0.0
        %760 = vmatprep.subr.mxu0 0.0
        %761 = vmatpush1.msra.mxu0 %v728
        %762 = vmatprep.subr.mxu0 0.0
        %763 = vmatpush1.msra.mxu0 %v727
        %764 = vmatprep.subr.mxu0 0.0
        %765 = vmatpush2.msra.mxu0 0.0
        %766 = vmatprep.subr.mxu0 0.0
        %767 = vmatpush2.msra.mxu0 0.0
        %768 = vmatprep.subr.mxu0 0.0
        %769 = vmatpush2.msra.mxu0 0.0
        %770 = vmatprep.subr.mxu0 0.0
        %771 = vmatpush2.msra.mxu0 0.0
        %772 = vmatprep.subr.mxu0 0.0
        %773 = vmatpush2.msra.mxu0 0.0
        %774 = vmatprep.subr.mxu0 0.0
        %775 = vmatpush2.msra.mxu0 0.0
        %776 = vmatprep.subr.mxu0 0.0
        %777 = vmatpush2.msra.mxu0 0.0
        %778 = vmatprep.subr.mxu0 0.0
        %779 = vmatpush2.msra.mxu0 0.0
        %780 = vmatprep.subr.mxu0 0.0
        %781 = vmatpush2.msra.mxu0 0.0
        %782 = vmatprep.subr.mxu0 0.0
        %783 = vmatpush2.msra.mxu0 0.0
        %784 = vmatprep.subr.mxu0 0.0
        %785 = vmatpush2.msra.mxu0 0.0
        %786 = vmatprep.subr.mxu0 0.0
        %787 = vmatpush2.msra.mxu0 0.0
        %788 = vmatprep.subr.mxu0 0.0
        %789 = vmatpush2.msra.mxu0 0.0
        %790 = vmatprep.subr.mxu0 0.0
        %791 = vmatpush2.msra.mxu0 0.0
        %792 = vmatprep.subr.mxu0 0.0
        %793 = vmatpush2.msra.mxu0 0.0
        %794 = vmatprep.subr.mxu0 0.0
        %795 = vmatpush2.msra.mxu0 0.0
        %796 = vmatprep.mubr.f32.mxu0 0.0
        %797 = vmatmul.mubr.f32.gmra.mxu0 %v730
        %v798 = vpop.f32.mrf.mxu0
        %v799 = vadd.f32 0.0, %v798
        %v800 = vpop.f32.mrf.mxu0
        %801 = vdwg.mxu0
        %v802 = vadd.f32 %v633, %v799
        %s803 = scalar_lea.vmem [#allocation2], 6
        %v804 = vld [vmem:[%s803] sm:$0x3]
        %s805 = scalar_lea.vmem [#allocation4], 6
        %v806 = vld [vmem:[%s805] sm:$0x3]
        %v808 = vsel %vm300, %v806, 0
        %810 = vmatprep.subr.bf16.mxu0 0
        %811 = vmatpush1.bf16.msra.mxu0 0
        %812 = vmatprep.subr.bf16.mxu0 0
        %813 = vmatpush1.bf16.msra.mxu0 0
        %814 = vmatprep.subr.bf16.mxu0 0
        %815 = vmatpush1.bf16.msra.mxu0 0
        %816 = vmatprep.subr.bf16.mxu0 0
        %817 = vmatpush1.bf16.msra.mxu0 0
        %818 = vmatprep.subr.bf16.mxu0 0
        %819 = vmatpush1.bf16.msra.mxu0 0
        %820 = vmatprep.subr.bf16.mxu0 0
        %821 = vmatpush1.bf16.msra.mxu0 0
        %822 = vmatprep.subr.bf16.mxu0 0
        %823 = vmatpush1.bf16.msra.mxu0 0
        %824 = vmatprep.subr.bf16.mxu0 0
        %825 = vmatpush1.bf16.msra.mxu0 %v306
        %826 = vmatprep.subr.bf16.mxu0 0
        %827 = vmatpush2.bf16.msra.mxu0 0
        %828 = vmatprep.subr.bf16.mxu0 0
        %829 = vmatpush2.bf16.msra.mxu0 0
        %830 = vmatprep.subr.bf16.mxu0 0
        %831 = vmatpush2.bf16.msra.mxu0 0
        %832 = vmatprep.subr.bf16.mxu0 0
        %833 = vmatpush2.bf16.msra.mxu0 0
        %834 = vmatprep.subr.bf16.mxu0 0
        %835 = vmatpush2.bf16.msra.mxu0 0
        %836 = vmatprep.subr.bf16.mxu0 0
        %837 = vmatpush2.bf16.msra.mxu0 0
        %838 = vmatprep.subr.bf16.mxu0 0
        %839 = vmatpush2.bf16.msra.mxu0 0
        %840 = vmatprep.subr.bf16.mxu0 0
        %841 = vmatpush2.bf16.msra.mxu0 0
        %842 = vmatprep.mubr.bf16.mxu0 0
        %843 = vmatmul.mubr.bf16.gmra.mxu0 %v808
        %v844 = vpop.f32.mrf.mxu0
        %v845 = vadd.f32 0.0, %v844
        %v846 = vpop.f32.mrf.mxu0
        %v847 = vpop.f32.mrf.mxu0
        %v848 = vpop.f32.mrf.mxu0
        %849 = vdwg.mxu0
        %v851 = vsel %vm300, %v804, 0
        %853 = vmatprep.subr.bf16.mxu0 0
        %854 = vmatpush1.bf16.msra.mxu0 0
        %855 = vmatprep.subr.bf16.mxu0 0
        %856 = vmatpush1.bf16.msra.mxu0 0
        %857 = vmatprep.subr.bf16.mxu0 0
        %858 = vmatpush1.bf16.msra.mxu0 0
        %859 = vmatprep.subr.bf16.mxu0 0
        %860 = vmatpush1.bf16.msra.mxu0 0
        %861 = vmatprep.subr.bf16.mxu0 0
        %862 = vmatpush1.bf16.msra.mxu0 0
        %863 = vmatprep.subr.bf16.mxu0 0
        %864 = vmatpush1.bf16.msra.mxu0 0
        %865 = vmatprep.subr.bf16.mxu0 0
        %866 = vmatpush1.bf16.msra.mxu0 0
        %867 = vmatprep.subr.bf16.mxu0 0
        %868 = vmatpush1.bf16.msra.mxu0 %v352
        %869 = vmatprep.subr.bf16.mxu0 0
        %870 = vmatpush2.bf16.msra.mxu0 0
        %871 = vmatprep.subr.bf16.mxu0 0
        %872 = vmatpush2.bf16.msra.mxu0 0
        %873 = vmatprep.subr.bf16.mxu0 0
        %874 = vmatpush2.bf16.msra.mxu0 0
        %875 = vmatprep.subr.bf16.mxu0 0
        %876 = vmatpush2.bf16.msra.mxu0 0
        %877 = vmatprep.subr.bf16.mxu0 0
        %878 = vmatpush2.bf16.msra.mxu0 0
        %879 = vmatprep.subr.bf16.mxu0 0
        %880 = vmatpush2.bf16.msra.mxu0 0
        %881 = vmatprep.subr.bf16.mxu0 0
        %882 = vmatpush2.bf16.msra.mxu0 0
        %883 = vmatprep.subr.bf16.mxu0 0
        %884 = vmatpush2.bf16.msra.mxu0 0
        %885 = vmatprep.mubr.bf16.mxu0 0
        %886 = vmatmul.mubr.bf16.gmra.mxu0 %v851
        %v887 = vpop.f32.mrf.mxu0
        %v888 = vadd.f32 %v845, %v887
        %v889 = vpop.f32.mrf.mxu0
        %v890 = vpop.f32.mrf.mxu0
        %v891 = vpop.f32.mrf.mxu0
        %892 = vdwg.mxu0
        %s893 = scalar_lea.vmem %s2, 48
        %v894 = vld [vmem:[%s893] sm:$0xff]
        %v895 = vld [vmem:[%s893 + $0x8] sm:$0xff]
        %v897 = vsel %vm489, %v888, 0
        %899 = vmatprep.subr.mxu0 0.0
        %900 = vmatpush1.msra.mxu0 0.0
        %901 = vmatprep.subr.mxu0 0.0
        %902 = vmatpush1.msra.mxu0 0.0
        %903 = vmatprep.subr.mxu0 0.0
        %904 = vmatpush1.msra.mxu0 0.0
        %905 = vmatprep.subr.mxu0 0.0
        %906 = vmatpush1.msra.mxu0 0.0
        %907 = vmatprep.subr.mxu0 0.0
        %908 = vmatpush1.msra.mxu0 0.0
        %909 = vmatprep.subr.mxu0 0.0
        %910 = vmatpush1.msra.mxu0 0.0
        %911 = vmatprep.subr.mxu0 0.0
        %912 = vmatpush1.msra.mxu0 0.0
        %913 = vmatprep.subr.mxu0 0.0
        %914 = vmatpush1.msra.mxu0 0.0
        %915 = vmatprep.subr.mxu0 0.0
        %916 = vmatpush1.msra.mxu0 0.0
        %917 = vmatprep.subr.mxu0 0.0
        %918 = vmatpush1.msra.mxu0 0.0
        %919 = vmatprep.subr.mxu0 0.0
        %920 = vmatpush1.msra.mxu0 0.0
        %921 = vmatprep.subr.mxu0 0.0
        %922 = vmatpush1.msra.mxu0 0.0
        %923 = vmatprep.subr.mxu0 0.0
        %924 = vmatpush1.msra.mxu0 0.0
        %925 = vmatprep.subr.mxu0 0.0
        %926 = vmatpush1.msra.mxu0 0.0
        %927 = vmatprep.subr.mxu0 0.0
        %928 = vmatpush1.msra.mxu0 %v895
        %929 = vmatprep.subr.mxu0 0.0
        %930 = vmatpush1.msra.mxu0 %v894
        %931 = vmatprep.subr.mxu0 0.0
        %932 = vmatpush2.msra.mxu0 0.0
        %933 = vmatprep.subr.mxu0 0.0
        %934 = vmatpush2.msra.mxu0 0.0
        %935 = vmatprep.subr.mxu0 0.0
        %936 = vmatpush2.msra.mxu0 0.0
        %937 = vmatprep.subr.mxu0 0.0
        %938 = vmatpush2.msra.mxu0 0.0
        %939 = vmatprep.subr.mxu0 0.0
        %940 = vmatpush2.msra.mxu0 0.0
        %941 = vmatprep.subr.mxu0 0.0
        %942 = vmatpush2.msra.mxu0 0.0
        %943 = vmatprep.subr.mxu0 0.0
        %944 = vmatpush2.msra.mxu0 0.0
        %945 = vmatprep.subr.mxu0 0.0
        %946 = vmatpush2.msra.mxu0 0.0
        %947 = vmatprep.subr.mxu0 0.0
        %948 = vmatpush2.msra.mxu0 0.0
        %949 = vmatprep.subr.mxu0 0.0
        %950 = vmatpush2.msra.mxu0 0.0
        %951 = vmatprep.subr.mxu0 0.0
        %952 = vmatpush2.msra.mxu0 0.0
        %953 = vmatprep.subr.mxu0 0.0
        %954 = vmatpush2.msra.mxu0 0.0
        %955 = vmatprep.subr.mxu0 0.0
        %956 = vmatpush2.msra.mxu0 0.0
        %957 = vmatprep.subr.mxu0 0.0
        %958 = vmatpush2.msra.mxu0 0.0
        %959 = vmatprep.subr.mxu0 0.0
        %960 = vmatpush2.msra.mxu0 0.0
        %961 = vmatprep.subr.mxu0 0.0
        %962 = vmatpush2.msra.mxu0 0.0
        %963 = vmatprep.mubr.f32.mxu0 0.0
        %964 = vmatmul.mubr.f32.gmra.mxu0 %v897
        %v965 = vpop.f32.mrf.mxu0
        %v966 = vadd.f32 0.0, %v965
        %v967 = vpop.f32.mrf.mxu0
        %968 = vdwg.mxu0
        %v969 = vadd.f32 %v802, %v966
        %s970 = scalar_lea.vmem [#allocation2], 8
        %v971 = vld [vmem:[%s970] sm:$0x3]
        %s972 = scalar_lea.vmem [#allocation4], 8
        %v973 = vld [vmem:[%s972] sm:$0x3]
        %v975 = vsel %vm300, %v973, 0
        %977 = vmatprep.subr.bf16.mxu0 0
        %978 = vmatpush1.bf16.msra.mxu0 0
        %979 = vmatprep.subr.bf16.mxu0 0
        %980 = vmatpush1.bf16.msra.mxu0 0
        %981 = vmatprep.subr.bf16.mxu0 0
        %982 = vmatpush1.bf16.msra.mxu0 0
        %983 = vmatprep.subr.bf16.mxu0 0
        %984 = vmatpush1.bf16.msra.mxu0 0
        %985 = vmatprep.subr.bf16.mxu0 0
        %986 = vmatpush1.bf16.msra.mxu0 0
        %987 = vmatprep.subr.bf16.mxu0 0
        %988 = vmatpush1.bf16.msra.mxu0 0
        %989 = vmatprep.subr.bf16.mxu0 0
        %990 = vmatpush1.bf16.msra.mxu0 0
        %991 = vmatprep.subr.bf16.mxu0 0
        %992 = vmatpush1.bf16.msra.mxu0 %v306
        %993 = vmatprep.subr.bf16.mxu0 0
        %994 = vmatpush2.bf16.msra.mxu0 0
        %995 = vmatprep.subr.bf16.mxu0 0
        %996 = vmatpush2.bf16.msra.mxu0 0
        %997 = vmatprep.subr.bf16.mxu0 0
        %998 = vmatpush2.bf16.msra.mxu0 0
        %999 = vmatprep.subr.bf16.mxu0 0
        %1000 = vmatpush2.bf16.msra.mxu0 0
        %1001 = vmatprep.subr.bf16.mxu0 0
        %1002 = vmatpush2.bf16.msra.mxu0 0
        %1003 = vmatprep.subr.bf16.mxu0 0
        %1004 = vmatpush2.bf16.msra.mxu0 0
        %1005 = vmatprep.subr.bf16.mxu0 0
        %1006 = vmatpush2.bf16.msra.mxu0 0
        %1007 = vmatprep.subr.bf16.mxu0 0
        %1008 = vmatpush2.bf16.msra.mxu0 0
        %1009 = vmatprep.mubr.bf16.mxu0 0
        %1010 = vmatmul.mubr.bf16.gmra.mxu0 %v975
        %v1011 = vpop.f32.mrf.mxu0
        %v1012 = vadd.f32 0.0, %v1011
        %v1013 = vpop.f32.mrf.mxu0
        %v1014 = vpop.f32.mrf.mxu0
        %v1015 = vpop.f32.mrf.mxu0
        %1016 = vdwg.mxu0
        %v1018 = vsel %vm300, %v971, 0
        %1020 = vmatprep.subr.bf16.mxu0 0
        %1021 = vmatpush1.bf16.msra.mxu0 0
        %1022 = vmatprep.subr.bf16.mxu0 0
        %1023 = vmatpush1.bf16.msra.mxu0 0
        %1024 = vmatprep.subr.bf16.mxu0 0
        %1025 = vmatpush1.bf16.msra.mxu0 0
        %1026 = vmatprep.subr.bf16.mxu0 0
        %1027 = vmatpush1.bf16.msra.mxu0 0
        %1028 = vmatprep.subr.bf16.mxu0 0
        %1029 = vmatpush1.bf16.msra.mxu0 0
        %1030 = vmatprep.subr.bf16.mxu0 0
        %1031 = vmatpush1.bf16.msra.mxu0 0
        %1032 = vmatprep.subr.bf16.mxu0 0
        %1033 = vmatpush1.bf16.msra.mxu0 0
        %1034 = vmatprep.subr.bf16.mxu0 0
        %1035 = vmatpush1.bf16.msra.mxu0 %v352
        %1036 = vmatprep.subr.bf16.mxu0 0
        %1037 = vmatpush2.bf16.msra.mxu0 0
        %1038 = vmatprep.subr.bf16.mxu0 0
        %1039 = vmatpush2.bf16.msra.mxu0 0
        %1040 = vmatprep.subr.bf16.mxu0 0
        %1041 = vmatpush2.bf16.msra.mxu0 0
        %1042 = vmatprep.subr.bf16.mxu0 0
        %1043 = vmatpush2.bf16.msra.mxu0 0
        %1044 = vmatprep.subr.bf16.mxu0 0
        %1045 = vmatpush2.bf16.msra.mxu0 0
        %1046 = vmatprep.subr.bf16.mxu0 0
        %1047 = vmatpush2.bf16.msra.mxu0 0
        %1048 = vmatprep.subr.bf16.mxu0 0
        %1049 = vmatpush2.bf16.msra.mxu0 0
        %1050 = vmatprep.subr.bf16.mxu0 0
        %1051 = vmatpush2.bf16.msra.mxu0 0
        %1052 = vmatprep.mubr.bf16.mxu0 0
        %1053 = vmatmul.mubr.bf16.gmra.mxu0 %v1018
        %v1054 = vpop.f32.mrf.mxu0
        %v1055 = vadd.f32 %v1012, %v1054
        %v1056 = vpop.f32.mrf.mxu0
        %v1057 = vpop.f32.mrf.mxu0
        %v1058 = vpop.f32.mrf.mxu0
        %1059 = vdwg.mxu0
        %s1060 = scalar_lea.vmem %s2, 64
        %v1061 = vld [vmem:[%s1060] sm:$0xff]
        %v1062 = vld [vmem:[%s1060 + $0x8] sm:$0xff]
        %v1064 = vsel %vm489, %v1055, 0
        %1066 = vmatprep.subr.mxu0 0.0
        %1067 = vmatpush1.msra.mxu0 0.0
        %1068 = vmatprep.subr.mxu0 0.0
        %1069 = vmatpush1.msra.mxu0 0.0
        %1070 = vmatprep.subr.mxu0 0.0
        %1071 = vmatpush1.msra.mxu0 0.0
        %1072 = vmatprep.subr.mxu0 0.0
        %1073 = vmatpush1.msra.mxu0 0.0
        %1074 = vmatprep.subr.mxu0 0.0
        %1075 = vmatpush1.msra.mxu0 0.0
        %1076 = vmatprep.subr.mxu0 0.0
        %1077 = vmatpush1.msra.mxu0 0.0
        %1078 = vmatprep.subr.mxu0 0.0
        %1079 = vmatpush1.msra.mxu0 0.0
        %1080 = vmatprep.subr.mxu0 0.0
        %1081 = vmatpush1.msra.mxu0 0.0
        %1082 = vmatprep.subr.mxu0 0.0
        %1083 = vmatpush1.msra.mxu0 0.0
        %1084 = vmatprep.subr.mxu0 0.0
        %1085 = vmatpush1.msra.mxu0 0.0
        %1086 = vmatprep.subr.mxu0 0.0
        %1087 = vmatpush1.msra.mxu0 0.0
        %1088 = vmatprep.subr.mxu0 0.0
        %1089 = vmatpush1.msra.mxu0 0.0
        %1090 = vmatprep.subr.mxu0 0.0
        %1091 = vmatpush1.msra.mxu0 0.0
        %1092 = vmatprep.subr.mxu0 0.0
        %1093 = vmatpush1.msra.mxu0 0.0
        %1094 = vmatprep.subr.mxu0 0.0
        %1095 = vmatpush1.msra.mxu0 %v1062
        %1096 = vmatprep.subr.mxu0 0.0
        %1097 = vmatpush1.msra.mxu0 %v1061
        %1098 = vmatprep.subr.mxu0 0.0
        %1099 = vmatpush2.msra.mxu0 0.0
        %1100 = vmatprep.subr.mxu0 0.0
        %1101 = vmatpush2.msra.mxu0 0.0
        %1102 = vmatprep.subr.mxu0 0.0
        %1103 = vmatpush2.msra.mxu0 0.0
        %1104 = vmatprep.subr.mxu0 0.0
        %1105 = vmatpush2.msra.mxu0 0.0
        %1106 = vmatprep.subr.mxu0 0.0
        %1107 = vmatpush2.msra.mxu0 0.0
        %1108 = vmatprep.subr.mxu0 0.0
        %1109 = vmatpush2.msra.mxu0 0.0
        %1110 = vmatprep.subr.mxu0 0.0
        %1111 = vmatpush2.msra.mxu0 0.0
        %1112 = vmatprep.subr.mxu0 0.0
        %1113 = vmatpush2.msra.mxu0 0.0
        %1114 = vmatprep.subr.mxu0 0.0
        %1115 = vmatpush2.msra.mxu0 0.0
        %1116 = vmatprep.subr.mxu0 0.0
        %1117 = vmatpush2.msra.mxu0 0.0
        %1118 = vmatprep.subr.mxu0 0.0
        %1119 = vmatpush2.msra.mxu0 0.0
        %1120 = vmatprep.subr.mxu0 0.0
        %1121 = vmatpush2.msra.mxu0 0.0
        %1122 = vmatprep.subr.mxu0 0.0
        %1123 = vmatpush2.msra.mxu0 0.0
        %1124 = vmatprep.subr.mxu0 0.0
        %1125 = vmatpush2.msra.mxu0 0.0
        %1126 = vmatprep.subr.mxu0 0.0
        %1127 = vmatpush2.msra.mxu0 0.0
        %1128 = vmatprep.subr.mxu0 0.0
        %1129 = vmatpush2.msra.mxu0 0.0
        %1130 = vmatprep.mubr.f32.mxu0 0.0
        %1131 = vmatmul.mubr.f32.gmra.mxu0 %v1064
        %v1132 = vpop.f32.mrf.mxu0
        %v1133 = vadd.f32 0.0, %v1132
        %v1134 = vpop.f32.mrf.mxu0
        %1135 = vdwg.mxu0
        %v1136 = vadd.f32 %v969, %v1133
        %s1137 = scalar_lea.vmem [#allocation2], 10
        %v1138 = vld [vmem:[%s1137] sm:$0x3]
        %s1139 = scalar_lea.vmem [#allocation4], 10
        %v1140 = vld [vmem:[%s1139] sm:$0x3]
        %v1142 = vsel %vm300, %v1140, 0
        %1144 = vmatprep.subr.bf16.mxu0 0
        %1145 = vmatpush1.bf16.msra.mxu0 0
        %1146 = vmatprep.subr.bf16.mxu0 0
        %1147 = vmatpush1.bf16.msra.mxu0 0
        %1148 = vmatprep.subr.bf16.mxu0 0
        %1149 = vmatpush1.bf16.msra.mxu0 0
        %1150 = vmatprep.subr.bf16.mxu0 0
        %1151 = vmatpush1.bf16.msra.mxu0 0
        %1152 = vmatprep.subr.bf16.mxu0 0
        %1153 = vmatpush1.bf16.msra.mxu0 0
        %1154 = vmatprep.subr.bf16.mxu0 0
        %1155 = vmatpush1.bf16.msra.mxu0 0
        %1156 = vmatprep.subr.bf16.mxu0 0
        %1157 = vmatpush1.bf16.msra.mxu0 0
        %1158 = vmatprep.subr.bf16.mxu0 0
        %1159 = vmatpush1.bf16.msra.mxu0 %v306
        %1160 = vmatprep.subr.bf16.mxu0 0
        %1161 = vmatpush2.bf16.msra.mxu0 0
        %1162 = vmatprep.subr.bf16.mxu0 0
        %1163 = vmatpush2.bf16.msra.mxu0 0
        %1164 = vmatprep.subr.bf16.mxu0 0
        %1165 = vmatpush2.bf16.msra.mxu0 0
        %1166 = vmatprep.subr.bf16.mxu0 0
        %1167 = vmatpush2.bf16.msra.mxu0 0
        %1168 = vmatprep.subr.bf16.mxu0 0
        %1169 = vmatpush2.bf16.msra.mxu0 0
        %1170 = vmatprep.subr.bf16.mxu0 0
        %1171 = vmatpush2.bf16.msra.mxu0 0
        %1172 = vmatprep.subr.bf16.mxu0 0
        %1173 = vmatpush2.bf16.msra.mxu0 0
        %1174 = vmatprep.subr.bf16.mxu0 0
        %1175 = vmatpush2.bf16.msra.mxu0 0
        %1176 = vmatprep.mubr.bf16.mxu0 0
        %1177 = vmatmul.mubr.bf16.gmra.mxu0 %v1142
        %v1178 = vpop.f32.mrf.mxu0
        %v1179 = vadd.f32 0.0, %v1178
        %v1180 = vpop.f32.mrf.mxu0
        %v1181 = vpop.f32.mrf.mxu0
        %v1182 = vpop.f32.mrf.mxu0
        %1183 = vdwg.mxu0
        %v1185 = vsel %vm300, %v1138, 0
        %1187 = vmatprep.subr.bf16.mxu0 0
        %1188 = vmatpush1.bf16.msra.mxu0 0
        %1189 = vmatprep.subr.bf16.mxu0 0
        %1190 = vmatpush1.bf16.msra.mxu0 0
        %1191 = vmatprep.subr.bf16.mxu0 0
        %1192 = vmatpush1.bf16.msra.mxu0 0
        %1193 = vmatprep.subr.bf16.mxu0 0
        %1194 = vmatpush1.bf16.msra.mxu0 0
        %1195 = vmatprep.subr.bf16.mxu0 0
        %1196 = vmatpush1.bf16.msra.mxu0 0
        %1197 = vmatprep.subr.bf16.mxu0 0
        %1198 = vmatpush1.bf16.msra.mxu0 0
        %1199 = vmatprep.subr.bf16.mxu0 0
        %1200 = vmatpush1.bf16.msra.mxu0 0
        %1201 = vmatprep.subr.bf16.mxu0 0
        %1202 = vmatpush1.bf16.msra.mxu0 %v352
        %1203 = vmatprep.subr.bf16.mxu0 0
        %1204 = vmatpush2.bf16.msra.mxu0 0
        %1205 = vmatprep.subr.bf16.mxu0 0
        %1206 = vmatpush2.bf16.msra.mxu0 0
        %1207 = vmatprep.subr.bf16.mxu0 0
        %1208 = vmatpush2.bf16.msra.mxu0 0
        %1209 = vmatprep.subr.bf16.mxu0 0
        %1210 = vmatpush2.bf16.msra.mxu0 0
        %1211 = vmatprep.subr.bf16.mxu0 0
        %1212 = vmatpush2.bf16.msra.mxu0 0
        %1213 = vmatprep.subr.bf16.mxu0 0
        %1214 = vmatpush2.bf16.msra.mxu0 0
        %1215 = vmatprep.subr.bf16.mxu0 0
        %1216 = vmatpush2.bf16.msra.mxu0 0
        %1217 = vmatprep.subr.bf16.mxu0 0
        %1218 = vmatpush2.bf16.msra.mxu0 0
        %1219 = vmatprep.mubr.bf16.mxu0 0
        %1220 = vmatmul.mubr.bf16.gmra.mxu0 %v1185
        %v1221 = vpop.f32.mrf.mxu0
        %v1222 = vadd.f32 %v1179, %v1221
        %v1223 = vpop.f32.mrf.mxu0
        %v1224 = vpop.f32.mrf.mxu0
        %v1225 = vpop.f32.mrf.mxu0
        %1226 = vdwg.mxu0
        %s1227 = scalar_lea.vmem %s2, 80
        %v1228 = vld [vmem:[%s1227] sm:$0xff]
        %v1229 = vld [vmem:[%s1227 + $0x8] sm:$0xff]
        %v1231 = vsel %vm489, %v1222, 0
        %1233 = vmatprep.subr.mxu0 0.0
        %1234 = vmatpush1.msra.mxu0 0.0
        %1235 = vmatprep.subr.mxu0 0.0
        %1236 = vmatpush1.msra.mxu0 0.0
        %1237 = vmatprep.subr.mxu0 0.0
        %1238 = vmatpush1.msra.mxu0 0.0
        %1239 = vmatprep.subr.mxu0 0.0
        %1240 = vmatpush1.msra.mxu0 0.0
        %1241 = vmatprep.subr.mxu0 0.0
        %1242 = vmatpush1.msra.mxu0 0.0
        %1243 = vmatprep.subr.mxu0 0.0
        %1244 = vmatpush1.msra.mxu0 0.0
        %1245 = vmatprep.subr.mxu0 0.0
        %1246 = vmatpush1.msra.mxu0 0.0
        %1247 = vmatprep.subr.mxu0 0.0
        %1248 = vmatpush1.msra.mxu0 0.0
        %1249 = vmatprep.subr.mxu0 0.0
        %1250 = vmatpush1.msra.mxu0 0.0
        %1251 = vmatprep.subr.mxu0 0.0
        %1252 = vmatpush1.msra.mxu0 0.0
        %1253 = vmatprep.subr.mxu0 0.0
        %1254 = vmatpush1.msra.mxu0 0.0
        %1255 = vmatprep.subr.mxu0 0.0
        %1256 = vmatpush1.msra.mxu0 0.0
        %1257 = vmatprep.subr.mxu0 0.0
        %1258 = vmatpush1.msra.mxu0 0.0
        %1259 = vmatprep.subr.mxu0 0.0
        %1260 = vmatpush1.msra.mxu0 0.0
        %1261 = vmatprep.subr.mxu0 0.0
        %1262 = vmatpush1.msra.mxu0 %v1229
        %1263 = vmatprep.subr.mxu0 0.0
        %1264 = vmatpush1.msra.mxu0 %v1228
        %1265 = vmatprep.subr.mxu0 0.0
        %1266 = vmatpush2.msra.mxu0 0.0
        %1267 = vmatprep.subr.mxu0 0.0
        %1268 = vmatpush2.msra.mxu0 0.0
        %1269 = vmatprep.subr.mxu0 0.0
        %1270 = vmatpush2.msra.mxu0 0.0
        %1271 = vmatprep.subr.mxu0 0.0
        %1272 = vmatpush2.msra.mxu0 0.0
        %1273 = vmatprep.subr.mxu0 0.0
        %1274 = vmatpush2.msra.mxu0 0.0
        %1275 = vmatprep.subr.mxu0 0.0
        %1276 = vmatpush2.msra.mxu0 0.0
        %1277 = vmatprep.subr.mxu0 0.0
        %1278 = vmatpush2.msra.mxu0 0.0
        %1279 = vmatprep.subr.mxu0 0.0
        %1280 = vmatpush2.msra.mxu0 0.0
        %1281 = vmatprep.subr.mxu0 0.0
        %1282 = vmatpush2.msra.mxu0 0.0
        %1283 = vmatprep.subr.mxu0 0.0
        %1284 = vmatpush2.msra.mxu0 0.0
        %1285 = vmatprep.subr.mxu0 0.0
        %1286 = vmatpush2.msra.mxu0 0.0
        %1287 = vmatprep.subr.mxu0 0.0
        %1288 = vmatpush2.msra.mxu0 0.0
        %1289 = vmatprep.subr.mxu0 0.0
        %1290 = vmatpush2.msra.mxu0 0.0
        %1291 = vmatprep.subr.mxu0 0.0
        %1292 = vmatpush2.msra.mxu0 0.0
        %1293 = vmatprep.subr.mxu0 0.0
        %1294 = vmatpush2.msra.mxu0 0.0
        %1295 = vmatprep.subr.mxu0 0.0
        %1296 = vmatpush2.msra.mxu0 0.0
        %1297 = vmatprep.mubr.f32.mxu0 0.0
        %1298 = vmatmul.mubr.f32.gmra.mxu0 %v1231
        %v1299 = vpop.f32.mrf.mxu0
        %v1300 = vadd.f32 0.0, %v1299
        %v1301 = vpop.f32.mrf.mxu0
        %1302 = vdwg.mxu0
        %v1303 = vadd.f32 %v1136, %v1300
        %s1304 = scalar_lea.vmem [#allocation2], 12
        %v1305 = vld [vmem:[%s1304] sm:$0x3]
        %s1306 = scalar_lea.vmem [#allocation4], 12
        %v1307 = vld [vmem:[%s1306] sm:$0x3]
        %v1309 = vsel %vm300, %v1307, 0
        %1311 = vmatprep.subr.bf16.mxu0 0
        %1312 = vmatpush1.bf16.msra.mxu0 0
        %1313 = vmatprep.subr.bf16.mxu0 0
        %1314 = vmatpush1.bf16.msra.mxu0 0
        %1315 = vmatprep.subr.bf16.mxu0 0
        %1316 = vmatpush1.bf16.msra.mxu0 0
        %1317 = vmatprep.subr.bf16.mxu0 0
        %1318 = vmatpush1.bf16.msra.mxu0 0
        %1319 = vmatprep.subr.bf16.mxu0 0
        %1320 = vmatpush1.bf16.msra.mxu0 0
        %1321 = vmatprep.subr.bf16.mxu0 0
        %1322 = vmatpush1.bf16.msra.mxu0 0
        %1323 = vmatprep.subr.bf16.mxu0 0
        %1324 = vmatpush1.bf16.msra.mxu0 0
        %1325 = vmatprep.subr.bf16.mxu0 0
        %1326 = vmatpush1.bf16.msra.mxu0 %v306
        %1327 = vmatprep.subr.bf16.mxu0 0
        %1328 = vmatpush2.bf16.msra.mxu0 0
        %1329 = vmatprep.subr.bf16.mxu0 0
        %1330 = vmatpush2.bf16.msra.mxu0 0
        %1331 = vmatprep.subr.bf16.mxu0 0
        %1332 = vmatpush2.bf16.msra.mxu0 0
        %1333 = vmatprep.subr.bf16.mxu0 0
        %1334 = vmatpush2.bf16.msra.mxu0 0
        %1335 = vmatprep.subr.bf16.mxu0 0
        %1336 = vmatpush2.bf16.msra.mxu0 0
        %1337 = vmatprep.subr.bf16.mxu0 0
        %1338 = vmatpush2.bf16.msra.mxu0 0
        %1339 = vmatprep.subr.bf16.mxu0 0
        %1340 = vmatpush2.bf16.msra.mxu0 0
        %1341 = vmatprep.subr.bf16.mxu0 0
        %1342 = vmatpush2.bf16.msra.mxu0 0
        %1343 = vmatprep.mubr.bf16.mxu0 0
        %1344 = vmatmul.mubr.bf16.gmra.mxu0 %v1309
        %v1345 = vpop.f32.mrf.mxu0
        %v1346 = vadd.f32 0.0, %v1345
        %v1347 = vpop.f32.mrf.mxu0
        %v1348 = vpop.f32.mrf.mxu0
        %v1349 = vpop.f32.mrf.mxu0
        %1350 = vdwg.mxu0
        %v1352 = vsel %vm300, %v1305, 0
        %1354 = vmatprep.subr.bf16.mxu0 0
        %1355 = vmatpush1.bf16.msra.mxu0 0
        %1356 = vmatprep.subr.bf16.mxu0 0
        %1357 = vmatpush1.bf16.msra.mxu0 0
        %1358 = vmatprep.subr.bf16.mxu0 0
        %1359 = vmatpush1.bf16.msra.mxu0 0
        %1360 = vmatprep.subr.bf16.mxu0 0
        %1361 = vmatpush1.bf16.msra.mxu0 0
        %1362 = vmatprep.subr.bf16.mxu0 0
        %1363 = vmatpush1.bf16.msra.mxu0 0
        %1364 = vmatprep.subr.bf16.mxu0 0
        %1365 = vmatpush1.bf16.msra.mxu0 0
        %1366 = vmatprep.subr.bf16.mxu0 0
        %1367 = vmatpush1.bf16.msra.mxu0 0
        %1368 = vmatprep.subr.bf16.mxu0 0
        %1369 = vmatpush1.bf16.msra.mxu0 %v352
        %1370 = vmatprep.subr.bf16.mxu0 0
        %1371 = vmatpush2.bf16.msra.mxu0 0
        %1372 = vmatprep.subr.bf16.mxu0 0
        %1373 = vmatpush2.bf16.msra.mxu0 0
        %1374 = vmatprep.subr.bf16.mxu0 0
        %1375 = vmatpush2.bf16.msra.mxu0 0
        %1376 = vmatprep.subr.bf16.mxu0 0
        %1377 = vmatpush2.bf16.msra.mxu0 0
        %1378 = vmatprep.subr.bf16.mxu0 0
        %1379 = vmatpush2.bf16.msra.mxu0 0
        %1380 = vmatprep.subr.bf16.mxu0 0
        %1381 = vmatpush2.bf16.msra.mxu0 0
        %1382 = vmatprep.subr.bf16.mxu0 0
        %1383 = vmatpush2.bf16.msra.mxu0 0
        %1384 = vmatprep.subr.bf16.mxu0 0
        %1385 = vmatpush2.bf16.msra.mxu0 0
        %1386 = vmatprep.mubr.bf16.mxu0 0
        %1387 = vmatmul.mubr.bf16.gmra.mxu0 %v1352
        %v1388 = vpop.f32.mrf.mxu0
        %v1389 = vadd.f32 %v1346, %v1388
        %v1390 = vpop.f32.mrf.mxu0
        %v1391 = vpop.f32.mrf.mxu0
        %v1392 = vpop.f32.mrf.mxu0
        %1393 = vdwg.mxu0
        %s1394 = scalar_lea.vmem %s2, 96
        %v1395 = vld [vmem:[%s1394] sm:$0xff]
        %v1396 = vld [vmem:[%s1394 + $0x8] sm:$0xff]
        %v1398 = vsel %vm489, %v1389, 0
        %1400 = vmatprep.subr.mxu0 0.0
        %1401 = vmatpush1.msra.mxu0 0.0
        %1402 = vmatprep.subr.mxu0 0.0
        %1403 = vmatpush1.msra.mxu0 0.0
        %1404 = vmatprep.subr.mxu0 0.0
        %1405 = vmatpush1.msra.mxu0 0.0
        %1406 = vmatprep.subr.mxu0 0.0
        %1407 = vmatpush1.msra.mxu0 0.0
        %1408 = vmatprep.subr.mxu0 0.0
        %1409 = vmatpush1.msra.mxu0 0.0
        %1410 = vmatprep.subr.mxu0 0.0
        %1411 = vmatpush1.msra.mxu0 0.0
        %1412 = vmatprep.subr.mxu0 0.0
        %1413 = vmatpush1.msra.mxu0 0.0
        %1414 = vmatprep.subr.mxu0 0.0
        %1415 = vmatpush1.msra.mxu0 0.0
        %1416 = vmatprep.subr.mxu0 0.0
        %1417 = vmatpush1.msra.mxu0 0.0
        %1418 = vmatprep.subr.mxu0 0.0
        %1419 = vmatpush1.msra.mxu0 0.0
        %1420 = vmatprep.subr.mxu0 0.0
        %1421 = vmatpush1.msra.mxu0 0.0
        %1422 = vmatprep.subr.mxu0 0.0
        %1423 = vmatpush1.msra.mxu0 0.0
        %1424 = vmatprep.subr.mxu0 0.0
        %1425 = vmatpush1.msra.mxu0 0.0
        %1426 = vmatprep.subr.mxu0 0.0
        %1427 = vmatpush1.msra.mxu0 0.0
        %1428 = vmatprep.subr.mxu0 0.0
        %1429 = vmatpush1.msra.mxu0 %v1396
        %1430 = vmatprep.subr.mxu0 0.0
        %1431 = vmatpush1.msra.mxu0 %v1395
        %1432 = vmatprep.subr.mxu0 0.0
        %1433 = vmatpush2.msra.mxu0 0.0
        %1434 = vmatprep.subr.mxu0 0.0
        %1435 = vmatpush2.msra.mxu0 0.0
        %1436 = vmatprep.subr.mxu0 0.0
        %1437 = vmatpush2.msra.mxu0 0.0
        %1438 = vmatprep.subr.mxu0 0.0
        %1439 = vmatpush2.msra.mxu0 0.0
        %1440 = vmatprep.subr.mxu0 0.0
        %1441 = vmatpush2.msra.mxu0 0.0
        %1442 = vmatprep.subr.mxu0 0.0
        %1443 = vmatpush2.msra.mxu0 0.0
        %1444 = vmatprep.subr.mxu0 0.0
        %1445 = vmatpush2.msra.mxu0 0.0
        %1446 = vmatprep.subr.mxu0 0.0
        %1447 = vmatpush2.msra.mxu0 0.0
        %1448 = vmatprep.subr.mxu0 0.0
        %1449 = vmatpush2.msra.mxu0 0.0
        %1450 = vmatprep.subr.mxu0 0.0
        %1451 = vmatpush2.msra.mxu0 0.0
        %1452 = vmatprep.subr.mxu0 0.0
        %1453 = vmatpush2.msra.mxu0 0.0
        %1454 = vmatprep.subr.mxu0 0.0
        %1455 = vmatpush2.msra.mxu0 0.0
        %1456 = vmatprep.subr.mxu0 0.0
        %1457 = vmatpush2.msra.mxu0 0.0
        %1458 = vmatprep.subr.mxu0 0.0
        %1459 = vmatpush2.msra.mxu0 0.0
        %1460 = vmatprep.subr.mxu0 0.0
        %1461 = vmatpush2.msra.mxu0 0.0
        %1462 = vmatprep.subr.mxu0 0.0
        %1463 = vmatpush2.msra.mxu0 0.0
        %1464 = vmatprep.mubr.f32.mxu0 0.0
        %1465 = vmatmul.mubr.f32.gmra.mxu0 %v1398
        %v1466 = vpop.f32.mrf.mxu0
        %v1467 = vadd.f32 0.0, %v1466
        %v1468 = vpop.f32.mrf.mxu0
        %1469 = vdwg.mxu0
        %v1470 = vadd.f32 %v1303, %v1467
        %s1471 = scalar_lea.vmem [#allocation2], 14
        %v1472 = vld [vmem:[%s1471] sm:$0x3]
        %s1473 = scalar_lea.vmem [#allocation4], 14
        %v1474 = vld [vmem:[%s1473] sm:$0x3]
        %v1476 = vsel %vm300, %v1474, 0
        %1478 = vmatprep.subr.bf16.mxu0 0
        %1479 = vmatpush1.bf16.msra.mxu0 0
        %1480 = vmatprep.subr.bf16.mxu0 0
        %1481 = vmatpush1.bf16.msra.mxu0 0
        %1482 = vmatprep.subr.bf16.mxu0 0
        %1483 = vmatpush1.bf16.msra.mxu0 0
        %1484 = vmatprep.subr.bf16.mxu0 0
        %1485 = vmatpush1.bf16.msra.mxu0 0
        %1486 = vmatprep.subr.bf16.mxu0 0
        %1487 = vmatpush1.bf16.msra.mxu0 0
        %1488 = vmatprep.subr.bf16.mxu0 0
        %1489 = vmatpush1.bf16.msra.mxu0 0
        %1490 = vmatprep.subr.bf16.mxu0 0
        %1491 = vmatpush1.bf16.msra.mxu0 0
        %1492 = vmatprep.subr.bf16.mxu0 0
        %1493 = vmatpush1.bf16.msra.mxu0 %v306
        %1494 = vmatprep.subr.bf16.mxu0 0
        %1495 = vmatpush2.bf16.msra.mxu0 0
        %1496 = vmatprep.subr.bf16.mxu0 0
        %1497 = vmatpush2.bf16.msra.mxu0 0
        %1498 = vmatprep.subr.bf16.mxu0 0
        %1499 = vmatpush2.bf16.msra.mxu0 0
        %1500 = vmatprep.subr.bf16.mxu0 0
        %1501 = vmatpush2.bf16.msra.mxu0 0
        %1502 = vmatprep.subr.bf16.mxu0 0
        %1503 = vmatpush2.bf16.msra.mxu0 0
        %1504 = vmatprep.subr.bf16.mxu0 0
        %1505 = vmatpush2.bf16.msra.mxu0 0
        %1506 = vmatprep.subr.bf16.mxu0 0
        %1507 = vmatpush2.bf16.msra.mxu0 0
        %1508 = vmatprep.subr.bf16.mxu0 0
        %1509 = vmatpush2.bf16.msra.mxu0 0
        %1510 = vmatprep.mubr.bf16.mxu0 0
        %1511 = vmatmul.mubr.bf16.gmra.mxu0 %v1476
        %v1512 = vpop.f32.mrf.mxu0
        %v1513 = vadd.f32 0.0, %v1512
        %v1514 = vpop.f32.mrf.mxu0
        %v1515 = vpop.f32.mrf.mxu0
        %v1516 = vpop.f32.mrf.mxu0
        %1517 = vdwg.mxu0
        %v1519 = vsel %vm300, %v1472, 0
        %1521 = vmatprep.subr.bf16.mxu0 0
        %1522 = vmatpush1.bf16.msra.mxu0 0
        %1523 = vmatprep.subr.bf16.mxu0 0
        %1524 = vmatpush1.bf16.msra.mxu0 0
        %1525 = vmatprep.subr.bf16.mxu0 0
        %1526 = vmatpush1.bf16.msra.mxu0 0
        %1527 = vmatprep.subr.bf16.mxu0 0
        %1528 = vmatpush1.bf16.msra.mxu0 0
        %1529 = vmatprep.subr.bf16.mxu0 0
        %1530 = vmatpush1.bf16.msra.mxu0 0
        %1531 = vmatprep.subr.bf16.mxu0 0
        %1532 = vmatpush1.bf16.msra.mxu0 0
        %1533 = vmatprep.subr.bf16.mxu0 0
        %1534 = vmatpush1.bf16.msra.mxu0 0
        %1535 = vmatprep.subr.bf16.mxu0 0
        %1536 = vmatpush1.bf16.msra.mxu0 %v352
        %1537 = vmatprep.subr.bf16.mxu0 0
        %1538 = vmatpush2.bf16.msra.mxu0 0
        %1539 = vmatprep.subr.bf16.mxu0 0
        %1540 = vmatpush2.bf16.msra.mxu0 0
        %1541 = vmatprep.subr.bf16.mxu0 0
        %1542 = vmatpush2.bf16.msra.mxu0 0
        %1543 = vmatprep.subr.bf16.mxu0 0
        %1544 = vmatpush2.bf16.msra.mxu0 0
        %1545 = vmatprep.subr.bf16.mxu0 0
        %1546 = vmatpush2.bf16.msra.mxu0 0
        %1547 = vmatprep.subr.bf16.mxu0 0
        %1548 = vmatpush2.bf16.msra.mxu0 0
        %1549 = vmatprep.subr.bf16.mxu0 0
        %1550 = vmatpush2.bf16.msra.mxu0 0
        %1551 = vmatprep.subr.bf16.mxu0 0
        %1552 = vmatpush2.bf16.msra.mxu0 0
        %1553 = vmatprep.mubr.bf16.mxu0 0
        %1554 = vmatmul.mubr.bf16.gmra.mxu0 %v1519
        %v1555 = vpop.f32.mrf.mxu0
        %v1556 = vadd.f32 %v1513, %v1555
        %v1557 = vpop.f32.mrf.mxu0
        %v1558 = vpop.f32.mrf.mxu0
        %v1559 = vpop.f32.mrf.mxu0
        %1560 = vdwg.mxu0
        %s1561 = scalar_lea.vmem %s2, 112
        %v1562 = vld [vmem:[%s1561] sm:$0xff]
        %v1563 = vld [vmem:[%s1561 + $0x8] sm:$0xff]
        %v1565 = vsel %vm489, %v1556, 0
        %1567 = vmatprep.subr.mxu0 0.0
        %1568 = vmatpush1.msra.mxu0 0.0
        %1569 = vmatprep.subr.mxu0 0.0
        %1570 = vmatpush1.msra.mxu0 0.0
        %1571 = vmatprep.subr.mxu0 0.0
        %1572 = vmatpush1.msra.mxu0 0.0
        %1573 = vmatprep.subr.mxu0 0.0
        %1574 = vmatpush1.msra.mxu0 0.0
        %1575 = vmatprep.subr.mxu0 0.0
        %1576 = vmatpush1.msra.mxu0 0.0
        %1577 = vmatprep.subr.mxu0 0.0
        %1578 = vmatpush1.msra.mxu0 0.0
        %1579 = vmatprep.subr.mxu0 0.0
        %1580 = vmatpush1.msra.mxu0 0.0
        %1581 = vmatprep.subr.mxu0 0.0
        %1582 = vmatpush1.msra.mxu0 0.0
        %1583 = vmatprep.subr.mxu0 0.0
        %1584 = vmatpush1.msra.mxu0 0.0
        %1585 = vmatprep.subr.mxu0 0.0
        %1586 = vmatpush1.msra.mxu0 0.0
        %1587 = vmatprep.subr.mxu0 0.0
        %1588 = vmatpush1.msra.mxu0 0.0
        %1589 = vmatprep.subr.mxu0 0.0
        %1590 = vmatpush1.msra.mxu0 0.0
        %1591 = vmatprep.subr.mxu0 0.0
        %1592 = vmatpush1.msra.mxu0 0.0
        %1593 = vmatprep.subr.mxu0 0.0
        %1594 = vmatpush1.msra.mxu0 0.0
        %1595 = vmatprep.subr.mxu0 0.0
        %1596 = vmatpush1.msra.mxu0 %v1563
        %1597 = vmatprep.subr.mxu0 0.0
        %1598 = vmatpush1.msra.mxu0 %v1562
        %1599 = vmatprep.subr.mxu0 0.0
        %1600 = vmatpush2.msra.mxu0 0.0
        %1601 = vmatprep.subr.mxu0 0.0
        %1602 = vmatpush2.msra.mxu0 0.0
        %1603 = vmatprep.subr.mxu0 0.0
        %1604 = vmatpush2.msra.mxu0 0.0
        %1605 = vmatprep.subr.mxu0 0.0
        %1606 = vmatpush2.msra.mxu0 0.0
        %1607 = vmatprep.subr.mxu0 0.0
        %1608 = vmatpush2.msra.mxu0 0.0
        %1609 = vmatprep.subr.mxu0 0.0
        %1610 = vmatpush2.msra.mxu0 0.0
        %1611 = vmatprep.subr.mxu0 0.0
        %1612 = vmatpush2.msra.mxu0 0.0
        %1613 = vmatprep.subr.mxu0 0.0
        %1614 = vmatpush2.msra.mxu0 0.0
        %1615 = vmatprep.subr.mxu0 0.0
        %1616 = vmatpush2.msra.mxu0 0.0
        %1617 = vmatprep.subr.mxu0 0.0
        %1618 = vmatpush2.msra.mxu0 0.0
        %1619 = vmatprep.subr.mxu0 0.0
        %1620 = vmatpush2.msra.mxu0 0.0
        %1621 = vmatprep.subr.mxu0 0.0
        %1622 = vmatpush2.msra.mxu0 0.0
        %1623 = vmatprep.subr.mxu0 0.0
        %1624 = vmatpush2.msra.mxu0 0.0
        %1625 = vmatprep.subr.mxu0 0.0
        %1626 = vmatpush2.msra.mxu0 0.0
        %1627 = vmatprep.subr.mxu0 0.0
        %1628 = vmatpush2.msra.mxu0 0.0
        %1629 = vmatprep.subr.mxu0 0.0
        %1630 = vmatpush2.msra.mxu0 0.0
        %1631 = vmatprep.mubr.f32.mxu0 0.0
        %1632 = vmatmul.mubr.f32.gmra.mxu0 %v1565
        %v1633 = vpop.f32.mrf.mxu0
        %v1634 = vadd.f32 0.0, %v1633
        %v1635 = vpop.f32.mrf.mxu0
        %1636 = vdwg.mxu0
        %v1637 = vadd.f32 %v1470, %v1634
        %s1638 = scalar_lea.vmem [#allocation2], 16
        %v1639 = vld [vmem:[%s1638] sm:$0x3]
        %s1640 = scalar_lea.vmem [#allocation4], 16
        %v1641 = vld [vmem:[%s1640] sm:$0x3]
        %v1643 = vsel %vm300, %v1641, 0
        %1645 = vmatprep.subr.bf16.mxu0 0
        %1646 = vmatpush1.bf16.msra.mxu0 0
        %1647 = vmatprep.subr.bf16.mxu0 0
        %1648 = vmatpush1.bf16.msra.mxu0 0
        %1649 = vmatprep.subr.bf16.mxu0 0
        %1650 = vmatpush1.bf16.msra.mxu0 0
        %1651 = vmatprep.subr.bf16.mxu0 0
        %1652 = vmatpush1.bf16.msra.mxu0 0
        %1653 = vmatprep.subr.bf16.mxu0 0
        %1654 = vmatpush1.bf16.msra.mxu0 0
        %1655 = vmatprep.subr.bf16.mxu0 0
        %1656 = vmatpush1.bf16.msra.mxu0 0
        %1657 = vmatprep.subr.bf16.mxu0 0
        %1658 = vmatpush1.bf16.msra.mxu0 0
        %1659 = vmatprep.subr.bf16.mxu0 0
        %1660 = vmatpush1.bf16.msra.mxu0 %v306
        %1661 = vmatprep.subr.bf16.mxu0 0
        %1662 = vmatpush2.bf16.msra.mxu0 0
        %1663 = vmatprep.subr.bf16.mxu0 0
        %1664 = vmatpush2.bf16.msra.mxu0 0
        %1665 = vmatprep.subr.bf16.mxu0 0
        %1666 = vmatpush2.bf16.msra.mxu0 0
        %1667 = vmatprep.subr.bf16.mxu0 0
        %1668 = vmatpush2.bf16.msra.mxu0 0
        %1669 = vmatprep.subr.bf16.mxu0 0
        %1670 = vmatpush2.bf16.msra.mxu0 0
        %1671 = vmatprep.subr.bf16.mxu0 0
        %1672 = vmatpush2.bf16.msra.mxu0 0
        %1673 = vmatprep.subr.bf16.mxu0 0
        %1674 = vmatpush2.bf16.msra.mxu0 0
        %1675 = vmatprep.subr.bf16.mxu0 0
        %1676 = vmatpush2.bf16.msra.mxu0 0
        %1677 = vmatprep.mubr.bf16.mxu0 0
        %1678 = vmatmul.mubr.bf16.gmra.mxu0 %v1643
        %v1679 = vpop.f32.mrf.mxu0
        %v1680 = vadd.f32 0.0, %v1679
        %v1681 = vpop.f32.mrf.mxu0
        %v1682 = vpop.f32.mrf.mxu0
        %v1683 = vpop.f32.mrf.mxu0
        %1684 = vdwg.mxu0
        %v1686 = vsel %vm300, %v1639, 0
        %1688 = vmatprep.subr.bf16.mxu0 0
        %1689 = vmatpush1.bf16.msra.mxu0 0
        %1690 = vmatprep.subr.bf16.mxu0 0
        %1691 = vmatpush1.bf16.msra.mxu0 0
        %1692 = vmatprep.subr.bf16.mxu0 0
        %1693 = vmatpush1.bf16.msra.mxu0 0
        %1694 = vmatprep.subr.bf16.mxu0 0
        %1695 = vmatpush1.bf16.msra.mxu0 0
        %1696 = vmatprep.subr.bf16.mxu0 0
        %1697 = vmatpush1.bf16.msra.mxu0 0
        %1698 = vmatprep.subr.bf16.mxu0 0
        %1699 = vmatpush1.bf16.msra.mxu0 0
        %1700 = vmatprep.subr.bf16.mxu0 0
        %1701 = vmatpush1.bf16.msra.mxu0 0
        %1702 = vmatprep.subr.bf16.mxu0 0
        %1703 = vmatpush1.bf16.msra.mxu0 %v352
        %1704 = vmatprep.subr.bf16.mxu0 0
        %1705 = vmatpush2.bf16.msra.mxu0 0
        %1706 = vmatprep.subr.bf16.mxu0 0
        %1707 = vmatpush2.bf16.msra.mxu0 0
        %1708 = vmatprep.subr.bf16.mxu0 0
        %1709 = vmatpush2.bf16.msra.mxu0 0
        %1710 = vmatprep.subr.bf16.mxu0 0
        %1711 = vmatpush2.bf16.msra.mxu0 0
        %1712 = vmatprep.subr.bf16.mxu0 0
        %1713 = vmatpush2.bf16.msra.mxu0 0
        %1714 = vmatprep.subr.bf16.mxu0 0
        %1715 = vmatpush2.bf16.msra.mxu0 0
        %1716 = vmatprep.subr.bf16.mxu0 0
        %1717 = vmatpush2.bf16.msra.mxu0 0
        %1718 = vmatprep.subr.bf16.mxu0 0
        %1719 = vmatpush2.bf16.msra.mxu0 0
        %1720 = vmatprep.mubr.bf16.mxu0 0
        %1721 = vmatmul.mubr.bf16.gmra.mxu0 %v1686
        %v1722 = vpop.f32.mrf.mxu0
        %v1723 = vadd.f32 %v1680, %v1722
        %v1724 = vpop.f32.mrf.mxu0
        %v1725 = vpop.f32.mrf.mxu0
        %v1726 = vpop.f32.mrf.mxu0
        %1727 = vdwg.mxu0
        %s1728 = scalar_lea.vmem %s2, 128
        %v1729 = vld [vmem:[%s1728] sm:$0xff]
        %v1730 = vld [vmem:[%s1728 + $0x8] sm:$0xff]
        %v1732 = vsel %vm489, %v1723, 0
        %1734 = vmatprep.subr.mxu0 0.0
        %1735 = vmatpush1.msra.mxu0 0.0
        %1736 = vmatprep.subr.mxu0 0.0
        %1737 = vmatpush1.msra.mxu0 0.0
        %1738 = vmatprep.subr.mxu0 0.0
        %1739 = vmatpush1.msra.mxu0 0.0
        %1740 = vmatprep.subr.mxu0 0.0
        %1741 = vmatpush1.msra.mxu0 0.0
        %1742 = vmatprep.subr.mxu0 0.0
        %1743 = vmatpush1.msra.mxu0 0.0
        %1744 = vmatprep.subr.mxu0 0.0
        %1745 = vmatpush1.msra.mxu0 0.0
        %1746 = vmatprep.subr.mxu0 0.0
        %1747 = vmatpush1.msra.mxu0 0.0
        %1748 = vmatprep.subr.mxu0 0.0
        %1749 = vmatpush1.msra.mxu0 0.0
        %1750 = vmatprep.subr.mxu0 0.0
        %1751 = vmatpush1.msra.mxu0 0.0
        %1752 = vmatprep.subr.mxu0 0.0
        %1753 = vmatpush1.msra.mxu0 0.0
        %1754 = vmatprep.subr.mxu0 0.0
        %1755 = vmatpush1.msra.mxu0 0.0
        %1756 = vmatprep.subr.mxu0 0.0
        %1757 = vmatpush1.msra.mxu0 0.0
        %1758 = vmatprep.subr.mxu0 0.0
        %1759 = vmatpush1.msra.mxu0 0.0
        %1760 = vmatprep.subr.mxu0 0.0
        %1761 = vmatpush1.msra.mxu0 0.0
        %1762 = vmatprep.subr.mxu0 0.0
        %1763 = vmatpush1.msra.mxu0 %v1730
        %1764 = vmatprep.subr.mxu0 0.0
        %1765 = vmatpush1.msra.mxu0 %v1729
        %1766 = vmatprep.subr.mxu0 0.0
        %1767 = vmatpush2.msra.mxu0 0.0
        %1768 = vmatprep.subr.mxu0 0.0
        %1769 = vmatpush2.msra.mxu0 0.0
        %1770 = vmatprep.subr.mxu0 0.0
        %1771 = vmatpush2.msra.mxu0 0.0
        %1772 = vmatprep.subr.mxu0 0.0
        %1773 = vmatpush2.msra.mxu0 0.0
        %1774 = vmatprep.subr.mxu0 0.0
        %1775 = vmatpush2.msra.mxu0 0.0
        %1776 = vmatprep.subr.mxu0 0.0
        %1777 = vmatpush2.msra.mxu0 0.0
        %1778 = vmatprep.subr.mxu0 0.0
        %1779 = vmatpush2.msra.mxu0 0.0
        %1780 = vmatprep.subr.mxu0 0.0
        %1781 = vmatpush2.msra.mxu0 0.0
        %1782 = vmatprep.subr.mxu0 0.0
        %1783 = vmatpush2.msra.mxu0 0.0
        %1784 = vmatprep.subr.mxu0 0.0
        %1785 = vmatpush2.msra.mxu0 0.0
        %1786 = vmatprep.subr.mxu0 0.0
        %1787 = vmatpush2.msra.mxu0 0.0
        %1788 = vmatprep.subr.mxu0 0.0
        %1789 = vmatpush2.msra.mxu0 0.0
        %1790 = vmatprep.subr.mxu0 0.0
        %1791 = vmatpush2.msra.mxu0 0.0
        %1792 = vmatprep.subr.mxu0 0.0
        %1793 = vmatpush2.msra.mxu0 0.0
        %1794 = vmatprep.subr.mxu0 0.0
        %1795 = vmatpush2.msra.mxu0 0.0
        %1796 = vmatprep.subr.mxu0 0.0
        %1797 = vmatpush2.msra.mxu0 0.0
        %1798 = vmatprep.mubr.f32.mxu0 0.0
        %1799 = vmatmul.mubr.f32.gmra.mxu0 %v1732
        %v1800 = vpop.f32.mrf.mxu0
        %v1801 = vadd.f32 0.0, %v1800
        %v1802 = vpop.f32.mrf.mxu0
        %1803 = vdwg.mxu0
        %v1804 = vadd.f32 %v1637, %v1801
        %s1805 = scalar_lea.vmem [#allocation2], 18
        %v1806 = vld [vmem:[%s1805] sm:$0x3]
        %s1807 = scalar_lea.vmem [#allocation4], 18
        %v1808 = vld [vmem:[%s1807] sm:$0x3]
        %v1810 = vsel %vm300, %v1808, 0
        %1812 = vmatprep.subr.bf16.mxu0 0
        %1813 = vmatpush1.bf16.msra.mxu0 0
        %1814 = vmatprep.subr.bf16.mxu0 0
        %1815 = vmatpush1.bf16.msra.mxu0 0
        %1816 = vmatprep.subr.bf16.mxu0 0
        %1817 = vmatpush1.bf16.msra.mxu0 0
        %1818 = vmatprep.subr.bf16.mxu0 0
        %1819 = vmatpush1.bf16.msra.mxu0 0
        %1820 = vmatprep.subr.bf16.mxu0 0
        %1821 = vmatpush1.bf16.msra.mxu0 0
        %1822 = vmatprep.subr.bf16.mxu0 0
        %1823 = vmatpush1.bf16.msra.mxu0 0
        %1824 = vmatprep.subr.bf16.mxu0 0
        %1825 = vmatpush1.bf16.msra.mxu0 0
        %1826 = vmatprep.subr.bf16.mxu0 0
        %1827 = vmatpush1.bf16.msra.mxu0 %v306
        %1828 = vmatprep.subr.bf16.mxu0 0
        %1829 = vmatpush2.bf16.msra.mxu0 0
        %1830 = vmatprep.subr.bf16.mxu0 0
        %1831 = vmatpush2.bf16.msra.mxu0 0
        %1832 = vmatprep.subr.bf16.mxu0 0
        %1833 = vmatpush2.bf16.msra.mxu0 0
        %1834 = vmatprep.subr.bf16.mxu0 0
        %1835 = vmatpush2.bf16.msra.mxu0 0
        %1836 = vmatprep.subr.bf16.mxu0 0
        %1837 = vmatpush2.bf16.msra.mxu0 0
        %1838 = vmatprep.subr.bf16.mxu0 0
        %1839 = vmatpush2.bf16.msra.mxu0 0
        %1840 = vmatprep.subr.bf16.mxu0 0
        %1841 = vmatpush2.bf16.msra.mxu0 0
        %1842 = vmatprep.subr.bf16.mxu0 0
        %1843 = vmatpush2.bf16.msra.mxu0 0
        %1844 = vmatprep.mubr.bf16.mxu0 0
        %1845 = vmatmul.mubr.bf16.gmra.mxu0 %v1810
        %v1846 = vpop.f32.mrf.mxu0
        %v1847 = vadd.f32 0.0, %v1846
        %v1848 = vpop.f32.mrf.mxu0
        %v1849 = vpop.f32.mrf.mxu0
        %v1850 = vpop.f32.mrf.mxu0
        %1851 = vdwg.mxu0
        %v1853 = vsel %vm300, %v1806, 0
        %1855 = vmatprep.subr.bf16.mxu0 0
        %1856 = vmatpush1.bf16.msra.mxu0 0
        %1857 = vmatprep.subr.bf16.mxu0 0
        %1858 = vmatpush1.bf16.msra.mxu0 0
        %1859 = vmatprep.subr.bf16.mxu0 0
        %1860 = vmatpush1.bf16.msra.mxu0 0
        %1861 = vmatprep.subr.bf16.mxu0 0
        %1862 = vmatpush1.bf16.msra.mxu0 0
        %1863 = vmatprep.subr.bf16.mxu0 0
        %1864 = vmatpush1.bf16.msra.mxu0 0
        %1865 = vmatprep.subr.bf16.mxu0 0
        %1866 = vmatpush1.bf16.msra.mxu0 0
        %1867 = vmatprep.subr.bf16.mxu0 0
        %1868 = vmatpush1.bf16.msra.mxu0 0
        %1869 = vmatprep.subr.bf16.mxu0 0
        %1870 = vmatpush1.bf16.msra.mxu0 %v352
        %1871 = vmatprep.subr.bf16.mxu0 0
        %1872 = vmatpush2.bf16.msra.mxu0 0
        %1873 = vmatprep.subr.bf16.mxu0 0
        %1874 = vmatpush2.bf16.msra.mxu0 0
        %1875 = vmatprep.subr.bf16.mxu0 0
        %1876 = vmatpush2.bf16.msra.mxu0 0
        %1877 = vmatprep.subr.bf16.mxu0 0
        %1878 = vmatpush2.bf16.msra.mxu0 0
        %1879 = vmatprep.subr.bf16.mxu0 0
        %1880 = vmatpush2.bf16.msra.mxu0 0
        %1881 = vmatprep.subr.bf16.mxu0 0
        %1882 = vmatpush2.bf16.msra.mxu0 0
        %1883 = vmatprep.subr.bf16.mxu0 0
        %1884 = vmatpush2.bf16.msra.mxu0 0
        %1885 = vmatprep.subr.bf16.mxu0 0
        %1886 = vmatpush2.bf16.msra.mxu0 0
        %1887 = vmatprep.mubr.bf16.mxu0 0
        %1888 = vmatmul.mubr.bf16.gmra.mxu0 %v1853
        %v1889 = vpop.f32.mrf.mxu0
        %v1890 = vadd.f32 %v1847, %v1889
        %v1891 = vpop.f32.mrf.mxu0
        %v1892 = vpop.f32.mrf.mxu0
        %v1893 = vpop.f32.mrf.mxu0
        %1894 = vdwg.mxu0
        %s1895 = scalar_lea.vmem %s2, 144
        %v1896 = vld [vmem:[%s1895] sm:$0xff]
        %v1897 = vld [vmem:[%s1895 + $0x8] sm:$0xff]
        %v1899 = vsel %vm489, %v1890, 0
        %1901 = vmatprep.subr.mxu0 0.0
        %1902 = vmatpush1.msra.mxu0 0.0
        %1903 = vmatprep.subr.mxu0 0.0
        %1904 = vmatpush1.msra.mxu0 0.0
        %1905 = vmatprep.subr.mxu0 0.0
        %1906 = vmatpush1.msra.mxu0 0.0
        %1907 = vmatprep.subr.mxu0 0.0
        %1908 = vmatpush1.msra.mxu0 0.0
        %1909 = vmatprep.subr.mxu0 0.0
        %1910 = vmatpush1.msra.mxu0 0.0
        %1911 = vmatprep.subr.mxu0 0.0
        %1912 = vmatpush1.msra.mxu0 0.0
        %1913 = vmatprep.subr.mxu0 0.0
        %1914 = vmatpush1.msra.mxu0 0.0
        %1915 = vmatprep.subr.mxu0 0.0
        %1916 = vmatpush1.msra.mxu0 0.0
        %1917 = vmatprep.subr.mxu0 0.0
        %1918 = vmatpush1.msra.mxu0 0.0
        %1919 = vmatprep.subr.mxu0 0.0
        %1920 = vmatpush1.msra.mxu0 0.0
        %1921 = vmatprep.subr.mxu0 0.0
        %1922 = vmatpush1.msra.mxu0 0.0
        %1923 = vmatprep.subr.mxu0 0.0
        %1924 = vmatpush1.msra.mxu0 0.0
        %1925 = vmatprep.subr.mxu0 0.0
        %1926 = vmatpush1.msra.mxu0 0.0
        %1927 = vmatprep.subr.mxu0 0.0
        %1928 = vmatpush1.msra.mxu0 0.0
        %1929 = vmatprep.subr.mxu0 0.0
        %1930 = vmatpush1.msra.mxu0 %v1897
        %1931 = vmatprep.subr.mxu0 0.0
        %1932 = vmatpush1.msra.mxu0 %v1896
        %1933 = vmatprep.subr.mxu0 0.0
        %1934 = vmatpush2.msra.mxu0 0.0
        %1935 = vmatprep.subr.mxu0 0.0
        %1936 = vmatpush2.msra.mxu0 0.0
        %1937 = vmatprep.subr.mxu0 0.0
        %1938 = vmatpush2.msra.mxu0 0.0
        %1939 = vmatprep.subr.mxu0 0.0
        %1940 = vmatpush2.msra.mxu0 0.0
        %1941 = vmatprep.subr.mxu0 0.0
        %1942 = vmatpush2.msra.mxu0 0.0
        %1943 = vmatprep.subr.mxu0 0.0
        %1944 = vmatpush2.msra.mxu0 0.0
        %1945 = vmatprep.subr.mxu0 0.0
        %1946 = vmatpush2.msra.mxu0 0.0
        %1947 = vmatprep.subr.mxu0 0.0
        %1948 = vmatpush2.msra.mxu0 0.0
        %1949 = vmatprep.subr.mxu0 0.0
        %1950 = vmatpush2.msra.mxu0 0.0
        %1951 = vmatprep.subr.mxu0 0.0
        %1952 = vmatpush2.msra.mxu0 0.0
        %1953 = vmatprep.subr.mxu0 0.0
        %1954 = vmatpush2.msra.mxu0 0.0
        %1955 = vmatprep.subr.mxu0 0.0
        %1956 = vmatpush2.msra.mxu0 0.0
        %1957 = vmatprep.subr.mxu0 0.0
        %1958 = vmatpush2.msra.mxu0 0.0
        %1959 = vmatprep.subr.mxu0 0.0
        %1960 = vmatpush2.msra.mxu0 0.0
        %1961 = vmatprep.subr.mxu0 0.0
        %1962 = vmatpush2.msra.mxu0 0.0
        %1963 = vmatprep.subr.mxu0 0.0
        %1964 = vmatpush2.msra.mxu0 0.0
        %1965 = vmatprep.mubr.f32.mxu0 0.0
        %1966 = vmatmul.mubr.f32.gmra.mxu0 %v1899
        %v1967 = vpop.f32.mrf.mxu0
        %v1968 = vadd.f32 0.0, %v1967
        %v1969 = vpop.f32.mrf.mxu0
        %1970 = vdwg.mxu0
        %v1971 = vadd.f32 %v1804, %v1968
        %s1972 = scalar_lea.vmem [#allocation2], 20
        %v1973 = vld [vmem:[%s1972] sm:$0x3]
        %s1974 = scalar_lea.vmem [#allocation4], 20
        %v1975 = vld [vmem:[%s1974] sm:$0x3]
        %v1977 = vsel %vm300, %v1975, 0
        %1979 = vmatprep.subr.bf16.mxu0 0
        %1980 = vmatpush1.bf16.msra.mxu0 0
        %1981 = vmatprep.subr.bf16.mxu0 0
        %1982 = vmatpush1.bf16.msra.mxu0 0
        %1983 = vmatprep.subr.bf16.mxu0 0
        %1984 = vmatpush1.bf16.msra.mxu0 0
        %1985 = vmatprep.subr.bf16.mxu0 0
        %1986 = vmatpush1.bf16.msra.mxu0 0
        %1987 = vmatprep.subr.bf16.mxu0 0
        %1988 = vmatpush1.bf16.msra.mxu0 0
        %1989 = vmatprep.subr.bf16.mxu0 0
        %1990 = vmatpush1.bf16.msra.mxu0 0
        %1991 = vmatprep.subr.bf16.mxu0 0
        %1992 = vmatpush1.bf16.msra.mxu0 0
        %1993 = vmatprep.subr.bf16.mxu0 0
        %1994 = vmatpush1.bf16.msra.mxu0 %v306
        %1995 = vmatprep.subr.bf16.mxu0 0
        %1996 = vmatpush2.bf16.msra.mxu0 0
        %1997 = vmatprep.subr.bf16.mxu0 0
        %1998 = vmatpush2.bf16.msra.mxu0 0
        %1999 = vmatprep.subr.bf16.mxu0 0
        %2000 = vmatpush2.bf16.msra.mxu0 0
        %2001 = vmatprep.subr.bf16.mxu0 0
        %2002 = vmatpush2.bf16.msra.mxu0 0
        %2003 = vmatprep.subr.bf16.mxu0 0
        %2004 = vmatpush2.bf16.msra.mxu0 0
        %2005 = vmatprep.subr.bf16.mxu0 0
        %2006 = vmatpush2.bf16.msra.mxu0 0
        %2007 = vmatprep.subr.bf16.mxu0 0
        %2008 = vmatpush2.bf16.msra.mxu0 0
        %2009 = vmatprep.subr.bf16.mxu0 0
        %2010 = vmatpush2.bf16.msra.mxu0 0
        %2011 = vmatprep.mubr.bf16.mxu0 0
        %2012 = vmatmul.mubr.bf16.gmra.mxu0 %v1977
        %v2013 = vpop.f32.mrf.mxu0
        %v2014 = vadd.f32 0.0, %v2013
        %v2015 = vpop.f32.mrf.mxu0
        %v2016 = vpop.f32.mrf.mxu0
        %v2017 = vpop.f32.mrf.mxu0
        %2018 = vdwg.mxu0
        %v2020 = vsel %vm300, %v1973, 0
        %2022 = vmatprep.subr.bf16.mxu0 0
        %2023 = vmatpush1.bf16.msra.mxu0 0
        %2024 = vmatprep.subr.bf16.mxu0 0
        %2025 = vmatpush1.bf16.msra.mxu0 0
        %2026 = vmatprep.subr.bf16.mxu0 0
        %2027 = vmatpush1.bf16.msra.mxu0 0
        %2028 = vmatprep.subr.bf16.mxu0 0
        %2029 = vmatpush1.bf16.msra.mxu0 0
        %2030 = vmatprep.subr.bf16.mxu0 0
        %2031 = vmatpush1.bf16.msra.mxu0 0
        %2032 = vmatprep.subr.bf16.mxu0 0
        %2033 = vmatpush1.bf16.msra.mxu0 0
        %2034 = vmatprep.subr.bf16.mxu0 0
        %2035 = vmatpush1.bf16.msra.mxu0 0
        %2036 = vmatprep.subr.bf16.mxu0 0
        %2037 = vmatpush1.bf16.msra.mxu0 %v352
        %2038 = vmatprep.subr.bf16.mxu0 0
        %2039 = vmatpush2.bf16.msra.mxu0 0
        %2040 = vmatprep.subr.bf16.mxu0 0
        %2041 = vmatpush2.bf16.msra.mxu0 0
        %2042 = vmatprep.subr.bf16.mxu0 0
        %2043 = vmatpush2.bf16.msra.mxu0 0
        %2044 = vmatprep.subr.bf16.mxu0 0
        %2045 = vmatpush2.bf16.msra.mxu0 0
        %2046 = vmatprep.subr.bf16.mxu0 0
        %2047 = vmatpush2.bf16.msra.mxu0 0
        %2048 = vmatprep.subr.bf16.mxu0 0
        %2049 = vmatpush2.bf16.msra.mxu0 0
        %2050 = vmatprep.subr.bf16.mxu0 0
        %2051 = vmatpush2.bf16.msra.mxu0 0
        %2052 = vmatprep.subr.bf16.mxu0 0
        %2053 = vmatpush2.bf16.msra.mxu0 0
        %2054 = vmatprep.mubr.bf16.mxu0 0
        %2055 = vmatmul.mubr.bf16.gmra.mxu0 %v2020
        %v2056 = vpop.f32.mrf.mxu0
        %v2057 = vadd.f32 %v2014, %v2056
        %v2058 = vpop.f32.mrf.mxu0
        %v2059 = vpop.f32.mrf.mxu0
        %v2060 = vpop.f32.mrf.mxu0
        %2061 = vdwg.mxu0
        %s2062 = scalar_lea.vmem %s2, 160
        %v2063 = vld [vmem:[%s2062] sm:$0xff]
        %v2064 = vld [vmem:[%s2062 + $0x8] sm:$0xff]
        %v2066 = vsel %vm489, %v2057, 0
        %2068 = vmatprep.subr.mxu0 0.0
        %2069 = vmatpush1.msra.mxu0 0.0
        %2070 = vmatprep.subr.mxu0 0.0
        %2071 = vmatpush1.msra.mxu0 0.0
        %2072 = vmatprep.subr.mxu0 0.0
        %2073 = vmatpush1.msra.mxu0 0.0
        %2074 = vmatprep.subr.mxu0 0.0
        %2075 = vmatpush1.msra.mxu0 0.0
        %2076 = vmatprep.subr.mxu0 0.0
        %2077 = vmatpush1.msra.mxu0 0.0
        %2078 = vmatprep.subr.mxu0 0.0
        %2079 = vmatpush1.msra.mxu0 0.0
        %2080 = vmatprep.subr.mxu0 0.0
        %2081 = vmatpush1.msra.mxu0 0.0
        %2082 = vmatprep.subr.mxu0 0.0
        %2083 = vmatpush1.msra.mxu0 0.0
        %2084 = vmatprep.subr.mxu0 0.0
        %2085 = vmatpush1.msra.mxu0 0.0
        %2086 = vmatprep.subr.mxu0 0.0
        %2087 = vmatpush1.msra.mxu0 0.0
        %2088 = vmatprep.subr.mxu0 0.0
        %2089 = vmatpush1.msra.mxu0 0.0
        %2090 = vmatprep.subr.mxu0 0.0
        %2091 = vmatpush1.msra.mxu0 0.0
        %2092 = vmatprep.subr.mxu0 0.0
        %2093 = vmatpush1.msra.mxu0 0.0
        %2094 = vmatprep.subr.mxu0 0.0
        %2095 = vmatpush1.msra.mxu0 0.0
        %2096 = vmatprep.subr.mxu0 0.0
        %2097 = vmatpush1.msra.mxu0 %v2064
        %2098 = vmatprep.subr.mxu0 0.0
        %2099 = vmatpush1.msra.mxu0 %v2063
        %2100 = vmatprep.subr.mxu0 0.0
        %2101 = vmatpush2.msra.mxu0 0.0
        %2102 = vmatprep.subr.mxu0 0.0
        %2103 = vmatpush2.msra.mxu0 0.0
        %2104 = vmatprep.subr.mxu0 0.0
        %2105 = vmatpush2.msra.mxu0 0.0
        %2106 = vmatprep.subr.mxu0 0.0
        %2107 = vmatpush2.msra.mxu0 0.0
        %2108 = vmatprep.subr.mxu0 0.0
        %2109 = vmatpush2.msra.mxu0 0.0
        %2110 = vmatprep.subr.mxu0 0.0
        %2111 = vmatpush2.msra.mxu0 0.0
        %2112 = vmatprep.subr.mxu0 0.0
        %2113 = vmatpush2.msra.mxu0 0.0
        %2114 = vmatprep.subr.mxu0 0.0
        %2115 = vmatpush2.msra.mxu0 0.0
        %2116 = vmatprep.subr.mxu0 0.0
        %2117 = vmatpush2.msra.mxu0 0.0
        %2118 = vmatprep.subr.mxu0 0.0
        %2119 = vmatpush2.msra.mxu0 0.0
        %2120 = vmatprep.subr.mxu0 0.0
        %2121 = vmatpush2.msra.mxu0 0.0
        %2122 = vmatprep.subr.mxu0 0.0
        %2123 = vmatpush2.msra.mxu0 0.0
        %2124 = vmatprep.subr.mxu0 0.0
        %2125 = vmatpush2.msra.mxu0 0.0
        %2126 = vmatprep.subr.mxu0 0.0
        %2127 = vmatpush2.msra.mxu0 0.0
        %2128 = vmatprep.subr.mxu0 0.0
        %2129 = vmatpush2.msra.mxu0 0.0
        %2130 = vmatprep.subr.mxu0 0.0
        %2131 = vmatpush2.msra.mxu0 0.0
        %2132 = vmatprep.mubr.f32.mxu0 0.0
        %2133 = vmatmul.mubr.f32.gmra.mxu0 %v2066
        %v2134 = vpop.f32.mrf.mxu0
        %v2135 = vadd.f32 0.0, %v2134
        %v2136 = vpop.f32.mrf.mxu0
        %2137 = vdwg.mxu0
        %v2138 = vadd.f32 %v1971, %v2135
        %s2139 = scalar_lea.vmem [#allocation2], 22
        %v2140 = vld [vmem:[%s2139] sm:$0x3]
        %s2141 = scalar_lea.vmem [#allocation4], 22
        %v2142 = vld [vmem:[%s2141] sm:$0x3]
        %v2144 = vsel %vm300, %v2142, 0
        %2146 = vmatprep.subr.bf16.mxu0 0
        %2147 = vmatpush1.bf16.msra.mxu0 0
        %2148 = vmatprep.subr.bf16.mxu0 0
        %2149 = vmatpush1.bf16.msra.mxu0 0
        %2150 = vmatprep.subr.bf16.mxu0 0
        %2151 = vmatpush1.bf16.msra.mxu0 0
        %2152 = vmatprep.subr.bf16.mxu0 0
        %2153 = vmatpush1.bf16.msra.mxu0 0
        %2154 = vmatprep.subr.bf16.mxu0 0
        %2155 = vmatpush1.bf16.msra.mxu0 0
        %2156 = vmatprep.subr.bf16.mxu0 0
        %2157 = vmatpush1.bf16.msra.mxu0 0
        %2158 = vmatprep.subr.bf16.mxu0 0
        %2159 = vmatpush1.bf16.msra.mxu0 0
        %2160 = vmatprep.subr.bf16.mxu0 0
        %2161 = vmatpush1.bf16.msra.mxu0 %v306
        %2162 = vmatprep.subr.bf16.mxu0 0
        %2163 = vmatpush2.bf16.msra.mxu0 0
        %2164 = vmatprep.subr.bf16.mxu0 0
        %2165 = vmatpush2.bf16.msra.mxu0 0
        %2166 = vmatprep.subr.bf16.mxu0 0
        %2167 = vmatpush2.bf16.msra.mxu0 0
        %2168 = vmatprep.subr.bf16.mxu0 0
        %2169 = vmatpush2.bf16.msra.mxu0 0
        %2170 = vmatprep.subr.bf16.mxu0 0
        %2171 = vmatpush2.bf16.msra.mxu0 0
        %2172 = vmatprep.subr.bf16.mxu0 0
        %2173 = vmatpush2.bf16.msra.mxu0 0
        %2174 = vmatprep.subr.bf16.mxu0 0
        %2175 = vmatpush2.bf16.msra.mxu0 0
        %2176 = vmatprep.subr.bf16.mxu0 0
        %2177 = vmatpush2.bf16.msra.mxu0 0
        %2178 = vmatprep.mubr.bf16.mxu0 0
        %2179 = vmatmul.mubr.bf16.gmra.mxu0 %v2144
        %v2180 = vpop.f32.mrf.mxu0
        %v2181 = vadd.f32 0.0, %v2180
        %v2182 = vpop.f32.mrf.mxu0
        %v2183 = vpop.f32.mrf.mxu0
        %v2184 = vpop.f32.mrf.mxu0
        %2185 = vdwg.mxu0
        %v2187 = vsel %vm300, %v2140, 0
        %2189 = vmatprep.subr.bf16.mxu0 0
        %2190 = vmatpush1.bf16.msra.mxu0 0
        %2191 = vmatprep.subr.bf16.mxu0 0
        %2192 = vmatpush1.bf16.msra.mxu0 0
        %2193 = vmatprep.subr.bf16.mxu0 0
        %2194 = vmatpush1.bf16.msra.mxu0 0
        %2195 = vmatprep.subr.bf16.mxu0 0
        %2196 = vmatpush1.bf16.msra.mxu0 0
        %2197 = vmatprep.subr.bf16.mxu0 0
        %2198 = vmatpush1.bf16.msra.mxu0 0
        %2199 = vmatprep.subr.bf16.mxu0 0
        %2200 = vmatpush1.bf16.msra.mxu0 0
        %2201 = vmatprep.subr.bf16.mxu0 0
        %2202 = vmatpush1.bf16.msra.mxu0 0
        %2203 = vmatprep.subr.bf16.mxu0 0
        %2204 = vmatpush1.bf16.msra.mxu0 %v352
        %2205 = vmatprep.subr.bf16.mxu0 0
        %2206 = vmatpush2.bf16.msra.mxu0 0
        %2207 = vmatprep.subr.bf16.mxu0 0
        %2208 = vmatpush2.bf16.msra.mxu0 0
        %2209 = vmatprep.subr.bf16.mxu0 0
        %2210 = vmatpush2.bf16.msra.mxu0 0
        %2211 = vmatprep.subr.bf16.mxu0 0
        %2212 = vmatpush2.bf16.msra.mxu0 0
        %2213 = vmatprep.subr.bf16.mxu0 0
        %2214 = vmatpush2.bf16.msra.mxu0 0
        %2215 = vmatprep.subr.bf16.mxu0 0
        %2216 = vmatpush2.bf16.msra.mxu0 0
        %2217 = vmatprep.subr.bf16.mxu0 0
        %2218 = vmatpush2.bf16.msra.mxu0 0
        %2219 = vmatprep.subr.bf16.mxu0 0
        %2220 = vmatpush2.bf16.msra.mxu0 0
        %2221 = vmatprep.mubr.bf16.mxu0 0
        %2222 = vmatmul.mubr.bf16.gmra.mxu0 %v2187
        %v2223 = vpop.f32.mrf.mxu0
        %v2224 = vadd.f32 %v2181, %v2223
        %v2225 = vpop.f32.mrf.mxu0
        %v2226 = vpop.f32.mrf.mxu0
        %v2227 = vpop.f32.mrf.mxu0
        %2228 = vdwg.mxu0
        %s2229 = scalar_lea.vmem %s2, 176
        %v2230 = vld [vmem:[%s2229] sm:$0xff]
        %v2231 = vld [vmem:[%s2229 + $0x8] sm:$0xff]
        %v2233 = vsel %vm489, %v2224, 0
        %2235 = vmatprep.subr.mxu0 0.0
        %2236 = vmatpush1.msra.mxu0 0.0
        %2237 = vmatprep.subr.mxu0 0.0
        %2238 = vmatpush1.msra.mxu0 0.0
        %2239 = vmatprep.subr.mxu0 0.0
        %2240 = vmatpush1.msra.mxu0 0.0
        %2241 = vmatprep.subr.mxu0 0.0
        %2242 = vmatpush1.msra.mxu0 0.0
        %2243 = vmatprep.subr.mxu0 0.0
        %2244 = vmatpush1.msra.mxu0 0.0
        %2245 = vmatprep.subr.mxu0 0.0
        %2246 = vmatpush1.msra.mxu0 0.0
        %2247 = vmatprep.subr.mxu0 0.0
        %2248 = vmatpush1.msra.mxu0 0.0
        %2249 = vmatprep.subr.mxu0 0.0
        %2250 = vmatpush1.msra.mxu0 0.0
        %2251 = vmatprep.subr.mxu0 0.0
        %2252 = vmatpush1.msra.mxu0 0.0
        %2253 = vmatprep.subr.mxu0 0.0
        %2254 = vmatpush1.msra.mxu0 0.0
        %2255 = vmatprep.subr.mxu0 0.0
        %2256 = vmatpush1.msra.mxu0 0.0
        %2257 = vmatprep.subr.mxu0 0.0
        %2258 = vmatpush1.msra.mxu0 0.0
        %2259 = vmatprep.subr.mxu0 0.0
        %2260 = vmatpush1.msra.mxu0 0.0
        %2261 = vmatprep.subr.mxu0 0.0
        %2262 = vmatpush1.msra.mxu0 0.0
        %2263 = vmatprep.subr.mxu0 0.0
        %2264 = vmatpush1.msra.mxu0 %v2231
        %2265 = vmatprep.subr.mxu0 0.0
        %2266 = vmatpush1.msra.mxu0 %v2230
        %2267 = vmatprep.subr.mxu0 0.0
        %2268 = vmatpush2.msra.mxu0 0.0
        %2269 = vmatprep.subr.mxu0 0.0
        %2270 = vmatpush2.msra.mxu0 0.0
        %2271 = vmatprep.subr.mxu0 0.0
        %2272 = vmatpush2.msra.mxu0 0.0
        %2273 = vmatprep.subr.mxu0 0.0
        %2274 = vmatpush2.msra.mxu0 0.0
        %2275 = vmatprep.subr.mxu0 0.0
        %2276 = vmatpush2.msra.mxu0 0.0
        %2277 = vmatprep.subr.mxu0 0.0
        %2278 = vmatpush2.msra.mxu0 0.0
        %2279 = vmatprep.subr.mxu0 0.0
        %2280 = vmatpush2.msra.mxu0 0.0
        %2281 = vmatprep.subr.mxu0 0.0
        %2282 = vmatpush2.msra.mxu0 0.0
        %2283 = vmatprep.subr.mxu0 0.0
        %2284 = vmatpush2.msra.mxu0 0.0
        %2285 = vmatprep.subr.mxu0 0.0
        %2286 = vmatpush2.msra.mxu0 0.0
        %2287 = vmatprep.subr.mxu0 0.0
        %2288 = vmatpush2.msra.mxu0 0.0
        %2289 = vmatprep.subr.mxu0 0.0
        %2290 = vmatpush2.msra.mxu0 0.0
        %2291 = vmatprep.subr.mxu0 0.0
        %2292 = vmatpush2.msra.mxu0 0.0
        %2293 = vmatprep.subr.mxu0 0.0
        %2294 = vmatpush2.msra.mxu0 0.0
        %2295 = vmatprep.subr.mxu0 0.0
        %2296 = vmatpush2.msra.mxu0 0.0
        %2297 = vmatprep.subr.mxu0 0.0
        %2298 = vmatpush2.msra.mxu0 0.0
        %2299 = vmatprep.mubr.f32.mxu0 0.0
        %2300 = vmatmul.mubr.f32.gmra.mxu0 %v2233
        %v2301 = vpop.f32.mrf.mxu0
        %v2302 = vadd.f32 0.0, %v2301
        %v2303 = vpop.f32.mrf.mxu0
        %2304 = vdwg.mxu0
        %v2305 = vadd.f32 %v2138, %v2302
        %s2306 = scalar_lea.vmem [#allocation2], 24
        %v2307 = vld [vmem:[%s2306] sm:$0x3]
        %s2308 = scalar_lea.vmem [#allocation4], 24
        %v2309 = vld [vmem:[%s2308] sm:$0x3]
        %v2311 = vsel %vm300, %v2309, 0
        %2313 = vmatprep.subr.bf16.mxu0 0
        %2314 = vmatpush1.bf16.msra.mxu0 0
        %2315 = vmatprep.subr.bf16.mxu0 0
        %2316 = vmatpush1.bf16.msra.mxu0 0
        %2317 = vmatprep.subr.bf16.mxu0 0
        %2318 = vmatpush1.bf16.msra.mxu0 0
        %2319 = vmatprep.subr.bf16.mxu0 0
        %2320 = vmatpush1.bf16.msra.mxu0 0
        %2321 = vmatprep.subr.bf16.mxu0 0
        %2322 = vmatpush1.bf16.msra.mxu0 0
        %2323 = vmatprep.subr.bf16.mxu0 0
        %2324 = vmatpush1.bf16.msra.mxu0 0
        %2325 = vmatprep.subr.bf16.mxu0 0
        %2326 = vmatpush1.bf16.msra.mxu0 0
        %2327 = vmatprep.subr.bf16.mxu0 0
        %2328 = vmatpush1.bf16.msra.mxu0 %v306
        %2329 = vmatprep.subr.bf16.mxu0 0
        %2330 = vmatpush2.bf16.msra.mxu0 0
        %2331 = vmatprep.subr.bf16.mxu0 0
        %2332 = vmatpush2.bf16.msra.mxu0 0
        %2333 = vmatprep.subr.bf16.mxu0 0
        %2334 = vmatpush2.bf16.msra.mxu0 0
        %2335 = vmatprep.subr.bf16.mxu0 0
        %2336 = vmatpush2.bf16.msra.mxu0 0
        %2337 = vmatprep.subr.bf16.mxu0 0
        %2338 = vmatpush2.bf16.msra.mxu0 0
        %2339 = vmatprep.subr.bf16.mxu0 0
        %2340 = vmatpush2.bf16.msra.mxu0 0
        %2341 = vmatprep.subr.bf16.mxu0 0
        %2342 = vmatpush2.bf16.msra.mxu0 0
        %2343 = vmatprep.subr.bf16.mxu0 0
        %2344 = vmatpush2.bf16.msra.mxu0 0
        %2345 = vmatprep.mubr.bf16.mxu0 0
        %2346 = vmatmul.mubr.bf16.gmra.mxu0 %v2311
        %v2347 = vpop.f32.mrf.mxu0
        %v2348 = vadd.f32 0.0, %v2347
        %v2349 = vpop.f32.mrf.mxu0
        %v2350 = vpop.f32.mrf.mxu0
        %v2351 = vpop.f32.mrf.mxu0
        %2352 = vdwg.mxu0
        %v2354 = vsel %vm300, %v2307, 0
        %2356 = vmatprep.subr.bf16.mxu0 0
        %2357 = vmatpush1.bf16.msra.mxu0 0
        %2358 = vmatprep.subr.bf16.mxu0 0
        %2359 = vmatpush1.bf16.msra.mxu0 0
        %2360 = vmatprep.subr.bf16.mxu0 0
        %2361 = vmatpush1.bf16.msra.mxu0 0
        %2362 = vmatprep.subr.bf16.mxu0 0
        %2363 = vmatpush1.bf16.msra.mxu0 0
        %2364 = vmatprep.subr.bf16.mxu0 0
        %2365 = vmatpush1.bf16.msra.mxu0 0
        %2366 = vmatprep.subr.bf16.mxu0 0
        %2367 = vmatpush1.bf16.msra.mxu0 0
        %2368 = vmatprep.subr.bf16.mxu0 0
        %2369 = vmatpush1.bf16.msra.mxu0 0
        %2370 = vmatprep.subr.bf16.mxu0 0
        %2371 = vmatpush1.bf16.msra.mxu0 %v352
        %2372 = vmatprep.subr.bf16.mxu0 0
        %2373 = vmatpush2.bf16.msra.mxu0 0
        %2374 = vmatprep.subr.bf16.mxu0 0
        %2375 = vmatpush2.bf16.msra.mxu0 0
        %2376 = vmatprep.subr.bf16.mxu0 0
        %2377 = vmatpush2.bf16.msra.mxu0 0
        %2378 = vmatprep.subr.bf16.mxu0 0
        %2379 = vmatpush2.bf16.msra.mxu0 0
        %2380 = vmatprep.subr.bf16.mxu0 0
        %2381 = vmatpush2.bf16.msra.mxu0 0
        %2382 = vmatprep.subr.bf16.mxu0 0
        %2383 = vmatpush2.bf16.msra.mxu0 0
        %2384 = vmatprep.subr.bf16.mxu0 0
        %2385 = vmatpush2.bf16.msra.mxu0 0
        %2386 = vmatprep.subr.bf16.mxu0 0
        %2387 = vmatpush2.bf16.msra.mxu0 0
        %2388 = vmatprep.mubr.bf16.mxu0 0
        %2389 = vmatmul.mubr.bf16.gmra.mxu0 %v2354
        %v2390 = vpop.f32.mrf.mxu0
        %v2391 = vadd.f32 %v2348, %v2390
        %v2392 = vpop.f32.mrf.mxu0
        %v2393 = vpop.f32.mrf.mxu0
        %v2394 = vpop.f32.mrf.mxu0
        %2395 = vdwg.mxu0
        %s2396 = scalar_lea.vmem %s2, 192
        %v2397 = vld [vmem:[%s2396] sm:$0xff]
        %v2398 = vld [vmem:[%s2396 + $0x8] sm:$0xff]
        %v2400 = vsel %vm489, %v2391, 0
        %2402 = vmatprep.subr.mxu0 0.0
        %2403 = vmatpush1.msra.mxu0 0.0
        %2404 = vmatprep.subr.mxu0 0.0
        %2405 = vmatpush1.msra.mxu0 0.0
        %2406 = vmatprep.subr.mxu0 0.0
        %2407 = vmatpush1.msra.mxu0 0.0
        %2408 = vmatprep.subr.mxu0 0.0
        %2409 = vmatpush1.msra.mxu0 0.0
        %2410 = vmatprep.subr.mxu0 0.0
        %2411 = vmatpush1.msra.mxu0 0.0
        %2412 = vmatprep.subr.mxu0 0.0
        %2413 = vmatpush1.msra.mxu0 0.0
        %2414 = vmatprep.subr.mxu0 0.0
        %2415 = vmatpush1.msra.mxu0 0.0
        %2416 = vmatprep.subr.mxu0 0.0
        %2417 = vmatpush1.msra.mxu0 0.0
        %2418 = vmatprep.subr.mxu0 0.0
        %2419 = vmatpush1.msra.mxu0 0.0
        %2420 = vmatprep.subr.mxu0 0.0
        %2421 = vmatpush1.msra.mxu0 0.0
        %2422 = vmatprep.subr.mxu0 0.0
        %2423 = vmatpush1.msra.mxu0 0.0
        %2424 = vmatprep.subr.mxu0 0.0
        %2425 = vmatpush1.msra.mxu0 0.0
        %2426 = vmatprep.subr.mxu0 0.0
        %2427 = vmatpush1.msra.mxu0 0.0
        %2428 = vmatprep.subr.mxu0 0.0
        %2429 = vmatpush1.msra.mxu0 0.0
        %2430 = vmatprep.subr.mxu0 0.0
        %2431 = vmatpush1.msra.mxu0 %v2398
        %2432 = vmatprep.subr.mxu0 0.0
        %2433 = vmatpush1.msra.mxu0 %v2397
        %2434 = vmatprep.subr.mxu0 0.0
        %2435 = vmatpush2.msra.mxu0 0.0
        %2436 = vmatprep.subr.mxu0 0.0
        %2437 = vmatpush2.msra.mxu0 0.0
        %2438 = vmatprep.subr.mxu0 0.0
        %2439 = vmatpush2.msra.mxu0 0.0
        %2440 = vmatprep.subr.mxu0 0.0
        %2441 = vmatpush2.msra.mxu0 0.0
        %2442 = vmatprep.subr.mxu0 0.0
        %2443 = vmatpush2.msra.mxu0 0.0
        %2444 = vmatprep.subr.mxu0 0.0
        %2445 = vmatpush2.msra.mxu0 0.0
        %2446 = vmatprep.subr.mxu0 0.0
        %2447 = vmatpush2.msra.mxu0 0.0
        %2448 = vmatprep.subr.mxu0 0.0
        %2449 = vmatpush2.msra.mxu0 0.0
        %2450 = vmatprep.subr.mxu0 0.0
        %2451 = vmatpush2.msra.mxu0 0.0
        %2452 = vmatprep.subr.mxu0 0.0
        %2453 = vmatpush2.msra.mxu0 0.0
        %2454 = vmatprep.subr.mxu0 0.0
        %2455 = vmatpush2.msra.mxu0 0.0
        %2456 = vmatprep.subr.mxu0 0.0
        %2457 = vmatpush2.msra.mxu0 0.0
        %2458 = vmatprep.subr.mxu0 0.0
        %2459 = vmatpush2.msra.mxu0 0.0
        %2460 = vmatprep.subr.mxu0 0.0
        %2461 = vmatpush2.msra.mxu0 0.0
        %2462 = vmatprep.subr.mxu0 0.0
        %2463 = vmatpush2.msra.mxu0 0.0
        %2464 = vmatprep.subr.mxu0 0.0
        %2465 = vmatpush2.msra.mxu0 0.0
        %2466 = vmatprep.mubr.f32.mxu0 0.0
        %2467 = vmatmul.mubr.f32.gmra.mxu0 %v2400
        %v2468 = vpop.f32.mrf.mxu0
        %v2469 = vadd.f32 0.0, %v2468
        %v2470 = vpop.f32.mrf.mxu0
        %2471 = vdwg.mxu0
        %v2472 = vadd.f32 %v2305, %v2469
        %s2473 = scalar_lea.vmem [#allocation2], 26
        %v2474 = vld [vmem:[%s2473] sm:$0x3]
        %s2475 = scalar_lea.vmem [#allocation4], 26
        %v2476 = vld [vmem:[%s2475] sm:$0x3]
        %v2478 = vsel %vm300, %v2476, 0
        %2480 = vmatprep.subr.bf16.mxu0 0
        %2481 = vmatpush1.bf16.msra.mxu0 0
        %2482 = vmatprep.subr.bf16.mxu0 0
        %2483 = vmatpush1.bf16.msra.mxu0 0
        %2484 = vmatprep.subr.bf16.mxu0 0
        %2485 = vmatpush1.bf16.msra.mxu0 0
        %2486 = vmatprep.subr.bf16.mxu0 0
        %2487 = vmatpush1.bf16.msra.mxu0 0
        %2488 = vmatprep.subr.bf16.mxu0 0
        %2489 = vmatpush1.bf16.msra.mxu0 0
        %2490 = vmatprep.subr.bf16.mxu0 0
        %2491 = vmatpush1.bf16.msra.mxu0 0
        %2492 = vmatprep.subr.bf16.mxu0 0
        %2493 = vmatpush1.bf16.msra.mxu0 0
        %2494 = vmatprep.subr.bf16.mxu0 0
        %2495 = vmatpush1.bf16.msra.mxu0 %v306
        %2496 = vmatprep.subr.bf16.mxu0 0
        %2497 = vmatpush2.bf16.msra.mxu0 0
        %2498 = vmatprep.subr.bf16.mxu0 0
        %2499 = vmatpush2.bf16.msra.mxu0 0
        %2500 = vmatprep.subr.bf16.mxu0 0
        %2501 = vmatpush2.bf16.msra.mxu0 0
        %2502 = vmatprep.subr.bf16.mxu0 0
        %2503 = vmatpush2.bf16.msra.mxu0 0
        %2504 = vmatprep.subr.bf16.mxu0 0
        %2505 = vmatpush2.bf16.msra.mxu0 0
        %2506 = vmatprep.subr.bf16.mxu0 0
        %2507 = vmatpush2.bf16.msra.mxu0 0
        %2508 = vmatprep.subr.bf16.mxu0 0
        %2509 = vmatpush2.bf16.msra.mxu0 0
        %2510 = vmatprep.subr.bf16.mxu0 0
        %2511 = vmatpush2.bf16.msra.mxu0 0
        %2512 = vmatprep.mubr.bf16.mxu0 0
        %2513 = vmatmul.mubr.bf16.gmra.mxu0 %v2478
        %v2514 = vpop.f32.mrf.mxu0
        %v2515 = vadd.f32 0.0, %v2514
        %v2516 = vpop.f32.mrf.mxu0
        %v2517 = vpop.f32.mrf.mxu0
        %v2518 = vpop.f32.mrf.mxu0
        %2519 = vdwg.mxu0
        %v2521 = vsel %vm300, %v2474, 0
        %2523 = vmatprep.subr.bf16.mxu0 0
        %2524 = vmatpush1.bf16.msra.mxu0 0
        %2525 = vmatprep.subr.bf16.mxu0 0
        %2526 = vmatpush1.bf16.msra.mxu0 0
        %2527 = vmatprep.subr.bf16.mxu0 0
        %2528 = vmatpush1.bf16.msra.mxu0 0
        %2529 = vmatprep.subr.bf16.mxu0 0
        %2530 = vmatpush1.bf16.msra.mxu0 0
        %2531 = vmatprep.subr.bf16.mxu0 0
        %2532 = vmatpush1.bf16.msra.mxu0 0
        %2533 = vmatprep.subr.bf16.mxu0 0
        %2534 = vmatpush1.bf16.msra.mxu0 0
        %2535 = vmatprep.subr.bf16.mxu0 0
        %2536 = vmatpush1.bf16.msra.mxu0 0
        %2537 = vmatprep.subr.bf16.mxu0 0
        %2538 = vmatpush1.bf16.msra.mxu0 %v352
        %2539 = vmatprep.subr.bf16.mxu0 0
        %2540 = vmatpush2.bf16.msra.mxu0 0
        %2541 = vmatprep.subr.bf16.mxu0 0
        %2542 = vmatpush2.bf16.msra.mxu0 0
        %2543 = vmatprep.subr.bf16.mxu0 0
        %2544 = vmatpush2.bf16.msra.mxu0 0
        %2545 = vmatprep.subr.bf16.mxu0 0
        %2546 = vmatpush2.bf16.msra.mxu0 0
        %2547 = vmatprep.subr.bf16.mxu0 0
        %2548 = vmatpush2.bf16.msra.mxu0 0
        %2549 = vmatprep.subr.bf16.mxu0 0
        %2550 = vmatpush2.bf16.msra.mxu0 0
        %2551 = vmatprep.subr.bf16.mxu0 0
        %2552 = vmatpush2.bf16.msra.mxu0 0
        %2553 = vmatprep.subr.bf16.mxu0 0
        %2554 = vmatpush2.bf16.msra.mxu0 0
        %2555 = vmatprep.mubr.bf16.mxu0 0
        %2556 = vmatmul.mubr.bf16.gmra.mxu0 %v2521
        %v2557 = vpop.f32.mrf.mxu0
        %v2558 = vadd.f32 %v2515, %v2557
        %v2559 = vpop.f32.mrf.mxu0
        %v2560 = vpop.f32.mrf.mxu0
        %v2561 = vpop.f32.mrf.mxu0
        %2562 = vdwg.mxu0
        %s2563 = scalar_lea.vmem %s2, 208
        %v2564 = vld [vmem:[%s2563] sm:$0xff]
        %v2565 = vld [vmem:[%s2563 + $0x8] sm:$0xff]
        %v2567 = vsel %vm489, %v2558, 0
        %2569 = vmatprep.subr.mxu0 0.0
        %2570 = vmatpush1.msra.mxu0 0.0
        %2571 = vmatprep.subr.mxu0 0.0
        %2572 = vmatpush1.msra.mxu0 0.0
        %2573 = vmatprep.subr.mxu0 0.0
        %2574 = vmatpush1.msra.mxu0 0.0
        %2575 = vmatprep.subr.mxu0 0.0
        %2576 = vmatpush1.msra.mxu0 0.0
        %2577 = vmatprep.subr.mxu0 0.0
        %2578 = vmatpush1.msra.mxu0 0.0
        %2579 = vmatprep.subr.mxu0 0.0
        %2580 = vmatpush1.msra.mxu0 0.0
        %2581 = vmatprep.subr.mxu0 0.0
        %2582 = vmatpush1.msra.mxu0 0.0
        %2583 = vmatprep.subr.mxu0 0.0
        %2584 = vmatpush1.msra.mxu0 0.0
        %2585 = vmatprep.subr.mxu0 0.0
        %2586 = vmatpush1.msra.mxu0 0.0
        %2587 = vmatprep.subr.mxu0 0.0
        %2588 = vmatpush1.msra.mxu0 0.0
        %2589 = vmatprep.subr.mxu0 0.0
        %2590 = vmatpush1.msra.mxu0 0.0
        %2591 = vmatprep.subr.mxu0 0.0
        %2592 = vmatpush1.msra.mxu0 0.0
        %2593 = vmatprep.subr.mxu0 0.0
        %2594 = vmatpush1.msra.mxu0 0.0
        %2595 = vmatprep.subr.mxu0 0.0
        %2596 = vmatpush1.msra.mxu0 0.0
        %2597 = vmatprep.subr.mxu0 0.0
        %2598 = vmatpush1.msra.mxu0 %v2565
        %2599 = vmatprep.subr.mxu0 0.0
        %2600 = vmatpush1.msra.mxu0 %v2564
        %2601 = vmatprep.subr.mxu0 0.0
        %2602 = vmatpush2.msra.mxu0 0.0
        %2603 = vmatprep.subr.mxu0 0.0
        %2604 = vmatpush2.msra.mxu0 0.0
        %2605 = vmatprep.subr.mxu0 0.0
        %2606 = vmatpush2.msra.mxu0 0.0
        %2607 = vmatprep.subr.mxu0 0.0
        %2608 = vmatpush2.msra.mxu0 0.0
        %2609 = vmatprep.subr.mxu0 0.0
        %2610 = vmatpush2.msra.mxu0 0.0
        %2611 = vmatprep.subr.mxu0 0.0
        %2612 = vmatpush2.msra.mxu0 0.0
        %2613 = vmatprep.subr.mxu0 0.0
        %2614 = vmatpush2.msra.mxu0 0.0
        %2615 = vmatprep.subr.mxu0 0.0
        %2616 = vmatpush2.msra.mxu0 0.0
        %2617 = vmatprep.subr.mxu0 0.0
        %2618 = vmatpush2.msra.mxu0 0.0
        %2619 = vmatprep.subr.mxu0 0.0
        %2620 = vmatpush2.msra.mxu0 0.0
        %2621 = vmatprep.subr.mxu0 0.0
        %2622 = vmatpush2.msra.mxu0 0.0
        %2623 = vmatprep.subr.mxu0 0.0
        %2624 = vmatpush2.msra.mxu0 0.0
        %2625 = vmatprep.subr.mxu0 0.0
        %2626 = vmatpush2.msra.mxu0 0.0
        %2627 = vmatprep.subr.mxu0 0.0
        %2628 = vmatpush2.msra.mxu0 0.0
        %2629 = vmatprep.subr.mxu0 0.0
        %2630 = vmatpush2.msra.mxu0 0.0
        %2631 = vmatprep.subr.mxu0 0.0
        %2632 = vmatpush2.msra.mxu0 0.0
        %2633 = vmatprep.mubr.f32.mxu0 0.0
        %2634 = vmatmul.mubr.f32.gmra.mxu0 %v2567
        %v2635 = vpop.f32.mrf.mxu0
        %v2636 = vadd.f32 0.0, %v2635
        %v2637 = vpop.f32.mrf.mxu0
        %2638 = vdwg.mxu0
        %v2639 = vadd.f32 %v2472, %v2636
        %s2640 = scalar_lea.vmem [#allocation2], 28
        %v2641 = vld [vmem:[%s2640] sm:$0x3]
        %s2642 = scalar_lea.vmem [#allocation4], 28
        %v2643 = vld [vmem:[%s2642] sm:$0x3]
        %v2645 = vsel %vm300, %v2643, 0
        %2647 = vmatprep.subr.bf16.mxu0 0
        %2648 = vmatpush1.bf16.msra.mxu0 0
        %2649 = vmatprep.subr.bf16.mxu0 0
        %2650 = vmatpush1.bf16.msra.mxu0 0
        %2651 = vmatprep.subr.bf16.mxu0 0
        %2652 = vmatpush1.bf16.msra.mxu0 0
        %2653 = vmatprep.subr.bf16.mxu0 0
        %2654 = vmatpush1.bf16.msra.mxu0 0
        %2655 = vmatprep.subr.bf16.mxu0 0
        %2656 = vmatpush1.bf16.msra.mxu0 0
        %2657 = vmatprep.subr.bf16.mxu0 0
        %2658 = vmatpush1.bf16.msra.mxu0 0
        %2659 = vmatprep.subr.bf16.mxu0 0
        %2660 = vmatpush1.bf16.msra.mxu0 0
        %2661 = vmatprep.subr.bf16.mxu0 0
        %2662 = vmatpush1.bf16.msra.mxu0 %v306
        %2663 = vmatprep.subr.bf16.mxu0 0
        %2664 = vmatpush2.bf16.msra.mxu0 0
        %2665 = vmatprep.subr.bf16.mxu0 0
        %2666 = vmatpush2.bf16.msra.mxu0 0
        %2667 = vmatprep.subr.bf16.mxu0 0
        %2668 = vmatpush2.bf16.msra.mxu0 0
        %2669 = vmatprep.subr.bf16.mxu0 0
        %2670 = vmatpush2.bf16.msra.mxu0 0
        %2671 = vmatprep.subr.bf16.mxu0 0
        %2672 = vmatpush2.bf16.msra.mxu0 0
        %2673 = vmatprep.subr.bf16.mxu0 0
        %2674 = vmatpush2.bf16.msra.mxu0 0
        %2675 = vmatprep.subr.bf16.mxu0 0
        %2676 = vmatpush2.bf16.msra.mxu0 0
        %2677 = vmatprep.subr.bf16.mxu0 0
        %2678 = vmatpush2.bf16.msra.mxu0 0
        %2679 = vmatprep.mubr.bf16.mxu0 0
        %2680 = vmatmul.mubr.bf16.gmra.mxu0 %v2645
        %v2681 = vpop.f32.mrf.mxu0
        %v2682 = vadd.f32 0.0, %v2681
        %v2683 = vpop.f32.mrf.mxu0
        %v2684 = vpop.f32.mrf.mxu0
        %v2685 = vpop.f32.mrf.mxu0
        %2686 = vdwg.mxu0
        %v2688 = vsel %vm300, %v2641, 0
        %2690 = vmatprep.subr.bf16.mxu0 0
        %2691 = vmatpush1.bf16.msra.mxu0 0
        %2692 = vmatprep.subr.bf16.mxu0 0
        %2693 = vmatpush1.bf16.msra.mxu0 0
        %2694 = vmatprep.subr.bf16.mxu0 0
        %2695 = vmatpush1.bf16.msra.mxu0 0
        %2696 = vmatprep.subr.bf16.mxu0 0
        %2697 = vmatpush1.bf16.msra.mxu0 0
        %2698 = vmatprep.subr.bf16.mxu0 0
        %2699 = vmatpush1.bf16.msra.mxu0 0
        %2700 = vmatprep.subr.bf16.mxu0 0
        %2701 = vmatpush1.bf16.msra.mxu0 0
        %2702 = vmatprep.subr.bf16.mxu0 0
        %2703 = vmatpush1.bf16.msra.mxu0 0
        %2704 = vmatprep.subr.bf16.mxu0 0
        %2705 = vmatpush1.bf16.msra.mxu0 %v352
        %2706 = vmatprep.subr.bf16.mxu0 0
        %2707 = vmatpush2.bf16.msra.mxu0 0
        %2708 = vmatprep.subr.bf16.mxu0 0
        %2709 = vmatpush2.bf16.msra.mxu0 0
        %2710 = vmatprep.subr.bf16.mxu0 0
        %2711 = vmatpush2.bf16.msra.mxu0 0
        %2712 = vmatprep.subr.bf16.mxu0 0
        %2713 = vmatpush2.bf16.msra.mxu0 0
        %2714 = vmatprep.subr.bf16.mxu0 0
        %2715 = vmatpush2.bf16.msra.mxu0 0
        %2716 = vmatprep.subr.bf16.mxu0 0
        %2717 = vmatpush2.bf16.msra.mxu0 0
        %2718 = vmatprep.subr.bf16.mxu0 0
        %2719 = vmatpush2.bf16.msra.mxu0 0
        %2720 = vmatprep.subr.bf16.mxu0 0
        %2721 = vmatpush2.bf16.msra.mxu0 0
        %2722 = vmatprep.mubr.bf16.mxu0 0
        %2723 = vmatmul.mubr.bf16.gmra.mxu0 %v2688
        %v2724 = vpop.f32.mrf.mxu0
        %v2725 = vadd.f32 %v2682, %v2724
        %v2726 = vpop.f32.mrf.mxu0
        %v2727 = vpop.f32.mrf.mxu0
        %v2728 = vpop.f32.mrf.mxu0
        %2729 = vdwg.mxu0
        %s2730 = scalar_lea.vmem %s2, 224
        %v2731 = vld [vmem:[%s2730] sm:$0xff]
        %v2732 = vld [vmem:[%s2730 + $0x8] sm:$0xff]
        %v2734 = vsel %vm489, %v2725, 0
        %2736 = vmatprep.subr.mxu0 0.0
        %2737 = vmatpush1.msra.mxu0 0.0
        %2738 = vmatprep.subr.mxu0 0.0
        %2739 = vmatpush1.msra.mxu0 0.0
        %2740 = vmatprep.subr.mxu0 0.0
        %2741 = vmatpush1.msra.mxu0 0.0
        %2742 = vmatprep.subr.mxu0 0.0
        %2743 = vmatpush1.msra.mxu0 0.0
        %2744 = vmatprep.subr.mxu0 0.0
        %2745 = vmatpush1.msra.mxu0 0.0
        %2746 = vmatprep.subr.mxu0 0.0
        %2747 = vmatpush1.msra.mxu0 0.0
        %2748 = vmatprep.subr.mxu0 0.0
        %2749 = vmatpush1.msra.mxu0 0.0
        %2750 = vmatprep.subr.mxu0 0.0
        %2751 = vmatpush1.msra.mxu0 0.0
        %2752 = vmatprep.subr.mxu0 0.0
        %2753 = vmatpush1.msra.mxu0 0.0
        %2754 = vmatprep.subr.mxu0 0.0
        %2755 = vmatpush1.msra.mxu0 0.0
        %2756 = vmatprep.subr.mxu0 0.0
        %2757 = vmatpush1.msra.mxu0 0.0
        %2758 = vmatprep.subr.mxu0 0.0
        %2759 = vmatpush1.msra.mxu0 0.0
        %2760 = vmatprep.subr.mxu0 0.0
        %2761 = vmatpush1.msra.mxu0 0.0
        %2762 = vmatprep.subr.mxu0 0.0
        %2763 = vmatpush1.msra.mxu0 0.0
        %2764 = vmatprep.subr.mxu0 0.0
        %2765 = vmatpush1.msra.mxu0 %v2732
        %2766 = vmatprep.subr.mxu0 0.0
        %2767 = vmatpush1.msra.mxu0 %v2731
        %2768 = vmatprep.subr.mxu0 0.0
        %2769 = vmatpush2.msra.mxu0 0.0
        %2770 = vmatprep.subr.mxu0 0.0
        %2771 = vmatpush2.msra.mxu0 0.0
        %2772 = vmatprep.subr.mxu0 0.0
        %2773 = vmatpush2.msra.mxu0 0.0
        %2774 = vmatprep.subr.mxu0 0.0
        %2775 = vmatpush2.msra.mxu0 0.0
        %2776 = vmatprep.subr.mxu0 0.0
        %2777 = vmatpush2.msra.mxu0 0.0
        %2778 = vmatprep.subr.mxu0 0.0
        %2779 = vmatpush2.msra.mxu0 0.0
        %2780 = vmatprep.subr.mxu0 0.0
        %2781 = vmatpush2.msra.mxu0 0.0
        %2782 = vmatprep.subr.mxu0 0.0
        %2783 = vmatpush2.msra.mxu0 0.0
        %2784 = vmatprep.subr.mxu0 0.0
        %2785 = vmatpush2.msra.mxu0 0.0
        %2786 = vmatprep.subr.mxu0 0.0
        %2787 = vmatpush2.msra.mxu0 0.0
        %2788 = vmatprep.subr.mxu0 0.0
        %2789 = vmatpush2.msra.mxu0 0.0
        %2790 = vmatprep.subr.mxu0 0.0
        %2791 = vmatpush2.msra.mxu0 0.0
        %2792 = vmatprep.subr.mxu0 0.0
        %2793 = vmatpush2.msra.mxu0 0.0
        %2794 = vmatprep.subr.mxu0 0.0
        %2795 = vmatpush2.msra.mxu0 0.0
        %2796 = vmatprep.subr.mxu0 0.0
        %2797 = vmatpush2.msra.mxu0 0.0
        %2798 = vmatprep.subr.mxu0 0.0
        %2799 = vmatpush2.msra.mxu0 0.0
        %2800 = vmatprep.mubr.f32.mxu0 0.0
        %2801 = vmatmul.mubr.f32.gmra.mxu0 %v2734
        %v2802 = vpop.f32.mrf.mxu0
        %v2803 = vadd.f32 0.0, %v2802
        %v2804 = vpop.f32.mrf.mxu0
        %2805 = vdwg.mxu0
        %v2806 = vadd.f32 %v2639, %v2803
        %s2807 = scalar_lea.vmem [#allocation2], 30
        %v2808 = vld [vmem:[%s2807] sm:$0x3]
        %s2809 = scalar_lea.vmem [#allocation4], 30
        %v2810 = vld [vmem:[%s2809] sm:$0x3]
        %v2812 = vsel %vm300, %v2810, 0
        %2814 = vmatprep.subr.bf16.mxu0 0
        %2815 = vmatpush1.bf16.msra.mxu0 0
        %2816 = vmatprep.subr.bf16.mxu0 0
        %2817 = vmatpush1.bf16.msra.mxu0 0
        %2818 = vmatprep.subr.bf16.mxu0 0
        %2819 = vmatpush1.bf16.msra.mxu0 0
        %2820 = vmatprep.subr.bf16.mxu0 0
        %2821 = vmatpush1.bf16.msra.mxu0 0
        %2822 = vmatprep.subr.bf16.mxu0 0
        %2823 = vmatpush1.bf16.msra.mxu0 0
        %2824 = vmatprep.subr.bf16.mxu0 0
        %2825 = vmatpush1.bf16.msra.mxu0 0
        %2826 = vmatprep.subr.bf16.mxu0 0
        %2827 = vmatpush1.bf16.msra.mxu0 0
        %2828 = vmatprep.subr.bf16.mxu0 0
        %2829 = vmatpush1.bf16.msra.mxu0 %v306
        %2830 = vmatprep.subr.bf16.mxu0 0
        %2831 = vmatpush2.bf16.msra.mxu0 0
        %2832 = vmatprep.subr.bf16.mxu0 0
        %2833 = vmatpush2.bf16.msra.mxu0 0
        %2834 = vmatprep.subr.bf16.mxu0 0
        %2835 = vmatpush2.bf16.msra.mxu0 0
        %2836 = vmatprep.subr.bf16.mxu0 0
        %2837 = vmatpush2.bf16.msra.mxu0 0
        %2838 = vmatprep.subr.bf16.mxu0 0
        %2839 = vmatpush2.bf16.msra.mxu0 0
        %2840 = vmatprep.subr.bf16.mxu0 0
        %2841 = vmatpush2.bf16.msra.mxu0 0
        %2842 = vmatprep.subr.bf16.mxu0 0
        %2843 = vmatpush2.bf16.msra.mxu0 0
        %2844 = vmatprep.subr.bf16.mxu0 0
        %2845 = vmatpush2.bf16.msra.mxu0 0
        %2846 = vmatprep.mubr.bf16.mxu0 0
        %2847 = vmatmul.mubr.bf16.gmra.mxu0 %v2812
        %v2848 = vpop.f32.mrf.mxu0
        %v2849 = vadd.f32 0.0, %v2848
        %v2850 = vpop.f32.mrf.mxu0
        %v2851 = vpop.f32.mrf.mxu0
        %v2852 = vpop.f32.mrf.mxu0
        %2853 = vdwg.mxu0
        %v2855 = vsel %vm300, %v2808, 0
        %2857 = vmatprep.subr.bf16.mxu0 0
        %2858 = vmatpush1.bf16.msra.mxu0 0
        %2859 = vmatprep.subr.bf16.mxu0 0
        %2860 = vmatpush1.bf16.msra.mxu0 0
        %2861 = vmatprep.subr.bf16.mxu0 0
        %2862 = vmatpush1.bf16.msra.mxu0 0
        %2863 = vmatprep.subr.bf16.mxu0 0
        %2864 = vmatpush1.bf16.msra.mxu0 0
        %2865 = vmatprep.subr.bf16.mxu0 0
        %2866 = vmatpush1.bf16.msra.mxu0 0
        %2867 = vmatprep.subr.bf16.mxu0 0
        %2868 = vmatpush1.bf16.msra.mxu0 0
        %2869 = vmatprep.subr.bf16.mxu0 0
        %2870 = vmatpush1.bf16.msra.mxu0 0
        %2871 = vmatprep.subr.bf16.mxu0 0
        %2872 = vmatpush1.bf16.msra.mxu0 %v352
        %2873 = vmatprep.subr.bf16.mxu0 0
        %2874 = vmatpush2.bf16.msra.mxu0 0
        %2875 = vmatprep.subr.bf16.mxu0 0
        %2876 = vmatpush2.bf16.msra.mxu0 0
        %2877 = vmatprep.subr.bf16.mxu0 0
        %2878 = vmatpush2.bf16.msra.mxu0 0
        %2879 = vmatprep.subr.bf16.mxu0 0
        %2880 = vmatpush2.bf16.msra.mxu0 0
        %2881 = vmatprep.subr.bf16.mxu0 0
        %2882 = vmatpush2.bf16.msra.mxu0 0
        %2883 = vmatprep.subr.bf16.mxu0 0
        %2884 = vmatpush2.bf16.msra.mxu0 0
        %2885 = vmatprep.subr.bf16.mxu0 0
        %2886 = vmatpush2.bf16.msra.mxu0 0
        %2887 = vmatprep.subr.bf16.mxu0 0
        %2888 = vmatpush2.bf16.msra.mxu0 0
        %2889 = vmatprep.mubr.bf16.mxu0 0
        %2890 = vmatmul.mubr.bf16.gmra.mxu0 %v2855
        %v2891 = vpop.f32.mrf.mxu0
        %v2892 = vadd.f32 %v2849, %v2891
        %v2893 = vpop.f32.mrf.mxu0
        %v2894 = vpop.f32.mrf.mxu0
        %v2895 = vpop.f32.mrf.mxu0
        %2896 = vdwg.mxu0
        %s2897 = scalar_lea.vmem %s2, 240
        %v2898 = vld [vmem:[%s2897] sm:$0xff]
        %v2899 = vld [vmem:[%s2897 + $0x8] sm:$0xff]
        %v2901 = vsel %vm489, %v2892, 0
        %2903 = vmatprep.subr.mxu0 0.0
        %2904 = vmatpush1.msra.mxu0 0.0
        %2905 = vmatprep.subr.mxu0 0.0
        %2906 = vmatpush1.msra.mxu0 0.0
        %2907 = vmatprep.subr.mxu0 0.0
        %2908 = vmatpush1.msra.mxu0 0.0
        %2909 = vmatprep.subr.mxu0 0.0
        %2910 = vmatpush1.msra.mxu0 0.0
        %2911 = vmatprep.subr.mxu0 0.0
        %2912 = vmatpush1.msra.mxu0 0.0
        %2913 = vmatprep.subr.mxu0 0.0
        %2914 = vmatpush1.msra.mxu0 0.0
        %2915 = vmatprep.subr.mxu0 0.0
        %2916 = vmatpush1.msra.mxu0 0.0
        %2917 = vmatprep.subr.mxu0 0.0
        %2918 = vmatpush1.msra.mxu0 0.0
        %2919 = vmatprep.subr.mxu0 0.0
        %2920 = vmatpush1.msra.mxu0 0.0
        %2921 = vmatprep.subr.mxu0 0.0
        %2922 = vmatpush1.msra.mxu0 0.0
        %2923 = vmatprep.subr.mxu0 0.0
        %2924 = vmatpush1.msra.mxu0 0.0
        %2925 = vmatprep.subr.mxu0 0.0
        %2926 = vmatpush1.msra.mxu0 0.0
        %2927 = vmatprep.subr.mxu0 0.0
        %2928 = vmatpush1.msra.mxu0 0.0
        %2929 = vmatprep.subr.mxu0 0.0
        %2930 = vmatpush1.msra.mxu0 0.0
        %2931 = vmatprep.subr.mxu0 0.0
        %2932 = vmatpush1.msra.mxu0 %v2899
        %2933 = vmatprep.subr.mxu0 0.0
        %2934 = vmatpush1.msra.mxu0 %v2898
        %2935 = vmatprep.subr.mxu0 0.0
        %2936 = vmatpush2.msra.mxu0 0.0
        %2937 = vmatprep.subr.mxu0 0.0
        %2938 = vmatpush2.msra.mxu0 0.0
        %2939 = vmatprep.subr.mxu0 0.0
        %2940 = vmatpush2.msra.mxu0 0.0
        %2941 = vmatprep.subr.mxu0 0.0
        %2942 = vmatpush2.msra.mxu0 0.0
        %2943 = vmatprep.subr.mxu0 0.0
        %2944 = vmatpush2.msra.mxu0 0.0
        %2945 = vmatprep.subr.mxu0 0.0
        %2946 = vmatpush2.msra.mxu0 0.0
        %2947 = vmatprep.subr.mxu0 0.0
        %2948 = vmatpush2.msra.mxu0 0.0
        %2949 = vmatprep.subr.mxu0 0.0
        %2950 = vmatpush2.msra.mxu0 0.0
        %2951 = vmatprep.subr.mxu0 0.0
        %2952 = vmatpush2.msra.mxu0 0.0
        %2953 = vmatprep.subr.mxu0 0.0
        %2954 = vmatpush2.msra.mxu0 0.0
        %2955 = vmatprep.subr.mxu0 0.0
        %2956 = vmatpush2.msra.mxu0 0.0
        %2957 = vmatprep.subr.mxu0 0.0
        %2958 = vmatpush2.msra.mxu0 0.0
        %2959 = vmatprep.subr.mxu0 0.0
        %2960 = vmatpush2.msra.mxu0 0.0
        %2961 = vmatprep.subr.mxu0 0.0
        %2962 = vmatpush2.msra.mxu0 0.0
        %2963 = vmatprep.subr.mxu0 0.0
        %2964 = vmatpush2.msra.mxu0 0.0
        %2965 = vmatprep.subr.mxu0 0.0
        %2966 = vmatpush2.msra.mxu0 0.0
        %2967 = vmatprep.mubr.f32.mxu0 0.0
        %2968 = vmatmul.mubr.f32.gmra.mxu0 %v2901
        %v2969 = vpop.f32.mrf.mxu0
        %v2970 = vadd.f32 0.0, %v2969
        %v2971 = vpop.f32.mrf.mxu0
        %2972 = vdwg.mxu0
        %v2973 = vadd.f32 %v2806, %v2970
        %v2974 = vld [vmem:[%s5] sm:$0x7]
        %2976 = vset.pattern.permute.xlu0 0
        %2977 = vperm.xlu0 %2976, %v2974
        %v2978 = vpop.permute.xlu0 %2977
        %v2980 = vadd.f32 %v2973, %v2978
        %v2981 = vtanh.pop %v2980
        %vm2982 = vcmask 518144
        %2983 = vst.msk [vmem:[%s293] sm:$0x7] %vm2982, %v2981
        %p2984 = scmp.lt.s32.totalorder %s19, 1
        %s2985 = scalar_select %p2984, %s19, 1
        %s2986 = smul.addr %s2985, 4
        %s2987 = scalar_lea.vmem %s6, %s2986
        // Predicated region
        $region53: #{_lambda_.5} parent=43 // pred_check
          %p2988 = pneg %p173
        $region54: #{_lambda_.5} parent=43 // pred_check_branch
          %2990 = sbr.rel (%p2988) target = $region56
        $region55: #{_lambda_.5} parent=43 // pred_region
          _
        $region56: #{_lambda_.5} parent=43 // pred_fallthru
          _
      $region44: #{_lambda_.5} parent=5 // pred_fallthru
        _
      %p2991 = scmp.le.s32.totalorder 2, %s14
      // Predicated region
      $region57: #{_lambda_.5} parent=5 // pred_check
        %p2992 = pneg %p2991
      $region58: #{_lambda_.5} parent=5 // pred_check_branch
        %2994 = sbr.rel (%p2992) target = $region60
      $region59: #{_lambda_.5} parent=5 // pred_region
        %s2995 = ssub.s32 %s14, 2
        // Predicated region
        $region61: #{_lambda_.5} parent=59 // pred_check
          %p2996 = pneg %p179
        $region62: #{_lambda_.5} parent=59 // pred_check_branch
          %2998 = sbr.rel (%p2996) target = $region64
        $region63: #{_lambda_.5} parent=59 // pred_region
          %p2999 = scmp.lt.s32.totalorder %s20, 1
          %s3000 = scalar_select %p2999, %s20, 1
          %s3001 = smul.addr %s3000, 4
          %s3002 = scalar_lea.vmem %s6, %s3001
        $region64: #{_lambda_.5} parent=59 // pred_fallthru
          _
      $region60: #{_lambda_.5} parent=5 // pred_fallthru
        _
    $region6: #{_lambda_.5} parent=1 // loop_footer
      %s18 = sadd.s32 1, %s14
    $region7: #{_lambda_.5} parent=1 // loop_footer_branch
      %13 = sbr.rel target = $region3
    $region8: #{_lambda_.5} parent=1 // loop_exit
      _
    %3003 = vsyncpa [#allocation3], 1
    %s3004 = scalar_lea.sflag [#allocation3], 1
    %3005 = vsyncpa %s3004, 1
    %3006 = vsyncpa [#allocation5], 1

// kernel: _lambda_.4
$region0: #{_lambda_.4}
  #allocation0 [shape = 'u32[]', space=smem, size = 0x4, offset = 0x4, fixed_abs, tag = 'smem constant byte address 0x4 - core index']
  #allocation1 [shape = 'u32[144,128]{1,0:T(1,128)}', space=vmem, size = 0x12000, scoped, tag = 'internal scratch']
  %s0 = inlined_call_operand.hbm [shape: bf16[16,4,8], index: 0, kind: input, shape index: {}]
  %s1 = inlined_call_operand.hbm [shape: bf16[16,4,8], index: 1, kind: input, shape index: {}]
  %s2 = inlined_call_operand.vmem [shape: f32[16,4,16], index: 2, kind: input, shape index: {}]
  %s3 = inlined_call_operand.vmem [shape: bf16[2,8,4], index: 3, kind: input, shape index: {}]
  %s4 = inlined_call_operand.vmem [shape: f32[2,8,4], index: 4, kind: input, shape index: {}]
  %s5 = inlined_call_operand.hbm [shape: f32[4,1], index: 5, kind: input, shape index: {}]
  %s6 = inlined_call_operand.hbm [shape: f32[4,1], index: 6, kind: input, shape index: {}]
  %s7 = inlined_call_operand.vmem [shape: bf16[2,4,16], index: 7, kind: output, shape index: {}]
  %s8 = sld [smem:[#allocation0]]
  $region54: #{_lambda_.4} parent=0
    _
  %s10 = ssub.s32 1, %s8
  %s11 = scalar_select 0, %s10, %s8
  $region1: #{_lambda_.4} parent=0
    #allocation2 [shape = 'u8[16384]{0}', space=vmem, size = 0x4000, scoped, tag = 'input window, operand 0, single buffered']
    #allocation3 [shape = 's32[1]{0}', space=sflag, size = 0x4, scoped, tag = 'scoped memory for _lambda_.4']
    #allocation4 [shape = 'u8[16384]{0}', space=vmem, size = 0x4000, scoped, tag = 'input window, operand 1, single buffered']
    #allocation5 [shape = 's32[1]{0}', space=sflag, size = 0x4, scoped, tag = 'scoped memory for _lambda_.4']
    #allocation6 [shape = 'u8[2048]{0}', space=vmem, size = 0x800, scoped, tag = 'input window, operand 5, single buffered']
    #allocation7 [shape = 'u8[2048]{0}', space=vmem, size = 0x800, scoped, tag = 'input window, operand 6, single buffered']
    #allocation8 [shape = 's32[1]{0}', space=sflag, size = 0x4, scoped, tag = 'scoped memory for _lambda_.4']
    %12 = vsyncpa [#allocation3], 0
    %13 = vsyncpa [#allocation5], 0
    %14 = vsyncpa [#allocation8], 0
    // Predicated region
    $region2: #{_lambda_.4} parent=1 // pred_check
      _
    $region3: #{_lambda_.4} parent=1 // pred_check_branch
      %16 = sbr.rel (0) target = $region5
    $region4: #{_lambda_.4} parent=1 // pred_region
      %s18 = ssub.s32 512, 512
      %19 = vsyncadd [#allocation3], %s18
      %s20 = sshll.u32 [#allocation2], 4
      %s21 = int_to_ptr.vmem [resolvable:$true] %s20
      %26 = dma.hbm_to_vmem [thread:$0]  %s0, 512, %s21, [#allocation3], 32, 32, 2
    $region5: #{_lambda_.4} parent=1 // pred_fallthru
      _
    // Predicated region
    $region6: #{_lambda_.4} parent=1 // pred_check
      _
    $region7: #{_lambda_.4} parent=1 // pred_check_branch
      %28 = sbr.rel (0) target = $region9
    $region8: #{_lambda_.4} parent=1 // pred_region
      %s30 = ssub.s32 512, 512
      %31 = vsyncadd [#allocation5], %s30
      %s32 = sshll.u32 [#allocation4], 4
      %s33 = int_to_ptr.vmem [resolvable:$true] %s32
      %38 = dma.hbm_to_vmem [thread:$0]  %s1, 512, %s33, [#allocation5], 32, 32, 2
    $region9: #{_lambda_.4} parent=1 // pred_fallthru
      _
    // Predicated region
    $region10: #{_lambda_.4} parent=1 // pred_check
      _
    $region11: #{_lambda_.4} parent=1 // pred_check_branch
      %40 = sbr.rel (0) target = $region13
    $region12: #{_lambda_.4} parent=1 // pred_region
      _
    $region13: #{_lambda_.4} parent=1 // pred_fallthru
      _
    // Predicated region
    $region14: #{_lambda_.4} parent=1 // pred_check
      _
    $region15: #{_lambda_.4} parent=1 // pred_check_branch
      %42 = sbr.rel (0) target = $region17
    $region16: #{_lambda_.4} parent=1 // pred_region
      _
    $region17: #{_lambda_.4} parent=1 // pred_fallthru
      _
    // Predicated region
    $region18: #{_lambda_.4} parent=1 // pred_check
      _
    $region19: #{_lambda_.4} parent=1 // pred_check_branch
      %44 = sbr.rel (0) target = $region21
    $region20: #{_lambda_.4} parent=1 // pred_region
      _
    $region21: #{_lambda_.4} parent=1 // pred_fallthru
      _
    // Predicated region
    $region22: #{_lambda_.4} parent=1 // pred_check
      _
    $region23: #{_lambda_.4} parent=1 // pred_check_branch
      %46 = sbr.rel (0) target = $region25
    $region24: #{_lambda_.4} parent=1 // pred_region
      %s48 = ssub.s32 64, 64
      %49 = vsyncadd [#allocation5], %s48
      %s51 = sshll.u32 [#allocation6], 4
      %s52 = int_to_ptr.vmem [resolvable:$true] %s51
      %54 = dma.hbm_to_vmem [thread:$0]  %s5, 64, %s52, [#allocation5]
    $region25: #{_lambda_.4} parent=1 // pred_fallthru
      _
    // Predicated region
    $region26: #{_lambda_.4} parent=1 // pred_check
      _
    $region27: #{_lambda_.4} parent=1 // pred_check_branch
      %56 = sbr.rel (0) target = $region29
    $region28: #{_lambda_.4} parent=1 // pred_region
      %s58 = ssub.s32 64, 64
      %59 = vsyncadd [#allocation8], %s58
      %s61 = sshll.u32 [#allocation7], 4
      %s62 = int_to_ptr.vmem [resolvable:$true] %s61
      %64 = dma.hbm_to_vmem [thread:$0]  %s6, 64, %s62, [#allocation8]
    $region29: #{_lambda_.4} parent=1 // pred_fallthru
      _
    // Predicated region
    $region30: #{_lambda_.4} parent=1 // pred_check
      _
    $region31: #{_lambda_.4} parent=1 // pred_check_branch
      %66 = sbr.rel (0) target = $region33
    $region32: #{_lambda_.4} parent=1 // pred_region
      %67 = dma.done [#allocation3], 512
    $region33: #{_lambda_.4} parent=1 // pred_fallthru
      _
    // Predicated region
    $region34: #{_lambda_.4} parent=1 // pred_check
      _
    $region35: #{_lambda_.4} parent=1 // pred_check_branch
      %69 = sbr.rel (0) target = $region37
    $region36: #{_lambda_.4} parent=1 // pred_region
      %70 = dma.done [#allocation5], 512
    $region37: #{_lambda_.4} parent=1 // pred_fallthru
      _
    // Predicated region
    $region38: #{_lambda_.4} parent=1 // pred_check
      _
    $region39: #{_lambda_.4} parent=1 // pred_check_branch
      %72 = sbr.rel (0) target = $region41
    $region40: #{_lambda_.4} parent=1 // pred_region
      %73 = dma.done [#allocation5], 64
    $region41: #{_lambda_.4} parent=1 // pred_fallthru
      _
    // Predicated region
    $region42: #{_lambda_.4} parent=1 // pred_check
      _
    $region43: #{_lambda_.4} parent=1 // pred_check_branch
      %75 = sbr.rel (0) target = $region45
    $region44: #{_lambda_.4} parent=1 // pred_region
      %76 = dma.done [#allocation8], 64
    $region45: #{_lambda_.4} parent=1 // pred_fallthru
      _
    %v78 = vld [vmem:[%s3] sm:$0xf]
    %v79 = vld [vmem:[%s4] sm:$0xff]
    %v80 = vpack.c.bf16 %v79, %v79
    %v81 = vld [vmem:[#allocation2] sm:$0x3]
    %v82 = vld [vmem:[#allocation4] sm:$0x3]
    %vm83 = vcmask 64512
    %v85 = vsel %vm83, %v82, 0
    %vm87 = vcmask 1043456
    %v89 = vsel %vm87, %v80, 0
    %91 = vmatprep.subr.bf16.mxu0 0
    %92 = vmatpush1.bf16.msra.mxu0 0
    %93 = vmatprep.subr.bf16.mxu0 0
    %94 = vmatpush1.bf16.msra.mxu0 0
    %95 = vmatprep.subr.bf16.mxu0 0
    %96 = vmatpush1.bf16.msra.mxu0 0
    %97 = vmatprep.subr.bf16.mxu0 0
    %98 = vmatpush1.bf16.msra.mxu0 0
    %99 = vmatprep.subr.bf16.mxu0 0
    %100 = vmatpush1.bf16.msra.mxu0 0
    %101 = vmatprep.subr.bf16.mxu0 0
    %102 = vmatpush1.bf16.msra.mxu0 0
    %103 = vmatprep.subr.bf16.mxu0 0
    %104 = vmatpush1.bf16.msra.mxu0 0
    %105 = vmatprep.subr.bf16.mxu0 0
    %106 = vmatpush1.bf16.msra.mxu0 %v89
    %107 = vmatprep.subr.bf16.mxu0 0
    %108 = vmatpush2.bf16.msra.mxu0 0
    %109 = vmatprep.subr.bf16.mxu0 0
    %110 = vmatpush2.bf16.msra.mxu0 0
    %111 = vmatprep.subr.bf16.mxu0 0
    %112 = vmatpush2.bf16.msra.mxu0 0
    %113 = vmatprep.subr.bf16.mxu0 0
    %114 = vmatpush2.bf16.msra.mxu0 0
    %115 = vmatprep.subr.bf16.mxu0 0
    %116 = vmatpush2.bf16.msra.mxu0 0
    %117 = vmatprep.subr.bf16.mxu0 0
    %118 = vmatpush2.bf16.msra.mxu0 0
    %119 = vmatprep.subr.bf16.mxu0 0
    %120 = vmatpush2.bf16.msra.mxu0 0
    %121 = vmatprep.subr.bf16.mxu0 0
    %122 = vmatpush2.bf16.msra.mxu0 0
    %123 = vmatprep.mubr.bf16.mxu0 0
    %124 = vmatmul.mubr.bf16.gmra.mxu0 %v85
    %v125 = vpop.f32.mrf.mxu0
    %v126 = vadd.f32 0.0, %v125
    %v127 = vpop.f32.mrf.mxu0
    %v128 = vpop.f32.mrf.mxu0
    %v129 = vpop.f32.mrf.mxu0
    %130 = vdwg.mxu0
    %v132 = vsel %vm83, %v81, 0
    %v135 = vsel %vm87, %v78, 0
    %137 = vmatprep.subr.bf16.mxu0 0
    %138 = vmatpush1.bf16.msra.mxu0 0
    %139 = vmatprep.subr.bf16.mxu0 0
    %140 = vmatpush1.bf16.msra.mxu0 0
    %141 = vmatprep.subr.bf16.mxu0 0
    %142 = vmatpush1.bf16.msra.mxu0 0
    %143 = vmatprep.subr.bf16.mxu0 0
    %144 = vmatpush1.bf16.msra.mxu0 0
    %145 = vmatprep.subr.bf16.mxu0 0
    %146 = vmatpush1.bf16.msra.mxu0 0
    %147 = vmatprep.subr.bf16.mxu0 0
    %148 = vmatpush1.bf16.msra.mxu0 0
    %149 = vmatprep.subr.bf16.mxu0 0
    %150 = vmatpush1.bf16.msra.mxu0 0
    %151 = vmatprep.subr.bf16.mxu0 0
    %152 = vmatpush1.bf16.msra.mxu0 %v135
    %153 = vmatprep.subr.bf16.mxu0 0
    %154 = vmatpush2.bf16.msra.mxu0 0
    %155 = vmatprep.subr.bf16.mxu0 0
    %156 = vmatpush2.bf16.msra.mxu0 0
    %157 = vmatprep.subr.bf16.mxu0 0
    %158 = vmatpush2.bf16.msra.mxu0 0
    %159 = vmatprep.subr.bf16.mxu0 0
    %160 = vmatpush2.bf16.msra.mxu0 0
    %161 = vmatprep.subr.bf16.mxu0 0
    %162 = vmatpush2.bf16.msra.mxu0 0
    %163 = vmatprep.subr.bf16.mxu0 0
    %164 = vmatpush2.bf16.msra.mxu0 0
    %165 = vmatprep.subr.bf16.mxu0 0
    %166 = vmatpush2.bf16.msra.mxu0 0
    %167 = vmatprep.subr.bf16.mxu0 0
    %168 = vmatpush2.bf16.msra.mxu0 0
    %169 = vmatprep.mubr.bf16.mxu0 0
    %170 = vmatmul.mubr.bf16.gmra.mxu0 %v132
    %v171 = vpop.f32.mrf.mxu0
    %v172 = vadd.f32 %v126, %v171
    %v173 = vpop.f32.mrf.mxu0
    %v174 = vpop.f32.mrf.mxu0
    %v175 = vpop.f32.mrf.mxu0
    %176 = vdwg.mxu0
    %v177 = vld [vmem:[%s2] sm:$0xf]
    %s178 = scalar_lea.vmem [#allocation2], 2
    %v179 = vld [vmem:[%s178] sm:$0x3]
    %s180 = scalar_lea.vmem [#allocation4], 2
    %v181 = vld [vmem:[%s180] sm:$0x3]
    %v183 = vsel %vm83, %v181, 0
    %185 = vmatprep.subr.bf16.mxu0 0
    %186 = vmatpush1.bf16.msra.mxu0 0
    %187 = vmatprep.subr.bf16.mxu0 0
    %188 = vmatpush1.bf16.msra.mxu0 0
    %189 = vmatprep.subr.bf16.mxu0 0
    %190 = vmatpush1.bf16.msra.mxu0 0
    %191 = vmatprep.subr.bf16.mxu0 0
    %192 = vmatpush1.bf16.msra.mxu0 0
    %193 = vmatprep.subr.bf16.mxu0 0
    %194 = vmatpush1.bf16.msra.mxu0 0
    %195 = vmatprep.subr.bf16.mxu0 0
    %196 = vmatpush1.bf16.msra.mxu0 0
    %197 = vmatprep.subr.bf16.mxu0 0
    %198 = vmatpush1.bf16.msra.mxu0 0
    %199 = vmatprep.subr.bf16.mxu0 0
    %200 = vmatpush1.bf16.msra.mxu0 %v89
    %201 = vmatprep.subr.bf16.mxu0 0
    %202 = vmatpush2.bf16.msra.mxu0 0
    %203 = vmatprep.subr.bf16.mxu0 0
    %204 = vmatpush2.bf16.msra.mxu0 0
    %205 = vmatprep.subr.bf16.mxu0 0
    %206 = vmatpush2.bf16.msra.mxu0 0
    %207 = vmatprep.subr.bf16.mxu0 0
    %208 = vmatpush2.bf16.msra.mxu0 0
    %209 = vmatprep.subr.bf16.mxu0 0
    %210 = vmatpush2.bf16.msra.mxu0 0
    %211 = vmatprep.subr.bf16.mxu0 0
    %212 = vmatpush2.bf16.msra.mxu0 0
    %213 = vmatprep.subr.bf16.mxu0 0
    %214 = vmatpush2.bf16.msra.mxu0 0
    %215 = vmatprep.subr.bf16.mxu0 0
    %216 = vmatpush2.bf16.msra.mxu0 0
    %217 = vmatprep.mubr.bf16.mxu0 0
    %218 = vmatmul.mubr.bf16.gmra.mxu0 %v183
    %v219 = vpop.f32.mrf.mxu0
    %v220 = vadd.f32 0.0, %v219
    %v221 = vpop.f32.mrf.mxu0
    %v222 = vpop.f32.mrf.mxu0
    %v223 = vpop.f32.mrf.mxu0
    %224 = vdwg.mxu0
    %v226 = vsel %vm83, %v179, 0
    %228 = vmatprep.subr.bf16.mxu0 0
    %229 = vmatpush1.bf16.msra.mxu0 0
    %230 = vmatprep.subr.bf16.mxu0 0
    %231 = vmatpush1.bf16.msra.mxu0 0
    %232 = vmatprep.subr.bf16.mxu0 0
    %233 = vmatpush1.bf16.msra.mxu0 0
    %234 = vmatprep.subr.bf16.mxu0 0
    %235 = vmatpush1.bf16.msra.mxu0 0
    %236 = vmatprep.subr.bf16.mxu0 0
    %237 = vmatpush1.bf16.msra.mxu0 0
    %238 = vmatprep.subr.bf16.mxu0 0
    %239 = vmatpush1.bf16.msra.mxu0 0
    %240 = vmatprep.subr.bf16.mxu0 0
    %241 = vmatpush1.bf16.msra.mxu0 0
    %242 = vmatprep.subr.bf16.mxu0 0
    %243 = vmatpush1.bf16.msra.mxu0 %v135
    %244 = vmatprep.subr.bf16.mxu0 0
    %245 = vmatpush2.bf16.msra.mxu0 0
    %246 = vmatprep.subr.bf16.mxu0 0
    %247 = vmatpush2.bf16.msra.mxu0 0
    %248 = vmatprep.subr.bf16.mxu0 0
    %249 = vmatpush2.bf16.msra.mxu0 0
    %250 = vmatprep.subr.bf16.mxu0 0
    %251 = vmatpush2.bf16.msra.mxu0 0
    %252 = vmatprep.subr.bf16.mxu0 0
    %253 = vmatpush2.bf16.msra.mxu0 0
    %254 = vmatprep.subr.bf16.mxu0 0
    %255 = vmatpush2.bf16.msra.mxu0 0
    %256 = vmatprep.subr.bf16.mxu0 0
    %257 = vmatpush2.bf16.msra.mxu0 0
    %258 = vmatprep.subr.bf16.mxu0 0
    %259 = vmatpush2.bf16.msra.mxu0 0
    %260 = vmatprep.mubr.bf16.mxu0 0
    %261 = vmatmul.mubr.bf16.gmra.mxu0 %v226
    %v262 = vpop.f32.mrf.mxu0
    %v263 = vadd.f32 %v220, %v262
    %v264 = vpop.f32.mrf.mxu0
    %v265 = vpop.f32.mrf.mxu0
    %v266 = vpop.f32.mrf.mxu0
    %267 = vdwg.mxu0
    %s268 = scalar_lea.vmem %s2, 4
    %v269 = vld [vmem:[%s268] sm:$0xf]
    %vm270 = vcmask 31744
    %v272 = vsel %vm270, %v263, 0
    %v275 = vsel %vm87, %v269, 0
    %277 = vmatprep.subr.mxu0 0.0
    %278 = vmatpush1.msra.mxu0 0.0
    %279 = vmatprep.subr.mxu0 0.0
    %280 = vmatpush1.msra.mxu0 0.0
    %281 = vmatprep.subr.mxu0 0.0
    %282 = vmatpush1.msra.mxu0 0.0
    %283 = vmatprep.subr.mxu0 0.0
    %284 = vmatpush1.msra.mxu0 0.0
    %285 = vmatprep.subr.mxu0 0.0
    %286 = vmatpush1.msra.mxu0 0.0
    %287 = vmatprep.subr.mxu0 0.0
    %288 = vmatpush1.msra.mxu0 0.0
    %289 = vmatprep.subr.mxu0 0.0
    %290 = vmatpush1.msra.mxu0 0.0
    %291 = vmatprep.subr.mxu0 0.0
    %292 = vmatpush1.msra.mxu0 0.0
    %293 = vmatprep.subr.mxu0 0.0
    %294 = vmatpush1.msra.mxu0 0.0
    %295 = vmatprep.subr.mxu0 0.0
    %296 = vmatpush1.msra.mxu0 0.0
    %297 = vmatprep.subr.mxu0 0.0
    %298 = vmatpush1.msra.mxu0 0.0
    %299 = vmatprep.subr.mxu0 0.0
    %300 = vmatpush1.msra.mxu0 0.0
    %301 = vmatprep.subr.mxu0 0.0
    %302 = vmatpush1.msra.mxu0 0.0
    %303 = vmatprep.subr.mxu0 0.0
    %304 = vmatpush1.msra.mxu0 0.0
    %305 = vmatprep.subr.mxu0 0.0
    %306 = vmatpush1.msra.mxu0 0.0
    %307 = vmatprep.subr.mxu0 0.0
    %308 = vmatpush1.msra.mxu0 %v275
    %309 = vmatprep.subr.mxu0 0.0
    %310 = vmatpush2.msra.mxu0 0.0
    %311 = vmatprep.subr.mxu0 0.0
    %312 = vmatpush2.msra.mxu0 0.0
    %313 = vmatprep.subr.mxu0 0.0
    %314 = vmatpush2.msra.mxu0 0.0
    %315 = vmatprep.subr.mxu0 0.0
    %316 = vmatpush2.msra.mxu0 0.0
    %317 = vmatprep.subr.mxu0 0.0
    %318 = vmatpush2.msra.mxu0 0.0
    %319 = vmatprep.subr.mxu0 0.0
    %320 = vmatpush2.msra.mxu0 0.0
    %321 = vmatprep.subr.mxu0 0.0
    %322 = vmatpush2.msra.mxu0 0.0
    %323 = vmatprep.subr.mxu0 0.0
    %324 = vmatpush2.msra.mxu0 0.0
    %325 = vmatprep.subr.mxu0 0.0
    %326 = vmatpush2.msra.mxu0 0.0
    %327 = vmatprep.subr.mxu0 0.0
    %328 = vmatpush2.msra.mxu0 0.0
    %329 = vmatprep.subr.mxu0 0.0
    %330 = vmatpush2.msra.mxu0 0.0
    %331 = vmatprep.subr.mxu0 0.0
    %332 = vmatpush2.msra.mxu0 0.0
    %333 = vmatprep.subr.mxu0 0.0
    %334 = vmatpush2.msra.mxu0 0.0
    %335 = vmatprep.subr.mxu0 0.0
    %336 = vmatpush2.msra.mxu0 0.0
    %337 = vmatprep.subr.mxu0 0.0
    %338 = vmatpush2.msra.mxu0 0.0
    %339 = vmatprep.subr.mxu0 0.0
    %340 = vmatpush2.msra.mxu0 0.0
    %341 = vmatprep.mubr.f32.mxu0 0.0
    %342 = vmatmul.mubr.f32.gmra.mxu0 %v272
    %v343 = vpop.f32.mrf.mxu0
    %v344 = vadd.f32 0.0, %v343
    %v345 = vpop.f32.mrf.mxu0
    %346 = vdwg.mxu0
    %v348 = vsel %vm270, %v172, 0
    %v351 = vsel %vm87, %v177, 0
    %353 = vmatprep.subr.mxu0 0.0
    %354 = vmatpush1.msra.mxu0 0.0
    %355 = vmatprep.subr.mxu0 0.0
    %356 = vmatpush1.msra.mxu0 0.0
    %357 = vmatprep.subr.mxu0 0.0
    %358 = vmatpush1.msra.mxu0 0.0
    %359 = vmatprep.subr.mxu0 0.0
    %360 = vmatpush1.msra.mxu0 0.0
    %361 = vmatprep.subr.mxu0 0.0
    %362 = vmatpush1.msra.mxu0 0.0
    %363 = vmatprep.subr.mxu0 0.0
    %364 = vmatpush1.msra.mxu0 0.0
    %365 = vmatprep.subr.mxu0 0.0
    %366 = vmatpush1.msra.mxu0 0.0
    %367 = vmatprep.subr.mxu0 0.0
    %368 = vmatpush1.msra.mxu0 0.0
    %369 = vmatprep.subr.mxu0 0.0
    %370 = vmatpush1.msra.mxu0 0.0
    %371 = vmatprep.subr.mxu0 0.0
    %372 = vmatpush1.msra.mxu0 0.0
    %373 = vmatprep.subr.mxu0 0.0
    %374 = vmatpush1.msra.mxu0 0.0
    %375 = vmatprep.subr.mxu0 0.0
    %376 = vmatpush1.msra.mxu0 0.0
    %377 = vmatprep.subr.mxu0 0.0
    %378 = vmatpush1.msra.mxu0 0.0
    %379 = vmatprep.subr.mxu0 0.0
    %380 = vmatpush1.msra.mxu0 0.0
    %381 = vmatprep.subr.mxu0 0.0
    %382 = vmatpush1.msra.mxu0 0.0
    %383 = vmatprep.subr.mxu0 0.0
    %384 = vmatpush1.msra.mxu0 %v351
    %385 = vmatprep.subr.mxu0 0.0
    %386 = vmatpush2.msra.mxu0 0.0
    %387 = vmatprep.subr.mxu0 0.0
    %388 = vmatpush2.msra.mxu0 0.0
    %389 = vmatprep.subr.mxu0 0.0
    %390 = vmatpush2.msra.mxu0 0.0
    %391 = vmatprep.subr.mxu0 0.0
    %392 = vmatpush2.msra.mxu0 0.0
    %393 = vmatprep.subr.mxu0 0.0
    %394 = vmatpush2.msra.mxu0 0.0
    %395 = vmatprep.subr.mxu0 0.0
    %396 = vmatpush2.msra.mxu0 0.0
    %397 = vmatprep.subr.mxu0 0.0
    %398 = vmatpush2.msra.mxu0 0.0
    %399 = vmatprep.subr.mxu0 0.0
    %400 = vmatpush2.msra.mxu0 0.0
    %401 = vmatprep.subr.mxu0 0.0
    %402 = vmatpush2.msra.mxu0 0.0
    %403 = vmatprep.subr.mxu0 0.0
    %404 = vmatpush2.msra.mxu0 0.0
    %405 = vmatprep.subr.mxu0 0.0
    %406 = vmatpush2.msra.mxu0 0.0
    %407 = vmatprep.subr.mxu0 0.0
    %408 = vmatpush2.msra.mxu0 0.0
    %409 = vmatprep.subr.mxu0 0.0
    %410 = vmatpush2.msra.mxu0 0.0
    %411 = vmatprep.subr.mxu0 0.0
    %412 = vmatpush2.msra.mxu0 0.0
    %413 = vmatprep.subr.mxu0 0.0
    %414 = vmatpush2.msra.mxu0 0.0
    %415 = vmatprep.subr.mxu0 0.0
    %416 = vmatpush2.msra.mxu0 0.0
    %417 = vmatprep.mubr.f32.mxu0 0.0
    %418 = vmatmul.mubr.f32.gmra.mxu0 %v348
    %v419 = vpop.f32.mrf.mxu0
    %v420 = vadd.f32 %v344, %v419
    %v421 = vpop.f32.mrf.mxu0
    %422 = vdwg.mxu0
    %s423 = scalar_lea.vmem [#allocation2], 4
    %v424 = vld [vmem:[%s423] sm:$0x3]
    %s425 = scalar_lea.vmem [#allocation4], 4
    %v426 = vld [vmem:[%s425] sm:$0x3]
    %v428 = vsel %vm83, %v426, 0
    %430 = vmatprep.subr.bf16.mxu0 0
    %431 = vmatpush1.bf16.msra.mxu0 0
    %432 = vmatprep.subr.bf16.mxu0 0
    %433 = vmatpush1.bf16.msra.mxu0 0
    %434 = vmatprep.subr.bf16.mxu0 0
    %435 = vmatpush1.bf16.msra.mxu0 0
    %436 = vmatprep.subr.bf16.mxu0 0
    %437 = vmatpush1.bf16.msra.mxu0 0
    %438 = vmatprep.subr.bf16.mxu0 0
    %439 = vmatpush1.bf16.msra.mxu0 0
    %440 = vmatprep.subr.bf16.mxu0 0
    %441 = vmatpush1.bf16.msra.mxu0 0
    %442 = vmatprep.subr.bf16.mxu0 0
    %443 = vmatpush1.bf16.msra.mxu0 0
    %444 = vmatprep.subr.bf16.mxu0 0
    %445 = vmatpush1.bf16.msra.mxu0 %v89
    %446 = vmatprep.subr.bf16.mxu0 0
    %447 = vmatpush2.bf16.msra.mxu0 0
    %448 = vmatprep.subr.bf16.mxu0 0
    %449 = vmatpush2.bf16.msra.mxu0 0
    %450 = vmatprep.subr.bf16.mxu0 0
    %451 = vmatpush2.bf16.msra.mxu0 0
    %452 = vmatprep.subr.bf16.mxu0 0
    %453 = vmatpush2.bf16.msra.mxu0 0
    %454 = vmatprep.subr.bf16.mxu0 0
    %455 = vmatpush2.bf16.msra.mxu0 0
    %456 = vmatprep.subr.bf16.mxu0 0
    %457 = vmatpush2.bf16.msra.mxu0 0
    %458 = vmatprep.subr.bf16.mxu0 0
    %459 = vmatpush2.bf16.msra.mxu0 0
    %460 = vmatprep.subr.bf16.mxu0 0
    %461 = vmatpush2.bf16.msra.mxu0 0
    %462 = vmatprep.mubr.bf16.mxu0 0
    %463 = vmatmul.mubr.bf16.gmra.mxu0 %v428
    %v464 = vpop.f32.mrf.mxu0
    %v465 = vadd.f32 0.0, %v464
    %v466 = vpop.f32.mrf.mxu0
    %v467 = vpop.f32.mrf.mxu0
    %v468 = vpop.f32.mrf.mxu0
    %469 = vdwg.mxu0
    %v471 = vsel %vm83, %v424, 0
    %473 = vmatprep.subr.bf16.mxu0 0
    %474 = vmatpush1.bf16.msra.mxu0 0
    %475 = vmatprep.subr.bf16.mxu0 0
    %476 = vmatpush1.bf16.msra.mxu0 0
    %477 = vmatprep.subr.bf16.mxu0 0
    %478 = vmatpush1.bf16.msra.mxu0 0
    %479 = vmatprep.subr.bf16.mxu0 0
    %480 = vmatpush1.bf16.msra.mxu0 0
    %481 = vmatprep.subr.bf16.mxu0 0
    %482 = vmatpush1.bf16.msra.mxu0 0
    %483 = vmatprep.subr.bf16.mxu0 0
    %484 = vmatpush1.bf16.msra.mxu0 0
    %485 = vmatprep.subr.bf16.mxu0 0
    %486 = vmatpush1.bf16.msra.mxu0 0
    %487 = vmatprep.subr.bf16.mxu0 0
    %488 = vmatpush1.bf16.msra.mxu0 %v135
    %489 = vmatprep.subr.bf16.mxu0 0
    %490 = vmatpush2.bf16.msra.mxu0 0
    %491 = vmatprep.subr.bf16.mxu0 0
    %492 = vmatpush2.bf16.msra.mxu0 0
    %493 = vmatprep.subr.bf16.mxu0 0
    %494 = vmatpush2.bf16.msra.mxu0 0
    %495 = vmatprep.subr.bf16.mxu0 0
    %496 = vmatpush2.bf16.msra.mxu0 0
    %497 = vmatprep.subr.bf16.mxu0 0
    %498 = vmatpush2.bf16.msra.mxu0 0
    %499 = vmatprep.subr.bf16.mxu0 0
    %500 = vmatpush2.bf16.msra.mxu0 0
    %501 = vmatprep.subr.bf16.mxu0 0
    %502 = vmatpush2.bf16.msra.mxu0 0
    %503 = vmatprep.subr.bf16.mxu0 0
    %504 = vmatpush2.bf16.msra.mxu0 0
    %505 = vmatprep.mubr.bf16.mxu0 0
    %506 = vmatmul.mubr.bf16.gmra.mxu0 %v471
    %v507 = vpop.f32.mrf.mxu0
    %v508 = vadd.f32 %v465, %v507
    %v509 = vpop.f32.mrf.mxu0
    %v510 = vpop.f32.mrf.mxu0
    %v511 = vpop.f32.mrf.mxu0
    %512 = vdwg.mxu0
    %s513 = scalar_lea.vmem %s2, 8
    %v514 = vld [vmem:[%s513] sm:$0xf]
    %v516 = vsel %vm270, %v508, 0
    %v519 = vsel %vm87, %v514, 0
    %521 = vmatprep.subr.mxu0 0.0
    %522 = vmatpush1.msra.mxu0 0.0
    %523 = vmatprep.subr.mxu0 0.0
    %524 = vmatpush1.msra.mxu0 0.0
    %525 = vmatprep.subr.mxu0 0.0
    %526 = vmatpush1.msra.mxu0 0.0
    %527 = vmatprep.subr.mxu0 0.0
    %528 = vmatpush1.msra.mxu0 0.0
    %529 = vmatprep.subr.mxu0 0.0
    %530 = vmatpush1.msra.mxu0 0.0
    %531 = vmatprep.subr.mxu0 0.0
    %532 = vmatpush1.msra.mxu0 0.0
    %533 = vmatprep.subr.mxu0 0.0
    %534 = vmatpush1.msra.mxu0 0.0
    %535 = vmatprep.subr.mxu0 0.0
    %536 = vmatpush1.msra.mxu0 0.0
    %537 = vmatprep.subr.mxu0 0.0
    %538 = vmatpush1.msra.mxu0 0.0
    %539 = vmatprep.subr.mxu0 0.0
    %540 = vmatpush1.msra.mxu0 0.0
    %541 = vmatprep.subr.mxu0 0.0
    %542 = vmatpush1.msra.mxu0 0.0
    %543 = vmatprep.subr.mxu0 0.0
    %544 = vmatpush1.msra.mxu0 0.0
    %545 = vmatprep.subr.mxu0 0.0
    %546 = vmatpush1.msra.mxu0 0.0
    %547 = vmatprep.subr.mxu0 0.0
    %548 = vmatpush1.msra.mxu0 0.0
    %549 = vmatprep.subr.mxu0 0.0
    %550 = vmatpush1.msra.mxu0 0.0
    %551 = vmatprep.subr.mxu0 0.0
    %552 = vmatpush1.msra.mxu0 %v519
    %553 = vmatprep.subr.mxu0 0.0
    %554 = vmatpush2.msra.mxu0 0.0
    %555 = vmatprep.subr.mxu0 0.0
    %556 = vmatpush2.msra.mxu0 0.0
    %557 = vmatprep.subr.mxu0 0.0
    %558 = vmatpush2.msra.mxu0 0.0
    %559 = vmatprep.subr.mxu0 0.0
    %560 = vmatpush2.msra.mxu0 0.0
    %561 = vmatprep.subr.mxu0 0.0
    %562 = vmatpush2.msra.mxu0 0.0
    %563 = vmatprep.subr.mxu0 0.0
    %564 = vmatpush2.msra.mxu0 0.0
    %565 = vmatprep.subr.mxu0 0.0
    %566 = vmatpush2.msra.mxu0 0.0
    %567 = vmatprep.subr.mxu0 0.0
    %568 = vmatpush2.msra.mxu0 0.0
    %569 = vmatprep.subr.mxu0 0.0
    %570 = vmatpush2.msra.mxu0 0.0
    %571 = vmatprep.subr.mxu0 0.0
    %572 = vmatpush2.msra.mxu0 0.0
    %573 = vmatprep.subr.mxu0 0.0
    %574 = vmatpush2.msra.mxu0 0.0
    %575 = vmatprep.subr.mxu0 0.0
    %576 = vmatpush2.msra.mxu0 0.0
    %577 = vmatprep.subr.mxu0 0.0
    %578 = vmatpush2.msra.mxu0 0.0
    %579 = vmatprep.subr.mxu0 0.0
    %580 = vmatpush2.msra.mxu0 0.0
    %581 = vmatprep.subr.mxu0 0.0
    %582 = vmatpush2.msra.mxu0 0.0
    %583 = vmatprep.subr.mxu0 0.0
    %584 = vmatpush2.msra.mxu0 0.0
    %585 = vmatprep.mubr.f32.mxu0 0.0
    %586 = vmatmul.mubr.f32.gmra.mxu0 %v516
    %v587 = vpop.f32.mrf.mxu0
    %v588 = vadd.f32 0.0, %v587
    %v589 = vpop.f32.mrf.mxu0
    %590 = vdwg.mxu0
    %v591 = vadd.f32 %v420, %v588
    %s592 = scalar_lea.vmem [#allocation2], 6
    %v593 = vld [vmem:[%s592] sm:$0x3]
    %s594 = scalar_lea.vmem [#allocation4], 6
    %v595 = vld [vmem:[%s594] sm:$0x3]
    %v597 = vsel %vm83, %v595, 0
    %599 = vmatprep.subr.bf16.mxu0 0
    %600 = vmatpush1.bf16.msra.mxu0 0
    %601 = vmatprep.subr.bf16.mxu0 0
    %602 = vmatpush1.bf16.msra.mxu0 0
    %603 = vmatprep.subr.bf16.mxu0 0
    %604 = vmatpush1.bf16.msra.mxu0 0
    %605 = vmatprep.subr.bf16.mxu0 0
    %606 = vmatpush1.bf16.msra.mxu0 0
    %607 = vmatprep.subr.bf16.mxu0 0
    %608 = vmatpush1.bf16.msra.mxu0 0
    %609 = vmatprep.subr.bf16.mxu0 0
    %610 = vmatpush1.bf16.msra.mxu0 0
    %611 = vmatprep.subr.bf16.mxu0 0
    %612 = vmatpush1.bf16.msra.mxu0 0
    %613 = vmatprep.subr.bf16.mxu0 0
    %614 = vmatpush1.bf16.msra.mxu0 %v89
    %615 = vmatprep.subr.bf16.mxu0 0
    %616 = vmatpush2.bf16.msra.mxu0 0
    %617 = vmatprep.subr.bf16.mxu0 0
    %618 = vmatpush2.bf16.msra.mxu0 0
    %619 = vmatprep.subr.bf16.mxu0 0
    %620 = vmatpush2.bf16.msra.mxu0 0
    %621 = vmatprep.subr.bf16.mxu0 0
    %622 = vmatpush2.bf16.msra.mxu0 0
    %623 = vmatprep.subr.bf16.mxu0 0
    %624 = vmatpush2.bf16.msra.mxu0 0
    %625 = vmatprep.subr.bf16.mxu0 0
    %626 = vmatpush2.bf16.msra.mxu0 0
    %627 = vmatprep.subr.bf16.mxu0 0
    %628 = vmatpush2.bf16.msra.mxu0 0
    %629 = vmatprep.subr.bf16.mxu0 0
    %630 = vmatpush2.bf16.msra.mxu0 0
    %631 = vmatprep.mubr.bf16.mxu0 0
    %632 = vmatmul.mubr.bf16.gmra.mxu0 %v597
    %v633 = vpop.f32.mrf.mxu0
    %v634 = vadd.f32 0.0, %v633
    %v635 = vpop.f32.mrf.mxu0
    %v636 = vpop.f32.mrf.mxu0
    %v637 = vpop.f32.mrf.mxu0
    %638 = vdwg.mxu0
    %v640 = vsel %vm83, %v593, 0
    %642 = vmatprep.subr.bf16.mxu0 0
    %643 = vmatpush1.bf16.msra.mxu0 0
    %644 = vmatprep.subr.bf16.mxu0 0
    %645 = vmatpush1.bf16.msra.mxu0 0
    %646 = vmatprep.subr.bf16.mxu0 0
    %647 = vmatpush1.bf16.msra.mxu0 0
    %648 = vmatprep.subr.bf16.mxu0 0
    %649 = vmatpush1.bf16.msra.mxu0 0
    %650 = vmatprep.subr.bf16.mxu0 0
    %651 = vmatpush1.bf16.msra.mxu0 0
    %652 = vmatprep.subr.bf16.mxu0 0
    %653 = vmatpush1.bf16.msra.mxu0 0
    %654 = vmatprep.subr.bf16.mxu0 0
    %655 = vmatpush1.bf16.msra.mxu0 0
    %656 = vmatprep.subr.bf16.mxu0 0
    %657 = vmatpush1.bf16.msra.mxu0 %v135
    %658 = vmatprep.subr.bf16.mxu0 0
    %659 = vmatpush2.bf16.msra.mxu0 0
    %660 = vmatprep.subr.bf16.mxu0 0
    %661 = vmatpush2.bf16.msra.mxu0 0
    %662 = vmatprep.subr.bf16.mxu0 0
    %663 = vmatpush2.bf16.msra.mxu0 0
    %664 = vmatprep.subr.bf16.mxu0 0
    %665 = vmatpush2.bf16.msra.mxu0 0
    %666 = vmatprep.subr.bf16.mxu0 0
    %667 = vmatpush2.bf16.msra.mxu0 0
    %668 = vmatprep.subr.bf16.mxu0 0
    %669 = vmatpush2.bf16.msra.mxu0 0
    %670 = vmatprep.subr.bf16.mxu0 0
    %671 = vmatpush2.bf16.msra.mxu0 0
    %672 = vmatprep.subr.bf16.mxu0 0
    %673 = vmatpush2.bf16.msra.mxu0 0
    %674 = vmatprep.mubr.bf16.mxu0 0
    %675 = vmatmul.mubr.bf16.gmra.mxu0 %v640
    %v676 = vpop.f32.mrf.mxu0
    %v677 = vadd.f32 %v634, %v676
    %v678 = vpop.f32.mrf.mxu0
    %v679 = vpop.f32.mrf.mxu0
    %v680 = vpop.f32.mrf.mxu0
    %681 = vdwg.mxu0
    %s682 = scalar_lea.vmem %s2, 12
    %v683 = vld [vmem:[%s682] sm:$0xf]
    %v685 = vsel %vm270, %v677, 0
    %v688 = vsel %vm87, %v683, 0
    %690 = vmatprep.subr.mxu0 0.0
    %691 = vmatpush1.msra.mxu0 0.0
    %692 = vmatprep.subr.mxu0 0.0
    %693 = vmatpush1.msra.mxu0 0.0
    %694 = vmatprep.subr.mxu0 0.0
    %695 = vmatpush1.msra.mxu0 0.0
    %696 = vmatprep.subr.mxu0 0.0
    %697 = vmatpush1.msra.mxu0 0.0
    %698 = vmatprep.subr.mxu0 0.0
    %699 = vmatpush1.msra.mxu0 0.0
    %700 = vmatprep.subr.mxu0 0.0
    %701 = vmatpush1.msra.mxu0 0.0
    %702 = vmatprep.subr.mxu0 0.0
    %703 = vmatpush1.msra.mxu0 0.0
    %704 = vmatprep.subr.mxu0 0.0
    %705 = vmatpush1.msra.mxu0 0.0
    %706 = vmatprep.subr.mxu0 0.0
    %707 = vmatpush1.msra.mxu0 0.0
    %708 = vmatprep.subr.mxu0 0.0
    %709 = vmatpush1.msra.mxu0 0.0
    %710 = vmatprep.subr.mxu0 0.0
    %711 = vmatpush1.msra.mxu0 0.0
    %712 = vmatprep.subr.mxu0 0.0
    %713 = vmatpush1.msra.mxu0 0.0
    %714 = vmatprep.subr.mxu0 0.0
    %715 = vmatpush1.msra.mxu0 0.0
    %716 = vmatprep.subr.mxu0 0.0
    %717 = vmatpush1.msra.mxu0 0.0
    %718 = vmatprep.subr.mxu0 0.0
    %719 = vmatpush1.msra.mxu0 0.0
    %720 = vmatprep.subr.mxu0 0.0
    %721 = vmatpush1.msra.mxu0 %v688
    %722 = vmatprep.subr.mxu0 0.0
    %723 = vmatpush2.msra.mxu0 0.0
    %724 = vmatprep.subr.mxu0 0.0
    %725 = vmatpush2.msra.mxu0 0.0
    %726 = vmatprep.subr.mxu0 0.0
    %727 = vmatpush2.msra.mxu0 0.0
    %728 = vmatprep.subr.mxu0 0.0
    %729 = vmatpush2.msra.mxu0 0.0
    %730 = vmatprep.subr.mxu0 0.0
    %731 = vmatpush2.msra.mxu0 0.0
    %732 = vmatprep.subr.mxu0 0.0
    %733 = vmatpush2.msra.mxu0 0.0
    %734 = vmatprep.subr.mxu0 0.0
    %735 = vmatpush2.msra.mxu0 0.0
    %736 = vmatprep.subr.mxu0 0.0
    %737 = vmatpush2.msra.mxu0 0.0
    %738 = vmatprep.subr.mxu0 0.0
    %739 = vmatpush2.msra.mxu0 0.0
    %740 = vmatprep.subr.mxu0 0.0
    %741 = vmatpush2.msra.mxu0 0.0
    %742 = vmatprep.subr.mxu0 0.0
    %743 = vmatpush2.msra.mxu0 0.0
    %744 = vmatprep.subr.mxu0 0.0
    %745 = vmatpush2.msra.mxu0 0.0
    %746 = vmatprep.subr.mxu0 0.0
    %747 = vmatpush2.msra.mxu0 0.0
    %748 = vmatprep.subr.mxu0 0.0
    %749 = vmatpush2.msra.mxu0 0.0
    %750 = vmatprep.subr.mxu0 0.0
    %751 = vmatpush2.msra.mxu0 0.0
    %752 = vmatprep.subr.mxu0 0.0
    %753 = vmatpush2.msra.mxu0 0.0
    %754 = vmatprep.mubr.f32.mxu0 0.0
    %755 = vmatmul.mubr.f32.gmra.mxu0 %v685
    %v756 = vpop.f32.mrf.mxu0
    %v757 = vadd.f32 0.0, %v756
    %v758 = vpop.f32.mrf.mxu0
    %759 = vdwg.mxu0
    %v760 = vadd.f32 %v591, %v757
    %s761 = scalar_lea.vmem [#allocation2], 8
    %v762 = vld [vmem:[%s761] sm:$0x3]
    %s763 = scalar_lea.vmem [#allocation4], 8
    %v764 = vld [vmem:[%s763] sm:$0x3]
    %v766 = vsel %vm83, %v764, 0
    %768 = vmatprep.subr.bf16.mxu0 0
    %769 = vmatpush1.bf16.msra.mxu0 0
    %770 = vmatprep.subr.bf16.mxu0 0
    %771 = vmatpush1.bf16.msra.mxu0 0
    %772 = vmatprep.subr.bf16.mxu0 0
    %773 = vmatpush1.bf16.msra.mxu0 0
    %774 = vmatprep.subr.bf16.mxu0 0
    %775 = vmatpush1.bf16.msra.mxu0 0
    %776 = vmatprep.subr.bf16.mxu0 0
    %777 = vmatpush1.bf16.msra.mxu0 0
    %778 = vmatprep.subr.bf16.mxu0 0
    %779 = vmatpush1.bf16.msra.mxu0 0
    %780 = vmatprep.subr.bf16.mxu0 0
    %781 = vmatpush1.bf16.msra.mxu0 0
    %782 = vmatprep.subr.bf16.mxu0 0
    %783 = vmatpush1.bf16.msra.mxu0 %v89
    %784 = vmatprep.subr.bf16.mxu0 0
    %785 = vmatpush2.bf16.msra.mxu0 0
    %786 = vmatprep.subr.bf16.mxu0 0
    %787 = vmatpush2.bf16.msra.mxu0 0
    %788 = vmatprep.subr.bf16.mxu0 0
    %789 = vmatpush2.bf16.msra.mxu0 0
    %790 = vmatprep.subr.bf16.mxu0 0
    %791 = vmatpush2.bf16.msra.mxu0 0
    %792 = vmatprep.subr.bf16.mxu0 0
    %793 = vmatpush2.bf16.msra.mxu0 0
    %794 = vmatprep.subr.bf16.mxu0 0
    %795 = vmatpush2.bf16.msra.mxu0 0
    %796 = vmatprep.subr.bf16.mxu0 0
    %797 = vmatpush2.bf16.msra.mxu0 0
    %798 = vmatprep.subr.bf16.mxu0 0
    %799 = vmatpush2.bf16.msra.mxu0 0
    %800 = vmatprep.mubr.bf16.mxu0 0
    %801 = vmatmul.mubr.bf16.gmra.mxu0 %v766
    %v802 = vpop.f32.mrf.mxu0
    %v803 = vadd.f32 0.0, %v802
    %v804 = vpop.f32.mrf.mxu0
    %v805 = vpop.f32.mrf.mxu0
    %v806 = vpop.f32.mrf.mxu0
    %807 = vdwg.mxu0
    %v809 = vsel %vm83, %v762, 0
    %811 = vmatprep.subr.bf16.mxu0 0
    %812 = vmatpush1.bf16.msra.mxu0 0
    %813 = vmatprep.subr.bf16.mxu0 0
    %814 = vmatpush1.bf16.msra.mxu0 0
    %815 = vmatprep.subr.bf16.mxu0 0
    %816 = vmatpush1.bf16.msra.mxu0 0
    %817 = vmatprep.subr.bf16.mxu0 0
    %818 = vmatpush1.bf16.msra.mxu0 0
    %819 = vmatprep.subr.bf16.mxu0 0
    %820 = vmatpush1.bf16.msra.mxu0 0
    %821 = vmatprep.subr.bf16.mxu0 0
    %822 = vmatpush1.bf16.msra.mxu0 0
    %823 = vmatprep.subr.bf16.mxu0 0
    %824 = vmatpush1.bf16.msra.mxu0 0
    %825 = vmatprep.subr.bf16.mxu0 0
    %826 = vmatpush1.bf16.msra.mxu0 %v135
    %827 = vmatprep.subr.bf16.mxu0 0
    %828 = vmatpush2.bf16.msra.mxu0 0
    %829 = vmatprep.subr.bf16.mxu0 0
    %830 = vmatpush2.bf16.msra.mxu0 0
    %831 = vmatprep.subr.bf16.mxu0 0
    %832 = vmatpush2.bf16.msra.mxu0 0
    %833 = vmatprep.subr.bf16.mxu0 0
    %834 = vmatpush2.bf16.msra.mxu0 0
    %835 = vmatprep.subr.bf16.mxu0 0
    %836 = vmatpush2.bf16.msra.mxu0 0
    %837 = vmatprep.subr.bf16.mxu0 0
    %838 = vmatpush2.bf16.msra.mxu0 0
    %839 = vmatprep.subr.bf16.mxu0 0
    %840 = vmatpush2.bf16.msra.mxu0 0
    %841 = vmatprep.subr.bf16.mxu0 0
    %842 = vmatpush2.bf16.msra.mxu0 0
    %843 = vmatprep.mubr.bf16.mxu0 0
    %844 = vmatmul.mubr.bf16.gmra.mxu0 %v809
    %v845 = vpop.f32.mrf.mxu0
    %v846 = vadd.f32 %v803, %v845
    %v847 = vpop.f32.mrf.mxu0
    %v848 = vpop.f32.mrf.mxu0
    %v849 = vpop.f32.mrf.mxu0
    %850 = vdwg.mxu0
    %s851 = scalar_lea.vmem %s2, 16
    %v852 = vld [vmem:[%s851] sm:$0xf]
    %v854 = vsel %vm270, %v846, 0
    %v857 = vsel %vm87, %v852, 0
    %859 = vmatprep.subr.mxu0 0.0
    %860 = vmatpush1.msra.mxu0 0.0
    %861 = vmatprep.subr.mxu0 0.0
    %862 = vmatpush1.msra.mxu0 0.0
    %863 = vmatprep.subr.mxu0 0.0
    %864 = vmatpush1.msra.mxu0 0.0
    %865 = vmatprep.subr.mxu0 0.0
    %866 = vmatpush1.msra.mxu0 0.0
    %867 = vmatprep.subr.mxu0 0.0
    %868 = vmatpush1.msra.mxu0 0.0
    %869 = vmatprep.subr.mxu0 0.0
    %870 = vmatpush1.msra.mxu0 0.0
    %871 = vmatprep.subr.mxu0 0.0
    %872 = vmatpush1.msra.mxu0 0.0
    %873 = vmatprep.subr.mxu0 0.0
    %874 = vmatpush1.msra.mxu0 0.0
    %875 = vmatprep.subr.mxu0 0.0
    %876 = vmatpush1.msra.mxu0 0.0
    %877 = vmatprep.subr.mxu0 0.0
    %878 = vmatpush1.msra.mxu0 0.0
    %879 = vmatprep.subr.mxu0 0.0
    %880 = vmatpush1.msra.mxu0 0.0
    %881 = vmatprep.subr.mxu0 0.0
    %882 = vmatpush1.msra.mxu0 0.0
    %883 = vmatprep.subr.mxu0 0.0
    %884 = vmatpush1.msra.mxu0 0.0
    %885 = vmatprep.subr.mxu0 0.0
    %886 = vmatpush1.msra.mxu0 0.0
    %887 = vmatprep.subr.mxu0 0.0
    %888 = vmatpush1.msra.mxu0 0.0
    %889 = vmatprep.subr.mxu0 0.0
    %890 = vmatpush1.msra.mxu0 %v857
    %891 = vmatprep.subr.mxu0 0.0
    %892 = vmatpush2.msra.mxu0 0.0
    %893 = vmatprep.subr.mxu0 0.0
    %894 = vmatpush2.msra.mxu0 0.0
    %895 = vmatprep.subr.mxu0 0.0
    %896 = vmatpush2.msra.mxu0 0.0
    %897 = vmatprep.subr.mxu0 0.0
    %898 = vmatpush2.msra.mxu0 0.0
    %899 = vmatprep.subr.mxu0 0.0
    %900 = vmatpush2.msra.mxu0 0.0
    %901 = vmatprep.subr.mxu0 0.0
    %902 = vmatpush2.msra.mxu0 0.0
    %903 = vmatprep.subr.mxu0 0.0
    %904 = vmatpush2.msra.mxu0 0.0
    %905 = vmatprep.subr.mxu0 0.0
    %906 = vmatpush2.msra.mxu0 0.0
    %907 = vmatprep.subr.mxu0 0.0
    %908 = vmatpush2.msra.mxu0 0.0
    %909 = vmatprep.subr.mxu0 0.0
    %910 = vmatpush2.msra.mxu0 0.0
    %911 = vmatprep.subr.mxu0 0.0
    %912 = vmatpush2.msra.mxu0 0.0
    %913 = vmatprep.subr.mxu0 0.0
    %914 = vmatpush2.msra.mxu0 0.0
    %915 = vmatprep.subr.mxu0 0.0
    %916 = vmatpush2.msra.mxu0 0.0
    %917 = vmatprep.subr.mxu0 0.0
    %918 = vmatpush2.msra.mxu0 0.0
    %919 = vmatprep.subr.mxu0 0.0
    %920 = vmatpush2.msra.mxu0 0.0
    %921 = vmatprep.subr.mxu0 0.0
    %922 = vmatpush2.msra.mxu0 0.0
    %923 = vmatprep.mubr.f32.mxu0 0.0
    %924 = vmatmul.mubr.f32.gmra.mxu0 %v854
    %v925 = vpop.f32.mrf.mxu0
    %v926 = vadd.f32 0.0, %v925
    %v927 = vpop.f32.mrf.mxu0
    %928 = vdwg.mxu0
    %v929 = vadd.f32 %v760, %v926
    %s930 = scalar_lea.vmem [#allocation2], 10
    %v931 = vld [vmem:[%s930] sm:$0x3]
    %s932 = scalar_lea.vmem [#allocation4], 10
    %v933 = vld [vmem:[%s932] sm:$0x3]
    %v935 = vsel %vm83, %v933, 0
    %937 = vmatprep.subr.bf16.mxu0 0
    %938 = vmatpush1.bf16.msra.mxu0 0
    %939 = vmatprep.subr.bf16.mxu0 0
    %940 = vmatpush1.bf16.msra.mxu0 0
    %941 = vmatprep.subr.bf16.mxu0 0
    %942 = vmatpush1.bf16.msra.mxu0 0
    %943 = vmatprep.subr.bf16.mxu0 0
    %944 = vmatpush1.bf16.msra.mxu0 0
    %945 = vmatprep.subr.bf16.mxu0 0
    %946 = vmatpush1.bf16.msra.mxu0 0
    %947 = vmatprep.subr.bf16.mxu0 0
    %948 = vmatpush1.bf16.msra.mxu0 0
    %949 = vmatprep.subr.bf16.mxu0 0
    %950 = vmatpush1.bf16.msra.mxu0 0
    %951 = vmatprep.subr.bf16.mxu0 0
    %952 = vmatpush1.bf16.msra.mxu0 %v89
    %953 = vmatprep.subr.bf16.mxu0 0
    %954 = vmatpush2.bf16.msra.mxu0 0
    %955 = vmatprep.subr.bf16.mxu0 0
    %956 = vmatpush2.bf16.msra.mxu0 0
    %957 = vmatprep.subr.bf16.mxu0 0
    %958 = vmatpush2.bf16.msra.mxu0 0
    %959 = vmatprep.subr.bf16.mxu0 0
    %960 = vmatpush2.bf16.msra.mxu0 0
    %961 = vmatprep.subr.bf16.mxu0 0
    %962 = vmatpush2.bf16.msra.mxu0 0
    %963 = vmatprep.subr.bf16.mxu0 0
    %964 = vmatpush2.bf16.msra.mxu0 0
    %965 = vmatprep.subr.bf16.mxu0 0
    %966 = vmatpush2.bf16.msra.mxu0 0
    %967 = vmatprep.subr.bf16.mxu0 0
    %968 = vmatpush2.bf16.msra.mxu0 0
    %969 = vmatprep.mubr.bf16.mxu0 0
    %970 = vmatmul.mubr.bf16.gmra.mxu0 %v935
    %v971 = vpop.f32.mrf.mxu0
    %v972 = vadd.f32 0.0, %v971
    %v973 = vpop.f32.mrf.mxu0
    %v974 = vpop.f32.mrf.mxu0
    %v975 = vpop.f32.mrf.mxu0
    %976 = vdwg.mxu0
    %v978 = vsel %vm83, %v931, 0
    %980 = vmatprep.subr.bf16.mxu0 0
    %981 = vmatpush1.bf16.msra.mxu0 0
    %982 = vmatprep.subr.bf16.mxu0 0
    %983 = vmatpush1.bf16.msra.mxu0 0
    %984 = vmatprep.subr.bf16.mxu0 0
    %985 = vmatpush1.bf16.msra.mxu0 0
    %986 = vmatprep.subr.bf16.mxu0 0
    %987 = vmatpush1.bf16.msra.mxu0 0
    %988 = vmatprep.subr.bf16.mxu0 0
    %989 = vmatpush1.bf16.msra.mxu0 0
    %990 = vmatprep.subr.bf16.mxu0 0
    %991 = vmatpush1.bf16.msra.mxu0 0
    %992 = vmatprep.subr.bf16.mxu0 0
    %993 = vmatpush1.bf16.msra.mxu0 0
    %994 = vmatprep.subr.bf16.mxu0 0
    %995 = vmatpush1.bf16.msra.mxu0 %v135
    %996 = vmatprep.subr.bf16.mxu0 0
    %997 = vmatpush2.bf16.msra.mxu0 0
    %998 = vmatprep.subr.bf16.mxu0 0
    %999 = vmatpush2.bf16.msra.mxu0 0
    %1000 = vmatprep.subr.bf16.mxu0 0
    %1001 = vmatpush2.bf16.msra.mxu0 0
    %1002 = vmatprep.subr.bf16.mxu0 0
    %1003 = vmatpush2.bf16.msra.mxu0 0
    %1004 = vmatprep.subr.bf16.mxu0 0
    %1005 = vmatpush2.bf16.msra.mxu0 0
    %1006 = vmatprep.subr.bf16.mxu0 0
    %1007 = vmatpush2.bf16.msra.mxu0 0
    %1008 = vmatprep.subr.bf16.mxu0 0
    %1009 = vmatpush2.bf16.msra.mxu0 0
    %1010 = vmatprep.subr.bf16.mxu0 0
    %1011 = vmatpush2.bf16.msra.mxu0 0
    %1012 = vmatprep.mubr.bf16.mxu0 0
    %1013 = vmatmul.mubr.bf16.gmra.mxu0 %v978
    %v1014 = vpop.f32.mrf.mxu0
    %v1015 = vadd.f32 %v972, %v1014
    %v1016 = vpop.f32.mrf.mxu0
    %v1017 = vpop.f32.mrf.mxu0
    %v1018 = vpop.f32.mrf.mxu0
    %1019 = vdwg.mxu0
    %s1020 = scalar_lea.vmem %s2, 20
    %v1021 = vld [vmem:[%s1020] sm:$0xf]
    %v1023 = vsel %vm270, %v1015, 0
    %v1026 = vsel %vm87, %v1021, 0
    %1028 = vmatprep.subr.mxu0 0.0
    %1029 = vmatpush1.msra.mxu0 0.0
    %1030 = vmatprep.subr.mxu0 0.0
    %1031 = vmatpush1.msra.mxu0 0.0
    %1032 = vmatprep.subr.mxu0 0.0
    %1033 = vmatpush1.msra.mxu0 0.0
    %1034 = vmatprep.subr.mxu0 0.0
    %1035 = vmatpush1.msra.mxu0 0.0
    %1036 = vmatprep.subr.mxu0 0.0
    %1037 = vmatpush1.msra.mxu0 0.0
    %1038 = vmatprep.subr.mxu0 0.0
    %1039 = vmatpush1.msra.mxu0 0.0
    %1040 = vmatprep.subr.mxu0 0.0
    %1041 = vmatpush1.msra.mxu0 0.0
    %1042 = vmatprep.subr.mxu0 0.0
    %1043 = vmatpush1.msra.mxu0 0.0
    %1044 = vmatprep.subr.mxu0 0.0
    %1045 = vmatpush1.msra.mxu0 0.0
    %1046 = vmatprep.subr.mxu0 0.0
    %1047 = vmatpush1.msra.mxu0 0.0
    %1048 = vmatprep.subr.mxu0 0.0
    %1049 = vmatpush1.msra.mxu0 0.0
    %1050 = vmatprep.subr.mxu0 0.0
    %1051 = vmatpush1.msra.mxu0 0.0
    %1052 = vmatprep.subr.mxu0 0.0
    %1053 = vmatpush1.msra.mxu0 0.0
    %1054 = vmatprep.subr.mxu0 0.0
    %1055 = vmatpush1.msra.mxu0 0.0
    %1056 = vmatprep.subr.mxu0 0.0
    %1057 = vmatpush1.msra.mxu0 0.0
    %1058 = vmatprep.subr.mxu0 0.0
    %1059 = vmatpush1.msra.mxu0 %v1026
    %1060 = vmatprep.subr.mxu0 0.0
    %1061 = vmatpush2.msra.mxu0 0.0
    %1062 = vmatprep.subr.mxu0 0.0
    %1063 = vmatpush2.msra.mxu0 0.0
    %1064 = vmatprep.subr.mxu0 0.0
    %1065 = vmatpush2.msra.mxu0 0.0
    %1066 = vmatprep.subr.mxu0 0.0
    %1067 = vmatpush2.msra.mxu0 0.0
    %1068 = vmatprep.subr.mxu0 0.0
    %1069 = vmatpush2.msra.mxu0 0.0
    %1070 = vmatprep.subr.mxu0 0.0
    %1071 = vmatpush2.msra.mxu0 0.0
    %1072 = vmatprep.subr.mxu0 0.0
    %1073 = vmatpush2.msra.mxu0 0.0
    %1074 = vmatprep.subr.mxu0 0.0
    %1075 = vmatpush2.msra.mxu0 0.0
    %1076 = vmatprep.subr.mxu0 0.0
    %1077 = vmatpush2.msra.mxu0 0.0
    %1078 = vmatprep.subr.mxu0 0.0
    %1079 = vmatpush2.msra.mxu0 0.0
    %1080 = vmatprep.subr.mxu0 0.0
    %1081 = vmatpush2.msra.mxu0 0.0
    %1082 = vmatprep.subr.mxu0 0.0
    %1083 = vmatpush2.msra.mxu0 0.0
    %1084 = vmatprep.subr.mxu0 0.0
    %1085 = vmatpush2.msra.mxu0 0.0
    %1086 = vmatprep.subr.mxu0 0.0
    %1087 = vmatpush2.msra.mxu0 0.0
    %1088 = vmatprep.subr.mxu0 0.0
    %1089 = vmatpush2.msra.mxu0 0.0
    %1090 = vmatprep.subr.mxu0 0.0
    %1091 = vmatpush2.msra.mxu0 0.0
    %1092 = vmatprep.mubr.f32.mxu0 0.0
    %1093 = vmatmul.mubr.f32.gmra.mxu0 %v1023
    %v1094 = vpop.f32.mrf.mxu0
    %v1095 = vadd.f32 0.0, %v1094
    %v1096 = vpop.f32.mrf.mxu0
    %1097 = vdwg.mxu0
    %v1098 = vadd.f32 %v929, %v1095
    %s1099 = scalar_lea.vmem [#allocation2], 12
    %v1100 = vld [vmem:[%s1099] sm:$0x3]
    %s1101 = scalar_lea.vmem [#allocation4], 12
    %v1102 = vld [vmem:[%s1101] sm:$0x3]
    %v1104 = vsel %vm83, %v1102, 0
    %1106 = vmatprep.subr.bf16.mxu0 0
    %1107 = vmatpush1.bf16.msra.mxu0 0
    %1108 = vmatprep.subr.bf16.mxu0 0
    %1109 = vmatpush1.bf16.msra.mxu0 0
    %1110 = vmatprep.subr.bf16.mxu0 0
    %1111 = vmatpush1.bf16.msra.mxu0 0
    %1112 = vmatprep.subr.bf16.mxu0 0
    %1113 = vmatpush1.bf16.msra.mxu0 0
    %1114 = vmatprep.subr.bf16.mxu0 0
    %1115 = vmatpush1.bf16.msra.mxu0 0
    %1116 = vmatprep.subr.bf16.mxu0 0
    %1117 = vmatpush1.bf16.msra.mxu0 0
    %1118 = vmatprep.subr.bf16.mxu0 0
    %1119 = vmatpush1.bf16.msra.mxu0 0
    %1120 = vmatprep.subr.bf16.mxu0 0
    %1121 = vmatpush1.bf16.msra.mxu0 %v89
    %1122 = vmatprep.subr.bf16.mxu0 0
    %1123 = vmatpush2.bf16.msra.mxu0 0
    %1124 = vmatprep.subr.bf16.mxu0 0
    %1125 = vmatpush2.bf16.msra.mxu0 0
    %1126 = vmatprep.subr.bf16.mxu0 0
    %1127 = vmatpush2.bf16.msra.mxu0 0
    %1128 = vmatprep.subr.bf16.mxu0 0
    %1129 = vmatpush2.bf16.msra.mxu0 0
    %1130 = vmatprep.subr.bf16.mxu0 0
    %1131 = vmatpush2.bf16.msra.mxu0 0
    %1132 = vmatprep.subr.bf16.mxu0 0
    %1133 = vmatpush2.bf16.msra.mxu0 0
    %1134 = vmatprep.subr.bf16.mxu0 0
    %1135 = vmatpush2.bf16.msra.mxu0 0
    %1136 = vmatprep.subr.bf16.mxu0 0
    %1137 = vmatpush2.bf16.msra.mxu0 0
    %1138 = vmatprep.mubr.bf16.mxu0 0
    %1139 = vmatmul.mubr.bf16.gmra.mxu0 %v1104
    %v1140 = vpop.f32.mrf.mxu0
    %v1141 = vadd.f32 0.0, %v1140
    %v1142 = vpop.f32.mrf.mxu0
    %v1143 = vpop.f32.mrf.mxu0
    %v1144 = vpop.f32.mrf.mxu0
    %1145 = vdwg.mxu0
    %v1147 = vsel %vm83, %v1100, 0
    %1149 = vmatprep.subr.bf16.mxu0 0
    %1150 = vmatpush1.bf16.msra.mxu0 0
    %1151 = vmatprep.subr.bf16.mxu0 0
    %1152 = vmatpush1.bf16.msra.mxu0 0
    %1153 = vmatprep.subr.bf16.mxu0 0
    %1154 = vmatpush1.bf16.msra.mxu0 0
    %1155 = vmatprep.subr.bf16.mxu0 0
    %1156 = vmatpush1.bf16.msra.mxu0 0
    %1157 = vmatprep.subr.bf16.mxu0 0
    %1158 = vmatpush1.bf16.msra.mxu0 0
    %1159 = vmatprep.subr.bf16.mxu0 0
    %1160 = vmatpush1.bf16.msra.mxu0 0
    %1161 = vmatprep.subr.bf16.mxu0 0
    %1162 = vmatpush1.bf16.msra.mxu0 0
    %1163 = vmatprep.subr.bf16.mxu0 0
    %1164 = vmatpush1.bf16.msra.mxu0 %v135
    %1165 = vmatprep.subr.bf16.mxu0 0
    %1166 = vmatpush2.bf16.msra.mxu0 0
    %1167 = vmatprep.subr.bf16.mxu0 0
    %1168 = vmatpush2.bf16.msra.mxu0 0
    %1169 = vmatprep.subr.bf16.mxu0 0
    %1170 = vmatpush2.bf16.msra.mxu0 0
    %1171 = vmatprep.subr.bf16.mxu0 0
    %1172 = vmatpush2.bf16.msra.mxu0 0
    %1173 = vmatprep.subr.bf16.mxu0 0
    %1174 = vmatpush2.bf16.msra.mxu0 0
    %1175 = vmatprep.subr.bf16.mxu0 0
    %1176 = vmatpush2.bf16.msra.mxu0 0
    %1177 = vmatprep.subr.bf16.mxu0 0
    %1178 = vmatpush2.bf16.msra.mxu0 0
    %1179 = vmatprep.subr.bf16.mxu0 0
    %1180 = vmatpush2.bf16.msra.mxu0 0
    %1181 = vmatprep.mubr.bf16.mxu0 0
    %1182 = vmatmul.mubr.bf16.gmra.mxu0 %v1147
    %v1183 = vpop.f32.mrf.mxu0
    %v1184 = vadd.f32 %v1141, %v1183
    %v1185 = vpop.f32.mrf.mxu0
    %v1186 = vpop.f32.mrf.mxu0
    %v1187 = vpop.f32.mrf.mxu0
    %1188 = vdwg.mxu0
    %s1189 = scalar_lea.vmem %s2, 24
    %v1190 = vld [vmem:[%s1189] sm:$0xf]
    %v1192 = vsel %vm270, %v1184, 0
    %v1195 = vsel %vm87, %v1190, 0
    %1197 = vmatprep.subr.mxu0 0.0
    %1198 = vmatpush1.msra.mxu0 0.0
    %1199 = vmatprep.subr.mxu0 0.0
    %1200 = vmatpush1.msra.mxu0 0.0
    %1201 = vmatprep.subr.mxu0 0.0
    %1202 = vmatpush1.msra.mxu0 0.0
    %1203 = vmatprep.subr.mxu0 0.0
    %1204 = vmatpush1.msra.mxu0 0.0
    %1205 = vmatprep.subr.mxu0 0.0
    %1206 = vmatpush1.msra.mxu0 0.0
    %1207 = vmatprep.subr.mxu0 0.0
    %1208 = vmatpush1.msra.mxu0 0.0
    %1209 = vmatprep.subr.mxu0 0.0
    %1210 = vmatpush1.msra.mxu0 0.0
    %1211 = vmatprep.subr.mxu0 0.0
    %1212 = vmatpush1.msra.mxu0 0.0
    %1213 = vmatprep.subr.mxu0 0.0
    %1214 = vmatpush1.msra.mxu0 0.0
    %1215 = vmatprep.subr.mxu0 0.0
    %1216 = vmatpush1.msra.mxu0 0.0
    %1217 = vmatprep.subr.mxu0 0.0
    %1218 = vmatpush1.msra.mxu0 0.0
    %1219 = vmatprep.subr.mxu0 0.0
    %1220 = vmatpush1.msra.mxu0 0.0
    %1221 = vmatprep.subr.mxu0 0.0
    %1222 = vmatpush1.msra.mxu0 0.0
    %1223 = vmatprep.subr.mxu0 0.0
    %1224 = vmatpush1.msra.mxu0 0.0
    %1225 = vmatprep.subr.mxu0 0.0
    %1226 = vmatpush1.msra.mxu0 0.0
    %1227 = vmatprep.subr.mxu0 0.0
    %1228 = vmatpush1.msra.mxu0 %v1195
    %1229 = vmatprep.subr.mxu0 0.0
    %1230 = vmatpush2.msra.mxu0 0.0
    %1231 = vmatprep.subr.mxu0 0.0
    %1232 = vmatpush2.msra.mxu0 0.0
    %1233 = vmatprep.subr.mxu0 0.0
    %1234 = vmatpush2.msra.mxu0 0.0
    %1235 = vmatprep.subr.mxu0 0.0
    %1236 = vmatpush2.msra.mxu0 0.0
    %1237 = vmatprep.subr.mxu0 0.0
    %1238 = vmatpush2.msra.mxu0 0.0
    %1239 = vmatprep.subr.mxu0 0.0
    %1240 = vmatpush2.msra.mxu0 0.0
    %1241 = vmatprep.subr.mxu0 0.0
    %1242 = vmatpush2.msra.mxu0 0.0
    %1243 = vmatprep.subr.mxu0 0.0
    %1244 = vmatpush2.msra.mxu0 0.0
    %1245 = vmatprep.subr.mxu0 0.0
    %1246 = vmatpush2.msra.mxu0 0.0
    %1247 = vmatprep.subr.mxu0 0.0
    %1248 = vmatpush2.msra.mxu0 0.0
    %1249 = vmatprep.subr.mxu0 0.0
    %1250 = vmatpush2.msra.mxu0 0.0
    %1251 = vmatprep.subr.mxu0 0.0
    %1252 = vmatpush2.msra.mxu0 0.0
    %1253 = vmatprep.subr.mxu0 0.0
    %1254 = vmatpush2.msra.mxu0 0.0
    %1255 = vmatprep.subr.mxu0 0.0
    %1256 = vmatpush2.msra.mxu0 0.0
    %1257 = vmatprep.subr.mxu0 0.0
    %1258 = vmatpush2.msra.mxu0 0.0
    %1259 = vmatprep.subr.mxu0 0.0
    %1260 = vmatpush2.msra.mxu0 0.0
    %1261 = vmatprep.mubr.f32.mxu0 0.0
    %1262 = vmatmul.mubr.f32.gmra.mxu0 %v1192
    %v1263 = vpop.f32.mrf.mxu0
    %v1264 = vadd.f32 0.0, %v1263
    %v1265 = vpop.f32.mrf.mxu0
    %1266 = vdwg.mxu0
    %v1267 = vadd.f32 %v1098, %v1264
    %s1268 = scalar_lea.vmem [#allocation2], 14
    %v1269 = vld [vmem:[%s1268] sm:$0x3]
    %s1270 = scalar_lea.vmem [#allocation4], 14
    %v1271 = vld [vmem:[%s1270] sm:$0x3]
    %v1273 = vsel %vm83, %v1271, 0
    %1275 = vmatprep.subr.bf16.mxu0 0
    %1276 = vmatpush1.bf16.msra.mxu0 0
    %1277 = vmatprep.subr.bf16.mxu0 0
    %1278 = vmatpush1.bf16.msra.mxu0 0
    %1279 = vmatprep.subr.bf16.mxu0 0
    %1280 = vmatpush1.bf16.msra.mxu0 0
    %1281 = vmatprep.subr.bf16.mxu0 0
    %1282 = vmatpush1.bf16.msra.mxu0 0
    %1283 = vmatprep.subr.bf16.mxu0 0
    %1284 = vmatpush1.bf16.msra.mxu0 0
    %1285 = vmatprep.subr.bf16.mxu0 0
    %1286 = vmatpush1.bf16.msra.mxu0 0
    %1287 = vmatprep.subr.bf16.mxu0 0
    %1288 = vmatpush1.bf16.msra.mxu0 0
    %1289 = vmatprep.subr.bf16.mxu0 0
    %1290 = vmatpush1.bf16.msra.mxu0 %v89
    %1291 = vmatprep.subr.bf16.mxu0 0
    %1292 = vmatpush2.bf16.msra.mxu0 0
    %1293 = vmatprep.subr.bf16.mxu0 0
    %1294 = vmatpush2.bf16.msra.mxu0 0
    %1295 = vmatprep.subr.bf16.mxu0 0
    %1296 = vmatpush2.bf16.msra.mxu0 0
    %1297 = vmatprep.subr.bf16.mxu0 0
    %1298 = vmatpush2.bf16.msra.mxu0 0
    %1299 = vmatprep.subr.bf16.mxu0 0
    %1300 = vmatpush2.bf16.msra.mxu0 0
    %1301 = vmatprep.subr.bf16.mxu0 0
    %1302 = vmatpush2.bf16.msra.mxu0 0
    %1303 = vmatprep.subr.bf16.mxu0 0
    %1304 = vmatpush2.bf16.msra.mxu0 0
    %1305 = vmatprep.subr.bf16.mxu0 0
    %1306 = vmatpush2.bf16.msra.mxu0 0
    %1307 = vmatprep.mubr.bf16.mxu0 0
    %1308 = vmatmul.mubr.bf16.gmra.mxu0 %v1273
    %v1309 = vpop.f32.mrf.mxu0
    %v1310 = vadd.f32 0.0, %v1309
    %v1311 = vpop.f32.mrf.mxu0
    %v1312 = vpop.f32.mrf.mxu0
    %v1313 = vpop.f32.mrf.mxu0
    %1314 = vdwg.mxu0
    %v1316 = vsel %vm83, %v1269, 0
    %1318 = vmatprep.subr.bf16.mxu0 0
    %1319 = vmatpush1.bf16.msra.mxu0 0
    %1320 = vmatprep.subr.bf16.mxu0 0
    %1321 = vmatpush1.bf16.msra.mxu0 0
    %1322 = vmatprep.subr.bf16.mxu0 0
    %1323 = vmatpush1.bf16.msra.mxu0 0
    %1324 = vmatprep.subr.bf16.mxu0 0
    %1325 = vmatpush1.bf16.msra.mxu0 0
    %1326 = vmatprep.subr.bf16.mxu0 0
    %1327 = vmatpush1.bf16.msra.mxu0 0
    %1328 = vmatprep.subr.bf16.mxu0 0
    %1329 = vmatpush1.bf16.msra.mxu0 0
    %1330 = vmatprep.subr.bf16.mxu0 0
    %1331 = vmatpush1.bf16.msra.mxu0 0
    %1332 = vmatprep.subr.bf16.mxu0 0
    %1333 = vmatpush1.bf16.msra.mxu0 %v135
    %1334 = vmatprep.subr.bf16.mxu0 0
    %1335 = vmatpush2.bf16.msra.mxu0 0
    %1336 = vmatprep.subr.bf16.mxu0 0
    %1337 = vmatpush2.bf16.msra.mxu0 0
    %1338 = vmatprep.subr.bf16.mxu0 0
    %1339 = vmatpush2.bf16.msra.mxu0 0
    %1340 = vmatprep.subr.bf16.mxu0 0
    %1341 = vmatpush2.bf16.msra.mxu0 0
    %1342 = vmatprep.subr.bf16.mxu0 0
    %1343 = vmatpush2.bf16.msra.mxu0 0
    %1344 = vmatprep.subr.bf16.mxu0 0
    %1345 = vmatpush2.bf16.msra.mxu0 0
    %1346 = vmatprep.subr.bf16.mxu0 0
    %1347 = vmatpush2.bf16.msra.mxu0 0
    %1348 = vmatprep.subr.bf16.mxu0 0
    %1349 = vmatpush2.bf16.msra.mxu0 0
    %1350 = vmatprep.mubr.bf16.mxu0 0
    %1351 = vmatmul.mubr.bf16.gmra.mxu0 %v1316
    %v1352 = vpop.f32.mrf.mxu0
    %v1353 = vadd.f32 %v1310, %v1352
    %v1354 = vpop.f32.mrf.mxu0
    %v1355 = vpop.f32.mrf.mxu0
    %v1356 = vpop.f32.mrf.mxu0
    %1357 = vdwg.mxu0
    %s1358 = scalar_lea.vmem %s2, 28
    %v1359 = vld [vmem:[%s1358] sm:$0xf]
    %v1361 = vsel %vm270, %v1353, 0
    %v1364 = vsel %vm87, %v1359, 0
    %1366 = vmatprep.subr.mxu0 0.0
    %1367 = vmatpush1.msra.mxu0 0.0
    %1368 = vmatprep.subr.mxu0 0.0
    %1369 = vmatpush1.msra.mxu0 0.0
    %1370 = vmatprep.subr.mxu0 0.0
    %1371 = vmatpush1.msra.mxu0 0.0
    %1372 = vmatprep.subr.mxu0 0.0
    %1373 = vmatpush1.msra.mxu0 0.0
    %1374 = vmatprep.subr.mxu0 0.0
    %1375 = vmatpush1.msra.mxu0 0.0
    %1376 = vmatprep.subr.mxu0 0.0
    %1377 = vmatpush1.msra.mxu0 0.0
    %1378 = vmatprep.subr.mxu0 0.0
    %1379 = vmatpush1.msra.mxu0 0.0
    %1380 = vmatprep.subr.mxu0 0.0
    %1381 = vmatpush1.msra.mxu0 0.0
    %1382 = vmatprep.subr.mxu0 0.0
    %1383 = vmatpush1.msra.mxu0 0.0
    %1384 = vmatprep.subr.mxu0 0.0
    %1385 = vmatpush1.msra.mxu0 0.0
    %1386 = vmatprep.subr.mxu0 0.0
    %1387 = vmatpush1.msra.mxu0 0.0
    %1388 = vmatprep.subr.mxu0 0.0
    %1389 = vmatpush1.msra.mxu0 0.0
    %1390 = vmatprep.subr.mxu0 0.0
    %1391 = vmatpush1.msra.mxu0 0.0
    %1392 = vmatprep.subr.mxu0 0.0
    %1393 = vmatpush1.msra.mxu0 0.0
    %1394 = vmatprep.subr.mxu0 0.0
    %1395 = vmatpush1.msra.mxu0 0.0
    %1396 = vmatprep.subr.mxu0 0.0
    %1397 = vmatpush1.msra.mxu0 %v1364
    %1398 = vmatprep.subr.mxu0 0.0
    %1399 = vmatpush2.msra.mxu0 0.0
    %1400 = vmatprep.subr.mxu0 0.0
    %1401 = vmatpush2.msra.mxu0 0.0
    %1402 = vmatprep.subr.mxu0 0.0
    %1403 = vmatpush2.msra.mxu0 0.0
    %1404 = vmatprep.subr.mxu0 0.0
    %1405 = vmatpush2.msra.mxu0 0.0
    %1406 = vmatprep.subr.mxu0 0.0
    %1407 = vmatpush2.msra.mxu0 0.0
    %1408 = vmatprep.subr.mxu0 0.0
    %1409 = vmatpush2.msra.mxu0 0.0
    %1410 = vmatprep.subr.mxu0 0.0
    %1411 = vmatpush2.msra.mxu0 0.0
    %1412 = vmatprep.subr.mxu0 0.0
    %1413 = vmatpush2.msra.mxu0 0.0
    %1414 = vmatprep.subr.mxu0 0.0
    %1415 = vmatpush2.msra.mxu0 0.0
    %1416 = vmatprep.subr.mxu0 0.0
    %1417 = vmatpush2.msra.mxu0 0.0
    %1418 = vmatprep.subr.mxu0 0.0
    %1419 = vmatpush2.msra.mxu0 0.0
    %1420 = vmatprep.subr.mxu0 0.0
    %1421 = vmatpush2.msra.mxu0 0.0
    %1422 = vmatprep.subr.mxu0 0.0
    %1423 = vmatpush2.msra.mxu0 0.0
    %1424 = vmatprep.subr.mxu0 0.0
    %1425 = vmatpush2.msra.mxu0 0.0
    %1426 = vmatprep.subr.mxu0 0.0
    %1427 = vmatpush2.msra.mxu0 0.0
    %1428 = vmatprep.subr.mxu0 0.0
    %1429 = vmatpush2.msra.mxu0 0.0
    %1430 = vmatprep.mubr.f32.mxu0 0.0
    %1431 = vmatmul.mubr.f32.gmra.mxu0 %v1361
    %v1432 = vpop.f32.mrf.mxu0
    %v1433 = vadd.f32 0.0, %v1432
    %v1434 = vpop.f32.mrf.mxu0
    %1435 = vdwg.mxu0
    %v1436 = vadd.f32 %v1267, %v1433
    %s1437 = scalar_lea.vmem [#allocation2], 16
    %v1438 = vld [vmem:[%s1437] sm:$0x3]
    %s1439 = scalar_lea.vmem [#allocation4], 16
    %v1440 = vld [vmem:[%s1439] sm:$0x3]
    %v1442 = vsel %vm83, %v1440, 0
    %1444 = vmatprep.subr.bf16.mxu0 0
    %1445 = vmatpush1.bf16.msra.mxu0 0
    %1446 = vmatprep.subr.bf16.mxu0 0
    %1447 = vmatpush1.bf16.msra.mxu0 0
    %1448 = vmatprep.subr.bf16.mxu0 0
    %1449 = vmatpush1.bf16.msra.mxu0 0
    %1450 = vmatprep.subr.bf16.mxu0 0
    %1451 = vmatpush1.bf16.msra.mxu0 0
    %1452 = vmatprep.subr.bf16.mxu0 0
    %1453 = vmatpush1.bf16.msra.mxu0 0
    %1454 = vmatprep.subr.bf16.mxu0 0
    %1455 = vmatpush1.bf16.msra.mxu0 0
    %1456 = vmatprep.subr.bf16.mxu0 0
    %1457 = vmatpush1.bf16.msra.mxu0 0
    %1458 = vmatprep.subr.bf16.mxu0 0
    %1459 = vmatpush1.bf16.msra.mxu0 %v89
    %1460 = vmatprep.subr.bf16.mxu0 0
    %1461 = vmatpush2.bf16.msra.mxu0 0
    %1462 = vmatprep.subr.bf16.mxu0 0
    %1463 = vmatpush2.bf16.msra.mxu0 0
    %1464 = vmatprep.subr.bf16.mxu0 0
    %1465 = vmatpush2.bf16.msra.mxu0 0
    %1466 = vmatprep.subr.bf16.mxu0 0
    %1467 = vmatpush2.bf16.msra.mxu0 0
    %1468 = vmatprep.subr.bf16.mxu0 0
    %1469 = vmatpush2.bf16.msra.mxu0 0
    %1470 = vmatprep.subr.bf16.mxu0 0
    %1471 = vmatpush2.bf16.msra.mxu0 0
    %1472 = vmatprep.subr.bf16.mxu0 0
    %1473 = vmatpush2.bf16.msra.mxu0 0
    %1474 = vmatprep.subr.bf16.mxu0 0
    %1475 = vmatpush2.bf16.msra.mxu0 0
    %1476 = vmatprep.mubr.bf16.mxu0 0
    %1477 = vmatmul.mubr.bf16.gmra.mxu0 %v1442
    %v1478 = vpop.f32.mrf.mxu0
    %v1479 = vadd.f32 0.0, %v1478
    %v1480 = vpop.f32.mrf.mxu0
    %v1481 = vpop.f32.mrf.mxu0
    %v1482 = vpop.f32.mrf.mxu0
    %1483 = vdwg.mxu0
    %v1485 = vsel %vm83, %v1438, 0
    %1487 = vmatprep.subr.bf16.mxu0 0
    %1488 = vmatpush1.bf16.msra.mxu0 0
    %1489 = vmatprep.subr.bf16.mxu0 0
    %1490 = vmatpush1.bf16.msra.mxu0 0
    %1491 = vmatprep.subr.bf16.mxu0 0
    %1492 = vmatpush1.bf16.msra.mxu0 0
    %1493 = vmatprep.subr.bf16.mxu0 0
    %1494 = vmatpush1.bf16.msra.mxu0 0
    %1495 = vmatprep.subr.bf16.mxu0 0
    %1496 = vmatpush1.bf16.msra.mxu0 0
    %1497 = vmatprep.subr.bf16.mxu0 0
    %1498 = vmatpush1.bf16.msra.mxu0 0
    %1499 = vmatprep.subr.bf16.mxu0 0
    %1500 = vmatpush1.bf16.msra.mxu0 0
    %1501 = vmatprep.subr.bf16.mxu0 0
    %1502 = vmatpush1.bf16.msra.mxu0 %v135
    %1503 = vmatprep.subr.bf16.mxu0 0
    %1504 = vmatpush2.bf16.msra.mxu0 0
    %1505 = vmatprep.subr.bf16.mxu0 0
    %1506 = vmatpush2.bf16.msra.mxu0 0
    %1507 = vmatprep.subr.bf16.mxu0 0
    %1508 = vmatpush2.bf16.msra.mxu0 0
    %1509 = vmatprep.subr.bf16.mxu0 0
    %1510 = vmatpush2.bf16.msra.mxu0 0
    %1511 = vmatprep.subr.bf16.mxu0 0
    %1512 = vmatpush2.bf16.msra.mxu0 0
    %1513 = vmatprep.subr.bf16.mxu0 0
    %1514 = vmatpush2.bf16.msra.mxu0 0
    %1515 = vmatprep.subr.bf16.mxu0 0
    %1516 = vmatpush2.bf16.msra.mxu0 0
    %1517 = vmatprep.subr.bf16.mxu0 0
    %1518 = vmatpush2.bf16.msra.mxu0 0
    %1519 = vmatprep.mubr.bf16.mxu0 0
    %1520 = vmatmul.mubr.bf16.gmra.mxu0 %v1485
    %v1521 = vpop.f32.mrf.mxu0
    %v1522 = vadd.f32 %v1479, %v1521
    %v1523 = vpop.f32.mrf.mxu0
    %v1524 = vpop.f32.mrf.mxu0
    %v1525 = vpop.f32.mrf.mxu0
    %1526 = vdwg.mxu0
    %s1527 = scalar_lea.vmem %s2, 32
    %v1528 = vld [vmem:[%s1527] sm:$0xf]
    %v1530 = vsel %vm270, %v1522, 0
    %v1533 = vsel %vm87, %v1528, 0
    %1535 = vmatprep.subr.mxu0 0.0
    %1536 = vmatpush1.msra.mxu0 0.0
    %1537 = vmatprep.subr.mxu0 0.0
    %1538 = vmatpush1.msra.mxu0 0.0
    %1539 = vmatprep.subr.mxu0 0.0
    %1540 = vmatpush1.msra.mxu0 0.0
    %1541 = vmatprep.subr.mxu0 0.0
    %1542 = vmatpush1.msra.mxu0 0.0
    %1543 = vmatprep.subr.mxu0 0.0
    %1544 = vmatpush1.msra.mxu0 0.0
    %1545 = vmatprep.subr.mxu0 0.0
    %1546 = vmatpush1.msra.mxu0 0.0
    %1547 = vmatprep.subr.mxu0 0.0
    %1548 = vmatpush1.msra.mxu0 0.0
    %1549 = vmatprep.subr.mxu0 0.0
    %1550 = vmatpush1.msra.mxu0 0.0
    %1551 = vmatprep.subr.mxu0 0.0
    %1552 = vmatpush1.msra.mxu0 0.0
    %1553 = vmatprep.subr.mxu0 0.0
    %1554 = vmatpush1.msra.mxu0 0.0
    %1555 = vmatprep.subr.mxu0 0.0
    %1556 = vmatpush1.msra.mxu0 0.0
    %1557 = vmatprep.subr.mxu0 0.0
    %1558 = vmatpush1.msra.mxu0 0.0
    %1559 = vmatprep.subr.mxu0 0.0
    %1560 = vmatpush1.msra.mxu0 0.0
    %1561 = vmatprep.subr.mxu0 0.0
    %1562 = vmatpush1.msra.mxu0 0.0
    %1563 = vmatprep.subr.mxu0 0.0
    %1564 = vmatpush1.msra.mxu0 0.0
    %1565 = vmatprep.subr.mxu0 0.0
    %1566 = vmatpush1.msra.mxu0 %v1533
    %1567 = vmatprep.subr.mxu0 0.0
    %1568 = vmatpush2.msra.mxu0 0.0
    %1569 = vmatprep.subr.mxu0 0.0
    %1570 = vmatpush2.msra.mxu0 0.0
    %1571 = vmatprep.subr.mxu0 0.0
    %1572 = vmatpush2.msra.mxu0 0.0
    %1573 = vmatprep.subr.mxu0 0.0
    %1574 = vmatpush2.msra.mxu0 0.0
    %1575 = vmatprep.subr.mxu0 0.0
    %1576 = vmatpush2.msra.mxu0 0.0
    %1577 = vmatprep.subr.mxu0 0.0
    %1578 = vmatpush2.msra.mxu0 0.0
    %1579 = vmatprep.subr.mxu0 0.0
    %1580 = vmatpush2.msra.mxu0 0.0
    %1581 = vmatprep.subr.mxu0 0.0
    %1582 = vmatpush2.msra.mxu0 0.0
    %1583 = vmatprep.subr.mxu0 0.0
    %1584 = vmatpush2.msra.mxu0 0.0
    %1585 = vmatprep.subr.mxu0 0.0
    %1586 = vmatpush2.msra.mxu0 0.0
    %1587 = vmatprep.subr.mxu0 0.0
    %1588 = vmatpush2.msra.mxu0 0.0
    %1589 = vmatprep.subr.mxu0 0.0
    %1590 = vmatpush2.msra.mxu0 0.0
    %1591 = vmatprep.subr.mxu0 0.0
    %1592 = vmatpush2.msra.mxu0 0.0
    %1593 = vmatprep.subr.mxu0 0.0
    %1594 = vmatpush2.msra.mxu0 0.0
    %1595 = vmatprep.subr.mxu0 0.0
    %1596 = vmatpush2.msra.mxu0 0.0
    %1597 = vmatprep.subr.mxu0 0.0
    %1598 = vmatpush2.msra.mxu0 0.0
    %1599 = vmatprep.mubr.f32.mxu0 0.0
    %1600 = vmatmul.mubr.f32.gmra.mxu0 %v1530
    %v1601 = vpop.f32.mrf.mxu0
    %v1602 = vadd.f32 0.0, %v1601
    %v1603 = vpop.f32.mrf.mxu0
    %1604 = vdwg.mxu0
    %v1605 = vadd.f32 %v1436, %v1602
    %s1606 = scalar_lea.vmem [#allocation2], 18
    %v1607 = vld [vmem:[%s1606] sm:$0x3]
    %s1608 = scalar_lea.vmem [#allocation4], 18
    %v1609 = vld [vmem:[%s1608] sm:$0x3]
    %v1611 = vsel %vm83, %v1609, 0
    %1613 = vmatprep.subr.bf16.mxu0 0
    %1614 = vmatpush1.bf16.msra.mxu0 0
    %1615 = vmatprep.subr.bf16.mxu0 0
    %1616 = vmatpush1.bf16.msra.mxu0 0
    %1617 = vmatprep.subr.bf16.mxu0 0
    %1618 = vmatpush1.bf16.msra.mxu0 0
    %1619 = vmatprep.subr.bf16.mxu0 0
    %1620 = vmatpush1.bf16.msra.mxu0 0
    %1621 = vmatprep.subr.bf16.mxu0 0
    %1622 = vmatpush1.bf16.msra.mxu0 0
    %1623 = vmatprep.subr.bf16.mxu0 0
    %1624 = vmatpush1.bf16.msra.mxu0 0
    %1625 = vmatprep.subr.bf16.mxu0 0
    %1626 = vmatpush1.bf16.msra.mxu0 0
    %1627 = vmatprep.subr.bf16.mxu0 0
    %1628 = vmatpush1.bf16.msra.mxu0 %v89
    %1629 = vmatprep.subr.bf16.mxu0 0
    %1630 = vmatpush2.bf16.msra.mxu0 0
    %1631 = vmatprep.subr.bf16.mxu0 0
    %1632 = vmatpush2.bf16.msra.mxu0 0
    %1633 = vmatprep.subr.bf16.mxu0 0
    %1634 = vmatpush2.bf16.msra.mxu0 0
    %1635 = vmatprep.subr.bf16.mxu0 0
    %1636 = vmatpush2.bf16.msra.mxu0 0
    %1637 = vmatprep.subr.bf16.mxu0 0
    %1638 = vmatpush2.bf16.msra.mxu0 0
    %1639 = vmatprep.subr.bf16.mxu0 0
    %1640 = vmatpush2.bf16.msra.mxu0 0
    %1641 = vmatprep.subr.bf16.mxu0 0
    %1642 = vmatpush2.bf16.msra.mxu0 0
    %1643 = vmatprep.subr.bf16.mxu0 0
    %1644 = vmatpush2.bf16.msra.mxu0 0
    %1645 = vmatprep.mubr.bf16.mxu0 0
    %1646 = vmatmul.mubr.bf16.gmra.mxu0 %v1611
    %v1647 = vpop.f32.mrf.mxu0
    %v1648 = vadd.f32 0.0, %v1647
    %v1649 = vpop.f32.mrf.mxu0
    %v1650 = vpop.f32.mrf.mxu0
    %v1651 = vpop.f32.mrf.mxu0
    %1652 = vdwg.mxu0
    %v1654 = vsel %vm83, %v1607, 0
    %1656 = vmatprep.subr.bf16.mxu0 0
    %1657 = vmatpush1.bf16.msra.mxu0 0
    %1658 = vmatprep.subr.bf16.mxu0 0
    %1659 = vmatpush1.bf16.msra.mxu0 0
    %1660 = vmatprep.subr.bf16.mxu0 0
    %1661 = vmatpush1.bf16.msra.mxu0 0
    %1662 = vmatprep.subr.bf16.mxu0 0
    %1663 = vmatpush1.bf16.msra.mxu0 0
    %1664 = vmatprep.subr.bf16.mxu0 0
    %1665 = vmatpush1.bf16.msra.mxu0 0
    %1666 = vmatprep.subr.bf16.mxu0 0
    %1667 = vmatpush1.bf16.msra.mxu0 0
    %1668 = vmatprep.subr.bf16.mxu0 0
    %1669 = vmatpush1.bf16.msra.mxu0 0
    %1670 = vmatprep.subr.bf16.mxu0 0
    %1671 = vmatpush1.bf16.msra.mxu0 %v135
    %1672 = vmatprep.subr.bf16.mxu0 0
    %1673 = vmatpush2.bf16.msra.mxu0 0
    %1674 = vmatprep.subr.bf16.mxu0 0
    %1675 = vmatpush2.bf16.msra.mxu0 0
    %1676 = vmatprep.subr.bf16.mxu0 0
    %1677 = vmatpush2.bf16.msra.mxu0 0
    %1678 = vmatprep.subr.bf16.mxu0 0
    %1679 = vmatpush2.bf16.msra.mxu0 0
    %1680 = vmatprep.subr.bf16.mxu0 0
    %1681 = vmatpush2.bf16.msra.mxu0 0
    %1682 = vmatprep.subr.bf16.mxu0 0
    %1683 = vmatpush2.bf16.msra.mxu0 0
    %1684 = vmatprep.subr.bf16.mxu0 0
    %1685 = vmatpush2.bf16.msra.mxu0 0
    %1686 = vmatprep.subr.bf16.mxu0 0
    %1687 = vmatpush2.bf16.msra.mxu0 0
    %1688 = vmatprep.mubr.bf16.mxu0 0
    %1689 = vmatmul.mubr.bf16.gmra.mxu0 %v1654
    %v1690 = vpop.f32.mrf.mxu0
    %v1691 = vadd.f32 %v1648, %v1690
    %v1692 = vpop.f32.mrf.mxu0
    %v1693 = vpop.f32.mrf.mxu0
    %v1694 = vpop.f32.mrf.mxu0
    %1695 = vdwg.mxu0
    %s1696 = scalar_lea.vmem %s2, 36
    %v1697 = vld [vmem:[%s1696] sm:$0xf]
    %v1699 = vsel %vm270, %v1691, 0
    %v1702 = vsel %vm87, %v1697, 0
    %1704 = vmatprep.subr.mxu0 0.0
    %1705 = vmatpush1.msra.mxu0 0.0
    %1706 = vmatprep.subr.mxu0 0.0
    %1707 = vmatpush1.msra.mxu0 0.0
    %1708 = vmatprep.subr.mxu0 0.0
    %1709 = vmatpush1.msra.mxu0 0.0
    %1710 = vmatprep.subr.mxu0 0.0
    %1711 = vmatpush1.msra.mxu0 0.0
    %1712 = vmatprep.subr.mxu0 0.0
    %1713 = vmatpush1.msra.mxu0 0.0
    %1714 = vmatprep.subr.mxu0 0.0
    %1715 = vmatpush1.msra.mxu0 0.0
    %1716 = vmatprep.subr.mxu0 0.0
    %1717 = vmatpush1.msra.mxu0 0.0
    %1718 = vmatprep.subr.mxu0 0.0
    %1719 = vmatpush1.msra.mxu0 0.0
    %1720 = vmatprep.subr.mxu0 0.0
    %1721 = vmatpush1.msra.mxu0 0.0
    %1722 = vmatprep.subr.mxu0 0.0
    %1723 = vmatpush1.msra.mxu0 0.0
    %1724 = vmatprep.subr.mxu0 0.0
    %1725 = vmatpush1.msra.mxu0 0.0
    %1726 = vmatprep.subr.mxu0 0.0
    %1727 = vmatpush1.msra.mxu0 0.0
    %1728 = vmatprep.subr.mxu0 0.0
    %1729 = vmatpush1.msra.mxu0 0.0
    %1730 = vmatprep.subr.mxu0 0.0
    %1731 = vmatpush1.msra.mxu0 0.0
    %1732 = vmatprep.subr.mxu0 0.0
    %1733 = vmatpush1.msra.mxu0 0.0
    %1734 = vmatprep.subr.mxu0 0.0
    %1735 = vmatpush1.msra.mxu0 %v1702
    %1736 = vmatprep.subr.mxu0 0.0
    %1737 = vmatpush2.msra.mxu0 0.0
    %1738 = vmatprep.subr.mxu0 0.0
    %1739 = vmatpush2.msra.mxu0 0.0
    %1740 = vmatprep.subr.mxu0 0.0
    %1741 = vmatpush2.msra.mxu0 0.0
    %1742 = vmatprep.subr.mxu0 0.0
    %1743 = vmatpush2.msra.mxu0 0.0
    %1744 = vmatprep.subr.mxu0 0.0
    %1745 = vmatpush2.msra.mxu0 0.0
    %1746 = vmatprep.subr.mxu0 0.0
    %1747 = vmatpush2.msra.mxu0 0.0
    %1748 = vmatprep.subr.mxu0 0.0
    %1749 = vmatpush2.msra.mxu0 0.0
    %1750 = vmatprep.subr.mxu0 0.0
    %1751 = vmatpush2.msra.mxu0 0.0
    %1752 = vmatprep.subr.mxu0 0.0
    %1753 = vmatpush2.msra.mxu0 0.0
    %1754 = vmatprep.subr.mxu0 0.0
    %1755 = vmatpush2.msra.mxu0 0.0
    %1756 = vmatprep.subr.mxu0 0.0
    %1757 = vmatpush2.msra.mxu0 0.0
    %1758 = vmatprep.subr.mxu0 0.0
    %1759 = vmatpush2.msra.mxu0 0.0
    %1760 = vmatprep.subr.mxu0 0.0
    %1761 = vmatpush2.msra.mxu0 0.0
    %1762 = vmatprep.subr.mxu0 0.0
    %1763 = vmatpush2.msra.mxu0 0.0
    %1764 = vmatprep.subr.mxu0 0.0
    %1765 = vmatpush2.msra.mxu0 0.0
    %1766 = vmatprep.subr.mxu0 0.0
    %1767 = vmatpush2.msra.mxu0 0.0
    %1768 = vmatprep.mubr.f32.mxu0 0.0
    %1769 = vmatmul.mubr.f32.gmra.mxu0 %v1699
    %v1770 = vpop.f32.mrf.mxu0
    %v1771 = vadd.f32 0.0, %v1770
    %v1772 = vpop.f32.mrf.mxu0
    %1773 = vdwg.mxu0
    %v1774 = vadd.f32 %v1605, %v1771
    %s1775 = scalar_lea.vmem [#allocation2], 20
    %v1776 = vld [vmem:[%s1775] sm:$0x3]
    %s1777 = scalar_lea.vmem [#allocation4], 20
    %v1778 = vld [vmem:[%s1777] sm:$0x3]
    %v1780 = vsel %vm83, %v1778, 0
    %1782 = vmatprep.subr.bf16.mxu0 0
    %1783 = vmatpush1.bf16.msra.mxu0 0
    %1784 = vmatprep.subr.bf16.mxu0 0
    %1785 = vmatpush1.bf16.msra.mxu0 0
    %1786 = vmatprep.subr.bf16.mxu0 0
    %1787 = vmatpush1.bf16.msra.mxu0 0
    %1788 = vmatprep.subr.bf16.mxu0 0
    %1789 = vmatpush1.bf16.msra.mxu0 0
    %1790 = vmatprep.subr.bf16.mxu0 0
    %1791 = vmatpush1.bf16.msra.mxu0 0
    %1792 = vmatprep.subr.bf16.mxu0 0
    %1793 = vmatpush1.bf16.msra.mxu0 0
    %1794 = vmatprep.subr.bf16.mxu0 0
    %1795 = vmatpush1.bf16.msra.mxu0 0
    %1796 = vmatprep.subr.bf16.mxu0 0
    %1797 = vmatpush1.bf16.msra.mxu0 %v89
    %1798 = vmatprep.subr.bf16.mxu0 0
    %1799 = vmatpush2.bf16.msra.mxu0 0
    %1800 = vmatprep.subr.bf16.mxu0 0
    %1801 = vmatpush2.bf16.msra.mxu0 0
    %1802 = vmatprep.subr.bf16.mxu0 0
    %1803 = vmatpush2.bf16.msra.mxu0 0
    %1804 = vmatprep.subr.bf16.mxu0 0
    %1805 = vmatpush2.bf16.msra.mxu0 0
    %1806 = vmatprep.subr.bf16.mxu0 0
    %1807 = vmatpush2.bf16.msra.mxu0 0
    %1808 = vmatprep.subr.bf16.mxu0 0
    %1809 = vmatpush2.bf16.msra.mxu0 0
    %1810 = vmatprep.subr.bf16.mxu0 0
    %1811 = vmatpush2.bf16.msra.mxu0 0
    %1812 = vmatprep.subr.bf16.mxu0 0
    %1813 = vmatpush2.bf16.msra.mxu0 0
    %1814 = vmatprep.mubr.bf16.mxu0 0
    %1815 = vmatmul.mubr.bf16.gmra.mxu0 %v1780
    %v1816 = vpop.f32.mrf.mxu0
    %v1817 = vadd.f32 0.0, %v1816
    %v1818 = vpop.f32.mrf.mxu0
    %v1819 = vpop.f32.mrf.mxu0
    %v1820 = vpop.f32.mrf.mxu0
    %1821 = vdwg.mxu0
    %v1823 = vsel %vm83, %v1776, 0
    %1825 = vmatprep.subr.bf16.mxu0 0
    %1826 = vmatpush1.bf16.msra.mxu0 0
    %1827 = vmatprep.subr.bf16.mxu0 0
    %1828 = vmatpush1.bf16.msra.mxu0 0
    %1829 = vmatprep.subr.bf16.mxu0 0
    %1830 = vmatpush1.bf16.msra.mxu0 0
    %1831 = vmatprep.subr.bf16.mxu0 0
    %1832 = vmatpush1.bf16.msra.mxu0 0
    %1833 = vmatprep.subr.bf16.mxu0 0
    %1834 = vmatpush1.bf16.msra.mxu0 0
    %1835 = vmatprep.subr.bf16.mxu0 0
    %1836 = vmatpush1.bf16.msra.mxu0 0
    %1837 = vmatprep.subr.bf16.mxu0 0
    %1838 = vmatpush1.bf16.msra.mxu0 0
    %1839 = vmatprep.subr.bf16.mxu0 0
    %1840 = vmatpush1.bf16.msra.mxu0 %v135
    %1841 = vmatprep.subr.bf16.mxu0 0
    %1842 = vmatpush2.bf16.msra.mxu0 0
    %1843 = vmatprep.subr.bf16.mxu0 0
    %1844 = vmatpush2.bf16.msra.mxu0 0
    %1845 = vmatprep.subr.bf16.mxu0 0
    %1846 = vmatpush2.bf16.msra.mxu0 0
    %1847 = vmatprep.subr.bf16.mxu0 0
    %1848 = vmatpush2.bf16.msra.mxu0 0
    %1849 = vmatprep.subr.bf16.mxu0 0
    %1850 = vmatpush2.bf16.msra.mxu0 0
    %1851 = vmatprep.subr.bf16.mxu0 0
    %1852 = vmatpush2.bf16.msra.mxu0 0
    %1853 = vmatprep.subr.bf16.mxu0 0
    %1854 = vmatpush2.bf16.msra.mxu0 0
    %1855 = vmatprep.subr.bf16.mxu0 0
    %1856 = vmatpush2.bf16.msra.mxu0 0
    %1857 = vmatprep.mubr.bf16.mxu0 0
    %1858 = vmatmul.mubr.bf16.gmra.mxu0 %v1823
    %v1859 = vpop.f32.mrf.mxu0
    %v1860 = vadd.f32 %v1817, %v1859
    %v1861 = vpop.f32.mrf.mxu0
    %v1862 = vpop.f32.mrf.mxu0
    %v1863 = vpop.f32.mrf.mxu0
    %1864 = vdwg.mxu0
    %s1865 = scalar_lea.vmem %s2, 40
    %v1866 = vld [vmem:[%s1865] sm:$0xf]
    %v1868 = vsel %vm270, %v1860, 0
    %v1871 = vsel %vm87, %v1866, 0
    %1873 = vmatprep.subr.mxu0 0.0
    %1874 = vmatpush1.msra.mxu0 0.0
    %1875 = vmatprep.subr.mxu0 0.0
    %1876 = vmatpush1.msra.mxu0 0.0
    %1877 = vmatprep.subr.mxu0 0.0
    %1878 = vmatpush1.msra.mxu0 0.0
    %1879 = vmatprep.subr.mxu0 0.0
    %1880 = vmatpush1.msra.mxu0 0.0
    %1881 = vmatprep.subr.mxu0 0.0
    %1882 = vmatpush1.msra.mxu0 0.0
    %1883 = vmatprep.subr.mxu0 0.0
    %1884 = vmatpush1.msra.mxu0 0.0
    %1885 = vmatprep.subr.mxu0 0.0
    %1886 = vmatpush1.msra.mxu0 0.0
    %1887 = vmatprep.subr.mxu0 0.0
    %1888 = vmatpush1.msra.mxu0 0.0
    %1889 = vmatprep.subr.mxu0 0.0
    %1890 = vmatpush1.msra.mxu0 0.0
    %1891 = vmatprep.subr.mxu0 0.0
    %1892 = vmatpush1.msra.mxu0 0.0
    %1893 = vmatprep.subr.mxu0 0.0
    %1894 = vmatpush1.msra.mxu0 0.0
    %1895 = vmatprep.subr.mxu0 0.0
    %1896 = vmatpush1.msra.mxu0 0.0
    %1897 = vmatprep.subr.mxu0 0.0
    %1898 = vmatpush1.msra.mxu0 0.0
    %1899 = vmatprep.subr.mxu0 0.0
    %1900 = vmatpush1.msra.mxu0 0.0
    %1901 = vmatprep.subr.mxu0 0.0
    %1902 = vmatpush1.msra.mxu0 0.0
    %1903 = vmatprep.subr.mxu0 0.0
    %1904 = vmatpush1.msra.mxu0 %v1871
    %1905 = vmatprep.subr.mxu0 0.0
    %1906 = vmatpush2.msra.mxu0 0.0
    %1907 = vmatprep.subr.mxu0 0.0
    %1908 = vmatpush2.msra.mxu0 0.0
    %1909 = vmatprep.subr.mxu0 0.0
    %1910 = vmatpush2.msra.mxu0 0.0
    %1911 = vmatprep.subr.mxu0 0.0
    %1912 = vmatpush2.msra.mxu0 0.0
    %1913 = vmatprep.subr.mxu0 0.0
    %1914 = vmatpush2.msra.mxu0 0.0
    %1915 = vmatprep.subr.mxu0 0.0
    %1916 = vmatpush2.msra.mxu0 0.0
    %1917 = vmatprep.subr.mxu0 0.0
    %1918 = vmatpush2.msra.mxu0 0.0
    %1919 = vmatprep.subr.mxu0 0.0
    %1920 = vmatpush2.msra.mxu0 0.0
    %1921 = vmatprep.subr.mxu0 0.0
    %1922 = vmatpush2.msra.mxu0 0.0
    %1923 = vmatprep.subr.mxu0 0.0
    %1924 = vmatpush2.msra.mxu0 0.0
    %1925 = vmatprep.subr.mxu0 0.0
    %1926 = vmatpush2.msra.mxu0 0.0
    %1927 = vmatprep.subr.mxu0 0.0
    %1928 = vmatpush2.msra.mxu0 0.0
    %1929 = vmatprep.subr.mxu0 0.0
    %1930 = vmatpush2.msra.mxu0 0.0
    %1931 = vmatprep.subr.mxu0 0.0
    %1932 = vmatpush2.msra.mxu0 0.0
    %1933 = vmatprep.subr.mxu0 0.0
    %1934 = vmatpush2.msra.mxu0 0.0
    %1935 = vmatprep.subr.mxu0 0.0
    %1936 = vmatpush2.msra.mxu0 0.0
    %1937 = vmatprep.mubr.f32.mxu0 0.0
    %1938 = vmatmul.mubr.f32.gmra.mxu0 %v1868
    %v1939 = vpop.f32.mrf.mxu0
    %v1940 = vadd.f32 0.0, %v1939
    %v1941 = vpop.f32.mrf.mxu0
    %1942 = vdwg.mxu0
    %v1943 = vadd.f32 %v1774, %v1940
    %s1944 = scalar_lea.vmem [#allocation2], 22
    %v1945 = vld [vmem:[%s1944] sm:$0x3]
    %s1946 = scalar_lea.vmem [#allocation4], 22
    %v1947 = vld [vmem:[%s1946] sm:$0x3]
    %v1949 = vsel %vm83, %v1947, 0
    %1951 = vmatprep.subr.bf16.mxu0 0
    %1952 = vmatpush1.bf16.msra.mxu0 0
    %1953 = vmatprep.subr.bf16.mxu0 0
    %1954 = vmatpush1.bf16.msra.mxu0 0
    %1955 = vmatprep.subr.bf16.mxu0 0
    %1956 = vmatpush1.bf16.msra.mxu0 0
    %1957 = vmatprep.subr.bf16.mxu0 0
    %1958 = vmatpush1.bf16.msra.mxu0 0
    %1959 = vmatprep.subr.bf16.mxu0 0
    %1960 = vmatpush1.bf16.msra.mxu0 0
    %1961 = vmatprep.subr.bf16.mxu0 0
    %1962 = vmatpush1.bf16.msra.mxu0 0
    %1963 = vmatprep.subr.bf16.mxu0 0
    %1964 = vmatpush1.bf16.msra.mxu0 0
    %1965 = vmatprep.subr.bf16.mxu0 0
    %1966 = vmatpush1.bf16.msra.mxu0 %v89
    %1967 = vmatprep.subr.bf16.mxu0 0
    %1968 = vmatpush2.bf16.msra.mxu0 0
    %1969 = vmatprep.subr.bf16.mxu0 0
    %1970 = vmatpush2.bf16.msra.mxu0 0
    %1971 = vmatprep.subr.bf16.mxu0 0
    %1972 = vmatpush2.bf16.msra.mxu0 0
    %1973 = vmatprep.subr.bf16.mxu0 0
    %1974 = vmatpush2.bf16.msra.mxu0 0
    %1975 = vmatprep.subr.bf16.mxu0 0
    %1976 = vmatpush2.bf16.msra.mxu0 0
    %1977 = vmatprep.subr.bf16.mxu0 0
    %1978 = vmatpush2.bf16.msra.mxu0 0
    %1979 = vmatprep.subr.bf16.mxu0 0
    %1980 = vmatpush2.bf16.msra.mxu0 0
    %1981 = vmatprep.subr.bf16.mxu0 0
    %1982 = vmatpush2.bf16.msra.mxu0 0
    %1983 = vmatprep.mubr.bf16.mxu0 0
    %1984 = vmatmul.mubr.bf16.gmra.mxu0 %v1949
    %v1985 = vpop.f32.mrf.mxu0
    %v1986 = vadd.f32 0.0, %v1985
    %v1987 = vpop.f32.mrf.mxu0
    %v1988 = vpop.f32.mrf.mxu0
    %v1989 = vpop.f32.mrf.mxu0
    %1990 = vdwg.mxu0
    %v1992 = vsel %vm83, %v1945, 0
    %1994 = vmatprep.subr.bf16.mxu0 0
    %1995 = vmatpush1.bf16.msra.mxu0 0
    %1996 = vmatprep.subr.bf16.mxu0 0
    %1997 = vmatpush1.bf16.msra.mxu0 0
    %1998 = vmatprep.subr.bf16.mxu0 0
    %1999 = vmatpush1.bf16.msra.mxu0 0
    %2000 = vmatprep.subr.bf16.mxu0 0
    %2001 = vmatpush1.bf16.msra.mxu0 0
    %2002 = vmatprep.subr.bf16.mxu0 0
    %2003 = vmatpush1.bf16.msra.mxu0 0
    %2004 = vmatprep.subr.bf16.mxu0 0
    %2005 = vmatpush1.bf16.msra.mxu0 0
    %2006 = vmatprep.subr.bf16.mxu0 0
    %2007 = vmatpush1.bf16.msra.mxu0 0
    %2008 = vmatprep.subr.bf16.mxu0 0
    %2009 = vmatpush1.bf16.msra.mxu0 %v135
    %2010 = vmatprep.subr.bf16.mxu0 0
    %2011 = vmatpush2.bf16.msra.mxu0 0
    %2012 = vmatprep.subr.bf16.mxu0 0
    %2013 = vmatpush2.bf16.msra.mxu0 0
    %2014 = vmatprep.subr.bf16.mxu0 0
    %2015 = vmatpush2.bf16.msra.mxu0 0
    %2016 = vmatprep.subr.bf16.mxu0 0
    %2017 = vmatpush2.bf16.msra.mxu0 0
    %2018 = vmatprep.subr.bf16.mxu0 0
    %2019 = vmatpush2.bf16.msra.mxu0 0
    %2020 = vmatprep.subr.bf16.mxu0 0
    %2021 = vmatpush2.bf16.msra.mxu0 0
    %2022 = vmatprep.subr.bf16.mxu0 0
    %2023 = vmatpush2.bf16.msra.mxu0 0
    %2024 = vmatprep.subr.bf16.mxu0 0
    %2025 = vmatpush2.bf16.msra.mxu0 0
    %2026 = vmatprep.mubr.bf16.mxu0 0
    %2027 = vmatmul.mubr.bf16.gmra.mxu0 %v1992
    %v2028 = vpop.f32.mrf.mxu0
    %v2029 = vadd.f32 %v1986, %v2028
    %v2030 = vpop.f32.mrf.mxu0
    %v2031 = vpop.f32.mrf.mxu0
    %v2032 = vpop.f32.mrf.mxu0
    %2033 = vdwg.mxu0
    %s2034 = scalar_lea.vmem %s2, 44
    %v2035 = vld [vmem:[%s2034] sm:$0xf]
    %v2037 = vsel %vm270, %v2029, 0
    %v2040 = vsel %vm87, %v2035, 0
    %2042 = vmatprep.subr.mxu0 0.0
    %2043 = vmatpush1.msra.mxu0 0.0
    %2044 = vmatprep.subr.mxu0 0.0
    %2045 = vmatpush1.msra.mxu0 0.0
    %2046 = vmatprep.subr.mxu0 0.0
    %2047 = vmatpush1.msra.mxu0 0.0
    %2048 = vmatprep.subr.mxu0 0.0
    %2049 = vmatpush1.msra.mxu0 0.0
    %2050 = vmatprep.subr.mxu0 0.0
    %2051 = vmatpush1.msra.mxu0 0.0
    %2052 = vmatprep.subr.mxu0 0.0
    %2053 = vmatpush1.msra.mxu0 0.0
    %2054 = vmatprep.subr.mxu0 0.0
    %2055 = vmatpush1.msra.mxu0 0.0
    %2056 = vmatprep.subr.mxu0 0.0
    %2057 = vmatpush1.msra.mxu0 0.0
    %2058 = vmatprep.subr.mxu0 0.0
    %2059 = vmatpush1.msra.mxu0 0.0
    %2060 = vmatprep.subr.mxu0 0.0
    %2061 = vmatpush1.msra.mxu0 0.0
    %2062 = vmatprep.subr.mxu0 0.0
    %2063 = vmatpush1.msra.mxu0 0.0
    %2064 = vmatprep.subr.mxu0 0.0
    %2065 = vmatpush1.msra.mxu0 0.0
    %2066 = vmatprep.subr.mxu0 0.0
    %2067 = vmatpush1.msra.mxu0 0.0
    %2068 = vmatprep.subr.mxu0 0.0
    %2069 = vmatpush1.msra.mxu0 0.0
    %2070 = vmatprep.subr.mxu0 0.0
    %2071 = vmatpush1.msra.mxu0 0.0
    %2072 = vmatprep.subr.mxu0 0.0
    %2073 = vmatpush1.msra.mxu0 %v2040
    %2074 = vmatprep.subr.mxu0 0.0
    %2075 = vmatpush2.msra.mxu0 0.0
    %2076 = vmatprep.subr.mxu0 0.0
    %2077 = vmatpush2.msra.mxu0 0.0
    %2078 = vmatprep.subr.mxu0 0.0
    %2079 = vmatpush2.msra.mxu0 0.0
    %2080 = vmatprep.subr.mxu0 0.0
    %2081 = vmatpush2.msra.mxu0 0.0
    %2082 = vmatprep.subr.mxu0 0.0
    %2083 = vmatpush2.msra.mxu0 0.0
    %2084 = vmatprep.subr.mxu0 0.0
    %2085 = vmatpush2.msra.mxu0 0.0
    %2086 = vmatprep.subr.mxu0 0.0
    %2087 = vmatpush2.msra.mxu0 0.0
    %2088 = vmatprep.subr.mxu0 0.0
    %2089 = vmatpush2.msra.mxu0 0.0
    %2090 = vmatprep.subr.mxu0 0.0
    %2091 = vmatpush2.msra.mxu0 0.0
    %2092 = vmatprep.subr.mxu0 0.0
    %2093 = vmatpush2.msra.mxu0 0.0
    %2094 = vmatprep.subr.mxu0 0.0
    %2095 = vmatpush2.msra.mxu0 0.0
    %2096 = vmatprep.subr.mxu0 0.0
    %2097 = vmatpush2.msra.mxu0 0.0
    %2098 = vmatprep.subr.mxu0 0.0
    %2099 = vmatpush2.msra.mxu0 0.0
    %2100 = vmatprep.subr.mxu0 0.0
    %2101 = vmatpush2.msra.mxu0 0.0
    %2102 = vmatprep.subr.mxu0 0.0
    %2103 = vmatpush2.msra.mxu0 0.0
    %2104 = vmatprep.subr.mxu0 0.0
    %2105 = vmatpush2.msra.mxu0 0.0
    %2106 = vmatprep.mubr.f32.mxu0 0.0
    %2107 = vmatmul.mubr.f32.gmra.mxu0 %v2037
    %v2108 = vpop.f32.mrf.mxu0
    %v2109 = vadd.f32 0.0, %v2108
    %v2110 = vpop.f32.mrf.mxu0
    %2111 = vdwg.mxu0
    %v2112 = vadd.f32 %v1943, %v2109
    %s2113 = scalar_lea.vmem [#allocation2], 24
    %v2114 = vld [vmem:[%s2113] sm:$0x3]
    %s2115 = scalar_lea.vmem [#allocation4], 24
    %v2116 = vld [vmem:[%s2115] sm:$0x3]
    %v2118 = vsel %vm83, %v2116, 0
    %2120 = vmatprep.subr.bf16.mxu0 0
    %2121 = vmatpush1.bf16.msra.mxu0 0
    %2122 = vmatprep.subr.bf16.mxu0 0
    %2123 = vmatpush1.bf16.msra.mxu0 0
    %2124 = vmatprep.subr.bf16.mxu0 0
    %2125 = vmatpush1.bf16.msra.mxu0 0
    %2126 = vmatprep.subr.bf16.mxu0 0
    %2127 = vmatpush1.bf16.msra.mxu0 0
    %2128 = vmatprep.subr.bf16.mxu0 0
    %2129 = vmatpush1.bf16.msra.mxu0 0
    %2130 = vmatprep.subr.bf16.mxu0 0
    %2131 = vmatpush1.bf16.msra.mxu0 0
    %2132 = vmatprep.subr.bf16.mxu0 0
    %2133 = vmatpush1.bf16.msra.mxu0 0
    %2134 = vmatprep.subr.bf16.mxu0 0
    %2135 = vmatpush1.bf16.msra.mxu0 %v89
    %2136 = vmatprep.subr.bf16.mxu0 0
    %2137 = vmatpush2.bf16.msra.mxu0 0
    %2138 = vmatprep.subr.bf16.mxu0 0
    %2139 = vmatpush2.bf16.msra.mxu0 0
    %2140 = vmatprep.subr.bf16.mxu0 0
    %2141 = vmatpush2.bf16.msra.mxu0 0
    %2142 = vmatprep.subr.bf16.mxu0 0
    %2143 = vmatpush2.bf16.msra.mxu0 0
    %2144 = vmatprep.subr.bf16.mxu0 0
    %2145 = vmatpush2.bf16.msra.mxu0 0
    %2146 = vmatprep.subr.bf16.mxu0 0
    %2147 = vmatpush2.bf16.msra.mxu0 0
    %2148 = vmatprep.subr.bf16.mxu0 0
    %2149 = vmatpush2.bf16.msra.mxu0 0
    %2150 = vmatprep.subr.bf16.mxu0 0
    %2151 = vmatpush2.bf16.msra.mxu0 0
    %2152 = vmatprep.mubr.bf16.mxu0 0
    %2153 = vmatmul.mubr.bf16.gmra.mxu0 %v2118
    %v2154 = vpop.f32.mrf.mxu0
    %v2155 = vadd.f32 0.0, %v2154
    %v2156 = vpop.f32.mrf.mxu0
    %v2157 = vpop.f32.mrf.mxu0
    %v2158 = vpop.f32.mrf.mxu0
    %2159 = vdwg.mxu0
    %v2161 = vsel %vm83, %v2114, 0
    %2163 = vmatprep.subr.bf16.mxu0 0
    %2164 = vmatpush1.bf16.msra.mxu0 0
    %2165 = vmatprep.subr.bf16.mxu0 0
    %2166 = vmatpush1.bf16.msra.mxu0 0
    %2167 = vmatprep.subr.bf16.mxu0 0
    %2168 = vmatpush1.bf16.msra.mxu0 0
    %2169 = vmatprep.subr.bf16.mxu0 0
    %2170 = vmatpush1.bf16.msra.mxu0 0
    %2171 = vmatprep.subr.bf16.mxu0 0
    %2172 = vmatpush1.bf16.msra.mxu0 0
    %2173 = vmatprep.subr.bf16.mxu0 0
    %2174 = vmatpush1.bf16.msra.mxu0 0
    %2175 = vmatprep.subr.bf16.mxu0 0
    %2176 = vmatpush1.bf16.msra.mxu0 0
    %2177 = vmatprep.subr.bf16.mxu0 0
    %2178 = vmatpush1.bf16.msra.mxu0 %v135
    %2179 = vmatprep.subr.bf16.mxu0 0
    %2180 = vmatpush2.bf16.msra.mxu0 0
    %2181 = vmatprep.subr.bf16.mxu0 0
    %2182 = vmatpush2.bf16.msra.mxu0 0
    %2183 = vmatprep.subr.bf16.mxu0 0
    %2184 = vmatpush2.bf16.msra.mxu0 0
    %2185 = vmatprep.subr.bf16.mxu0 0
    %2186 = vmatpush2.bf16.msra.mxu0 0
    %2187 = vmatprep.subr.bf16.mxu0 0
    %2188 = vmatpush2.bf16.msra.mxu0 0
    %2189 = vmatprep.subr.bf16.mxu0 0
    %2190 = vmatpush2.bf16.msra.mxu0 0
    %2191 = vmatprep.subr.bf16.mxu0 0
    %2192 = vmatpush2.bf16.msra.mxu0 0
    %2193 = vmatprep.subr.bf16.mxu0 0
    %2194 = vmatpush2.bf16.msra.mxu0 0
    %2195 = vmatprep.mubr.bf16.mxu0 0
    %2196 = vmatmul.mubr.bf16.gmra.mxu0 %v2161
    %v2197 = vpop.f32.mrf.mxu0
    %v2198 = vadd.f32 %v2155, %v2197
    %v2199 = vpop.f32.mrf.mxu0
    %v2200 = vpop.f32.mrf.mxu0
    %v2201 = vpop.f32.mrf.mxu0
    %2202 = vdwg.mxu0
    %s2203 = scalar_lea.vmem %s2, 48
    %v2204 = vld [vmem:[%s2203] sm:$0xf]
    %v2206 = vsel %vm270, %v2198, 0
    %v2209 = vsel %vm87, %v2204, 0
    %2211 = vmatprep.subr.mxu0 0.0
    %2212 = vmatpush1.msra.mxu0 0.0
    %2213 = vmatprep.subr.mxu0 0.0
    %2214 = vmatpush1.msra.mxu0 0.0
    %2215 = vmatprep.subr.mxu0 0.0
    %2216 = vmatpush1.msra.mxu0 0.0
    %2217 = vmatprep.subr.mxu0 0.0
    %2218 = vmatpush1.msra.mxu0 0.0
    %2219 = vmatprep.subr.mxu0 0.0
    %2220 = vmatpush1.msra.mxu0 0.0
    %2221 = vmatprep.subr.mxu0 0.0
    %2222 = vmatpush1.msra.mxu0 0.0
    %2223 = vmatprep.subr.mxu0 0.0
    %2224 = vmatpush1.msra.mxu0 0.0
    %2225 = vmatprep.subr.mxu0 0.0
    %2226 = vmatpush1.msra.mxu0 0.0
    %2227 = vmatprep.subr.mxu0 0.0
    %2228 = vmatpush1.msra.mxu0 0.0
    %2229 = vmatprep.subr.mxu0 0.0
    %2230 = vmatpush1.msra.mxu0 0.0
    %2231 = vmatprep.subr.mxu0 0.0
    %2232 = vmatpush1.msra.mxu0 0.0
    %2233 = vmatprep.subr.mxu0 0.0
    %2234 = vmatpush1.msra.mxu0 0.0
    %2235 = vmatprep.subr.mxu0 0.0
    %2236 = vmatpush1.msra.mxu0 0.0
    %2237 = vmatprep.subr.mxu0 0.0
    %2238 = vmatpush1.msra.mxu0 0.0
    %2239 = vmatprep.subr.mxu0 0.0
    %2240 = vmatpush1.msra.mxu0 0.0
    %2241 = vmatprep.subr.mxu0 0.0
    %2242 = vmatpush1.msra.mxu0 %v2209
    %2243 = vmatprep.subr.mxu0 0.0
    %2244 = vmatpush2.msra.mxu0 0.0
    %2245 = vmatprep.subr.mxu0 0.0
    %2246 = vmatpush2.msra.mxu0 0.0
    %2247 = vmatprep.subr.mxu0 0.0
    %2248 = vmatpush2.msra.mxu0 0.0
    %2249 = vmatprep.subr.mxu0 0.0
    %2250 = vmatpush2.msra.mxu0 0.0
    %2251 = vmatprep.subr.mxu0 0.0
    %2252 = vmatpush2.msra.mxu0 0.0
    %2253 = vmatprep.subr.mxu0 0.0
    %2254 = vmatpush2.msra.mxu0 0.0
    %2255 = vmatprep.subr.mxu0 0.0
    %2256 = vmatpush2.msra.mxu0 0.0
    %2257 = vmatprep.subr.mxu0 0.0
    %2258 = vmatpush2.msra.mxu0 0.0
    %2259 = vmatprep.subr.mxu0 0.0
    %2260 = vmatpush2.msra.mxu0 0.0
    %2261 = vmatprep.subr.mxu0 0.0
    %2262 = vmatpush2.msra.mxu0 0.0
    %2263 = vmatprep.subr.mxu0 0.0
    %2264 = vmatpush2.msra.mxu0 0.0
    %2265 = vmatprep.subr.mxu0 0.0
    %2266 = vmatpush2.msra.mxu0 0.0
    %2267 = vmatprep.subr.mxu0 0.0
    %2268 = vmatpush2.msra.mxu0 0.0
    %2269 = vmatprep.subr.mxu0 0.0
    %2270 = vmatpush2.msra.mxu0 0.0
    %2271 = vmatprep.subr.mxu0 0.0
    %2272 = vmatpush2.msra.mxu0 0.0
    %2273 = vmatprep.subr.mxu0 0.0
    %2274 = vmatpush2.msra.mxu0 0.0
    %2275 = vmatprep.mubr.f32.mxu0 0.0
    %2276 = vmatmul.mubr.f32.gmra.mxu0 %v2206
    %v2277 = vpop.f32.mrf.mxu0
    %v2278 = vadd.f32 0.0, %v2277
    %v2279 = vpop.f32.mrf.mxu0
    %2280 = vdwg.mxu0
    %v2281 = vadd.f32 %v2112, %v2278
    %s2282 = scalar_lea.vmem [#allocation2], 26
    %v2283 = vld [vmem:[%s2282] sm:$0x3]
    %s2284 = scalar_lea.vmem [#allocation4], 26
    %v2285 = vld [vmem:[%s2284] sm:$0x3]
    %v2287 = vsel %vm83, %v2285, 0
    %2289 = vmatprep.subr.bf16.mxu0 0
    %2290 = vmatpush1.bf16.msra.mxu0 0
    %2291 = vmatprep.subr.bf16.mxu0 0
    %2292 = vmatpush1.bf16.msra.mxu0 0
    %2293 = vmatprep.subr.bf16.mxu0 0
    %2294 = vmatpush1.bf16.msra.mxu0 0
    %2295 = vmatprep.subr.bf16.mxu0 0
    %2296 = vmatpush1.bf16.msra.mxu0 0
    %2297 = vmatprep.subr.bf16.mxu0 0
    %2298 = vmatpush1.bf16.msra.mxu0 0
    %2299 = vmatprep.subr.bf16.mxu0 0
    %2300 = vmatpush1.bf16.msra.mxu0 0
    %2301 = vmatprep.subr.bf16.mxu0 0
    %2302 = vmatpush1.bf16.msra.mxu0 0
    %2303 = vmatprep.subr.bf16.mxu0 0
    %2304 = vmatpush1.bf16.msra.mxu0 %v89
    %2305 = vmatprep.subr.bf16.mxu0 0
    %2306 = vmatpush2.bf16.msra.mxu0 0
    %2307 = vmatprep.subr.bf16.mxu0 0
    %2308 = vmatpush2.bf16.msra.mxu0 0
    %2309 = vmatprep.subr.bf16.mxu0 0
    %2310 = vmatpush2.bf16.msra.mxu0 0
    %2311 = vmatprep.subr.bf16.mxu0 0
    %2312 = vmatpush2.bf16.msra.mxu0 0
    %2313 = vmatprep.subr.bf16.mxu0 0
    %2314 = vmatpush2.bf16.msra.mxu0 0
    %2315 = vmatprep.subr.bf16.mxu0 0
    %2316 = vmatpush2.bf16.msra.mxu0 0
    %2317 = vmatprep.subr.bf16.mxu0 0
    %2318 = vmatpush2.bf16.msra.mxu0 0
    %2319 = vmatprep.subr.bf16.mxu0 0
    %2320 = vmatpush2.bf16.msra.mxu0 0
    %2321 = vmatprep.mubr.bf16.mxu0 0
    %2322 = vmatmul.mubr.bf16.gmra.mxu0 %v2287
    %v2323 = vpop.f32.mrf.mxu0
    %v2324 = vadd.f32 0.0, %v2323
    %v2325 = vpop.f32.mrf.mxu0
    %v2326 = vpop.f32.mrf.mxu0
    %v2327 = vpop.f32.mrf.mxu0
    %2328 = vdwg.mxu0
    %v2330 = vsel %vm83, %v2283, 0
    %2332 = vmatprep.subr.bf16.mxu0 0
    %2333 = vmatpush1.bf16.msra.mxu0 0
    %2334 = vmatprep.subr.bf16.mxu0 0
    %2335 = vmatpush1.bf16.msra.mxu0 0
    %2336 = vmatprep.subr.bf16.mxu0 0
    %2337 = vmatpush1.bf16.msra.mxu0 0
    %2338 = vmatprep.subr.bf16.mxu0 0
    %2339 = vmatpush1.bf16.msra.mxu0 0
    %2340 = vmatprep.subr.bf16.mxu0 0
    %2341 = vmatpush1.bf16.msra.mxu0 0
    %2342 = vmatprep.subr.bf16.mxu0 0
    %2343 = vmatpush1.bf16.msra.mxu0 0
    %2344 = vmatprep.subr.bf16.mxu0 0
    %2345 = vmatpush1.bf16.msra.mxu0 0
    %2346 = vmatprep.subr.bf16.mxu0 0
    %2347 = vmatpush1.bf16.msra.mxu0 %v135
    %2348 = vmatprep.subr.bf16.mxu0 0
    %2349 = vmatpush2.bf16.msra.mxu0 0
    %2350 = vmatprep.subr.bf16.mxu0 0
    %2351 = vmatpush2.bf16.msra.mxu0 0
    %2352 = vmatprep.subr.bf16.mxu0 0
    %2353 = vmatpush2.bf16.msra.mxu0 0
    %2354 = vmatprep.subr.bf16.mxu0 0
    %2355 = vmatpush2.bf16.msra.mxu0 0
    %2356 = vmatprep.subr.bf16.mxu0 0
    %2357 = vmatpush2.bf16.msra.mxu0 0
    %2358 = vmatprep.subr.bf16.mxu0 0
    %2359 = vmatpush2.bf16.msra.mxu0 0
    %2360 = vmatprep.subr.bf16.mxu0 0
    %2361 = vmatpush2.bf16.msra.mxu0 0
    %2362 = vmatprep.subr.bf16.mxu0 0
    %2363 = vmatpush2.bf16.msra.mxu0 0
    %2364 = vmatprep.mubr.bf16.mxu0 0
    %2365 = vmatmul.mubr.bf16.gmra.mxu0 %v2330
    %v2366 = vpop.f32.mrf.mxu0
    %v2367 = vadd.f32 %v2324, %v2366
    %v2368 = vpop.f32.mrf.mxu0
    %v2369 = vpop.f32.mrf.mxu0
    %v2370 = vpop.f32.mrf.mxu0
    %2371 = vdwg.mxu0
    %s2372 = scalar_lea.vmem %s2, 52
    %v2373 = vld [vmem:[%s2372] sm:$0xf]
    %v2375 = vsel %vm270, %v2367, 0
    %v2378 = vsel %vm87, %v2373, 0
    %2380 = vmatprep.subr.mxu0 0.0
    %2381 = vmatpush1.msra.mxu0 0.0
    %2382 = vmatprep.subr.mxu0 0.0
    %2383 = vmatpush1.msra.mxu0 0.0
    %2384 = vmatprep.subr.mxu0 0.0
    %2385 = vmatpush1.msra.mxu0 0.0
    %2386 = vmatprep.subr.mxu0 0.0
    %2387 = vmatpush1.msra.mxu0 0.0
    %2388 = vmatprep.subr.mxu0 0.0
    %2389 = vmatpush1.msra.mxu0 0.0
    %2390 = vmatprep.subr.mxu0 0.0
    %2391 = vmatpush1.msra.mxu0 0.0
    %2392 = vmatprep.subr.mxu0 0.0
    %2393 = vmatpush1.msra.mxu0 0.0
    %2394 = vmatprep.subr.mxu0 0.0
    %2395 = vmatpush1.msra.mxu0 0.0
    %2396 = vmatprep.subr.mxu0 0.0
    %2397 = vmatpush1.msra.mxu0 0.0
    %2398 = vmatprep.subr.mxu0 0.0
    %2399 = vmatpush1.msra.mxu0 0.0
    %2400 = vmatprep.subr.mxu0 0.0
    %2401 = vmatpush1.msra.mxu0 0.0
    %2402 = vmatprep.subr.mxu0 0.0
    %2403 = vmatpush1.msra.mxu0 0.0
    %2404 = vmatprep.subr.mxu0 0.0
    %2405 = vmatpush1.msra.mxu0 0.0
    %2406 = vmatprep.subr.mxu0 0.0
    %2407 = vmatpush1.msra.mxu0 0.0
    %2408 = vmatprep.subr.mxu0 0.0
    %2409 = vmatpush1.msra.mxu0 0.0
    %2410 = vmatprep.subr.mxu0 0.0
    %2411 = vmatpush1.msra.mxu0 %v2378
    %2412 = vmatprep.subr.mxu0 0.0
    %2413 = vmatpush2.msra.mxu0 0.0
    %2414 = vmatprep.subr.mxu0 0.0
    %2415 = vmatpush2.msra.mxu0 0.0
    %2416 = vmatprep.subr.mxu0 0.0
    %2417 = vmatpush2.msra.mxu0 0.0
    %2418 = vmatprep.subr.mxu0 0.0
    %2419 = vmatpush2.msra.mxu0 0.0
    %2420 = vmatprep.subr.mxu0 0.0
    %2421 = vmatpush2.msra.mxu0 0.0
    %2422 = vmatprep.subr.mxu0 0.0
    %2423 = vmatpush2.msra.mxu0 0.0
    %2424 = vmatprep.subr.mxu0 0.0
    %2425 = vmatpush2.msra.mxu0 0.0
    %2426 = vmatprep.subr.mxu0 0.0
    %2427 = vmatpush2.msra.mxu0 0.0
    %2428 = vmatprep.subr.mxu0 0.0
    %2429 = vmatpush2.msra.mxu0 0.0
    %2430 = vmatprep.subr.mxu0 0.0
    %2431 = vmatpush2.msra.mxu0 0.0
    %2432 = vmatprep.subr.mxu0 0.0
    %2433 = vmatpush2.msra.mxu0 0.0
    %2434 = vmatprep.subr.mxu0 0.0
    %2435 = vmatpush2.msra.mxu0 0.0
    %2436 = vmatprep.subr.mxu0 0.0
    %2437 = vmatpush2.msra.mxu0 0.0
    %2438 = vmatprep.subr.mxu0 0.0
    %2439 = vmatpush2.msra.mxu0 0.0
    %2440 = vmatprep.subr.mxu0 0.0
    %2441 = vmatpush2.msra.mxu0 0.0
    %2442 = vmatprep.subr.mxu0 0.0
    %2443 = vmatpush2.msra.mxu0 0.0
    %2444 = vmatprep.mubr.f32.mxu0 0.0
    %2445 = vmatmul.mubr.f32.gmra.mxu0 %v2375
    %v2446 = vpop.f32.mrf.mxu0
    %v2447 = vadd.f32 0.0, %v2446
    %v2448 = vpop.f32.mrf.mxu0
    %2449 = vdwg.mxu0
    %v2450 = vadd.f32 %v2281, %v2447
    %s2451 = scalar_lea.vmem [#allocation2], 28
    %v2452 = vld [vmem:[%s2451] sm:$0x3]
    %s2453 = scalar_lea.vmem [#allocation4], 28
    %v2454 = vld [vmem:[%s2453] sm:$0x3]
    %v2456 = vsel %vm83, %v2454, 0
    %2458 = vmatprep.subr.bf16.mxu0 0
    %2459 = vmatpush1.bf16.msra.mxu0 0
    %2460 = vmatprep.subr.bf16.mxu0 0
    %2461 = vmatpush1.bf16.msra.mxu0 0
    %2462 = vmatprep.subr.bf16.mxu0 0
    %2463 = vmatpush1.bf16.msra.mxu0 0
    %2464 = vmatprep.subr.bf16.mxu0 0
    %2465 = vmatpush1.bf16.msra.mxu0 0
    %2466 = vmatprep.subr.bf16.mxu0 0
    %2467 = vmatpush1.bf16.msra.mxu0 0
    %2468 = vmatprep.subr.bf16.mxu0 0
    %2469 = vmatpush1.bf16.msra.mxu0 0
    %2470 = vmatprep.subr.bf16.mxu0 0
    %2471 = vmatpush1.bf16.msra.mxu0 0
    %2472 = vmatprep.subr.bf16.mxu0 0
    %2473 = vmatpush1.bf16.msra.mxu0 %v89
    %2474 = vmatprep.subr.bf16.mxu0 0
    %2475 = vmatpush2.bf16.msra.mxu0 0
    %2476 = vmatprep.subr.bf16.mxu0 0
    %2477 = vmatpush2.bf16.msra.mxu0 0
    %2478 = vmatprep.subr.bf16.mxu0 0
    %2479 = vmatpush2.bf16.msra.mxu0 0
    %2480 = vmatprep.subr.bf16.mxu0 0
    %2481 = vmatpush2.bf16.msra.mxu0 0
    %2482 = vmatprep.subr.bf16.mxu0 0
    %2483 = vmatpush2.bf16.msra.mxu0 0
    %2484 = vmatprep.subr.bf16.mxu0 0
    %2485 = vmatpush2.bf16.msra.mxu0 0
    %2486 = vmatprep.subr.bf16.mxu0 0
    %2487 = vmatpush2.bf16.msra.mxu0 0
    %2488 = vmatprep.subr.bf16.mxu0 0
    %2489 = vmatpush2.bf16.msra.mxu0 0
    %2490 = vmatprep.mubr.bf16.mxu0 0
    %2491 = vmatmul.mubr.bf16.gmra.mxu0 %v2456
    %v2492 = vpop.f32.mrf.mxu0
    %v2493 = vadd.f32 0.0, %v2492
    %v2494 = vpop.f32.mrf.mxu0
    %v2495 = vpop.f32.mrf.mxu0
    %v2496 = vpop.f32.mrf.mxu0
    %2497 = vdwg.mxu0
    %v2499 = vsel %vm83, %v2452, 0
    %2501 = vmatprep.subr.bf16.mxu0 0
    %2502 = vmatpush1.bf16.msra.mxu0 0
    %2503 = vmatprep.subr.bf16.mxu0 0
    %2504 = vmatpush1.bf16.msra.mxu0 0
    %2505 = vmatprep.subr.bf16.mxu0 0
    %2506 = vmatpush1.bf16.msra.mxu0 0
    %2507 = vmatprep.subr.bf16.mxu0 0
    %2508 = vmatpush1.bf16.msra.mxu0 0
    %2509 = vmatprep.subr.bf16.mxu0 0
    %2510 = vmatpush1.bf16.msra.mxu0 0
    %2511 = vmatprep.subr.bf16.mxu0 0
    %2512 = vmatpush1.bf16.msra.mxu0 0
    %2513 = vmatprep.subr.bf16.mxu0 0
    %2514 = vmatpush1.bf16.msra.mxu0 0
    %2515 = vmatprep.subr.bf16.mxu0 0
    %2516 = vmatpush1.bf16.msra.mxu0 %v135
    %2517 = vmatprep.subr.bf16.mxu0 0
    %2518 = vmatpush2.bf16.msra.mxu0 0
    %2519 = vmatprep.subr.bf16.mxu0 0
    %2520 = vmatpush2.bf16.msra.mxu0 0
    %2521 = vmatprep.subr.bf16.mxu0 0
    %2522 = vmatpush2.bf16.msra.mxu0 0
    %2523 = vmatprep.subr.bf16.mxu0 0
    %2524 = vmatpush2.bf16.msra.mxu0 0
    %2525 = vmatprep.subr.bf16.mxu0 0
    %2526 = vmatpush2.bf16.msra.mxu0 0
    %2527 = vmatprep.subr.bf16.mxu0 0
    %2528 = vmatpush2.bf16.msra.mxu0 0
    %2529 = vmatprep.subr.bf16.mxu0 0
    %2530 = vmatpush2.bf16.msra.mxu0 0
    %2531 = vmatprep.subr.bf16.mxu0 0
    %2532 = vmatpush2.bf16.msra.mxu0 0
    %2533 = vmatprep.mubr.bf16.mxu0 0
    %2534 = vmatmul.mubr.bf16.gmra.mxu0 %v2499
    %v2535 = vpop.f32.mrf.mxu0
    %v2536 = vadd.f32 %v2493, %v2535
    %v2537 = vpop.f32.mrf.mxu0
    %v2538 = vpop.f32.mrf.mxu0
    %v2539 = vpop.f32.mrf.mxu0
    %2540 = vdwg.mxu0
    %s2541 = scalar_lea.vmem %s2, 56
    %v2542 = vld [vmem:[%s2541] sm:$0xf]
    %v2544 = vsel %vm270, %v2536, 0
    %v2547 = vsel %vm87, %v2542, 0
    %2549 = vmatprep.subr.mxu0 0.0
    %2550 = vmatpush1.msra.mxu0 0.0
    %2551 = vmatprep.subr.mxu0 0.0
    %2552 = vmatpush1.msra.mxu0 0.0
    %2553 = vmatprep.subr.mxu0 0.0
    %2554 = vmatpush1.msra.mxu0 0.0
    %2555 = vmatprep.subr.mxu0 0.0
    %2556 = vmatpush1.msra.mxu0 0.0
    %2557 = vmatprep.subr.mxu0 0.0
    %2558 = vmatpush1.msra.mxu0 0.0
    %2559 = vmatprep.subr.mxu0 0.0
    %2560 = vmatpush1.msra.mxu0 0.0
    %2561 = vmatprep.subr.mxu0 0.0
    %2562 = vmatpush1.msra.mxu0 0.0
    %2563 = vmatprep.subr.mxu0 0.0
    %2564 = vmatpush1.msra.mxu0 0.0
    %2565 = vmatprep.subr.mxu0 0.0
    %2566 = vmatpush1.msra.mxu0 0.0
    %2567 = vmatprep.subr.mxu0 0.0
    %2568 = vmatpush1.msra.mxu0 0.0
    %2569 = vmatprep.subr.mxu0 0.0
    %2570 = vmatpush1.msra.mxu0 0.0
    %2571 = vmatprep.subr.mxu0 0.0
    %2572 = vmatpush1.msra.mxu0 0.0
    %2573 = vmatprep.subr.mxu0 0.0
    %2574 = vmatpush1.msra.mxu0 0.0
    %2575 = vmatprep.subr.mxu0 0.0
    %2576 = vmatpush1.msra.mxu0 0.0
    %2577 = vmatprep.subr.mxu0 0.0
    %2578 = vmatpush1.msra.mxu0 0.0
    %2579 = vmatprep.subr.mxu0 0.0
    %2580 = vmatpush1.msra.mxu0 %v2547
    %2581 = vmatprep.subr.mxu0 0.0
    %2582 = vmatpush2.msra.mxu0 0.0
    %2583 = vmatprep.subr.mxu0 0.0
    %2584 = vmatpush2.msra.mxu0 0.0
    %2585 = vmatprep.subr.mxu0 0.0
    %2586 = vmatpush2.msra.mxu0 0.0
    %2587 = vmatprep.subr.mxu0 0.0
    %2588 = vmatpush2.msra.mxu0 0.0
    %2589 = vmatprep.subr.mxu0 0.0
    %2590 = vmatpush2.msra.mxu0 0.0
    %2591 = vmatprep.subr.mxu0 0.0
    %2592 = vmatpush2.msra.mxu0 0.0
    %2593 = vmatprep.subr.mxu0 0.0
    %2594 = vmatpush2.msra.mxu0 0.0
    %2595 = vmatprep.subr.mxu0 0.0
    %2596 = vmatpush2.msra.mxu0 0.0
    %2597 = vmatprep.subr.mxu0 0.0
    %2598 = vmatpush2.msra.mxu0 0.0
    %2599 = vmatprep.subr.mxu0 0.0
    %2600 = vmatpush2.msra.mxu0 0.0
    %2601 = vmatprep.subr.mxu0 0.0
    %2602 = vmatpush2.msra.mxu0 0.0
    %2603 = vmatprep.subr.mxu0 0.0
    %2604 = vmatpush2.msra.mxu0 0.0
    %2605 = vmatprep.subr.mxu0 0.0
    %2606 = vmatpush2.msra.mxu0 0.0
    %2607 = vmatprep.subr.mxu0 0.0
    %2608 = vmatpush2.msra.mxu0 0.0
    %2609 = vmatprep.subr.mxu0 0.0
    %2610 = vmatpush2.msra.mxu0 0.0
    %2611 = vmatprep.subr.mxu0 0.0
    %2612 = vmatpush2.msra.mxu0 0.0
    %2613 = vmatprep.mubr.f32.mxu0 0.0
    %2614 = vmatmul.mubr.f32.gmra.mxu0 %v2544
    %v2615 = vpop.f32.mrf.mxu0
    %v2616 = vadd.f32 0.0, %v2615
    %v2617 = vpop.f32.mrf.mxu0
    %2618 = vdwg.mxu0
    %v2619 = vadd.f32 %v2450, %v2616
    %s2620 = scalar_lea.vmem [#allocation2], 30
    %v2621 = vld [vmem:[%s2620] sm:$0x3]
    %s2622 = scalar_lea.vmem [#allocation4], 30
    %v2623 = vld [vmem:[%s2622] sm:$0x3]
    %v2625 = vsel %vm83, %v2623, 0
    %2627 = vmatprep.subr.bf16.mxu0 0
    %2628 = vmatpush1.bf16.msra.mxu0 0
    %2629 = vmatprep.subr.bf16.mxu0 0
    %2630 = vmatpush1.bf16.msra.mxu0 0
    %2631 = vmatprep.subr.bf16.mxu0 0
    %2632 = vmatpush1.bf16.msra.mxu0 0
    %2633 = vmatprep.subr.bf16.mxu0 0
    %2634 = vmatpush1.bf16.msra.mxu0 0
    %2635 = vmatprep.subr.bf16.mxu0 0
    %2636 = vmatpush1.bf16.msra.mxu0 0
    %2637 = vmatprep.subr.bf16.mxu0 0
    %2638 = vmatpush1.bf16.msra.mxu0 0
    %2639 = vmatprep.subr.bf16.mxu0 0
    %2640 = vmatpush1.bf16.msra.mxu0 0
    %2641 = vmatprep.subr.bf16.mxu0 0
    %2642 = vmatpush1.bf16.msra.mxu0 %v89
    %2643 = vmatprep.subr.bf16.mxu0 0
    %2644 = vmatpush2.bf16.msra.mxu0 0
    %2645 = vmatprep.subr.bf16.mxu0 0
    %2646 = vmatpush2.bf16.msra.mxu0 0
    %2647 = vmatprep.subr.bf16.mxu0 0
    %2648 = vmatpush2.bf16.msra.mxu0 0
    %2649 = vmatprep.subr.bf16.mxu0 0
    %2650 = vmatpush2.bf16.msra.mxu0 0
    %2651 = vmatprep.subr.bf16.mxu0 0
    %2652 = vmatpush2.bf16.msra.mxu0 0
    %2653 = vmatprep.subr.bf16.mxu0 0
    %2654 = vmatpush2.bf16.msra.mxu0 0
    %2655 = vmatprep.subr.bf16.mxu0 0
    %2656 = vmatpush2.bf16.msra.mxu0 0
    %2657 = vmatprep.subr.bf16.mxu0 0
    %2658 = vmatpush2.bf16.msra.mxu0 0
    %2659 = vmatprep.mubr.bf16.mxu0 0
    %2660 = vmatmul.mubr.bf16.gmra.mxu0 %v2625
    %v2661 = vpop.f32.mrf.mxu0
    %v2662 = vadd.f32 0.0, %v2661
    %v2663 = vpop.f32.mrf.mxu0
    %v2664 = vpop.f32.mrf.mxu0
    %v2665 = vpop.f32.mrf.mxu0
    %2666 = vdwg.mxu0
    %v2668 = vsel %vm83, %v2621, 0
    %2670 = vmatprep.subr.bf16.mxu0 0
    %2671 = vmatpush1.bf16.msra.mxu0 0
    %2672 = vmatprep.subr.bf16.mxu0 0
    %2673 = vmatpush1.bf16.msra.mxu0 0
    %2674 = vmatprep.subr.bf16.mxu0 0
    %2675 = vmatpush1.bf16.msra.mxu0 0
    %2676 = vmatprep.subr.bf16.mxu0 0
    %2677 = vmatpush1.bf16.msra.mxu0 0
    %2678 = vmatprep.subr.bf16.mxu0 0
    %2679 = vmatpush1.bf16.msra.mxu0 0
    %2680 = vmatprep.subr.bf16.mxu0 0
    %2681 = vmatpush1.bf16.msra.mxu0 0
    %2682 = vmatprep.subr.bf16.mxu0 0
    %2683 = vmatpush1.bf16.msra.mxu0 0
    %2684 = vmatprep.subr.bf16.mxu0 0
    %2685 = vmatpush1.bf16.msra.mxu0 %v135
    %2686 = vmatprep.subr.bf16.mxu0 0
    %2687 = vmatpush2.bf16.msra.mxu0 0
    %2688 = vmatprep.subr.bf16.mxu0 0
    %2689 = vmatpush2.bf16.msra.mxu0 0
    %2690 = vmatprep.subr.bf16.mxu0 0
    %2691 = vmatpush2.bf16.msra.mxu0 0
    %2692 = vmatprep.subr.bf16.mxu0 0
    %2693 = vmatpush2.bf16.msra.mxu0 0
    %2694 = vmatprep.subr.bf16.mxu0 0
    %2695 = vmatpush2.bf16.msra.mxu0 0
    %2696 = vmatprep.subr.bf16.mxu0 0
    %2697 = vmatpush2.bf16.msra.mxu0 0
    %2698 = vmatprep.subr.bf16.mxu0 0
    %2699 = vmatpush2.bf16.msra.mxu0 0
    %2700 = vmatprep.subr.bf16.mxu0 0
    %2701 = vmatpush2.bf16.msra.mxu0 0
    %2702 = vmatprep.mubr.bf16.mxu0 0
    %2703 = vmatmul.mubr.bf16.gmra.mxu0 %v2668
    %v2704 = vpop.f32.mrf.mxu0
    %v2705 = vadd.f32 %v2662, %v2704
    %v2706 = vpop.f32.mrf.mxu0
    %v2707 = vpop.f32.mrf.mxu0
    %v2708 = vpop.f32.mrf.mxu0
    %2709 = vdwg.mxu0
    %s2710 = scalar_lea.vmem %s2, 60
    %v2711 = vld [vmem:[%s2710] sm:$0xf]
    %v2713 = vsel %vm270, %v2705, 0
    %v2716 = vsel %vm87, %v2711, 0
    %2718 = vmatprep.subr.mxu0 0.0
    %2719 = vmatpush1.msra.mxu0 0.0
    %2720 = vmatprep.subr.mxu0 0.0
    %2721 = vmatpush1.msra.mxu0 0.0
    %2722 = vmatprep.subr.mxu0 0.0
    %2723 = vmatpush1.msra.mxu0 0.0
    %2724 = vmatprep.subr.mxu0 0.0
    %2725 = vmatpush1.msra.mxu0 0.0
    %2726 = vmatprep.subr.mxu0 0.0
    %2727 = vmatpush1.msra.mxu0 0.0
    %2728 = vmatprep.subr.mxu0 0.0
    %2729 = vmatpush1.msra.mxu0 0.0
    %2730 = vmatprep.subr.mxu0 0.0
    %2731 = vmatpush1.msra.mxu0 0.0
    %2732 = vmatprep.subr.mxu0 0.0
    %2733 = vmatpush1.msra.mxu0 0.0
    %2734 = vmatprep.subr.mxu0 0.0
    %2735 = vmatpush1.msra.mxu0 0.0
    %2736 = vmatprep.subr.mxu0 0.0
    %2737 = vmatpush1.msra.mxu0 0.0
    %2738 = vmatprep.subr.mxu0 0.0
    %2739 = vmatpush1.msra.mxu0 0.0
    %2740 = vmatprep.subr.mxu0 0.0
    %2741 = vmatpush1.msra.mxu0 0.0
    %2742 = vmatprep.subr.mxu0 0.0
    %2743 = vmatpush1.msra.mxu0 0.0
    %2744 = vmatprep.subr.mxu0 0.0
    %2745 = vmatpush1.msra.mxu0 0.0
    %2746 = vmatprep.subr.mxu0 0.0
    %2747 = vmatpush1.msra.mxu0 0.0
    %2748 = vmatprep.subr.mxu0 0.0
    %2749 = vmatpush1.msra.mxu0 %v2716
    %2750 = vmatprep.subr.mxu0 0.0
    %2751 = vmatpush2.msra.mxu0 0.0
    %2752 = vmatprep.subr.mxu0 0.0
    %2753 = vmatpush2.msra.mxu0 0.0
    %2754 = vmatprep.subr.mxu0 0.0
    %2755 = vmatpush2.msra.mxu0 0.0
    %2756 = vmatprep.subr.mxu0 0.0
    %2757 = vmatpush2.msra.mxu0 0.0
    %2758 = vmatprep.subr.mxu0 0.0
    %2759 = vmatpush2.msra.mxu0 0.0
    %2760 = vmatprep.subr.mxu0 0.0
    %2761 = vmatpush2.msra.mxu0 0.0
    %2762 = vmatprep.subr.mxu0 0.0
    %2763 = vmatpush2.msra.mxu0 0.0
    %2764 = vmatprep.subr.mxu0 0.0
    %2765 = vmatpush2.msra.mxu0 0.0
    %2766 = vmatprep.subr.mxu0 0.0
    %2767 = vmatpush2.msra.mxu0 0.0
    %2768 = vmatprep.subr.mxu0 0.0
    %2769 = vmatpush2.msra.mxu0 0.0
    %2770 = vmatprep.subr.mxu0 0.0
    %2771 = vmatpush2.msra.mxu0 0.0
    %2772 = vmatprep.subr.mxu0 0.0
    %2773 = vmatpush2.msra.mxu0 0.0
    %2774 = vmatprep.subr.mxu0 0.0
    %2775 = vmatpush2.msra.mxu0 0.0
    %2776 = vmatprep.subr.mxu0 0.0
    %2777 = vmatpush2.msra.mxu0 0.0
    %2778 = vmatprep.subr.mxu0 0.0
    %2779 = vmatpush2.msra.mxu0 0.0
    %2780 = vmatprep.subr.mxu0 0.0
    %2781 = vmatpush2.msra.mxu0 0.0
    %2782 = vmatprep.mubr.f32.mxu0 0.0
    %2783 = vmatmul.mubr.f32.gmra.mxu0 %v2713
    %v2784 = vpop.f32.mrf.mxu0
    %v2785 = vadd.f32 0.0, %v2784
    %v2786 = vpop.f32.mrf.mxu0
    %2787 = vdwg.mxu0
    %v2788 = vadd.f32 %v2619, %v2785
    %vm2789 = vcmask 125952
    %v2790 = vsel %vm2789, %v2788, 0.0
    %2791 = vadd.xlane.f32.xlu0 %v2790
    %v2792 = vpop.xlane.xlu0 %2791
    %s2793 = scalar_lea.vmem %s3, 4
    %v2794 = vld [vmem:[%s2793] sm:$0xf]
    %s2795 = scalar_lea.vmem %s4, 8
    %v2796 = vld [vmem:[%s2795] sm:$0xff]
    %v2797 = vpack.c.bf16 %v2796, %v2796
    %v2799 = vsel %vm87, %v2797, 0
    %2801 = vmatprep.subr.bf16.mxu0 0
    %2802 = vmatpush1.bf16.msra.mxu0 0
    %2803 = vmatprep.subr.bf16.mxu0 0
    %2804 = vmatpush1.bf16.msra.mxu0 0
    %2805 = vmatprep.subr.bf16.mxu0 0
    %2806 = vmatpush1.bf16.msra.mxu0 0
    %2807 = vmatprep.subr.bf16.mxu0 0
    %2808 = vmatpush1.bf16.msra.mxu0 0
    %2809 = vmatprep.subr.bf16.mxu0 0
    %2810 = vmatpush1.bf16.msra.mxu0 0
    %2811 = vmatprep.subr.bf16.mxu0 0
    %2812 = vmatpush1.bf16.msra.mxu0 0
    %2813 = vmatprep.subr.bf16.mxu0 0
    %2814 = vmatpush1.bf16.msra.mxu0 0
    %2815 = vmatprep.subr.bf16.mxu0 0
    %2816 = vmatpush1.bf16.msra.mxu0 %v2799
    %2817 = vmatprep.subr.bf16.mxu0 0
    %2818 = vmatpush2.bf16.msra.mxu0 0
    %2819 = vmatprep.subr.bf16.mxu0 0
    %2820 = vmatpush2.bf16.msra.mxu0 0
    %2821 = vmatprep.subr.bf16.mxu0 0
    %2822 = vmatpush2.bf16.msra.mxu0 0
    %2823 = vmatprep.subr.bf16.mxu0 0
    %2824 = vmatpush2.bf16.msra.mxu0 0
    %2825 = vmatprep.subr.bf16.mxu0 0
    %2826 = vmatpush2.bf16.msra.mxu0 0
    %2827 = vmatprep.subr.bf16.mxu0 0
    %2828 = vmatpush2.bf16.msra.mxu0 0
    %2829 = vmatprep.subr.bf16.mxu0 0
    %2830 = vmatpush2.bf16.msra.mxu0 0
    %2831 = vmatprep.subr.bf16.mxu0 0
    %2832 = vmatpush2.bf16.msra.mxu0 0
    %2833 = vmatprep.mubr.bf16.mxu0 0
    %2834 = vmatmul.mubr.bf16.gmra.mxu0 %v85
    %v2835 = vpop.f32.mrf.mxu0
    %v2836 = vadd.f32 0.0, %v2835
    %v2837 = vpop.f32.mrf.mxu0
    %v2838 = vpop.f32.mrf.mxu0
    %v2839 = vpop.f32.mrf.mxu0
    %2840 = vdwg.mxu0
    %v2842 = vsel %vm87, %v2794, 0
    %2844 = vmatprep.subr.bf16.mxu0 0
    %2845 = vmatpush1.bf16.msra.mxu0 0
    %2846 = vmatprep.subr.bf16.mxu0 0
    %2847 = vmatpush1.bf16.msra.mxu0 0
    %2848 = vmatprep.subr.bf16.mxu0 0
    %2849 = vmatpush1.bf16.msra.mxu0 0
    %2850 = vmatprep.subr.bf16.mxu0 0
    %2851 = vmatpush1.bf16.msra.mxu0 0
    %2852 = vmatprep.subr.bf16.mxu0 0
    %2853 = vmatpush1.bf16.msra.mxu0 0
    %2854 = vmatprep.subr.bf16.mxu0 0
    %2855 = vmatpush1.bf16.msra.mxu0 0
    %2856 = vmatprep.subr.bf16.mxu0 0
    %2857 = vmatpush1.bf16.msra.mxu0 0
    %2858 = vmatprep.subr.bf16.mxu0 0
    %2859 = vmatpush1.bf16.msra.mxu0 %v2842
    %2860 = vmatprep.subr.bf16.mxu0 0
    %2861 = vmatpush2.bf16.msra.mxu0 0
    %2862 = vmatprep.subr.bf16.mxu0 0
    %2863 = vmatpush2.bf16.msra.mxu0 0
    %2864 = vmatprep.subr.bf16.mxu0 0
    %2865 = vmatpush2.bf16.msra.mxu0 0
    %2866 = vmatprep.subr.bf16.mxu0 0
    %2867 = vmatpush2.bf16.msra.mxu0 0
    %2868 = vmatprep.subr.bf16.mxu0 0
    %2869 = vmatpush2.bf16.msra.mxu0 0
    %2870 = vmatprep.subr.bf16.mxu0 0
    %2871 = vmatpush2.bf16.msra.mxu0 0
    %2872 = vmatprep.subr.bf16.mxu0 0
    %2873 = vmatpush2.bf16.msra.mxu0 0
    %2874 = vmatprep.subr.bf16.mxu0 0
    %2875 = vmatpush2.bf16.msra.mxu0 0
    %2876 = vmatprep.mubr.bf16.mxu0 0
    %2877 = vmatmul.mubr.bf16.gmra.mxu0 %v132
    %v2878 = vpop.f32.mrf.mxu0
    %v2879 = vadd.f32 %v2836, %v2878
    %v2880 = vpop.f32.mrf.mxu0
    %v2881 = vpop.f32.mrf.mxu0
    %v2882 = vpop.f32.mrf.mxu0
    %2883 = vdwg.mxu0
    %2884 = vmatprep.subr.bf16.mxu0 0
    %2885 = vmatpush1.bf16.msra.mxu0 0
    %2886 = vmatprep.subr.bf16.mxu0 0
    %2887 = vmatpush1.bf16.msra.mxu0 0
    %2888 = vmatprep.subr.bf16.mxu0 0
    %2889 = vmatpush1.bf16.msra.mxu0 0
    %2890 = vmatprep.subr.bf16.mxu0 0
    %2891 = vmatpush1.bf16.msra.mxu0 0
    %2892 = vmatprep.subr.bf16.mxu0 0
    %2893 = vmatpush1.bf16.msra.mxu0 0
    %2894 = vmatprep.subr.bf16.mxu0 0
    %2895 = vmatpush1.bf16.msra.mxu0 0
    %2896 = vmatprep.subr.bf16.mxu0 0
    %2897 = vmatpush1.bf16.msra.mxu0 0
    %2898 = vmatprep.subr.bf16.mxu0 0
    %2899 = vmatpush1.bf16.msra.mxu0 %v2799
    %2900 = vmatprep.subr.bf16.mxu0 0
    %2901 = vmatpush2.bf16.msra.mxu0 0
    %2902 = vmatprep.subr.bf16.mxu0 0
    %2903 = vmatpush2.bf16.msra.mxu0 0
    %2904 = vmatprep.subr.bf16.mxu0 0
    %2905 = vmatpush2.bf16.msra.mxu0 0
    %2906 = vmatprep.subr.bf16.mxu0 0
    %2907 = vmatpush2.bf16.msra.mxu0 0
    %2908 = vmatprep.subr.bf16.mxu0 0
    %2909 = vmatpush2.bf16.msra.mxu0 0
    %2910 = vmatprep.subr.bf16.mxu0 0
    %2911 = vmatpush2.bf16.msra.mxu0 0
    %2912 = vmatprep.subr.bf16.mxu0 0
    %2913 = vmatpush2.bf16.msra.mxu0 0
    %2914 = vmatprep.subr.bf16.mxu0 0
    %2915 = vmatpush2.bf16.msra.mxu0 0
    %2916 = vmatprep.mubr.bf16.mxu0 0
    %2917 = vmatmul.mubr.bf16.gmra.mxu0 %v183
    %v2918 = vpop.f32.mrf.mxu0
    %v2919 = vadd.f32 0.0, %v2918
    %v2920 = vpop.f32.mrf.mxu0
    %v2921 = vpop.f32.mrf.mxu0
    %v2922 = vpop.f32.mrf.mxu0
    %2923 = vdwg.mxu0
    %2924 = vmatprep.subr.bf16.mxu0 0
    %2925 = vmatpush1.bf16.msra.mxu0 0
    %2926 = vmatprep.subr.bf16.mxu0 0
    %2927 = vmatpush1.bf16.msra.mxu0 0
    %2928 = vmatprep.subr.bf16.mxu0 0
    %2929 = vmatpush1.bf16.msra.mxu0 0
    %2930 = vmatprep.subr.bf16.mxu0 0
    %2931 = vmatpush1.bf16.msra.mxu0 0
    %2932 = vmatprep.subr.bf16.mxu0 0
    %2933 = vmatpush1.bf16.msra.mxu0 0
    %2934 = vmatprep.subr.bf16.mxu0 0
    %2935 = vmatpush1.bf16.msra.mxu0 0
    %2936 = vmatprep.subr.bf16.mxu0 0
    %2937 = vmatpush1.bf16.msra.mxu0 0
    %2938 = vmatprep.subr.bf16.mxu0 0
    %2939 = vmatpush1.bf16.msra.mxu0 %v2842
    %2940 = vmatprep.subr.bf16.mxu0 0
    %2941 = vmatpush2.bf16.msra.mxu0 0
    %2942 = vmatprep.subr.bf16.mxu0 0
    %2943 = vmatpush2.bf16.msra.mxu0 0
    %2944 = vmatprep.subr.bf16.mxu0 0
    %2945 = vmatpush2.bf16.msra.mxu0 0
    %2946 = vmatprep.subr.bf16.mxu0 0
    %2947 = vmatpush2.bf16.msra.mxu0 0
    %2948 = vmatprep.subr.bf16.mxu0 0
    %2949 = vmatpush2.bf16.msra.mxu0 0
    %2950 = vmatprep.subr.bf16.mxu0 0
    %2951 = vmatpush2.bf16.msra.mxu0 0
    %2952 = vmatprep.subr.bf16.mxu0 0
    %2953 = vmatpush2.bf16.msra.mxu0 0
    %2954 = vmatprep.subr.bf16.mxu0 0
    %2955 = vmatpush2.bf16.msra.mxu0 0
    %2956 = vmatprep.mubr.bf16.mxu0 0
    %2957 = vmatmul.mubr.bf16.gmra.mxu0 %v226
    %v2958 = vpop.f32.mrf.mxu0
    %v2959 = vadd.f32 %v2919, %v2958
    %v2960 = vpop.f32.mrf.mxu0
    %v2961 = vpop.f32.mrf.mxu0
    %v2962 = vpop.f32.mrf.mxu0
    %2963 = vdwg.mxu0
    %v2965 = vsel %vm270, %v2959, 0
    %2967 = vmatprep.subr.mxu0 0.0
    %2968 = vmatpush1.msra.mxu0 0.0
    %2969 = vmatprep.subr.mxu0 0.0
    %2970 = vmatpush1.msra.mxu0 0.0
    %2971 = vmatprep.subr.mxu0 0.0
    %2972 = vmatpush1.msra.mxu0 0.0
    %2973 = vmatprep.subr.mxu0 0.0
    %2974 = vmatpush1.msra.mxu0 0.0
    %2975 = vmatprep.subr.mxu0 0.0
    %2976 = vmatpush1.msra.mxu0 0.0
    %2977 = vmatprep.subr.mxu0 0.0
    %2978 = vmatpush1.msra.mxu0 0.0
    %2979 = vmatprep.subr.mxu0 0.0
    %2980 = vmatpush1.msra.mxu0 0.0
    %2981 = vmatprep.subr.mxu0 0.0
    %2982 = vmatpush1.msra.mxu0 0.0
    %2983 = vmatprep.subr.mxu0 0.0
    %2984 = vmatpush1.msra.mxu0 0.0
    %2985 = vmatprep.subr.mxu0 0.0
    %2986 = vmatpush1.msra.mxu0 0.0
    %2987 = vmatprep.subr.mxu0 0.0
    %2988 = vmatpush1.msra.mxu0 0.0
    %2989 = vmatprep.subr.mxu0 0.0
    %2990 = vmatpush1.msra.mxu0 0.0
    %2991 = vmatprep.subr.mxu0 0.0
    %2992 = vmatpush1.msra.mxu0 0.0
    %2993 = vmatprep.subr.mxu0 0.0
    %2994 = vmatpush1.msra.mxu0 0.0
    %2995 = vmatprep.subr.mxu0 0.0
    %2996 = vmatpush1.msra.mxu0 0.0
    %2997 = vmatprep.subr.mxu0 0.0
    %2998 = vmatpush1.msra.mxu0 %v275
    %2999 = vmatprep.subr.mxu0 0.0
    %3000 = vmatpush2.msra.mxu0 0.0
    %3001 = vmatprep.subr.mxu0 0.0
    %3002 = vmatpush2.msra.mxu0 0.0
    %3003 = vmatprep.subr.mxu0 0.0
    %3004 = vmatpush2.msra.mxu0 0.0
    %3005 = vmatprep.subr.mxu0 0.0
    %3006 = vmatpush2.msra.mxu0 0.0
    %3007 = vmatprep.subr.mxu0 0.0
    %3008 = vmatpush2.msra.mxu0 0.0
    %3009 = vmatprep.subr.mxu0 0.0
    %3010 = vmatpush2.msra.mxu0 0.0
    %3011 = vmatprep.subr.mxu0 0.0
    %3012 = vmatpush2.msra.mxu0 0.0
    %3013 = vmatprep.subr.mxu0 0.0
    %3014 = vmatpush2.msra.mxu0 0.0
    %3015 = vmatprep.subr.mxu0 0.0
    %3016 = vmatpush2.msra.mxu0 0.0
    %3017 = vmatprep.subr.mxu0 0.0
    %3018 = vmatpush2.msra.mxu0 0.0
    %3019 = vmatprep.subr.mxu0 0.0
    %3020 = vmatpush2.msra.mxu0 0.0
    %3021 = vmatprep.subr.mxu0 0.0
    %3022 = vmatpush2.msra.mxu0 0.0
    %3023 = vmatprep.subr.mxu0 0.0
    %3024 = vmatpush2.msra.mxu0 0.0
    %3025 = vmatprep.subr.mxu0 0.0
    %3026 = vmatpush2.msra.mxu0 0.0
    %3027 = vmatprep.subr.mxu0 0.0
    %3028 = vmatpush2.msra.mxu0 0.0
    %3029 = vmatprep.subr.mxu0 0.0
    %3030 = vmatpush2.msra.mxu0 0.0
    %3031 = vmatprep.mubr.f32.mxu0 0.0
    %3032 = vmatmul.mubr.f32.gmra.mxu0 %v2965
    %v3033 = vpop.f32.mrf.mxu0
    %v3034 = vadd.f32 0.0, %v3033
    %v3035 = vpop.f32.mrf.mxu0
    %3036 = vdwg.mxu0
    %v3038 = vsel %vm270, %v2879, 0
    %3040 = vmatprep.subr.mxu0 0.0
    %3041 = vmatpush1.msra.mxu0 0.0
    %3042 = vmatprep.subr.mxu0 0.0
    %3043 = vmatpush1.msra.mxu0 0.0
    %3044 = vmatprep.subr.mxu0 0.0
    %3045 = vmatpush1.msra.mxu0 0.0
    %3046 = vmatprep.subr.mxu0 0.0
    %3047 = vmatpush1.msra.mxu0 0.0
    %3048 = vmatprep.subr.mxu0 0.0
    %3049 = vmatpush1.msra.mxu0 0.0
    %3050 = vmatprep.subr.mxu0 0.0
    %3051 = vmatpush1.msra.mxu0 0.0
    %3052 = vmatprep.subr.mxu0 0.0
    %3053 = vmatpush1.msra.mxu0 0.0
    %3054 = vmatprep.subr.mxu0 0.0
    %3055 = vmatpush1.msra.mxu0 0.0
    %3056 = vmatprep.subr.mxu0 0.0
    %3057 = vmatpush1.msra.mxu0 0.0
    %3058 = vmatprep.subr.mxu0 0.0
    %3059 = vmatpush1.msra.mxu0 0.0
    %3060 = vmatprep.subr.mxu0 0.0
    %3061 = vmatpush1.msra.mxu0 0.0
    %3062 = vmatprep.subr.mxu0 0.0
    %3063 = vmatpush1.msra.mxu0 0.0
    %3064 = vmatprep.subr.mxu0 0.0
    %3065 = vmatpush1.msra.mxu0 0.0
    %3066 = vmatprep.subr.mxu0 0.0
    %3067 = vmatpush1.msra.mxu0 0.0
    %3068 = vmatprep.subr.mxu0 0.0
    %3069 = vmatpush1.msra.mxu0 0.0
    %3070 = vmatprep.subr.mxu0 0.0
    %3071 = vmatpush1.msra.mxu0 %v351
    %3072 = vmatprep.subr.mxu0 0.0
    %3073 = vmatpush2.msra.mxu0 0.0
    %3074 = vmatprep.subr.mxu0 0.0
    %3075 = vmatpush2.msra.mxu0 0.0
    %3076 = vmatprep.subr.mxu0 0.0
    %3077 = vmatpush2.msra.mxu0 0.0
    %3078 = vmatprep.subr.mxu0 0.0
    %3079 = vmatpush2.msra.mxu0 0.0
    %3080 = vmatprep.subr.mxu0 0.0
    %3081 = vmatpush2.msra.mxu0 0.0
    %3082 = vmatprep.subr.mxu0 0.0
    %3083 = vmatpush2.msra.mxu0 0.0
    %3084 = vmatprep.subr.mxu0 0.0
    %3085 = vmatpush2.msra.mxu0 0.0
    %3086 = vmatprep.subr.mxu0 0.0
    %3087 = vmatpush2.msra.mxu0 0.0
    %3088 = vmatprep.subr.mxu0 0.0
    %3089 = vmatpush2.msra.mxu0 0.0
    %3090 = vmatprep.subr.mxu0 0.0
    %3091 = vmatpush2.msra.mxu0 0.0
    %3092 = vmatprep.subr.mxu0 0.0
    %3093 = vmatpush2.msra.mxu0 0.0
    %3094 = vmatprep.subr.mxu0 0.0
    %3095 = vmatpush2.msra.mxu0 0.0
    %3096 = vmatprep.subr.mxu0 0.0
    %3097 = vmatpush2.msra.mxu0 0.0
    %3098 = vmatprep.subr.mxu0 0.0
    %3099 = vmatpush2.msra.mxu0 0.0
    %3100 = vmatprep.subr.mxu0 0.0
    %3101 = vmatpush2.msra.mxu0 0.0
    %3102 = vmatprep.subr.mxu0 0.0
    %3103 = vmatpush2.msra.mxu0 0.0
    %3104 = vmatprep.mubr.f32.mxu0 0.0
    %3105 = vmatmul.mubr.f32.gmra.mxu0 %v3038
    %v3106 = vpop.f32.mrf.mxu0
    %v3107 = vadd.f32 %v3034, %v3106
    %v3108 = vpop.f32.mrf.mxu0
    %3109 = vdwg.mxu0
    %3110 = vmatprep.subr.bf16.mxu0 0
    %3111 = vmatpush1.bf16.msra.mxu0 0
    %3112 = vmatprep.subr.bf16.mxu0 0
    %3113 = vmatpush1.bf16.msra.mxu0 0
    %3114 = vmatprep.subr.bf16.mxu0 0
    %3115 = vmatpush1.bf16.msra.mxu0 0
    %3116 = vmatprep.subr.bf16.mxu0 0
    %3117 = vmatpush1.bf16.msra.mxu0 0
    %3118 = vmatprep.subr.bf16.mxu0 0
    %3119 = vmatpush1.bf16.msra.mxu0 0
    %3120 = vmatprep.subr.bf16.mxu0 0
    %3121 = vmatpush1.bf16.msra.mxu0 0
    %3122 = vmatprep.subr.bf16.mxu0 0
    %3123 = vmatpush1.bf16.msra.mxu0 0
    %3124 = vmatprep.subr.bf16.mxu0 0
    %3125 = vmatpush1.bf16.msra.mxu0 %v2799
    %3126 = vmatprep.subr.bf16.mxu0 0
    %3127 = vmatpush2.bf16.msra.mxu0 0
    %3128 = vmatprep.subr.bf16.mxu0 0
    %3129 = vmatpush2.bf16.msra.mxu0 0
    %3130 = vmatprep.subr.bf16.mxu0 0
    %3131 = vmatpush2.bf16.msra.mxu0 0
    %3132 = vmatprep.subr.bf16.mxu0 0
    %3133 = vmatpush2.bf16.msra.mxu0 0
    %3134 = vmatprep.subr.bf16.mxu0 0
    %3135 = vmatpush2.bf16.msra.mxu0 0
    %3136 = vmatprep.subr.bf16.mxu0 0
    %3137 = vmatpush2.bf16.msra.mxu0 0
    %3138 = vmatprep.subr.bf16.mxu0 0
    %3139 = vmatpush2.bf16.msra.mxu0 0
    %3140 = vmatprep.subr.bf16.mxu0 0
    %3141 = vmatpush2.bf16.msra.mxu0 0
    %3142 = vmatprep.mubr.bf16.mxu0 0
    %3143 = vmatmul.mubr.bf16.gmra.mxu0 %v428
    %v3144 = vpop.f32.mrf.mxu0
    %v3145 = vadd.f32 0.0, %v3144
    %v3146 = vpop.f32.mrf.mxu0
    %v3147 = vpop.f32.mrf.mxu0
    %v3148 = vpop.f32.mrf.mxu0
    %3149 = vdwg.mxu0
    %3150 = vmatprep.subr.bf16.mxu0 0
    %3151 = vmatpush1.bf16.msra.mxu0 0
    %3152 = vmatprep.subr.bf16.mxu0 0
    %3153 = vmatpush1.bf16.msra.mxu0 0
    %3154 = vmatprep.subr.bf16.mxu0 0
    %3155 = vmatpush1.bf16.msra.mxu0 0
    %3156 = vmatprep.subr.bf16.mxu0 0
    %3157 = vmatpush1.bf16.msra.mxu0 0
    %3158 = vmatprep.subr.bf16.mxu0 0
    %3159 = vmatpush1.bf16.msra.mxu0 0
    %3160 = vmatprep.subr.bf16.mxu0 0
    %3161 = vmatpush1.bf16.msra.mxu0 0
    %3162 = vmatprep.subr.bf16.mxu0 0
    %3163 = vmatpush1.bf16.msra.mxu0 0
    %3164 = vmatprep.subr.bf16.mxu0 0
    %3165 = vmatpush1.bf16.msra.mxu0 %v2842
    %3166 = vmatprep.subr.bf16.mxu0 0
    %3167 = vmatpush2.bf16.msra.mxu0 0
    %3168 = vmatprep.subr.bf16.mxu0 0
    %3169 = vmatpush2.bf16.msra.mxu0 0
    %3170 = vmatprep.subr.bf16.mxu0 0
    %3171 = vmatpush2.bf16.msra.mxu0 0
    %3172 = vmatprep.subr.bf16.mxu0 0
    %3173 = vmatpush2.bf16.msra.mxu0 0
    %3174 = vmatprep.subr.bf16.mxu0 0
    %3175 = vmatpush2.bf16.msra.mxu0 0
    %3176 = vmatprep.subr.bf16.mxu0 0
    %3177 = vmatpush2.bf16.msra.mxu0 0
    %3178 = vmatprep.subr.bf16.mxu0 0
    %3179 = vmatpush2.bf16.msra.mxu0 0
    %3180 = vmatprep.subr.bf16.mxu0 0
    %3181 = vmatpush2.bf16.msra.mxu0 0
    %3182 = vmatprep.mubr.bf16.mxu0 0
    %3183 = vmatmul.mubr.bf16.gmra.mxu0 %v471
    %v3184 = vpop.f32.mrf.mxu0
    %v3185 = vadd.f32 %v3145, %v3184
    %v3186 = vpop.f32.mrf.mxu0
    %v3187 = vpop.f32.mrf.mxu0
    %v3188 = vpop.f32.mrf.mxu0
    %3189 = vdwg.mxu0
    %v3191 = vsel %vm270, %v3185, 0
    %3193 = vmatprep.subr.mxu0 0.0
    %3194 = vmatpush1.msra.mxu0 0.0
    %3195 = vmatprep.subr.mxu0 0.0
    %3196 = vmatpush1.msra.mxu0 0.0
    %3197 = vmatprep.subr.mxu0 0.0
    %3198 = vmatpush1.msra.mxu0 0.0
    %3199 = vmatprep.subr.mxu0 0.0
    %3200 = vmatpush1.msra.mxu0 0.0
    %3201 = vmatprep.subr.mxu0 0.0
    %3202 = vmatpush1.msra.mxu0 0.0
    %3203 = vmatprep.subr.mxu0 0.0
    %3204 = vmatpush1.msra.mxu0 0.0
    %3205 = vmatprep.subr.mxu0 0.0
    %3206 = vmatpush1.msra.mxu0 0.0
    %3207 = vmatprep.subr.mxu0 0.0
    %3208 = vmatpush1.msra.mxu0 0.0
    %3209 = vmatprep.subr.mxu0 0.0
    %3210 = vmatpush1.msra.mxu0 0.0
    %3211 = vmatprep.subr.mxu0 0.0
    %3212 = vmatpush1.msra.mxu0 0.0
    %3213 = vmatprep.subr.mxu0 0.0
    %3214 = vmatpush1.msra.mxu0 0.0
    %3215 = vmatprep.subr.mxu0 0.0
    %3216 = vmatpush1.msra.mxu0 0.0
    %3217 = vmatprep.subr.mxu0 0.0
    %3218 = vmatpush1.msra.mxu0 0.0
    %3219 = vmatprep.subr.mxu0 0.0
    %3220 = vmatpush1.msra.mxu0 0.0
    %3221 = vmatprep.subr.mxu0 0.0
    %3222 = vmatpush1.msra.mxu0 0.0
    %3223 = vmatprep.subr.mxu0 0.0
    %3224 = vmatpush1.msra.mxu0 %v519
    %3225 = vmatprep.subr.mxu0 0.0
    %3226 = vmatpush2.msra.mxu0 0.0
    %3227 = vmatprep.subr.mxu0 0.0
    %3228 = vmatpush2.msra.mxu0 0.0
    %3229 = vmatprep.subr.mxu0 0.0
    %3230 = vmatpush2.msra.mxu0 0.0
    %3231 = vmatprep.subr.mxu0 0.0
    %3232 = vmatpush2.msra.mxu0 0.0
    %3233 = vmatprep.subr.mxu0 0.0
    %3234 = vmatpush2.msra.mxu0 0.0
    %3235 = vmatprep.subr.mxu0 0.0
    %3236 = vmatpush2.msra.mxu0 0.0
    %3237 = vmatprep.subr.mxu0 0.0
    %3238 = vmatpush2.msra.mxu0 0.0
    %3239 = vmatprep.subr.mxu0 0.0
    %3240 = vmatpush2.msra.mxu0 0.0
    %3241 = vmatprep.subr.mxu0 0.0
    %3242 = vmatpush2.msra.mxu0 0.0
    %3243 = vmatprep.subr.mxu0 0.0
    %3244 = vmatpush2.msra.mxu0 0.0
    %3245 = vmatprep.subr.mxu0 0.0
    %3246 = vmatpush2.msra.mxu0 0.0
    %3247 = vmatprep.subr.mxu0 0.0
    %3248 = vmatpush2.msra.mxu0 0.0
    %3249 = vmatprep.subr.mxu0 0.0
    %3250 = vmatpush2.msra.mxu0 0.0
    %3251 = vmatprep.subr.mxu0 0.0
    %3252 = vmatpush2.msra.mxu0 0.0
    %3253 = vmatprep.subr.mxu0 0.0
    %3254 = vmatpush2.msra.mxu0 0.0
    %3255 = vmatprep.subr.mxu0 0.0
    %3256 = vmatpush2.msra.mxu0 0.0
    %3257 = vmatprep.mubr.f32.mxu0 0.0
    %3258 = vmatmul.mubr.f32.gmra.mxu0 %v3191
    %v3259 = vpop.f32.mrf.mxu0
    %v3260 = vadd.f32 0.0, %v3259
    %v3261 = vpop.f32.mrf.mxu0
    %3262 = vdwg.mxu0
    %v3263 = vadd.f32 %v3107, %v3260
    %3264 = vmatprep.subr.bf16.mxu0 0
    %3265 = vmatpush1.bf16.msra.mxu0 0
    %3266 = vmatprep.subr.bf16.mxu0 0
    %3267 = vmatpush1.bf16.msra.mxu0 0
    %3268 = vmatprep.subr.bf16.mxu0 0
    %3269 = vmatpush1.bf16.msra.mxu0 0
    %3270 = vmatprep.subr.bf16.mxu0 0
    %3271 = vmatpush1.bf16.msra.mxu0 0
    %3272 = vmatprep.subr.bf16.mxu0 0
    %3273 = vmatpush1.bf16.msra.mxu0 0
    %3274 = vmatprep.subr.bf16.mxu0 0
    %3275 = vmatpush1.bf16.msra.mxu0 0
    %3276 = vmatprep.subr.bf16.mxu0 0
    %3277 = vmatpush1.bf16.msra.mxu0 0
    %3278 = vmatprep.subr.bf16.mxu0 0
    %3279 = vmatpush1.bf16.msra.mxu0 %v2799
    %3280 = vmatprep.subr.bf16.mxu0 0
    %3281 = vmatpush2.bf16.msra.mxu0 0
    %3282 = vmatprep.subr.bf16.mxu0 0
    %3283 = vmatpush2.bf16.msra.mxu0 0
    %3284 = vmatprep.subr.bf16.mxu0 0
    %3285 = vmatpush2.bf16.msra.mxu0 0
    %3286 = vmatprep.subr.bf16.mxu0 0
    %3287 = vmatpush2.bf16.msra.mxu0 0
    %3288 = vmatprep.subr.bf16.mxu0 0
    %3289 = vmatpush2.bf16.msra.mxu0 0
    %3290 = vmatprep.subr.bf16.mxu0 0
    %3291 = vmatpush2.bf16.msra.mxu0 0
    %3292 = vmatprep.subr.bf16.mxu0 0
    %3293 = vmatpush2.bf16.msra.mxu0 0
    %3294 = vmatprep.subr.bf16.mxu0 0
    %3295 = vmatpush2.bf16.msra.mxu0 0
    %3296 = vmatprep.mubr.bf16.mxu0 0
    %3297 = vmatmul.mubr.bf16.gmra.mxu0 %v597
    %v3298 = vpop.f32.mrf.mxu0
    %v3299 = vadd.f32 0.0, %v3298
    %v3300 = vpop.f32.mrf.mxu0
    %v3301 = vpop.f32.mrf.mxu0
    %v3302 = vpop.f32.mrf.mxu0
    %3303 = vdwg.mxu0
    %3304 = vmatprep.subr.bf16.mxu0 0
    %3305 = vmatpush1.bf16.msra.mxu0 0
    %3306 = vmatprep.subr.bf16.mxu0 0
    %3307 = vmatpush1.bf16.msra.mxu0 0
    %3308 = vmatprep.subr.bf16.mxu0 0
    %3309 = vmatpush1.bf16.msra.mxu0 0
    %3310 = vmatprep.subr.bf16.mxu0 0
    %3311 = vmatpush1.bf16.msra.mxu0 0
    %3312 = vmatprep.subr.bf16.mxu0 0
    %3313 = vmatpush1.bf16.msra.mxu0 0
    %3314 = vmatprep.subr.bf16.mxu0 0
    %3315 = vmatpush1.bf16.msra.mxu0 0
    %3316 = vmatprep.subr.bf16.mxu0 0
    %3317 = vmatpush1.bf16.msra.mxu0 0
    %3318 = vmatprep.subr.bf16.mxu0 0
    %3319 = vmatpush1.bf16.msra.mxu0 %v2842
    %3320 = vmatprep.subr.bf16.mxu0 0
    %3321 = vmatpush2.bf16.msra.mxu0 0
    %3322 = vmatprep.subr.bf16.mxu0 0
    %3323 = vmatpush2.bf16.msra.mxu0 0
    %3324 = vmatprep.subr.bf16.mxu0 0
    %3325 = vmatpush2.bf16.msra.mxu0 0
    %3326 = vmatprep.subr.bf16.mxu0 0
    %3327 = vmatpush2.bf16.msra.mxu0 0
    %3328 = vmatprep.subr.bf16.mxu0 0
    %3329 = vmatpush2.bf16.msra.mxu0 0
    %3330 = vmatprep.subr.bf16.mxu0 0
    %3331 = vmatpush2.bf16.msra.mxu0 0
    %3332 = vmatprep.subr.bf16.mxu0 0
    %3333 = vmatpush2.bf16.msra.mxu0 0
    %3334 = vmatprep.subr.bf16.mxu0 0
    %3335 = vmatpush2.bf16.msra.mxu0 0
    %3336 = vmatprep.mubr.bf16.mxu0 0
    %3337 = vmatmul.mubr.bf16.gmra.mxu0 %v640
    %v3338 = vpop.f32.mrf.mxu0
    %v3339 = vadd.f32 %v3299, %v3338
    %v3340 = vpop.f32.mrf.mxu0
    %v3341 = vpop.f32.mrf.mxu0
    %v3342 = vpop.f32.mrf.mxu0
    %3343 = vdwg.mxu0
    %v3345 = vsel %vm270, %v3339, 0
    %3347 = vmatprep.subr.mxu0 0.0
    %3348 = vmatpush1.msra.mxu0 0.0
    %3349 = vmatprep.subr.mxu0 0.0
    %3350 = vmatpush1.msra.mxu0 0.0
    %3351 = vmatprep.subr.mxu0 0.0
    %3352 = vmatpush1.msra.mxu0 0.0
    %3353 = vmatprep.subr.mxu0 0.0
    %3354 = vmatpush1.msra.mxu0 0.0
    %3355 = vmatprep.subr.mxu0 0.0
    %3356 = vmatpush1.msra.mxu0 0.0
    %3357 = vmatprep.subr.mxu0 0.0
    %3358 = vmatpush1.msra.mxu0 0.0
    %3359 = vmatprep.subr.mxu0 0.0
    %3360 = vmatpush1.msra.mxu0 0.0
    %3361 = vmatprep.subr.mxu0 0.0
    %3362 = vmatpush1.msra.mxu0 0.0
    %3363 = vmatprep.subr.mxu0 0.0
    %3364 = vmatpush1.msra.mxu0 0.0
    %3365 = vmatprep.subr.mxu0 0.0
    %3366 = vmatpush1.msra.mxu0 0.0
    %3367 = vmatprep.subr.mxu0 0.0
    %3368 = vmatpush1.msra.mxu0 0.0
    %3369 = vmatprep.subr.mxu0 0.0
    %3370 = vmatpush1.msra.mxu0 0.0
    %3371 = vmatprep.subr.mxu0 0.0
    %3372 = vmatpush1.msra.mxu0 0.0
    %3373 = vmatprep.subr.mxu0 0.0
    %3374 = vmatpush1.msra.mxu0 0.0
    %3375 = vmatprep.subr.mxu0 0.0
    %3376 = vmatpush1.msra.mxu0 0.0
    %3377 = vmatprep.subr.mxu0 0.0
    %3378 = vmatpush1.msra.mxu0 %v688
    %3379 = vmatprep.subr.mxu0 0.0
    %3380 = vmatpush2.msra.mxu0 0.0
    %3381 = vmatprep.subr.mxu0 0.0
    %3382 = vmatpush2.msra.mxu0 0.0
    %3383 = vmatprep.subr.mxu0 0.0
    %3384 = vmatpush2.msra.mxu0 0.0
    %3385 = vmatprep.subr.mxu0 0.0
    %3386 = vmatpush2.msra.mxu0 0.0
    %3387 = vmatprep.subr.mxu0 0.0
    %3388 = vmatpush2.msra.mxu0 0.0
    %3389 = vmatprep.subr.mxu0 0.0
    %3390 = vmatpush2.msra.mxu0 0.0
    %3391 = vmatprep.subr.mxu0 0.0
    %3392 = vmatpush2.msra.mxu0 0.0
    %3393 = vmatprep.subr.mxu0 0.0
    %3394 = vmatpush2.msra.mxu0 0.0
    %3395 = vmatprep.subr.mxu0 0.0
    %3396 = vmatpush2.msra.mxu0 0.0
    %3397 = vmatprep.subr.mxu0 0.0
    %3398 = vmatpush2.msra.mxu0 0.0
    %3399 = vmatprep.subr.mxu0 0.0
    %3400 = vmatpush2.msra.mxu0 0.0
    %3401 = vmatprep.subr.mxu0 0.0
    %3402 = vmatpush2.msra.mxu0 0.0
    %3403 = vmatprep.subr.mxu0 0.0
    %3404 = vmatpush2.msra.mxu0 0.0
    %3405 = vmatprep.subr.mxu0 0.0
    %3406 = vmatpush2.msra.mxu0 0.0
    %3407 = vmatprep.subr.mxu0 0.0
    %3408 = vmatpush2.msra.mxu0 0.0
    %3409 = vmatprep.subr.mxu0 0.0
    %3410 = vmatpush2.msra.mxu0 0.0
    %3411 = vmatprep.mubr.f32.mxu0 0.0
    %3412 = vmatmul.mubr.f32.gmra.mxu0 %v3345
    %v3413 = vpop.f32.mrf.mxu0
    %v3414 = vadd.f32 0.0, %v3413
    %v3415 = vpop.f32.mrf.mxu0
    %3416 = vdwg.mxu0
    %v3417 = vadd.f32 %v3263, %v3414
    %3418 = vmatprep.subr.bf16.mxu0 0
    %3419 = vmatpush1.bf16.msra.mxu0 0
    %3420 = vmatprep.subr.bf16.mxu0 0
    %3421 = vmatpush1.bf16.msra.mxu0 0
    %3422 = vmatprep.subr.bf16.mxu0 0
    %3423 = vmatpush1.bf16.msra.mxu0 0
    %3424 = vmatprep.subr.bf16.mxu0 0
    %3425 = vmatpush1.bf16.msra.mxu0 0
    %3426 = vmatprep.subr.bf16.mxu0 0
    %3427 = vmatpush1.bf16.msra.mxu0 0
    %3428 = vmatprep.subr.bf16.mxu0 0
    %3429 = vmatpush1.bf16.msra.mxu0 0
    %3430 = vmatprep.subr.bf16.mxu0 0
    %3431 = vmatpush1.bf16.msra.mxu0 0
    %3432 = vmatprep.subr.bf16.mxu0 0
    %3433 = vmatpush1.bf16.msra.mxu0 %v2799
    %3434 = vmatprep.subr.bf16.mxu0 0
    %3435 = vmatpush2.bf16.msra.mxu0 0
    %3436 = vmatprep.subr.bf16.mxu0 0
    %3437 = vmatpush2.bf16.msra.mxu0 0
    %3438 = vmatprep.subr.bf16.mxu0 0
    %3439 = vmatpush2.bf16.msra.mxu0 0
    %3440 = vmatprep.subr.bf16.mxu0 0
    %3441 = vmatpush2.bf16.msra.mxu0 0
    %3442 = vmatprep.subr.bf16.mxu0 0
    %3443 = vmatpush2.bf16.msra.mxu0 0
    %3444 = vmatprep.subr.bf16.mxu0 0
    %3445 = vmatpush2.bf16.msra.mxu0 0
    %3446 = vmatprep.subr.bf16.mxu0 0
    %3447 = vmatpush2.bf16.msra.mxu0 0
    %3448 = vmatprep.subr.bf16.mxu0 0
    %3449 = vmatpush2.bf16.msra.mxu0 0
    %3450 = vmatprep.mubr.bf16.mxu0 0
    %3451 = vmatmul.mubr.bf16.gmra.mxu0 %v766
    %v3452 = vpop.f32.mrf.mxu0
    %v3453 = vadd.f32 0.0, %v3452
    %v3454 = vpop.f32.mrf.mxu0
    %v3455 = vpop.f32.mrf.mxu0
    %v3456 = vpop.f32.mrf.mxu0
    %3457 = vdwg.mxu0
    %3458 = vmatprep.subr.bf16.mxu0 0
    %3459 = vmatpush1.bf16.msra.mxu0 0
    %3460 = vmatprep.subr.bf16.mxu0 0
    %3461 = vmatpush1.bf16.msra.mxu0 0
    %3462 = vmatprep.subr.bf16.mxu0 0
    %3463 = vmatpush1.bf16.msra.mxu0 0
    %3464 = vmatprep.subr.bf16.mxu0 0
    %3465 = vmatpush1.bf16.msra.mxu0 0
    %3466 = vmatprep.subr.bf16.mxu0 0
    %3467 = vmatpush1.bf16.msra.mxu0 0
    %3468 = vmatprep.subr.bf16.mxu0 0
    %3469 = vmatpush1.bf16.msra.mxu0 0
    %3470 = vmatprep.subr.bf16.mxu0 0
    %3471 = vmatpush1.bf16.msra.mxu0 0
    %3472 = vmatprep.subr.bf16.mxu0 0
    %3473 = vmatpush1.bf16.msra.mxu0 %v2842
    %3474 = vmatprep.subr.bf16.mxu0 0
    %3475 = vmatpush2.bf16.msra.mxu0 0
    %3476 = vmatprep.subr.bf16.mxu0 0
    %3477 = vmatpush2.bf16.msra.mxu0 0
    %3478 = vmatprep.subr.bf16.mxu0 0
    %3479 = vmatpush2.bf16.msra.mxu0 0
    %3480 = vmatprep.subr.bf16.mxu0 0
    %3481 = vmatpush2.bf16.msra.mxu0 0
    %3482 = vmatprep.subr.bf16.mxu0 0
    %3483 = vmatpush2.bf16.msra.mxu0 0
    %3484 = vmatprep.subr.bf16.mxu0 0
    %3485 = vmatpush2.bf16.msra.mxu0 0
    %3486 = vmatprep.subr.bf16.mxu0 0
    %3487 = vmatpush2.bf16.msra.mxu0 0
    %3488 = vmatprep.subr.bf16.mxu0 0
    %3489 = vmatpush2.bf16.msra.mxu0 0
    %3490 = vmatprep.mubr.bf16.mxu0 0
    %3491 = vmatmul.mubr.bf16.gmra.mxu0 %v809
    %v3492 = vpop.f32.mrf.mxu0
    %v3493 = vadd.f32 %v3453, %v3492
    %v3494 = vpop.f32.mrf.mxu0
    %v3495 = vpop.f32.mrf.mxu0
    %v3496 = vpop.f32.mrf.mxu0
    %3497 = vdwg.mxu0
    %v3499 = vsel %vm270, %v3493, 0
    %3501 = vmatprep.subr.mxu0 0.0
    %3502 = vmatpush1.msra.mxu0 0.0
    %3503 = vmatprep.subr.mxu0 0.0
    %3504 = vmatpush1.msra.mxu0 0.0
    %3505 = vmatprep.subr.mxu0 0.0
    %3506 = vmatpush1.msra.mxu0 0.0
    %3507 = vmatprep.subr.mxu0 0.0
    %3508 = vmatpush1.msra.mxu0 0.0
    %3509 = vmatprep.subr.mxu0 0.0
    %3510 = vmatpush1.msra.mxu0 0.0
    %3511 = vmatprep.subr.mxu0 0.0
    %3512 = vmatpush1.msra.mxu0 0.0
    %3513 = vmatprep.subr.mxu0 0.0
    %3514 = vmatpush1.msra.mxu0 0.0
    %3515 = vmatprep.subr.mxu0 0.0
    %3516 = vmatpush1.msra.mxu0 0.0
    %3517 = vmatprep.subr.mxu0 0.0
    %3518 = vmatpush1.msra.mxu0 0.0
    %3519 = vmatprep.subr.mxu0 0.0
    %3520 = vmatpush1.msra.mxu0 0.0
    %3521 = vmatprep.subr.mxu0 0.0
    %3522 = vmatpush1.msra.mxu0 0.0
    %3523 = vmatprep.subr.mxu0 0.0
    %3524 = vmatpush1.msra.mxu0 0.0
    %3525 = vmatprep.subr.mxu0 0.0
    %3526 = vmatpush1.msra.mxu0 0.0
    %3527 = vmatprep.subr.mxu0 0.0
    %3528 = vmatpush1.msra.mxu0 0.0
    %3529 = vmatprep.subr.mxu0 0.0
    %3530 = vmatpush1.msra.mxu0 0.0
    %3531 = vmatprep.subr.mxu0 0.0
    %3532 = vmatpush1.msra.mxu0 %v857
    %3533 = vmatprep.subr.mxu0 0.0
    %3534 = vmatpush2.msra.mxu0 0.0
    %3535 = vmatprep.subr.mxu0 0.0
    %3536 = vmatpush2.msra.mxu0 0.0
    %3537 = vmatprep.subr.mxu0 0.0
    %3538 = vmatpush2.msra.mxu0 0.0
    %3539 = vmatprep.subr.mxu0 0.0
    %3540 = vmatpush2.msra.mxu0 0.0
    %3541 = vmatprep.subr.mxu0 0.0
    %3542 = vmatpush2.msra.mxu0 0.0
    %3543 = vmatprep.subr.mxu0 0.0
    %3544 = vmatpush2.msra.mxu0 0.0
    %3545 = vmatprep.subr.mxu0 0.0
    %3546 = vmatpush2.msra.mxu0 0.0
    %3547 = vmatprep.subr.mxu0 0.0
    %3548 = vmatpush2.msra.mxu0 0.0
    %3549 = vmatprep.subr.mxu0 0.0
    %3550 = vmatpush2.msra.mxu0 0.0
    %3551 = vmatprep.subr.mxu0 0.0
    %3552 = vmatpush2.msra.mxu0 0.0
    %3553 = vmatprep.subr.mxu0 0.0
    %3554 = vmatpush2.msra.mxu0 0.0
    %3555 = vmatprep.subr.mxu0 0.0
    %3556 = vmatpush2.msra.mxu0 0.0
    %3557 = vmatprep.subr.mxu0 0.0
    %3558 = vmatpush2.msra.mxu0 0.0
    %3559 = vmatprep.subr.mxu0 0.0
    %3560 = vmatpush2.msra.mxu0 0.0
    %3561 = vmatprep.subr.mxu0 0.0
    %3562 = vmatpush2.msra.mxu0 0.0
    %3563 = vmatprep.subr.mxu0 0.0
    %3564 = vmatpush2.msra.mxu0 0.0
    %3565 = vmatprep.mubr.f32.mxu0 0.0
    %3566 = vmatmul.mubr.f32.gmra.mxu0 %v3499
    %v3567 = vpop.f32.mrf.mxu0
    %v3568 = vadd.f32 0.0, %v3567
    %v3569 = vpop.f32.mrf.mxu0
    %3570 = vdwg.mxu0
    %v3571 = vadd.f32 %v3417, %v3568
    %3572 = vmatprep.subr.bf16.mxu0 0
    %3573 = vmatpush1.bf16.msra.mxu0 0
    %3574 = vmatprep.subr.bf16.mxu0 0
    %3575 = vmatpush1.bf16.msra.mxu0 0
    %3576 = vmatprep.subr.bf16.mxu0 0
    %3577 = vmatpush1.bf16.msra.mxu0 0
    %3578 = vmatprep.subr.bf16.mxu0 0
    %3579 = vmatpush1.bf16.msra.mxu0 0
    %3580 = vmatprep.subr.bf16.mxu0 0
    %3581 = vmatpush1.bf16.msra.mxu0 0
    %3582 = vmatprep.subr.bf16.mxu0 0
    %3583 = vmatpush1.bf16.msra.mxu0 0
    %3584 = vmatprep.subr.bf16.mxu0 0
    %3585 = vmatpush1.bf16.msra.mxu0 0
    %3586 = vmatprep.subr.bf16.mxu0 0
    %3587 = vmatpush1.bf16.msra.mxu0 %v2799
    %3588 = vmatprep.subr.bf16.mxu0 0
    %3589 = vmatpush2.bf16.msra.mxu0 0
    %3590 = vmatprep.subr.bf16.mxu0 0
    %3591 = vmatpush2.bf16.msra.mxu0 0
    %3592 = vmatprep.subr.bf16.mxu0 0
    %3593 = vmatpush2.bf16.msra.mxu0 0
    %3594 = vmatprep.subr.bf16.mxu0 0
    %3595 = vmatpush2.bf16.msra.mxu0 0
    %3596 = vmatprep.subr.bf16.mxu0 0
    %3597 = vmatpush2.bf16.msra.mxu0 0
    %3598 = vmatprep.subr.bf16.mxu0 0
    %3599 = vmatpush2.bf16.msra.mxu0 0
    %3600 = vmatprep.subr.bf16.mxu0 0
    %3601 = vmatpush2.bf16.msra.mxu0 0
    %3602 = vmatprep.subr.bf16.mxu0 0
    %3603 = vmatpush2.bf16.msra.mxu0 0
    %3604 = vmatprep.mubr.bf16.mxu0 0
    %3605 = vmatmul.mubr.bf16.gmra.mxu0 %v935
    %v3606 = vpop.f32.mrf.mxu0
    %v3607 = vadd.f32 0.0, %v3606
    %v3608 = vpop.f32.mrf.mxu0
    %v3609 = vpop.f32.mrf.mxu0
    %v3610 = vpop.f32.mrf.mxu0
    %3611 = vdwg.mxu0
    %3612 = vmatprep.subr.bf16.mxu0 0
    %3613 = vmatpush1.bf16.msra.mxu0 0
    %3614 = vmatprep.subr.bf16.mxu0 0
    %3615 = vmatpush1.bf16.msra.mxu0 0
    %3616 = vmatprep.subr.bf16.mxu0 0
    %3617 = vmatpush1.bf16.msra.mxu0 0
    %3618 = vmatprep.subr.bf16.mxu0 0
    %3619 = vmatpush1.bf16.msra.mxu0 0
    %3620 = vmatprep.subr.bf16.mxu0 0
    %3621 = vmatpush1.bf16.msra.mxu0 0
    %3622 = vmatprep.subr.bf16.mxu0 0
    %3623 = vmatpush1.bf16.msra.mxu0 0
    %3624 = vmatprep.subr.bf16.mxu0 0
    %3625 = vmatpush1.bf16.msra.mxu0 0
    %3626 = vmatprep.subr.bf16.mxu0 0
    %3627 = vmatpush1.bf16.msra.mxu0 %v2842
    %3628 = vmatprep.subr.bf16.mxu0 0
    %3629 = vmatpush2.bf16.msra.mxu0 0
    %3630 = vmatprep.subr.bf16.mxu0 0
    %3631 = vmatpush2.bf16.msra.mxu0 0
    %3632 = vmatprep.subr.bf16.mxu0 0
    %3633 = vmatpush2.bf16.msra.mxu0 0
    %3634 = vmatprep.subr.bf16.mxu0 0
    %3635 = vmatpush2.bf16.msra.mxu0 0
    %3636 = vmatprep.subr.bf16.mxu0 0
    %3637 = vmatpush2.bf16.msra.mxu0 0
    %3638 = vmatprep.subr.bf16.mxu0 0
    %3639 = vmatpush2.bf16.msra.mxu0 0
    %3640 = vmatprep.subr.bf16.mxu0 0
    %3641 = vmatpush2.bf16.msra.mxu0 0
    %3642 = vmatprep.subr.bf16.mxu0 0
    %3643 = vmatpush2.bf16.msra.mxu0 0
    %3644 = vmatprep.mubr.bf16.mxu0 0
    %3645 = vmatmul.mubr.bf16.gmra.mxu0 %v978
    %v3646 = vpop.f32.mrf.mxu0
    %v3647 = vadd.f32 %v3607, %v3646
    %v3648 = vpop.f32.mrf.mxu0
    %v3649 = vpop.f32.mrf.mxu0
    %v3650 = vpop.f32.mrf.mxu0
    %3651 = vdwg.mxu0
    %v3653 = vsel %vm270, %v3647, 0
    %3655 = vmatprep.subr.mxu0 0.0
    %3656 = vmatpush1.msra.mxu0 0.0
    %3657 = vmatprep.subr.mxu0 0.0
    %3658 = vmatpush1.msra.mxu0 0.0
    %3659 = vmatprep.subr.mxu0 0.0
    %3660 = vmatpush1.msra.mxu0 0.0
    %3661 = vmatprep.subr.mxu0 0.0
    %3662 = vmatpush1.msra.mxu0 0.0
    %3663 = vmatprep.subr.mxu0 0.0
    %3664 = vmatpush1.msra.mxu0 0.0
    %3665 = vmatprep.subr.mxu0 0.0
    %3666 = vmatpush1.msra.mxu0 0.0
    %3667 = vmatprep.subr.mxu0 0.0
    %3668 = vmatpush1.msra.mxu0 0.0
    %3669 = vmatprep.subr.mxu0 0.0
    %3670 = vmatpush1.msra.mxu0 0.0
    %3671 = vmatprep.subr.mxu0 0.0
    %3672 = vmatpush1.msra.mxu0 0.0
    %3673 = vmatprep.subr.mxu0 0.0
    %3674 = vmatpush1.msra.mxu0 0.0
    %3675 = vmatprep.subr.mxu0 0.0
    %3676 = vmatpush1.msra.mxu0 0.0
    %3677 = vmatprep.subr.mxu0 0.0
    %3678 = vmatpush1.msra.mxu0 0.0
    %3679 = vmatprep.subr.mxu0 0.0
    %3680 = vmatpush1.msra.mxu0 0.0
    %3681 = vmatprep.subr.mxu0 0.0
    %3682 = vmatpush1.msra.mxu0 0.0
    %3683 = vmatprep.subr.mxu0 0.0
    %3684 = vmatpush1.msra.mxu0 0.0
    %3685 = vmatprep.subr.mxu0 0.0
    %3686 = vmatpush1.msra.mxu0 %v1026
    %3687 = vmatprep.subr.mxu0 0.0
    %3688 = vmatpush2.msra.mxu0 0.0
    %3689 = vmatprep.subr.mxu0 0.0
    %3690 = vmatpush2.msra.mxu0 0.0
    %3691 = vmatprep.subr.mxu0 0.0
    %3692 = vmatpush2.msra.mxu0 0.0
    %3693 = vmatprep.subr.mxu0 0.0
    %3694 = vmatpush2.msra.mxu0 0.0
    %3695 = vmatprep.subr.mxu0 0.0
    %3696 = vmatpush2.msra.mxu0 0.0
    %3697 = vmatprep.subr.mxu0 0.0
    %3698 = vmatpush2.msra.mxu0 0.0
    %3699 = vmatprep.subr.mxu0 0.0
    %3700 = vmatpush2.msra.mxu0 0.0
    %3701 = vmatprep.subr.mxu0 0.0
    %3702 = vmatpush2.msra.mxu0 0.0
    %3703 = vmatprep.subr.mxu0 0.0
    %3704 = vmatpush2.msra.mxu0 0.0
    %3705 = vmatprep.subr.mxu0 0.0
    %3706 = vmatpush2.msra.mxu0 0.0
    %3707 = vmatprep.subr.mxu0 0.0
    %3708 = vmatpush2.msra.mxu0 0.0
    %3709 = vmatprep.subr.mxu0 0.0
    %3710 = vmatpush2.msra.mxu0 0.0
    %3711 = vmatprep.subr.mxu0 0.0
    %3712 = vmatpush2.msra.mxu0 0.0
    %3713 = vmatprep.subr.mxu0 0.0
    %3714 = vmatpush2.msra.mxu0 0.0
    %3715 = vmatprep.subr.mxu0 0.0
    %3716 = vmatpush2.msra.mxu0 0.0
    %3717 = vmatprep.subr.mxu0 0.0
    %3718 = vmatpush2.msra.mxu0 0.0
    %3719 = vmatprep.mubr.f32.mxu0 0.0
    %3720 = vmatmul.mubr.f32.gmra.mxu0 %v3653
    %v3721 = vpop.f32.mrf.mxu0
    %v3722 = vadd.f32 0.0, %v3721
    %v3723 = vpop.f32.mrf.mxu0
    %3724 = vdwg.mxu0
    %v3725 = vadd.f32 %v3571, %v3722
    %3726 = vmatprep.subr.bf16.mxu0 0
    %3727 = vmatpush1.bf16.msra.mxu0 0
    %3728 = vmatprep.subr.bf16.mxu0 0
    %3729 = vmatpush1.bf16.msra.mxu0 0
    %3730 = vmatprep.subr.bf16.mxu0 0
    %3731 = vmatpush1.bf16.msra.mxu0 0
    %3732 = vmatprep.subr.bf16.mxu0 0
    %3733 = vmatpush1.bf16.msra.mxu0 0
    %3734 = vmatprep.subr.bf16.mxu0 0
    %3735 = vmatpush1.bf16.msra.mxu0 0
    %3736 = vmatprep.subr.bf16.mxu0 0
    %3737 = vmatpush1.bf16.msra.mxu0 0
    %3738 = vmatprep.subr.bf16.mxu0 0
    %3739 = vmatpush1.bf16.msra.mxu0 0
    %3740 = vmatprep.subr.bf16.mxu0 0
    %3741 = vmatpush1.bf16.msra.mxu0 %v2799
    %3742 = vmatprep.subr.bf16.mxu0 0
    %3743 = vmatpush2.bf16.msra.mxu0 0
    %3744 = vmatprep.subr.bf16.mxu0 0
    %3745 = vmatpush2.bf16.msra.mxu0 0
    %3746 = vmatprep.subr.bf16.mxu0 0
    %3747 = vmatpush2.bf16.msra.mxu0 0
    %3748 = vmatprep.subr.bf16.mxu0 0
    %3749 = vmatpush2.bf16.msra.mxu0 0
    %3750 = vmatprep.subr.bf16.mxu0 0
    %3751 = vmatpush2.bf16.msra.mxu0 0
    %3752 = vmatprep.subr.bf16.mxu0 0
    %3753 = vmatpush2.bf16.msra.mxu0 0
    %3754 = vmatprep.subr.bf16.mxu0 0
    %3755 = vmatpush2.bf16.msra.mxu0 0
    %3756 = vmatprep.subr.bf16.mxu0 0
    %3757 = vmatpush2.bf16.msra.mxu0 0
    %3758 = vmatprep.mubr.bf16.mxu0 0
    %3759 = vmatmul.mubr.bf16.gmra.mxu0 %v1104
    %v3760 = vpop.f32.mrf.mxu0
    %v3761 = vadd.f32 0.0, %v3760
    %v3762 = vpop.f32.mrf.mxu0
    %v3763 = vpop.f32.mrf.mxu0
    %v3764 = vpop.f32.mrf.mxu0
    %3765 = vdwg.mxu0
    %3766 = vmatprep.subr.bf16.mxu0 0
    %3767 = vmatpush1.bf16.msra.mxu0 0
    %3768 = vmatprep.subr.bf16.mxu0 0
    %3769 = vmatpush1.bf16.msra.mxu0 0
    %3770 = vmatprep.subr.bf16.mxu0 0
    %3771 = vmatpush1.bf16.msra.mxu0 0
    %3772 = vmatprep.subr.bf16.mxu0 0
    %3773 = vmatpush1.bf16.msra.mxu0 0
    %3774 = vmatprep.subr.bf16.mxu0 0
    %3775 = vmatpush1.bf16.msra.mxu0 0
    %3776 = vmatprep.subr.bf16.mxu0 0
    %3777 = vmatpush1.bf16.msra.mxu0 0
    %3778 = vmatprep.subr.bf16.mxu0 0
    %3779 = vmatpush1.bf16.msra.mxu0 0
    %3780 = vmatprep.subr.bf16.mxu0 0
    %3781 = vmatpush1.bf16.msra.mxu0 %v2842
    %3782 = vmatprep.subr.bf16.mxu0 0
    %3783 = vmatpush2.bf16.msra.mxu0 0
    %3784 = vmatprep.subr.bf16.mxu0 0
    %3785 = vmatpush2.bf16.msra.mxu0 0
    %3786 = vmatprep.subr.bf16.mxu0 0
    %3787 = vmatpush2.bf16.msra.mxu0 0
    %3788 = vmatprep.subr.bf16.mxu0 0
    %3789 = vmatpush2.bf16.msra.mxu0 0
    %3790 = vmatprep.subr.bf16.mxu0 0
    %3791 = vmatpush2.bf16.msra.mxu0 0
    %3792 = vmatprep.subr.bf16.mxu0 0
    %3793 = vmatpush2.bf16.msra.mxu0 0
    %3794 = vmatprep.subr.bf16.mxu0 0
    %3795 = vmatpush2.bf16.msra.mxu0 0
    %3796 = vmatprep.subr.bf16.mxu0 0
    %3797 = vmatpush2.bf16.msra.mxu0 0
    %3798 = vmatprep.mubr.bf16.mxu0 0
    %3799 = vmatmul.mubr.bf16.gmra.mxu0 %v1147
    %v3800 = vpop.f32.mrf.mxu0
    %v3801 = vadd.f32 %v3761, %v3800
    %v3802 = vpop.f32.mrf.mxu0
    %v3803 = vpop.f32.mrf.mxu0
    %v3804 = vpop.f32.mrf.mxu0
    %3805 = vdwg.mxu0
    %v3807 = vsel %vm270, %v3801, 0
    %3809 = vmatprep.subr.mxu0 0.0
    %3810 = vmatpush1.msra.mxu0 0.0
    %3811 = vmatprep.subr.mxu0 0.0
    %3812 = vmatpush1.msra.mxu0 0.0
    %3813 = vmatprep.subr.mxu0 0.0
    %3814 = vmatpush1.msra.mxu0 0.0
    %3815 = vmatprep.subr.mxu0 0.0
    %3816 = vmatpush1.msra.mxu0 0.0
    %3817 = vmatprep.subr.mxu0 0.0
    %3818 = vmatpush1.msra.mxu0 0.0
    %3819 = vmatprep.subr.mxu0 0.0
    %3820 = vmatpush1.msra.mxu0 0.0
    %3821 = vmatprep.subr.mxu0 0.0
    %3822 = vmatpush1.msra.mxu0 0.0
    %3823 = vmatprep.subr.mxu0 0.0
    %3824 = vmatpush1.msra.mxu0 0.0
    %3825 = vmatprep.subr.mxu0 0.0
    %3826 = vmatpush1.msra.mxu0 0.0
    %3827 = vmatprep.subr.mxu0 0.0
    %3828 = vmatpush1.msra.mxu0 0.0
    %3829 = vmatprep.subr.mxu0 0.0
    %3830 = vmatpush1.msra.mxu0 0.0
    %3831 = vmatprep.subr.mxu0 0.0
    %3832 = vmatpush1.msra.mxu0 0.0
    %3833 = vmatprep.subr.mxu0 0.0
    %3834 = vmatpush1.msra.mxu0 0.0
    %3835 = vmatprep.subr.mxu0 0.0
    %3836 = vmatpush1.msra.mxu0 0.0
    %3837 = vmatprep.subr.mxu0 0.0
    %3838 = vmatpush1.msra.mxu0 0.0
    %3839 = vmatprep.subr.mxu0 0.0
    %3840 = vmatpush1.msra.mxu0 %v1195
    %3841 = vmatprep.subr.mxu0 0.0
    %3842 = vmatpush2.msra.mxu0 0.0
    %3843 = vmatprep.subr.mxu0 0.0
    %3844 = vmatpush2.msra.mxu0 0.0
    %3845 = vmatprep.subr.mxu0 0.0
    %3846 = vmatpush2.msra.mxu0 0.0
    %3847 = vmatprep.subr.mxu0 0.0
    %3848 = vmatpush2.msra.mxu0 0.0
    %3849 = vmatprep.subr.mxu0 0.0
    %3850 = vmatpush2.msra.mxu0 0.0
    %3851 = vmatprep.subr.mxu0 0.0
    %3852 = vmatpush2.msra.mxu0 0.0
    %3853 = vmatprep.subr.mxu0 0.0
    %3854 = vmatpush2.msra.mxu0 0.0
    %3855 = vmatprep.subr.mxu0 0.0
    %3856 = vmatpush2.msra.mxu0 0.0
    %3857 = vmatprep.subr.mxu0 0.0
    %3858 = vmatpush2.msra.mxu0 0.0
    %3859 = vmatprep.subr.mxu0 0.0
    %3860 = vmatpush2.msra.mxu0 0.0
    %3861 = vmatprep.subr.mxu0 0.0
    %3862 = vmatpush2.msra.mxu0 0.0
    %3863 = vmatprep.subr.mxu0 0.0
    %3864 = vmatpush2.msra.mxu0 0.0
    %3865 = vmatprep.subr.mxu0 0.0
    %3866 = vmatpush2.msra.mxu0 0.0
    %3867 = vmatprep.subr.mxu0 0.0
    %3868 = vmatpush2.msra.mxu0 0.0
    %3869 = vmatprep.subr.mxu0 0.0
    %3870 = vmatpush2.msra.mxu0 0.0
    %3871 = vmatprep.subr.mxu0 0.0
    %3872 = vmatpush2.msra.mxu0 0.0
    %3873 = vmatprep.mubr.f32.mxu0 0.0
    %3874 = vmatmul.mubr.f32.gmra.mxu0 %v3807
    %v3875 = vpop.f32.mrf.mxu0
    %v3876 = vadd.f32 0.0, %v3875
    %v3877 = vpop.f32.mrf.mxu0
    %3878 = vdwg.mxu0
    %v3879 = vadd.f32 %v3725, %v3876
    %3880 = vmatprep.subr.bf16.mxu0 0
    %3881 = vmatpush1.bf16.msra.mxu0 0
    %3882 = vmatprep.subr.bf16.mxu0 0
    %3883 = vmatpush1.bf16.msra.mxu0 0
    %3884 = vmatprep.subr.bf16.mxu0 0
    %3885 = vmatpush1.bf16.msra.mxu0 0
    %3886 = vmatprep.subr.bf16.mxu0 0
    %3887 = vmatpush1.bf16.msra.mxu0 0
    %3888 = vmatprep.subr.bf16.mxu0 0
    %3889 = vmatpush1.bf16.msra.mxu0 0
    %3890 = vmatprep.subr.bf16.mxu0 0
    %3891 = vmatpush1.bf16.msra.mxu0 0
    %3892 = vmatprep.subr.bf16.mxu0 0
    %3893 = vmatpush1.bf16.msra.mxu0 0
    %3894 = vmatprep.subr.bf16.mxu0 0
    %3895 = vmatpush1.bf16.msra.mxu0 %v2799
    %3896 = vmatprep.subr.bf16.mxu0 0
    %3897 = vmatpush2.bf16.msra.mxu0 0
    %3898 = vmatprep.subr.bf16.mxu0 0
    %3899 = vmatpush2.bf16.msra.mxu0 0
    %3900 = vmatprep.subr.bf16.mxu0 0
    %3901 = vmatpush2.bf16.msra.mxu0 0
    %3902 = vmatprep.subr.bf16.mxu0 0
    %3903 = vmatpush2.bf16.msra.mxu0 0
    %3904 = vmatprep.subr.bf16.mxu0 0
    %3905 = vmatpush2.bf16.msra.mxu0 0
    %3906 = vmatprep.subr.bf16.mxu0 0
    %3907 = vmatpush2.bf16.msra.mxu0 0
    %3908 = vmatprep.subr.bf16.mxu0 0
    %3909 = vmatpush2.bf16.msra.mxu0 0
    %3910 = vmatprep.subr.bf16.mxu0 0
    %3911 = vmatpush2.bf16.msra.mxu0 0
    %3912 = vmatprep.mubr.bf16.mxu0 0
    %3913 = vmatmul.mubr.bf16.gmra.mxu0 %v1273
    %v3914 = vpop.f32.mrf.mxu0
    %v3915 = vadd.f32 0.0, %v3914
    %v3916 = vpop.f32.mrf.mxu0
    %v3917 = vpop.f32.mrf.mxu0
    %v3918 = vpop.f32.mrf.mxu0
    %3919 = vdwg.mxu0
    %3920 = vmatprep.subr.bf16.mxu0 0
    %3921 = vmatpush1.bf16.msra.mxu0 0
    %3922 = vmatprep.subr.bf16.mxu0 0
    %3923 = vmatpush1.bf16.msra.mxu0 0
    %3924 = vmatprep.subr.bf16.mxu0 0
    %3925 = vmatpush1.bf16.msra.mxu0 0
    %3926 = vmatprep.subr.bf16.mxu0 0
    %3927 = vmatpush1.bf16.msra.mxu0 0
    %3928 = vmatprep.subr.bf16.mxu0 0
    %3929 = vmatpush1.bf16.msra.mxu0 0
    %3930 = vmatprep.subr.bf16.mxu0 0
    %3931 = vmatpush1.bf16.msra.mxu0 0
    %3932 = vmatprep.subr.bf16.mxu0 0
    %3933 = vmatpush1.bf16.msra.mxu0 0
    %3934 = vmatprep.subr.bf16.mxu0 0
    %3935 = vmatpush1.bf16.msra.mxu0 %v2842
    %3936 = vmatprep.subr.bf16.mxu0 0
    %3937 = vmatpush2.bf16.msra.mxu0 0
    %3938 = vmatprep.subr.bf16.mxu0 0
    %3939 = vmatpush2.bf16.msra.mxu0 0
    %3940 = vmatprep.subr.bf16.mxu0 0
    %3941 = vmatpush2.bf16.msra.mxu0 0
    %3942 = vmatprep.subr.bf16.mxu0 0
    %3943 = vmatpush2.bf16.msra.mxu0 0
    %3944 = vmatprep.subr.bf16.mxu0 0
    %3945 = vmatpush2.bf16.msra.mxu0 0
    %3946 = vmatprep.subr.bf16.mxu0 0
    %3947 = vmatpush2.bf16.msra.mxu0 0
    %3948 = vmatprep.subr.bf16.mxu0 0
    %3949 = vmatpush2.bf16.msra.mxu0 0
    %3950 = vmatprep.subr.bf16.mxu0 0
    %3951 = vmatpush2.bf16.msra.mxu0 0
    %3952 = vmatprep.mubr.bf16.mxu0 0
    %3953 = vmatmul.mubr.bf16.gmra.mxu0 %v1316
    %v3954 = vpop.f32.mrf.mxu0
    %v3955 = vadd.f32 %v3915, %v3954
    %v3956 = vpop.f32.mrf.mxu0
    %v3957 = vpop.f32.mrf.mxu0
    %v3958 = vpop.f32.mrf.mxu0
    %3959 = vdwg.mxu0
    %v3961 = vsel %vm270, %v3955, 0
    %3963 = vmatprep.subr.mxu0 0.0
    %3964 = vmatpush1.msra.mxu0 0.0
    %3965 = vmatprep.subr.mxu0 0.0
    %3966 = vmatpush1.msra.mxu0 0.0
    %3967 = vmatprep.subr.mxu0 0.0
    %3968 = vmatpush1.msra.mxu0 0.0
    %3969 = vmatprep.subr.mxu0 0.0
    %3970 = vmatpush1.msra.mxu0 0.0
    %3971 = vmatprep.subr.mxu0 0.0
    %3972 = vmatpush1.msra.mxu0 0.0
    %3973 = vmatprep.subr.mxu0 0.0
    %3974 = vmatpush1.msra.mxu0 0.0
    %3975 = vmatprep.subr.mxu0 0.0
    %3976 = vmatpush1.msra.mxu0 0.0
    %3977 = vmatprep.subr.mxu0 0.0
    %3978 = vmatpush1.msra.mxu0 0.0
    %3979 = vmatprep.subr.mxu0 0.0
    %3980 = vmatpush1.msra.mxu0 0.0
    %3981 = vmatprep.subr.mxu0 0.0
    %3982 = vmatpush1.msra.mxu0 0.0
    %3983 = vmatprep.subr.mxu0 0.0
    %3984 = vmatpush1.msra.mxu0 0.0
    %3985 = vmatprep.subr.mxu0 0.0
    %3986 = vmatpush1.msra.mxu0 0.0
    %3987 = vmatprep.subr.mxu0 0.0
    %3988 = vmatpush1.msra.mxu0 0.0
    %3989 = vmatprep.subr.mxu0 0.0
    %3990 = vmatpush1.msra.mxu0 0.0
    %3991 = vmatprep.subr.mxu0 0.0
    %3992 = vmatpush1.msra.mxu0 0.0
    %3993 = vmatprep.subr.mxu0 0.0
    %3994 = vmatpush1.msra.mxu0 %v1364
    %3995 = vmatprep.subr.mxu0 0.0
    %3996 = vmatpush2.msra.mxu0 0.0
    %3997 = vmatprep.subr.mxu0 0.0
    %3998 = vmatpush2.msra.mxu0 0.0
    %3999 = vmatprep.subr.mxu0 0.0
    %4000 = vmatpush2.msra.mxu0 0.0
    %4001 = vmatprep.subr.mxu0 0.0
    %4002 = vmatpush2.msra.mxu0 0.0
    %4003 = vmatprep.subr.mxu0 0.0
    %4004 = vmatpush2.msra.mxu0 0.0
    %4005 = vmatprep.subr.mxu0 0.0
    %4006 = vmatpush2.msra.mxu0 0.0
    %4007 = vmatprep.subr.mxu0 0.0
    %4008 = vmatpush2.msra.mxu0 0.0
    %4009 = vmatprep.subr.mxu0 0.0
    %4010 = vmatpush2.msra.mxu0 0.0
    %4011 = vmatprep.subr.mxu0 0.0
    %4012 = vmatpush2.msra.mxu0 0.0
    %4013 = vmatprep.subr.mxu0 0.0
    %4014 = vmatpush2.msra.mxu0 0.0
    %4015 = vmatprep.subr.mxu0 0.0
    %4016 = vmatpush2.msra.mxu0 0.0
    %4017 = vmatprep.subr.mxu0 0.0
    %4018 = vmatpush2.msra.mxu0 0.0
    %4019 = vmatprep.subr.mxu0 0.0
    %4020 = vmatpush2.msra.mxu0 0.0
    %4021 = vmatprep.subr.mxu0 0.0
    %4022 = vmatpush2.msra.mxu0 0.0
    %4023 = vmatprep.subr.mxu0 0.0
    %4024 = vmatpush2.msra.mxu0 0.0
    %4025 = vmatprep.subr.mxu0 0.0
    %4026 = vmatpush2.msra.mxu0 0.0
    %4027 = vmatprep.mubr.f32.mxu0 0.0
    %4028 = vmatmul.mubr.f32.gmra.mxu0 %v3961
    %v4029 = vpop.f32.mrf.mxu0
    %v4030 = vadd.f32 0.0, %v4029
    %v4031 = vpop.f32.mrf.mxu0
    %4032 = vdwg.mxu0
    %v4033 = vadd.f32 %v3879, %v4030
    %4034 = vmatprep.subr.bf16.mxu0 0
    %4035 = vmatpush1.bf16.msra.mxu0 0
    %4036 = vmatprep.subr.bf16.mxu0 0
    %4037 = vmatpush1.bf16.msra.mxu0 0
    %4038 = vmatprep.subr.bf16.mxu0 0
    %4039 = vmatpush1.bf16.msra.mxu0 0
    %4040 = vmatprep.subr.bf16.mxu0 0
    %4041 = vmatpush1.bf16.msra.mxu0 0
    %4042 = vmatprep.subr.bf16.mxu0 0
    %4043 = vmatpush1.bf16.msra.mxu0 0
    %4044 = vmatprep.subr.bf16.mxu0 0
    %4045 = vmatpush1.bf16.msra.mxu0 0
    %4046 = vmatprep.subr.bf16.mxu0 0
    %4047 = vmatpush1.bf16.msra.mxu0 0
    %4048 = vmatprep.subr.bf16.mxu0 0
    %4049 = vmatpush1.bf16.msra.mxu0 %v2799
    %4050 = vmatprep.subr.bf16.mxu0 0
    %4051 = vmatpush2.bf16.msra.mxu0 0
    %4052 = vmatprep.subr.bf16.mxu0 0
    %4053 = vmatpush2.bf16.msra.mxu0 0
    %4054 = vmatprep.subr.bf16.mxu0 0
    %4055 = vmatpush2.bf16.msra.mxu0 0
    %4056 = vmatprep.subr.bf16.mxu0 0
    %4057 = vmatpush2.bf16.msra.mxu0 0
    %4058 = vmatprep.subr.bf16.mxu0 0
    %4059 = vmatpush2.bf16.msra.mxu0 0
    %4060 = vmatprep.subr.bf16.mxu0 0
    %4061 = vmatpush2.bf16.msra.mxu0 0
    %4062 = vmatprep.subr.bf16.mxu0 0
    %4063 = vmatpush2.bf16.msra.mxu0 0
    %4064 = vmatprep.subr.bf16.mxu0 0
    %4065 = vmatpush2.bf16.msra.mxu0 0
    %4066 = vmatprep.mubr.bf16.mxu0 0
    %4067 = vmatmul.mubr.bf16.gmra.mxu0 %v1442
    %v4068 = vpop.f32.mrf.mxu0
    %v4069 = vadd.f32 0.0, %v4068
    %v4070 = vpop.f32.mrf.mxu0
    %v4071 = vpop.f32.mrf.mxu0
    %v4072 = vpop.f32.mrf.mxu0
    %4073 = vdwg.mxu0
    %4074 = vmatprep.subr.bf16.mxu0 0
    %4075 = vmatpush1.bf16.msra.mxu0 0
    %4076 = vmatprep.subr.bf16.mxu0 0
    %4077 = vmatpush1.bf16.msra.mxu0 0
    %4078 = vmatprep.subr.bf16.mxu0 0
    %4079 = vmatpush1.bf16.msra.mxu0 0
    %4080 = vmatprep.subr.bf16.mxu0 0
    %4081 = vmatpush1.bf16.msra.mxu0 0
    %4082 = vmatprep.subr.bf16.mxu0 0
    %4083 = vmatpush1.bf16.msra.mxu0 0
    %4084 = vmatprep.subr.bf16.mxu0 0
    %4085 = vmatpush1.bf16.msra.mxu0 0
    %4086 = vmatprep.subr.bf16.mxu0 0
    %4087 = vmatpush1.bf16.msra.mxu0 0
    %4088 = vmatprep.subr.bf16.mxu0 0
    %4089 = vmatpush1.bf16.msra.mxu0 %v2842
    %4090 = vmatprep.subr.bf16.mxu0 0
    %4091 = vmatpush2.bf16.msra.mxu0 0
    %4092 = vmatprep.subr.bf16.mxu0 0
    %4093 = vmatpush2.bf16.msra.mxu0 0
    %4094 = vmatprep.subr.bf16.mxu0 0
    %4095 = vmatpush2.bf16.msra.mxu0 0
    %4096 = vmatprep.subr.bf16.mxu0 0
    %4097 = vmatpush2.bf16.msra.mxu0 0
    %4098 = vmatprep.subr.bf16.mxu0 0
    %4099 = vmatpush2.bf16.msra.mxu0 0
    %4100 = vmatprep.subr.bf16.mxu0 0
    %4101 = vmatpush2.bf16.msra.mxu0 0
    %4102 = vmatprep.subr.bf16.mxu0 0
    %4103 = vmatpush2.bf16.msra.mxu0 0
    %4104 = vmatprep.subr.bf16.mxu0 0
    %4105 = vmatpush2.bf16.msra.mxu0 0
    %4106 = vmatprep.mubr.bf16.mxu0 0
    %4107 = vmatmul.mubr.bf16.gmra.mxu0 %v1485
    %v4108 = vpop.f32.mrf.mxu0
    %v4109 = vadd.f32 %v4069, %v4108
    %v4110 = vpop.f32.mrf.mxu0
    %v4111 = vpop.f32.mrf.mxu0
    %v4112 = vpop.f32.mrf.mxu0
    %4113 = vdwg.mxu0
    %v4115 = vsel %vm270, %v4109, 0
    %4117 = vmatprep.subr.mxu0 0.0
    %4118 = vmatpush1.msra.mxu0 0.0
    %4119 = vmatprep.subr.mxu0 0.0
    %4120 = vmatpush1.msra.mxu0 0.0
    %4121 = vmatprep.subr.mxu0 0.0
    %4122 = vmatpush1.msra.mxu0 0.0
    %4123 = vmatprep.subr.mxu0 0.0
    %4124 = vmatpush1.msra.mxu0 0.0
    %4125 = vmatprep.subr.mxu0 0.0
    %4126 = vmatpush1.msra.mxu0 0.0
    %4127 = vmatprep.subr.mxu0 0.0
    %4128 = vmatpush1.msra.mxu0 0.0
    %4129 = vmatprep.subr.mxu0 0.0
    %4130 = vmatpush1.msra.mxu0 0.0
    %4131 = vmatprep.subr.mxu0 0.0
    %4132 = vmatpush1.msra.mxu0 0.0
    %4133 = vmatprep.subr.mxu0 0.0
    %4134 = vmatpush1.msra.mxu0 0.0
    %4135 = vmatprep.subr.mxu0 0.0
    %4136 = vmatpush1.msra.mxu0 0.0
    %4137 = vmatprep.subr.mxu0 0.0
    %4138 = vmatpush1.msra.mxu0 0.0
    %4139 = vmatprep.subr.mxu0 0.0
    %4140 = vmatpush1.msra.mxu0 0.0
    %4141 = vmatprep.subr.mxu0 0.0
    %4142 = vmatpush1.msra.mxu0 0.0
    %4143 = vmatprep.subr.mxu0 0.0
    %4144 = vmatpush1.msra.mxu0 0.0
    %4145 = vmatprep.subr.mxu0 0.0
    %4146 = vmatpush1.msra.mxu0 0.0
    %4147 = vmatprep.subr.mxu0 0.0
    %4148 = vmatpush1.msra.mxu0 %v1533
    %4149 = vmatprep.subr.mxu0 0.0
    %4150 = vmatpush2.msra.mxu0 0.0
    %4151 = vmatprep.subr.mxu0 0.0
    %4152 = vmatpush2.msra.mxu0 0.0
    %4153 = vmatprep.subr.mxu0 0.0
    %4154 = vmatpush2.msra.mxu0 0.0
    %4155 = vmatprep.subr.mxu0 0.0
    %4156 = vmatpush2.msra.mxu0 0.0
    %4157 = vmatprep.subr.mxu0 0.0
    %4158 = vmatpush2.msra.mxu0 0.0
    %4159 = vmatprep.subr.mxu0 0.0
    %4160 = vmatpush2.msra.mxu0 0.0
    %4161 = vmatprep.subr.mxu0 0.0
    %4162 = vmatpush2.msra.mxu0 0.0
    %4163 = vmatprep.subr.mxu0 0.0
    %4164 = vmatpush2.msra.mxu0 0.0
    %4165 = vmatprep.subr.mxu0 0.0
    %4166 = vmatpush2.msra.mxu0 0.0
    %4167 = vmatprep.subr.mxu0 0.0
    %4168 = vmatpush2.msra.mxu0 0.0
    %4169 = vmatprep.subr.mxu0 0.0
    %4170 = vmatpush2.msra.mxu0 0.0
    %4171 = vmatprep.subr.mxu0 0.0
    %4172 = vmatpush2.msra.mxu0 0.0
    %4173 = vmatprep.subr.mxu0 0.0
    %4174 = vmatpush2.msra.mxu0 0.0
    %4175 = vmatprep.subr.mxu0 0.0
    %4176 = vmatpush2.msra.mxu0 0.0
    %4177 = vmatprep.subr.mxu0 0.0
    %4178 = vmatpush2.msra.mxu0 0.0
    %4179 = vmatprep.subr.mxu0 0.0
    %4180 = vmatpush2.msra.mxu0 0.0
    %4181 = vmatprep.mubr.f32.mxu0 0.0
    %4182 = vmatmul.mubr.f32.gmra.mxu0 %v4115
    %v4183 = vpop.f32.mrf.mxu0
    %v4184 = vadd.f32 0.0, %v4183
    %v4185 = vpop.f32.mrf.mxu0
    %4186 = vdwg.mxu0
    %v4187 = vadd.f32 %v4033, %v4184
    %4188 = vmatprep.subr.bf16.mxu0 0
    %4189 = vmatpush1.bf16.msra.mxu0 0
    %4190 = vmatprep.subr.bf16.mxu0 0
    %4191 = vmatpush1.bf16.msra.mxu0 0
    %4192 = vmatprep.subr.bf16.mxu0 0
    %4193 = vmatpush1.bf16.msra.mxu0 0
    %4194 = vmatprep.subr.bf16.mxu0 0
    %4195 = vmatpush1.bf16.msra.mxu0 0
    %4196 = vmatprep.subr.bf16.mxu0 0
    %4197 = vmatpush1.bf16.msra.mxu0 0
    %4198 = vmatprep.subr.bf16.mxu0 0
    %4199 = vmatpush1.bf16.msra.mxu0 0
    %4200 = vmatprep.subr.bf16.mxu0 0
    %4201 = vmatpush1.bf16.msra.mxu0 0
    %4202 = vmatprep.subr.bf16.mxu0 0
    %4203 = vmatpush1.bf16.msra.mxu0 %v2799
    %4204 = vmatprep.subr.bf16.mxu0 0
    %4205 = vmatpush2.bf16.msra.mxu0 0
    %4206 = vmatprep.subr.bf16.mxu0 0
    %4207 = vmatpush2.bf16.msra.mxu0 0
    %4208 = vmatprep.subr.bf16.mxu0 0
    %4209 = vmatpush2.bf16.msra.mxu0 0
    %4210 = vmatprep.subr.bf16.mxu0 0
    %4211 = vmatpush2.bf16.msra.mxu0 0
    %4212 = vmatprep.subr.bf16.mxu0 0
    %4213 = vmatpush2.bf16.msra.mxu0 0
    %4214 = vmatprep.subr.bf16.mxu0 0
    %4215 = vmatpush2.bf16.msra.mxu0 0
    %4216 = vmatprep.subr.bf16.mxu0 0
    %4217 = vmatpush2.bf16.msra.mxu0 0
    %4218 = vmatprep.subr.bf16.mxu0 0
    %4219 = vmatpush2.bf16.msra.mxu0 0
    %4220 = vmatprep.mubr.bf16.mxu0 0
    %4221 = vmatmul.mubr.bf16.gmra.mxu0 %v1611
    %v4222 = vpop.f32.mrf.mxu0
    %v4223 = vadd.f32 0.0, %v4222
    %v4224 = vpop.f32.mrf.mxu0
    %v4225 = vpop.f32.mrf.mxu0
    %v4226 = vpop.f32.mrf.mxu0
    %4227 = vdwg.mxu0
    %4228 = vmatprep.subr.bf16.mxu0 0
    %4229 = vmatpush1.bf16.msra.mxu0 0
    %4230 = vmatprep.subr.bf16.mxu0 0
    %4231 = vmatpush1.bf16.msra.mxu0 0
    %4232 = vmatprep.subr.bf16.mxu0 0
    %4233 = vmatpush1.bf16.msra.mxu0 0
    %4234 = vmatprep.subr.bf16.mxu0 0
    %4235 = vmatpush1.bf16.msra.mxu0 0
    %4236 = vmatprep.subr.bf16.mxu0 0
    %4237 = vmatpush1.bf16.msra.mxu0 0
    %4238 = vmatprep.subr.bf16.mxu0 0
    %4239 = vmatpush1.bf16.msra.mxu0 0
    %4240 = vmatprep.subr.bf16.mxu0 0
    %4241 = vmatpush1.bf16.msra.mxu0 0
    %4242 = vmatprep.subr.bf16.mxu0 0
    %4243 = vmatpush1.bf16.msra.mxu0 %v2842
    %4244 = vmatprep.subr.bf16.mxu0 0
    %4245 = vmatpush2.bf16.msra.mxu0 0
    %4246 = vmatprep.subr.bf16.mxu0 0
    %4247 = vmatpush2.bf16.msra.mxu0 0
    %4248 = vmatprep.subr.bf16.mxu0 0
    %4249 = vmatpush2.bf16.msra.mxu0 0
    %4250 = vmatprep.subr.bf16.mxu0 0
    %4251 = vmatpush2.bf16.msra.mxu0 0
    %4252 = vmatprep.subr.bf16.mxu0 0
    %4253 = vmatpush2.bf16.msra.mxu0 0
    %4254 = vmatprep.subr.bf16.mxu0 0
    %4255 = vmatpush2.bf16.msra.mxu0 0
    %4256 = vmatprep.subr.bf16.mxu0 0
    %4257 = vmatpush2.bf16.msra.mxu0 0
    %4258 = vmatprep.subr.bf16.mxu0 0
    %4259 = vmatpush2.bf16.msra.mxu0 0
    %4260 = vmatprep.mubr.bf16.mxu0 0
    %4261 = vmatmul.mubr.bf16.gmra.mxu0 %v1654
    %v4262 = vpop.f32.mrf.mxu0
    %v4263 = vadd.f32 %v4223, %v4262
    %v4264 = vpop.f32.mrf.mxu0
    %v4265 = vpop.f32.mrf.mxu0
    %v4266 = vpop.f32.mrf.mxu0
    %4267 = vdwg.mxu0
    %v4269 = vsel %vm270, %v4263, 0
    %4271 = vmatprep.subr.mxu0 0.0
    %4272 = vmatpush1.msra.mxu0 0.0
    %4273 = vmatprep.subr.mxu0 0.0
    %4274 = vmatpush1.msra.mxu0 0.0
    %4275 = vmatprep.subr.mxu0 0.0
    %4276 = vmatpush1.msra.mxu0 0.0
    %4277 = vmatprep.subr.mxu0 0.0
    %4278 = vmatpush1.msra.mxu0 0.0
    %4279 = vmatprep.subr.mxu0 0.0
    %4280 = vmatpush1.msra.mxu0 0.0
    %4281 = vmatprep.subr.mxu0 0.0
    %4282 = vmatpush1.msra.mxu0 0.0
    %4283 = vmatprep.subr.mxu0 0.0
    %4284 = vmatpush1.msra.mxu0 0.0
    %4285 = vmatprep.subr.mxu0 0.0
    %4286 = vmatpush1.msra.mxu0 0.0
    %4287 = vmatprep.subr.mxu0 0.0
    %4288 = vmatpush1.msra.mxu0 0.0
    %4289 = vmatprep.subr.mxu0 0.0
    %4290 = vmatpush1.msra.mxu0 0.0
    %4291 = vmatprep.subr.mxu0 0.0
    %4292 = vmatpush1.msra.mxu0 0.0
    %4293 = vmatprep.subr.mxu0 0.0
    %4294 = vmatpush1.msra.mxu0 0.0
    %4295 = vmatprep.subr.mxu0 0.0
    %4296 = vmatpush1.msra.mxu0 0.0
    %4297 = vmatprep.subr.mxu0 0.0
    %4298 = vmatpush1.msra.mxu0 0.0
    %4299 = vmatprep.subr.mxu0 0.0
    %4300 = vmatpush1.msra.mxu0 0.0
    %4301 = vmatprep.subr.mxu0 0.0
    %4302 = vmatpush1.msra.mxu0 %v1702
    %4303 = vmatprep.subr.mxu0 0.0
    %4304 = vmatpush2.msra.mxu0 0.0
    %4305 = vmatprep.subr.mxu0 0.0
    %4306 = vmatpush2.msra.mxu0 0.0
    %4307 = vmatprep.subr.mxu0 0.0
    %4308 = vmatpush2.msra.mxu0 0.0
    %4309 = vmatprep.subr.mxu0 0.0
    %4310 = vmatpush2.msra.mxu0 0.0
    %4311 = vmatprep.subr.mxu0 0.0
    %4312 = vmatpush2.msra.mxu0 0.0
    %4313 = vmatprep.subr.mxu0 0.0
    %4314 = vmatpush2.msra.mxu0 0.0
    %4315 = vmatprep.subr.mxu0 0.0
    %4316 = vmatpush2.msra.mxu0 0.0
    %4317 = vmatprep.subr.mxu0 0.0
    %4318 = vmatpush2.msra.mxu0 0.0
    %4319 = vmatprep.subr.mxu0 0.0
    %4320 = vmatpush2.msra.mxu0 0.0
    %4321 = vmatprep.subr.mxu0 0.0
    %4322 = vmatpush2.msra.mxu0 0.0
    %4323 = vmatprep.subr.mxu0 0.0
    %4324 = vmatpush2.msra.mxu0 0.0
    %4325 = vmatprep.subr.mxu0 0.0
    %4326 = vmatpush2.msra.mxu0 0.0
    %4327 = vmatprep.subr.mxu0 0.0
    %4328 = vmatpush2.msra.mxu0 0.0
    %4329 = vmatprep.subr.mxu0 0.0
    %4330 = vmatpush2.msra.mxu0 0.0
    %4331 = vmatprep.subr.mxu0 0.0
    %4332 = vmatpush2.msra.mxu0 0.0
    %4333 = vmatprep.subr.mxu0 0.0
    %4334 = vmatpush2.msra.mxu0 0.0
    %4335 = vmatprep.mubr.f32.mxu0 0.0
    %4336 = vmatmul.mubr.f32.gmra.mxu0 %v4269
    %v4337 = vpop.f32.mrf.mxu0
    %v4338 = vadd.f32 0.0, %v4337
    %v4339 = vpop.f32.mrf.mxu0
    %4340 = vdwg.mxu0
    %v4341 = vadd.f32 %v4187, %v4338
    %4342 = vmatprep.subr.bf16.mxu0 0
    %4343 = vmatpush1.bf16.msra.mxu0 0
    %4344 = vmatprep.subr.bf16.mxu0 0
    %4345 = vmatpush1.bf16.msra.mxu0 0
    %4346 = vmatprep.subr.bf16.mxu0 0
    %4347 = vmatpush1.bf16.msra.mxu0 0
    %4348 = vmatprep.subr.bf16.mxu0 0
    %4349 = vmatpush1.bf16.msra.mxu0 0
    %4350 = vmatprep.subr.bf16.mxu0 0
    %4351 = vmatpush1.bf16.msra.mxu0 0
    %4352 = vmatprep.subr.bf16.mxu0 0
    %4353 = vmatpush1.bf16.msra.mxu0 0
    %4354 = vmatprep.subr.bf16.mxu0 0
    %4355 = vmatpush1.bf16.msra.mxu0 0
    %4356 = vmatprep.subr.bf16.mxu0 0
    %4357 = vmatpush1.bf16.msra.mxu0 %v2799
    %4358 = vmatprep.subr.bf16.mxu0 0
    %4359 = vmatpush2.bf16.msra.mxu0 0
    %4360 = vmatprep.subr.bf16.mxu0 0
    %4361 = vmatpush2.bf16.msra.mxu0 0
    %4362 = vmatprep.subr.bf16.mxu0 0
    %4363 = vmatpush2.bf16.msra.mxu0 0
    %4364 = vmatprep.subr.bf16.mxu0 0
    %4365 = vmatpush2.bf16.msra.mxu0 0
    %4366 = vmatprep.subr.bf16.mxu0 0
    %4367 = vmatpush2.bf16.msra.mxu0 0
    %4368 = vmatprep.subr.bf16.mxu0 0
    %4369 = vmatpush2.bf16.msra.mxu0 0
    %4370 = vmatprep.subr.bf16.mxu0 0
    %4371 = vmatpush2.bf16.msra.mxu0 0
    %4372 = vmatprep.subr.bf16.mxu0 0
    %4373 = vmatpush2.bf16.msra.mxu0 0
    %4374 = vmatprep.mubr.bf16.mxu0 0
    %4375 = vmatmul.mubr.bf16.gmra.mxu0 %v1780
    %v4376 = vpop.f32.mrf.mxu0
    %v4377 = vadd.f32 0.0, %v4376
    %v4378 = vpop.f32.mrf.mxu0
    %v4379 = vpop.f32.mrf.mxu0
    %v4380 = vpop.f32.mrf.mxu0
    %4381 = vdwg.mxu0
    %4382 = vmatprep.subr.bf16.mxu0 0
    %4383 = vmatpush1.bf16.msra.mxu0 0
    %4384 = vmatprep.subr.bf16.mxu0 0
    %4385 = vmatpush1.bf16.msra.mxu0 0
    %4386 = vmatprep.subr.bf16.mxu0 0
    %4387 = vmatpush1.bf16.msra.mxu0 0
    %4388 = vmatprep.subr.bf16.mxu0 0
    %4389 = vmatpush1.bf16.msra.mxu0 0
    %4390 = vmatprep.subr.bf16.mxu0 0
    %4391 = vmatpush1.bf16.msra.mxu0 0
    %4392 = vmatprep.subr.bf16.mxu0 0
    %4393 = vmatpush1.bf16.msra.mxu0 0
    %4394 = vmatprep.subr.bf16.mxu0 0
    %4395 = vmatpush1.bf16.msra.mxu0 0
    %4396 = vmatprep.subr.bf16.mxu0 0
    %4397 = vmatpush1.bf16.msra.mxu0 %v2842
    %4398 = vmatprep.subr.bf16.mxu0 0
    %4399 = vmatpush2.bf16.msra.mxu0 0
    %4400 = vmatprep.subr.bf16.mxu0 0
    %4401 = vmatpush2.bf16.msra.mxu0 0
    %4402 = vmatprep.subr.bf16.mxu0 0
    %4403 = vmatpush2.bf16.msra.mxu0 0
    %4404 = vmatprep.subr.bf16.mxu0 0
    %4405 = vmatpush2.bf16.msra.mxu0 0
    %4406 = vmatprep.subr.bf16.mxu0 0
    %4407 = vmatpush2.bf16.msra.mxu0 0
    %4408 = vmatprep.subr.bf16.mxu0 0
    %4409 = vmatpush2.bf16.msra.mxu0 0
    %4410 = vmatprep.subr.bf16.mxu0 0
    %4411 = vmatpush2.bf16.msra.mxu0 0
    %4412 = vmatprep.subr.bf16.mxu0 0
    %4413 = vmatpush2.bf16.msra.mxu0 0
    %4414 = vmatprep.mubr.bf16.mxu0 0
    %4415 = vmatmul.mubr.bf16.gmra.mxu0 %v1823
    %v4416 = vpop.f32.mrf.mxu0
    %v4417 = vadd.f32 %v4377, %v4416
    %v4418 = vpop.f32.mrf.mxu0
    %v4419 = vpop.f32.mrf.mxu0
    %v4420 = vpop.f32.mrf.mxu0
    %4421 = vdwg.mxu0
    %v4423 = vsel %vm270, %v4417, 0
    %4425 = vmatprep.subr.mxu0 0.0
    %4426 = vmatpush1.msra.mxu0 0.0
    %4427 = vmatprep.subr.mxu0 0.0
    %4428 = vmatpush1.msra.mxu0 0.0
    %4429 = vmatprep.subr.mxu0 0.0
    %4430 = vmatpush1.msra.mxu0 0.0
    %4431 = vmatprep.subr.mxu0 0.0
    %4432 = vmatpush1.msra.mxu0 0.0
    %4433 = vmatprep.subr.mxu0 0.0
    %4434 = vmatpush1.msra.mxu0 0.0
    %4435 = vmatprep.subr.mxu0 0.0
    %4436 = vmatpush1.msra.mxu0 0.0
    %4437 = vmatprep.subr.mxu0 0.0
    %4438 = vmatpush1.msra.mxu0 0.0
    %4439 = vmatprep.subr.mxu0 0.0
    %4440 = vmatpush1.msra.mxu0 0.0
    %4441 = vmatprep.subr.mxu0 0.0
    %4442 = vmatpush1.msra.mxu0 0.0
    %4443 = vmatprep.subr.mxu0 0.0
    %4444 = vmatpush1.msra.mxu0 0.0
    %4445 = vmatprep.subr.mxu0 0.0
    %4446 = vmatpush1.msra.mxu0 0.0
    %4447 = vmatprep.subr.mxu0 0.0
    %4448 = vmatpush1.msra.mxu0 0.0
    %4449 = vmatprep.subr.mxu0 0.0
    %4450 = vmatpush1.msra.mxu0 0.0
    %4451 = vmatprep.subr.mxu0 0.0
    %4452 = vmatpush1.msra.mxu0 0.0
    %4453 = vmatprep.subr.mxu0 0.0
    %4454 = vmatpush1.msra.mxu0 0.0
    %4455 = vmatprep.subr.mxu0 0.0
    %4456 = vmatpush1.msra.mxu0 %v1871
    %4457 = vmatprep.subr.mxu0 0.0
    %4458 = vmatpush2.msra.mxu0 0.0
    %4459 = vmatprep.subr.mxu0 0.0
    %4460 = vmatpush2.msra.mxu0 0.0
    %4461 = vmatprep.subr.mxu0 0.0
    %4462 = vmatpush2.msra.mxu0 0.0
    %4463 = vmatprep.subr.mxu0 0.0
    %4464 = vmatpush2.msra.mxu0 0.0
    %4465 = vmatprep.subr.mxu0 0.0
    %4466 = vmatpush2.msra.mxu0 0.0
    %4467 = vmatprep.subr.mxu0 0.0
    %4468 = vmatpush2.msra.mxu0 0.0
    %4469 = vmatprep.subr.mxu0 0.0
    %4470 = vmatpush2.msra.mxu0 0.0
    %4471 = vmatprep.subr.mxu0 0.0
    %4472 = vmatpush2.msra.mxu0 0.0
    %4473 = vmatprep.subr.mxu0 0.0
    %4474 = vmatpush2.msra.mxu0 0.0
    %4475 = vmatprep.subr.mxu0 0.0
    %4476 = vmatpush2.msra.mxu0 0.0
    %4477 = vmatprep.subr.mxu0 0.0
    %4478 = vmatpush2.msra.mxu0 0.0
    %4479 = vmatprep.subr.mxu0 0.0
    %4480 = vmatpush2.msra.mxu0 0.0
    %4481 = vmatprep.subr.mxu0 0.0
    %4482 = vmatpush2.msra.mxu0 0.0
    %4483 = vmatprep.subr.mxu0 0.0
    %4484 = vmatpush2.msra.mxu0 0.0
    %4485 = vmatprep.subr.mxu0 0.0
    %4486 = vmatpush2.msra.mxu0 0.0
    %4487 = vmatprep.subr.mxu0 0.0
    %4488 = vmatpush2.msra.mxu0 0.0
    %4489 = vmatprep.mubr.f32.mxu0 0.0
    %4490 = vmatmul.mubr.f32.gmra.mxu0 %v4423
    %v4491 = vpop.f32.mrf.mxu0
    %v4492 = vadd.f32 0.0, %v4491
    %v4493 = vpop.f32.mrf.mxu0
    %4494 = vdwg.mxu0
    %v4495 = vadd.f32 %v4341, %v4492
    %4496 = vmatprep.subr.bf16.mxu0 0
    %4497 = vmatpush1.bf16.msra.mxu0 0
    %4498 = vmatprep.subr.bf16.mxu0 0
    %4499 = vmatpush1.bf16.msra.mxu0 0
    %4500 = vmatprep.subr.bf16.mxu0 0
    %4501 = vmatpush1.bf16.msra.mxu0 0
    %4502 = vmatprep.subr.bf16.mxu0 0
    %4503 = vmatpush1.bf16.msra.mxu0 0
    %4504 = vmatprep.subr.bf16.mxu0 0
    %4505 = vmatpush1.bf16.msra.mxu0 0
    %4506 = vmatprep.subr.bf16.mxu0 0
    %4507 = vmatpush1.bf16.msra.mxu0 0
    %4508 = vmatprep.subr.bf16.mxu0 0
    %4509 = vmatpush1.bf16.msra.mxu0 0
    %4510 = vmatprep.subr.bf16.mxu0 0
    %4511 = vmatpush1.bf16.msra.mxu0 %v2799
    %4512 = vmatprep.subr.bf16.mxu0 0
    %4513 = vmatpush2.bf16.msra.mxu0 0
    %4514 = vmatprep.subr.bf16.mxu0 0
    %4515 = vmatpush2.bf16.msra.mxu0 0
    %4516 = vmatprep.subr.bf16.mxu0 0
    %4517 = vmatpush2.bf16.msra.mxu0 0
    %4518 = vmatprep.subr.bf16.mxu0 0
    %4519 = vmatpush2.bf16.msra.mxu0 0
    %4520 = vmatprep.subr.bf16.mxu0 0
    %4521 = vmatpush2.bf16.msra.mxu0 0
    %4522 = vmatprep.subr.bf16.mxu0 0
    %4523 = vmatpush2.bf16.msra.mxu0 0
    %4524 = vmatprep.subr.bf16.mxu0 0
    %4525 = vmatpush2.bf16.msra.mxu0 0
    %4526 = vmatprep.subr.bf16.mxu0 0
    %4527 = vmatpush2.bf16.msra.mxu0 0
    %4528 = vmatprep.mubr.bf16.mxu0 0
    %4529 = vmatmul.mubr.bf16.gmra.mxu0 %v1949
    %v4530 = vpop.f32.mrf.mxu0
    %v4531 = vadd.f32 0.0, %v4530
    %v4532 = vpop.f32.mrf.mxu0
    %v4533 = vpop.f32.mrf.mxu0
    %v4534 = vpop.f32.mrf.mxu0
    %4535 = vdwg.mxu0
    %4536 = vmatprep.subr.bf16.mxu0 0
    %4537 = vmatpush1.bf16.msra.mxu0 0
    %4538 = vmatprep.subr.bf16.mxu0 0
    %4539 = vmatpush1.bf16.msra.mxu0 0
    %4540 = vmatprep.subr.bf16.mxu0 0
    %4541 = vmatpush1.bf16.msra.mxu0 0
    %4542 = vmatprep.subr.bf16.mxu0 0
    %4543 = vmatpush1.bf16.msra.mxu0 0
    %4544 = vmatprep.subr.bf16.mxu0 0
    %4545 = vmatpush1.bf16.msra.mxu0 0
    %4546 = vmatprep.subr.bf16.mxu0 0
    %4547 = vmatpush1.bf16.msra.mxu0 0
    %4548 = vmatprep.subr.bf16.mxu0 0
    %4549 = vmatpush1.bf16.msra.mxu0 0
    %4550 = vmatprep.subr.bf16.mxu0 0
    %4551 = vmatpush1.bf16.msra.mxu0 %v2842
    %4552 = vmatprep.subr.bf16.mxu0 0
    %4553 = vmatpush2.bf16.msra.mxu0 0
    %4554 = vmatprep.subr.bf16.mxu0 0
    %4555 = vmatpush2.bf16.msra.mxu0 0
    %4556 = vmatprep.subr.bf16.mxu0 0
    %4557 = vmatpush2.bf16.msra.mxu0 0
    %4558 = vmatprep.subr.bf16.mxu0 0
    %4559 = vmatpush2.bf16.msra.mxu0 0
    %4560 = vmatprep.subr.bf16.mxu0 0
    %4561 = vmatpush2.bf16.msra.mxu0 0
    %4562 = vmatprep.subr.bf16.mxu0 0
    %4563 = vmatpush2.bf16.msra.mxu0 0
    %4564 = vmatprep.subr.bf16.mxu0 0
    %4565 = vmatpush2.bf16.msra.mxu0 0
    %4566 = vmatprep.subr.bf16.mxu0 0
    %4567 = vmatpush2.bf16.msra.mxu0 0
    %4568 = vmatprep.mubr.bf16.mxu0 0
    %4569 = vmatmul.mubr.bf16.gmra.mxu0 %v1992
    %v4570 = vpop.f32.mrf.mxu0
    %v4571 = vadd.f32 %v4531, %v4570
    %v4572 = vpop.f32.mrf.mxu0
    %v4573 = vpop.f32.mrf.mxu0
    %v4574 = vpop.f32.mrf.mxu0
    %4575 = vdwg.mxu0
    %v4577 = vsel %vm270, %v4571, 0
    %4579 = vmatprep.subr.mxu0 0.0
    %4580 = vmatpush1.msra.mxu0 0.0
    %4581 = vmatprep.subr.mxu0 0.0
    %4582 = vmatpush1.msra.mxu0 0.0
    %4583 = vmatprep.subr.mxu0 0.0
    %4584 = vmatpush1.msra.mxu0 0.0
    %4585 = vmatprep.subr.mxu0 0.0
    %4586 = vmatpush1.msra.mxu0 0.0
    %4587 = vmatprep.subr.mxu0 0.0
    %4588 = vmatpush1.msra.mxu0 0.0
    %4589 = vmatprep.subr.mxu0 0.0
    %4590 = vmatpush1.msra.mxu0 0.0
    %4591 = vmatprep.subr.mxu0 0.0
    %4592 = vmatpush1.msra.mxu0 0.0
    %4593 = vmatprep.subr.mxu0 0.0
    %4594 = vmatpush1.msra.mxu0 0.0
    %4595 = vmatprep.subr.mxu0 0.0
    %4596 = vmatpush1.msra.mxu0 0.0
    %4597 = vmatprep.subr.mxu0 0.0
    %4598 = vmatpush1.msra.mxu0 0.0
    %4599 = vmatprep.subr.mxu0 0.0
    %4600 = vmatpush1.msra.mxu0 0.0
    %4601 = vmatprep.subr.mxu0 0.0
    %4602 = vmatpush1.msra.mxu0 0.0
    %4603 = vmatprep.subr.mxu0 0.0
    %4604 = vmatpush1.msra.mxu0 0.0
    %4605 = vmatprep.subr.mxu0 0.0
    %4606 = vmatpush1.msra.mxu0 0.0
    %4607 = vmatprep.subr.mxu0 0.0
    %4608 = vmatpush1.msra.mxu0 0.0
    %4609 = vmatprep.subr.mxu0 0.0
    %4610 = vmatpush1.msra.mxu0 %v2040
    %4611 = vmatprep.subr.mxu0 0.0
    %4612 = vmatpush2.msra.mxu0 0.0
    %4613 = vmatprep.subr.mxu0 0.0
    %4614 = vmatpush2.msra.mxu0 0.0
    %4615 = vmatprep.subr.mxu0 0.0
    %4616 = vmatpush2.msra.mxu0 0.0
    %4617 = vmatprep.subr.mxu0 0.0
    %4618 = vmatpush2.msra.mxu0 0.0
    %4619 = vmatprep.subr.mxu0 0.0
    %4620 = vmatpush2.msra.mxu0 0.0
    %4621 = vmatprep.subr.mxu0 0.0
    %4622 = vmatpush2.msra.mxu0 0.0
    %4623 = vmatprep.subr.mxu0 0.0
    %4624 = vmatpush2.msra.mxu0 0.0
    %4625 = vmatprep.subr.mxu0 0.0
    %4626 = vmatpush2.msra.mxu0 0.0
    %4627 = vmatprep.subr.mxu0 0.0
    %4628 = vmatpush2.msra.mxu0 0.0
    %4629 = vmatprep.subr.mxu0 0.0
    %4630 = vmatpush2.msra.mxu0 0.0
    %4631 = vmatprep.subr.mxu0 0.0
    %4632 = vmatpush2.msra.mxu0 0.0
    %4633 = vmatprep.subr.mxu0 0.0
    %4634 = vmatpush2.msra.mxu0 0.0
    %4635 = vmatprep.subr.mxu0 0.0
    %4636 = vmatpush2.msra.mxu0 0.0
    %4637 = vmatprep.subr.mxu0 0.0
    %4638 = vmatpush2.msra.mxu0 0.0
    %4639 = vmatprep.subr.mxu0 0.0
    %4640 = vmatpush2.msra.mxu0 0.0
    %4641 = vmatprep.subr.mxu0 0.0
    %4642 = vmatpush2.msra.mxu0 0.0
    %4643 = vmatprep.mubr.f32.mxu0 0.0
    %4644 = vmatmul.mubr.f32.gmra.mxu0 %v4577
    %v4645 = vpop.f32.mrf.mxu0
    %v4646 = vadd.f32 0.0, %v4645
    %v4647 = vpop.f32.mrf.mxu0
    %4648 = vdwg.mxu0
    %v4649 = vadd.f32 %v4495, %v4646
    %4650 = vmatprep.subr.bf16.mxu0 0
    %4651 = vmatpush1.bf16.msra.mxu0 0
    %4652 = vmatprep.subr.bf16.mxu0 0
    %4653 = vmatpush1.bf16.msra.mxu0 0
    %4654 = vmatprep.subr.bf16.mxu0 0
    %4655 = vmatpush1.bf16.msra.mxu0 0
    %4656 = vmatprep.subr.bf16.mxu0 0
    %4657 = vmatpush1.bf16.msra.mxu0 0
    %4658 = vmatprep.subr.bf16.mxu0 0
    %4659 = vmatpush1.bf16.msra.mxu0 0
    %4660 = vmatprep.subr.bf16.mxu0 0
    %4661 = vmatpush1.bf16.msra.mxu0 0
    %4662 = vmatprep.subr.bf16.mxu0 0
    %4663 = vmatpush1.bf16.msra.mxu0 0
    %4664 = vmatprep.subr.bf16.mxu0 0
    %4665 = vmatpush1.bf16.msra.mxu0 %v2799
    %4666 = vmatprep.subr.bf16.mxu0 0
    %4667 = vmatpush2.bf16.msra.mxu0 0
    %4668 = vmatprep.subr.bf16.mxu0 0
    %4669 = vmatpush2.bf16.msra.mxu0 0
    %4670 = vmatprep.subr.bf16.mxu0 0
    %4671 = vmatpush2.bf16.msra.mxu0 0
    %4672 = vmatprep.subr.bf16.mxu0 0
    %4673 = vmatpush2.bf16.msra.mxu0 0
    %4674 = vmatprep.subr.bf16.mxu0 0
    %4675 = vmatpush2.bf16.msra.mxu0 0
    %4676 = vmatprep.subr.bf16.mxu0 0
    %4677 = vmatpush2.bf16.msra.mxu0 0
    %4678 = vmatprep.subr.bf16.mxu0 0
    %4679 = vmatpush2.bf16.msra.mxu0 0
    %4680 = vmatprep.subr.bf16.mxu0 0
    %4681 = vmatpush2.bf16.msra.mxu0 0
    %4682 = vmatprep.mubr.bf16.mxu0 0
    %4683 = vmatmul.mubr.bf16.gmra.mxu0 %v2118
    %v4684 = vpop.f32.mrf.mxu0
    %v4685 = vadd.f32 0.0, %v4684
    %v4686 = vpop.f32.mrf.mxu0
    %v4687 = vpop.f32.mrf.mxu0
    %v4688 = vpop.f32.mrf.mxu0
    %4689 = vdwg.mxu0
    %4690 = vmatprep.subr.bf16.mxu0 0
    %4691 = vmatpush1.bf16.msra.mxu0 0
    %4692 = vmatprep.subr.bf16.mxu0 0
    %4693 = vmatpush1.bf16.msra.mxu0 0
    %4694 = vmatprep.subr.bf16.mxu0 0
    %4695 = vmatpush1.bf16.msra.mxu0 0
    %4696 = vmatprep.subr.bf16.mxu0 0
    %4697 = vmatpush1.bf16.msra.mxu0 0
    %4698 = vmatprep.subr.bf16.mxu0 0
    %4699 = vmatpush1.bf16.msra.mxu0 0
    %4700 = vmatprep.subr.bf16.mxu0 0
    %4701 = vmatpush1.bf16.msra.mxu0 0
    %4702 = vmatprep.subr.bf16.mxu0 0
    %4703 = vmatpush1.bf16.msra.mxu0 0
    %4704 = vmatprep.subr.bf16.mxu0 0
    %4705 = vmatpush1.bf16.msra.mxu0 %v2842
    %4706 = vmatprep.subr.bf16.mxu0 0
    %4707 = vmatpush2.bf16.msra.mxu0 0
    %4708 = vmatprep.subr.bf16.mxu0 0
    %4709 = vmatpush2.bf16.msra.mxu0 0
    %4710 = vmatprep.subr.bf16.mxu0 0
    %4711 = vmatpush2.bf16.msra.mxu0 0
    %4712 = vmatprep.subr.bf16.mxu0 0
    %4713 = vmatpush2.bf16.msra.mxu0 0
    %4714 = vmatprep.subr.bf16.mxu0 0
    %4715 = vmatpush2.bf16.msra.mxu0 0
    %4716 = vmatprep.subr.bf16.mxu0 0
    %4717 = vmatpush2.bf16.msra.mxu0 0
    %4718 = vmatprep.subr.bf16.mxu0 0
    %4719 = vmatpush2.bf16.msra.mxu0 0
    %4720 = vmatprep.subr.bf16.mxu0 0
    %4721 = vmatpush2.bf16.msra.mxu0 0
    %4722 = vmatprep.mubr.bf16.mxu0 0
    %4723 = vmatmul.mubr.bf16.gmra.mxu0 %v2161
    %v4724 = vpop.f32.mrf.mxu0
    %v4725 = vadd.f32 %v4685, %v4724
    %v4726 = vpop.f32.mrf.mxu0
    %v4727 = vpop.f32.mrf.mxu0
    %v4728 = vpop.f32.mrf.mxu0
    %4729 = vdwg.mxu0
    %v4731 = vsel %vm270, %v4725, 0
    %4733 = vmatprep.subr.mxu0 0.0
    %4734 = vmatpush1.msra.mxu0 0.0
    %4735 = vmatprep.subr.mxu0 0.0
    %4736 = vmatpush1.msra.mxu0 0.0
    %4737 = vmatprep.subr.mxu0 0.0
    %4738 = vmatpush1.msra.mxu0 0.0
    %4739 = vmatprep.subr.mxu0 0.0
    %4740 = vmatpush1.msra.mxu0 0.0
    %4741 = vmatprep.subr.mxu0 0.0
    %4742 = vmatpush1.msra.mxu0 0.0
    %4743 = vmatprep.subr.mxu0 0.0
    %4744 = vmatpush1.msra.mxu0 0.0
    %4745 = vmatprep.subr.mxu0 0.0
    %4746 = vmatpush1.msra.mxu0 0.0
    %4747 = vmatprep.subr.mxu0 0.0
    %4748 = vmatpush1.msra.mxu0 0.0
    %4749 = vmatprep.subr.mxu0 0.0
    %4750 = vmatpush1.msra.mxu0 0.0
    %4751 = vmatprep.subr.mxu0 0.0
    %4752 = vmatpush1.msra.mxu0 0.0
    %4753 = vmatprep.subr.mxu0 0.0
    %4754 = vmatpush1.msra.mxu0 0.0
    %4755 = vmatprep.subr.mxu0 0.0
    %4756 = vmatpush1.msra.mxu0 0.0
    %4757 = vmatprep.subr.mxu0 0.0
    %4758 = vmatpush1.msra.mxu0 0.0
    %4759 = vmatprep.subr.mxu0 0.0
    %4760 = vmatpush1.msra.mxu0 0.0
    %4761 = vmatprep.subr.mxu0 0.0
    %4762 = vmatpush1.msra.mxu0 0.0
    %4763 = vmatprep.subr.mxu0 0.0
    %4764 = vmatpush1.msra.mxu0 %v2209
    %4765 = vmatprep.subr.mxu0 0.0
    %4766 = vmatpush2.msra.mxu0 0.0
    %4767 = vmatprep.subr.mxu0 0.0
    %4768 = vmatpush2.msra.mxu0 0.0
    %4769 = vmatprep.subr.mxu0 0.0
    %4770 = vmatpush2.msra.mxu0 0.0
    %4771 = vmatprep.subr.mxu0 0.0
    %4772 = vmatpush2.msra.mxu0 0.0
    %4773 = vmatprep.subr.mxu0 0.0
    %4774 = vmatpush2.msra.mxu0 0.0
    %4775 = vmatprep.subr.mxu0 0.0
    %4776 = vmatpush2.msra.mxu0 0.0
    %4777 = vmatprep.subr.mxu0 0.0
    %4778 = vmatpush2.msra.mxu0 0.0
    %4779 = vmatprep.subr.mxu0 0.0
    %4780 = vmatpush2.msra.mxu0 0.0
    %4781 = vmatprep.subr.mxu0 0.0
    %4782 = vmatpush2.msra.mxu0 0.0
    %4783 = vmatprep.subr.mxu0 0.0
    %4784 = vmatpush2.msra.mxu0 0.0
    %4785 = vmatprep.subr.mxu0 0.0
    %4786 = vmatpush2.msra.mxu0 0.0
    %4787 = vmatprep.subr.mxu0 0.0
    %4788 = vmatpush2.msra.mxu0 0.0
    %4789 = vmatprep.subr.mxu0 0.0
    %4790 = vmatpush2.msra.mxu0 0.0
    %4791 = vmatprep.subr.mxu0 0.0
    %4792 = vmatpush2.msra.mxu0 0.0
    %4793 = vmatprep.subr.mxu0 0.0
    %4794 = vmatpush2.msra.mxu0 0.0
    %4795 = vmatprep.subr.mxu0 0.0
    %4796 = vmatpush2.msra.mxu0 0.0
    %4797 = vmatprep.mubr.f32.mxu0 0.0
    %4798 = vmatmul.mubr.f32.gmra.mxu0 %v4731
    %v4799 = vpop.f32.mrf.mxu0
    %v4800 = vadd.f32 0.0, %v4799
    %v4801 = vpop.f32.mrf.mxu0
    %4802 = vdwg.mxu0
    %v4803 = vadd.f32 %v4649, %v4800
    %4804 = vmatprep.subr.bf16.mxu0 0
    %4805 = vmatpush1.bf16.msra.mxu0 0
    %4806 = vmatprep.subr.bf16.mxu0 0
    %4807 = vmatpush1.bf16.msra.mxu0 0
    %4808 = vmatprep.subr.bf16.mxu0 0
    %4809 = vmatpush1.bf16.msra.mxu0 0
    %4810 = vmatprep.subr.bf16.mxu0 0
    %4811 = vmatpush1.bf16.msra.mxu0 0
    %4812 = vmatprep.subr.bf16.mxu0 0
    %4813 = vmatpush1.bf16.msra.mxu0 0
    %4814 = vmatprep.subr.bf16.mxu0 0
    %4815 = vmatpush1.bf16.msra.mxu0 0
    %4816 = vmatprep.subr.bf16.mxu0 0
    %4817 = vmatpush1.bf16.msra.mxu0 0
    %4818 = vmatprep.subr.bf16.mxu0 0
    %4819 = vmatpush1.bf16.msra.mxu0 %v2799
    %4820 = vmatprep.subr.bf16.mxu0 0
    %4821 = vmatpush2.bf16.msra.mxu0 0
    %4822 = vmatprep.subr.bf16.mxu0 0
    %4823 = vmatpush2.bf16.msra.mxu0 0
    %4824 = vmatprep.subr.bf16.mxu0 0
    %4825 = vmatpush2.bf16.msra.mxu0 0
    %4826 = vmatprep.subr.bf16.mxu0 0
    %4827 = vmatpush2.bf16.msra.mxu0 0
    %4828 = vmatprep.subr.bf16.mxu0 0
    %4829 = vmatpush2.bf16.msra.mxu0 0
    %4830 = vmatprep.subr.bf16.mxu0 0
    %4831 = vmatpush2.bf16.msra.mxu0 0
    %4832 = vmatprep.subr.bf16.mxu0 0
    %4833 = vmatpush2.bf16.msra.mxu0 0
    %4834 = vmatprep.subr.bf16.mxu0 0
    %4835 = vmatpush2.bf16.msra.mxu0 0
    %4836 = vmatprep.mubr.bf16.mxu0 0
    %4837 = vmatmul.mubr.bf16.gmra.mxu0 %v2287
    %v4838 = vpop.f32.mrf.mxu0
    %v4839 = vadd.f32 0.0, %v4838
    %v4840 = vpop.f32.mrf.mxu0
    %v4841 = vpop.f32.mrf.mxu0
    %v4842 = vpop.f32.mrf.mxu0
    %4843 = vdwg.mxu0
    %4844 = vmatprep.subr.bf16.mxu0 0
    %4845 = vmatpush1.bf16.msra.mxu0 0
    %4846 = vmatprep.subr.bf16.mxu0 0
    %4847 = vmatpush1.bf16.msra.mxu0 0
    %4848 = vmatprep.subr.bf16.mxu0 0
    %4849 = vmatpush1.bf16.msra.mxu0 0
    %4850 = vmatprep.subr.bf16.mxu0 0
    %4851 = vmatpush1.bf16.msra.mxu0 0
    %4852 = vmatprep.subr.bf16.mxu0 0
    %4853 = vmatpush1.bf16.msra.mxu0 0
    %4854 = vmatprep.subr.bf16.mxu0 0
    %4855 = vmatpush1.bf16.msra.mxu0 0
    %4856 = vmatprep.subr.bf16.mxu0 0
    %4857 = vmatpush1.bf16.msra.mxu0 0
    %4858 = vmatprep.subr.bf16.mxu0 0
    %4859 = vmatpush1.bf16.msra.mxu0 %v2842
    %4860 = vmatprep.subr.bf16.mxu0 0
    %4861 = vmatpush2.bf16.msra.mxu0 0
    %4862 = vmatprep.subr.bf16.mxu0 0
    %4863 = vmatpush2.bf16.msra.mxu0 0
    %4864 = vmatprep.subr.bf16.mxu0 0
    %4865 = vmatpush2.bf16.msra.mxu0 0
    %4866 = vmatprep.subr.bf16.mxu0 0
    %4867 = vmatpush2.bf16.msra.mxu0 0
    %4868 = vmatprep.subr.bf16.mxu0 0
    %4869 = vmatpush2.bf16.msra.mxu0 0
    %4870 = vmatprep.subr.bf16.mxu0 0
    %4871 = vmatpush2.bf16.msra.mxu0 0
    %4872 = vmatprep.subr.bf16.mxu0 0
    %4873 = vmatpush2.bf16.msra.mxu0 0
    %4874 = vmatprep.subr.bf16.mxu0 0
    %4875 = vmatpush2.bf16.msra.mxu0 0
    %4876 = vmatprep.mubr.bf16.mxu0 0
    %4877 = vmatmul.mubr.bf16.gmra.mxu0 %v2330
    %v4878 = vpop.f32.mrf.mxu0
    %v4879 = vadd.f32 %v4839, %v4878
    %v4880 = vpop.f32.mrf.mxu0
    %v4881 = vpop.f32.mrf.mxu0
    %v4882 = vpop.f32.mrf.mxu0
    %4883 = vdwg.mxu0
    %v4885 = vsel %vm270, %v4879, 0
    %4887 = vmatprep.subr.mxu0 0.0
    %4888 = vmatpush1.msra.mxu0 0.0
    %4889 = vmatprep.subr.mxu0 0.0
    %4890 = vmatpush1.msra.mxu0 0.0
    %4891 = vmatprep.subr.mxu0 0.0
    %4892 = vmatpush1.msra.mxu0 0.0
    %4893 = vmatprep.subr.mxu0 0.0
    %4894 = vmatpush1.msra.mxu0 0.0
    %4895 = vmatprep.subr.mxu0 0.0
    %4896 = vmatpush1.msra.mxu0 0.0
    %4897 = vmatprep.subr.mxu0 0.0
    %4898 = vmatpush1.msra.mxu0 0.0
    %4899 = vmatprep.subr.mxu0 0.0
    %4900 = vmatpush1.msra.mxu0 0.0
    %4901 = vmatprep.subr.mxu0 0.0
    %4902 = vmatpush1.msra.mxu0 0.0
    %4903 = vmatprep.subr.mxu0 0.0
    %4904 = vmatpush1.msra.mxu0 0.0
    %4905 = vmatprep.subr.mxu0 0.0
    %4906 = vmatpush1.msra.mxu0 0.0
    %4907 = vmatprep.subr.mxu0 0.0
    %4908 = vmatpush1.msra.mxu0 0.0
    %4909 = vmatprep.subr.mxu0 0.0
    %4910 = vmatpush1.msra.mxu0 0.0
    %4911 = vmatprep.subr.mxu0 0.0
    %4912 = vmatpush1.msra.mxu0 0.0
    %4913 = vmatprep.subr.mxu0 0.0
    %4914 = vmatpush1.msra.mxu0 0.0
    %4915 = vmatprep.subr.mxu0 0.0
    %4916 = vmatpush1.msra.mxu0 0.0
    %4917 = vmatprep.subr.mxu0 0.0
    %4918 = vmatpush1.msra.mxu0 %v2378
    %4919 = vmatprep.subr.mxu0 0.0
    %4920 = vmatpush2.msra.mxu0 0.0
    %4921 = vmatprep.subr.mxu0 0.0
    %4922 = vmatpush2.msra.mxu0 0.0
    %4923 = vmatprep.subr.mxu0 0.0
    %4924 = vmatpush2.msra.mxu0 0.0
    %4925 = vmatprep.subr.mxu0 0.0
    %4926 = vmatpush2.msra.mxu0 0.0
    %4927 = vmatprep.subr.mxu0 0.0
    %4928 = vmatpush2.msra.mxu0 0.0
    %4929 = vmatprep.subr.mxu0 0.0
    %4930 = vmatpush2.msra.mxu0 0.0
    %4931 = vmatprep.subr.mxu0 0.0
    %4932 = vmatpush2.msra.mxu0 0.0
    %4933 = vmatprep.subr.mxu0 0.0
    %4934 = vmatpush2.msra.mxu0 0.0
    %4935 = vmatprep.subr.mxu0 0.0
    %4936 = vmatpush2.msra.mxu0 0.0
    %4937 = vmatprep.subr.mxu0 0.0
    %4938 = vmatpush2.msra.mxu0 0.0
    %4939 = vmatprep.subr.mxu0 0.0
    %4940 = vmatpush2.msra.mxu0 0.0
    %4941 = vmatprep.subr.mxu0 0.0
    %4942 = vmatpush2.msra.mxu0 0.0
    %4943 = vmatprep.subr.mxu0 0.0
    %4944 = vmatpush2.msra.mxu0 0.0
    %4945 = vmatprep.subr.mxu0 0.0
    %4946 = vmatpush2.msra.mxu0 0.0
    %4947 = vmatprep.subr.mxu0 0.0
    %4948 = vmatpush2.msra.mxu0 0.0
    %4949 = vmatprep.subr.mxu0 0.0
    %4950 = vmatpush2.msra.mxu0 0.0
    %4951 = vmatprep.mubr.f32.mxu0 0.0
    %4952 = vmatmul.mubr.f32.gmra.mxu0 %v4885
    %v4953 = vpop.f32.mrf.mxu0
    %v4954 = vadd.f32 0.0, %v4953
    %v4955 = vpop.f32.mrf.mxu0
    %4956 = vdwg.mxu0
    %v4957 = vadd.f32 %v4803, %v4954
    %4958 = vmatprep.subr.bf16.mxu0 0
    %4959 = vmatpush1.bf16.msra.mxu0 0
    %4960 = vmatprep.subr.bf16.mxu0 0
    %4961 = vmatpush1.bf16.msra.mxu0 0
    %4962 = vmatprep.subr.bf16.mxu0 0
    %4963 = vmatpush1.bf16.msra.mxu0 0
    %4964 = vmatprep.subr.bf16.mxu0 0
    %4965 = vmatpush1.bf16.msra.mxu0 0
    %4966 = vmatprep.subr.bf16.mxu0 0
    %4967 = vmatpush1.bf16.msra.mxu0 0
    %4968 = vmatprep.subr.bf16.mxu0 0
    %4969 = vmatpush1.bf16.msra.mxu0 0
    %4970 = vmatprep.subr.bf16.mxu0 0
    %4971 = vmatpush1.bf16.msra.mxu0 0
    %4972 = vmatprep.subr.bf16.mxu0 0
    %4973 = vmatpush1.bf16.msra.mxu0 %v2799
    %4974 = vmatprep.subr.bf16.mxu0 0
    %4975 = vmatpush2.bf16.msra.mxu0 0
    %4976 = vmatprep.subr.bf16.mxu0 0
    %4977 = vmatpush2.bf16.msra.mxu0 0
    %4978 = vmatprep.subr.bf16.mxu0 0
    %4979 = vmatpush2.bf16.msra.mxu0 0
    %4980 = vmatprep.subr.bf16.mxu0 0
    %4981 = vmatpush2.bf16.msra.mxu0 0
    %4982 = vmatprep.subr.bf16.mxu0 0
    %4983 = vmatpush2.bf16.msra.mxu0 0
    %4984 = vmatprep.subr.bf16.mxu0 0
    %4985 = vmatpush2.bf16.msra.mxu0 0
    %4986 = vmatprep.subr.bf16.mxu0 0
    %4987 = vmatpush2.bf16.msra.mxu0 0
    %4988 = vmatprep.subr.bf16.mxu0 0
    %4989 = vmatpush2.bf16.msra.mxu0 0
    %4990 = vmatprep.mubr.bf16.mxu0 0
    %4991 = vmatmul.mubr.bf16.gmra.mxu0 %v2456
    %v4992 = vpop.f32.mrf.mxu0
    %v4993 = vadd.f32 0.0, %v4992
    %v4994 = vpop.f32.mrf.mxu0
    %v4995 = vpop.f32.mrf.mxu0
    %v4996 = vpop.f32.mrf.mxu0
    %4997 = vdwg.mxu0
    %4998 = vmatprep.subr.bf16.mxu0 0
    %4999 = vmatpush1.bf16.msra.mxu0 0
    %5000 = vmatprep.subr.bf16.mxu0 0
    %5001 = vmatpush1.bf16.msra.mxu0 0
    %5002 = vmatprep.subr.bf16.mxu0 0
    %5003 = vmatpush1.bf16.msra.mxu0 0
    %5004 = vmatprep.subr.bf16.mxu0 0
    %5005 = vmatpush1.bf16.msra.mxu0 0
    %5006 = vmatprep.subr.bf16.mxu0 0
    %5007 = vmatpush1.bf16.msra.mxu0 0
    %5008 = vmatprep.subr.bf16.mxu0 0
    %5009 = vmatpush1.bf16.msra.mxu0 0
    %5010 = vmatprep.subr.bf16.mxu0 0
    %5011 = vmatpush1.bf16.msra.mxu0 0
    %5012 = vmatprep.subr.bf16.mxu0 0
    %5013 = vmatpush1.bf16.msra.mxu0 %v2842
    %5014 = vmatprep.subr.bf16.mxu0 0
    %5015 = vmatpush2.bf16.msra.mxu0 0
    %5016 = vmatprep.subr.bf16.mxu0 0
    %5017 = vmatpush2.bf16.msra.mxu0 0
    %5018 = vmatprep.subr.bf16.mxu0 0
    %5019 = vmatpush2.bf16.msra.mxu0 0
    %5020 = vmatprep.subr.bf16.mxu0 0
    %5021 = vmatpush2.bf16.msra.mxu0 0
    %5022 = vmatprep.subr.bf16.mxu0 0
    %5023 = vmatpush2.bf16.msra.mxu0 0
    %5024 = vmatprep.subr.bf16.mxu0 0
    %5025 = vmatpush2.bf16.msra.mxu0 0
    %5026 = vmatprep.subr.bf16.mxu0 0
    %5027 = vmatpush2.bf16.msra.mxu0 0
    %5028 = vmatprep.subr.bf16.mxu0 0
    %5029 = vmatpush2.bf16.msra.mxu0 0
    %5030 = vmatprep.mubr.bf16.mxu0 0
    %5031 = vmatmul.mubr.bf16.gmra.mxu0 %v2499
    %v5032 = vpop.f32.mrf.mxu0
    %v5033 = vadd.f32 %v4993, %v5032
    %v5034 = vpop.f32.mrf.mxu0
    %v5035 = vpop.f32.mrf.mxu0
    %v5036 = vpop.f32.mrf.mxu0
    %5037 = vdwg.mxu0
    %v5039 = vsel %vm270, %v5033, 0
    %5041 = vmatprep.subr.mxu0 0.0
    %5042 = vmatpush1.msra.mxu0 0.0
    %5043 = vmatprep.subr.mxu0 0.0
    %5044 = vmatpush1.msra.mxu0 0.0
    %5045 = vmatprep.subr.mxu0 0.0
    %5046 = vmatpush1.msra.mxu0 0.0
    %5047 = vmatprep.subr.mxu0 0.0
    %5048 = vmatpush1.msra.mxu0 0.0
    %5049 = vmatprep.subr.mxu0 0.0
    %5050 = vmatpush1.msra.mxu0 0.0
    %5051 = vmatprep.subr.mxu0 0.0
    %5052 = vmatpush1.msra.mxu0 0.0
    %5053 = vmatprep.subr.mxu0 0.0
    %5054 = vmatpush1.msra.mxu0 0.0
    %5055 = vmatprep.subr.mxu0 0.0
    %5056 = vmatpush1.msra.mxu0 0.0
    %5057 = vmatprep.subr.mxu0 0.0
    %5058 = vmatpush1.msra.mxu0 0.0
    %5059 = vmatprep.subr.mxu0 0.0
    %5060 = vmatpush1.msra.mxu0 0.0
    %5061 = vmatprep.subr.mxu0 0.0
    %5062 = vmatpush1.msra.mxu0 0.0
    %5063 = vmatprep.subr.mxu0 0.0
    %5064 = vmatpush1.msra.mxu0 0.0
    %5065 = vmatprep.subr.mxu0 0.0
    %5066 = vmatpush1.msra.mxu0 0.0
    %5067 = vmatprep.subr.mxu0 0.0
    %5068 = vmatpush1.msra.mxu0 0.0
    %5069 = vmatprep.subr.mxu0 0.0
    %5070 = vmatpush1.msra.mxu0 0.0
    %5071 = vmatprep.subr.mxu0 0.0
    %5072 = vmatpush1.msra.mxu0 %v2547
    %5073 = vmatprep.subr.mxu0 0.0
    %5074 = vmatpush2.msra.mxu0 0.0
    %5075 = vmatprep.subr.mxu0 0.0
    %5076 = vmatpush2.msra.mxu0 0.0
    %5077 = vmatprep.subr.mxu0 0.0
    %5078 = vmatpush2.msra.mxu0 0.0
    %5079 = vmatprep.subr.mxu0 0.0
    %5080 = vmatpush2.msra.mxu0 0.0
    %5081 = vmatprep.subr.mxu0 0.0
    %5082 = vmatpush2.msra.mxu0 0.0
    %5083 = vmatprep.subr.mxu0 0.0
    %5084 = vmatpush2.msra.mxu0 0.0
    %5085 = vmatprep.subr.mxu0 0.0
    %5086 = vmatpush2.msra.mxu0 0.0
    %5087 = vmatprep.subr.mxu0 0.0
    %5088 = vmatpush2.msra.mxu0 0.0
    %5089 = vmatprep.subr.mxu0 0.0
    %5090 = vmatpush2.msra.mxu0 0.0
    %5091 = vmatprep.subr.mxu0 0.0
    %5092 = vmatpush2.msra.mxu0 0.0
    %5093 = vmatprep.subr.mxu0 0.0
    %5094 = vmatpush2.msra.mxu0 0.0
    %5095 = vmatprep.subr.mxu0 0.0
    %5096 = vmatpush2.msra.mxu0 0.0
    %5097 = vmatprep.subr.mxu0 0.0
    %5098 = vmatpush2.msra.mxu0 0.0
    %5099 = vmatprep.subr.mxu0 0.0
    %5100 = vmatpush2.msra.mxu0 0.0
    %5101 = vmatprep.subr.mxu0 0.0
    %5102 = vmatpush2.msra.mxu0 0.0
    %5103 = vmatprep.subr.mxu0 0.0
    %5104 = vmatpush2.msra.mxu0 0.0
    %5105 = vmatprep.mubr.f32.mxu0 0.0
    %5106 = vmatmul.mubr.f32.gmra.mxu0 %v5039
    %v5107 = vpop.f32.mrf.mxu0
    %v5108 = vadd.f32 0.0, %v5107
    %v5109 = vpop.f32.mrf.mxu0
    %5110 = vdwg.mxu0
    %v5111 = vadd.f32 %v4957, %v5108
    %5112 = vmatprep.subr.bf16.mxu0 0
    %5113 = vmatpush1.bf16.msra.mxu0 0
    %5114 = vmatprep.subr.bf16.mxu0 0
    %5115 = vmatpush1.bf16.msra.mxu0 0
    %5116 = vmatprep.subr.bf16.mxu0 0
    %5117 = vmatpush1.bf16.msra.mxu0 0
    %5118 = vmatprep.subr.bf16.mxu0 0
    %5119 = vmatpush1.bf16.msra.mxu0 0
    %5120 = vmatprep.subr.bf16.mxu0 0
    %5121 = vmatpush1.bf16.msra.mxu0 0
    %5122 = vmatprep.subr.bf16.mxu0 0
    %5123 = vmatpush1.bf16.msra.mxu0 0
    %5124 = vmatprep.subr.bf16.mxu0 0
    %5125 = vmatpush1.bf16.msra.mxu0 0
    %5126 = vmatprep.subr.bf16.mxu0 0
    %5127 = vmatpush1.bf16.msra.mxu0 %v2799
    %5128 = vmatprep.subr.bf16.mxu0 0
    %5129 = vmatpush2.bf16.msra.mxu0 0
    %5130 = vmatprep.subr.bf16.mxu0 0
    %5131 = vmatpush2.bf16.msra.mxu0 0
    %5132 = vmatprep.subr.bf16.mxu0 0
    %5133 = vmatpush2.bf16.msra.mxu0 0
    %5134 = vmatprep.subr.bf16.mxu0 0
    %5135 = vmatpush2.bf16.msra.mxu0 0
    %5136 = vmatprep.subr.bf16.mxu0 0
    %5137 = vmatpush2.bf16.msra.mxu0 0
    %5138 = vmatprep.subr.bf16.mxu0 0
    %5139 = vmatpush2.bf16.msra.mxu0 0
    %5140 = vmatprep.subr.bf16.mxu0 0
    %5141 = vmatpush2.bf16.msra.mxu0 0
    %5142 = vmatprep.subr.bf16.mxu0 0
    %5143 = vmatpush2.bf16.msra.mxu0 0
    %5144 = vmatprep.mubr.bf16.mxu0 0
    %5145 = vmatmul.mubr.bf16.gmra.mxu0 %v2625
    %v5146 = vpop.f32.mrf.mxu0
    %v5147 = vadd.f32 0.0, %v5146
    %v5148 = vpop.f32.mrf.mxu0
    %v5149 = vpop.f32.mrf.mxu0
    %v5150 = vpop.f32.mrf.mxu0
    %5151 = vdwg.mxu0
    %5152 = vmatprep.subr.bf16.mxu0 0
    %5153 = vmatpush1.bf16.msra.mxu0 0
    %5154 = vmatprep.subr.bf16.mxu0 0
    %5155 = vmatpush1.bf16.msra.mxu0 0
    %5156 = vmatprep.subr.bf16.mxu0 0
    %5157 = vmatpush1.bf16.msra.mxu0 0
    %5158 = vmatprep.subr.bf16.mxu0 0
    %5159 = vmatpush1.bf16.msra.mxu0 0
    %5160 = vmatprep.subr.bf16.mxu0 0
    %5161 = vmatpush1.bf16.msra.mxu0 0
    %5162 = vmatprep.subr.bf16.mxu0 0
    %5163 = vmatpush1.bf16.msra.mxu0 0
    %5164 = vmatprep.subr.bf16.mxu0 0
    %5165 = vmatpush1.bf16.msra.mxu0 0
    %5166 = vmatprep.subr.bf16.mxu0 0
    %5167 = vmatpush1.bf16.msra.mxu0 %v2842
    %5168 = vmatprep.subr.bf16.mxu0 0
    %5169 = vmatpush2.bf16.msra.mxu0 0
    %5170 = vmatprep.subr.bf16.mxu0 0
    %5171 = vmatpush2.bf16.msra.mxu0 0
    %5172 = vmatprep.subr.bf16.mxu0 0
    %5173 = vmatpush2.bf16.msra.mxu0 0
    %5174 = vmatprep.subr.bf16.mxu0 0
    %5175 = vmatpush2.bf16.msra.mxu0 0
    %5176 = vmatprep.subr.bf16.mxu0 0
    %5177 = vmatpush2.bf16.msra.mxu0 0
    %5178 = vmatprep.subr.bf16.mxu0 0
    %5179 = vmatpush2.bf16.msra.mxu0 0
    %5180 = vmatprep.subr.bf16.mxu0 0
    %5181 = vmatpush2.bf16.msra.mxu0 0
    %5182 = vmatprep.subr.bf16.mxu0 0
    %5183 = vmatpush2.bf16.msra.mxu0 0
    %5184 = vmatprep.mubr.bf16.mxu0 0
    %5185 = vmatmul.mubr.bf16.gmra.mxu0 %v2668
    %v5186 = vpop.f32.mrf.mxu0
    %v5187 = vadd.f32 %v5147, %v5186
    %v5188 = vpop.f32.mrf.mxu0
    %v5189 = vpop.f32.mrf.mxu0
    %v5190 = vpop.f32.mrf.mxu0
    %5191 = vdwg.mxu0
    %v5193 = vsel %vm270, %v5187, 0
    %5195 = vmatprep.subr.mxu0 0.0
    %5196 = vmatpush1.msra.mxu0 0.0
    %5197 = vmatprep.subr.mxu0 0.0
    %5198 = vmatpush1.msra.mxu0 0.0
    %5199 = vmatprep.subr.mxu0 0.0
    %5200 = vmatpush1.msra.mxu0 0.0
    %5201 = vmatprep.subr.mxu0 0.0
    %5202 = vmatpush1.msra.mxu0 0.0
    %5203 = vmatprep.subr.mxu0 0.0
    %5204 = vmatpush1.msra.mxu0 0.0
    %5205 = vmatprep.subr.mxu0 0.0
    %5206 = vmatpush1.msra.mxu0 0.0
    %5207 = vmatprep.subr.mxu0 0.0
    %5208 = vmatpush1.msra.mxu0 0.0
    %5209 = vmatprep.subr.mxu0 0.0
    %5210 = vmatpush1.msra.mxu0 0.0
    %5211 = vmatprep.subr.mxu0 0.0
    %5212 = vmatpush1.msra.mxu0 0.0
    %5213 = vmatprep.subr.mxu0 0.0
    %5214 = vmatpush1.msra.mxu0 0.0
    %5215 = vmatprep.subr.mxu0 0.0
    %5216 = vmatpush1.msra.mxu0 0.0
    %5217 = vmatprep.subr.mxu0 0.0
    %5218 = vmatpush1.msra.mxu0 0.0
    %5219 = vmatprep.subr.mxu0 0.0
    %5220 = vmatpush1.msra.mxu0 0.0
    %5221 = vmatprep.subr.mxu0 0.0
    %5222 = vmatpush1.msra.mxu0 0.0
    %5223 = vmatprep.subr.mxu0 0.0
    %5224 = vmatpush1.msra.mxu0 0.0
    %5225 = vmatprep.subr.mxu0 0.0
    %5226 = vmatpush1.msra.mxu0 %v2716
    %5227 = vmatprep.subr.mxu0 0.0
    %5228 = vmatpush2.msra.mxu0 0.0
    %5229 = vmatprep.subr.mxu0 0.0
    %5230 = vmatpush2.msra.mxu0 0.0
    %5231 = vmatprep.subr.mxu0 0.0
    %5232 = vmatpush2.msra.mxu0 0.0
    %5233 = vmatprep.subr.mxu0 0.0
    %5234 = vmatpush2.msra.mxu0 0.0
    %5235 = vmatprep.subr.mxu0 0.0
    %5236 = vmatpush2.msra.mxu0 0.0
    %5237 = vmatprep.subr.mxu0 0.0
    %5238 = vmatpush2.msra.mxu0 0.0
    %5239 = vmatprep.subr.mxu0 0.0
    %5240 = vmatpush2.msra.mxu0 0.0
    %5241 = vmatprep.subr.mxu0 0.0
    %5242 = vmatpush2.msra.mxu0 0.0
    %5243 = vmatprep.subr.mxu0 0.0
    %5244 = vmatpush2.msra.mxu0 0.0
    %5245 = vmatprep.subr.mxu0 0.0
    %5246 = vmatpush2.msra.mxu0 0.0
    %5247 = vmatprep.subr.mxu0 0.0
    %5248 = vmatpush2.msra.mxu0 0.0
    %5249 = vmatprep.subr.mxu0 0.0
    %5250 = vmatpush2.msra.mxu0 0.0
    %5251 = vmatprep.subr.mxu0 0.0
    %5252 = vmatpush2.msra.mxu0 0.0
    %5253 = vmatprep.subr.mxu0 0.0
    %5254 = vmatpush2.msra.mxu0 0.0
    %5255 = vmatprep.subr.mxu0 0.0
    %5256 = vmatpush2.msra.mxu0 0.0
    %5257 = vmatprep.subr.mxu0 0.0
    %5258 = vmatpush2.msra.mxu0 0.0
    %5259 = vmatprep.mubr.f32.mxu0 0.0
    %5260 = vmatmul.mubr.f32.gmra.mxu0 %v5193
    %v5261 = vpop.f32.mrf.mxu0
    %v5262 = vadd.f32 0.0, %v5261
    %v5263 = vpop.f32.mrf.mxu0
    %5264 = vdwg.mxu0
    %v5265 = vadd.f32 %v5111, %v5262
    %v5266 = vsel %vm2789, %v5265, 0.0
    %5267 = vadd.xlane.f32.xlu0 %v5266
    %v5268 = vpop.xlane.xlu0 %5267
    %v5269 = vadd.f32 %v2792, %v5268
    %v5270 = vmul.f32 %v5269, 0.03125
    %v5271 = vsub.f32 %v2788, %v5270
    %v5272 = vmul.f32 %v5271, %v5271
    %v5273 = vsel %vm2789, %v5272, 0.0
    %5274 = vadd.xlane.f32.xlu0 %v5273
    %v5275 = vpop.xlane.xlu0 %5274
    %v5276 = vsub.f32 %v5265, %v5270
    %v5277 = vmul.f32 %v5276, %v5276
    %v5278 = vsel %vm2789, %v5277, 0.0
    %5279 = vadd.xlane.f32.xlu0 %v5278
    %v5280 = vpop.xlane.xlu0 %5279
    %v5281 = vadd.f32 %v5275, %v5280
    %v5282 = vmul.f32 %v5281, 0.03125
    %v5283 = vld [vmem:[#allocation6] sm:$0xf]
    %v5284 = vadd.f32 %v5282, 1e-05
    %v5285 = vrsqrt.pop %v5284
    %v5286 = vmul.f32 %v5283, %v5285
    %v5287 = vld [vmem:[#allocation7] sm:$0xf]
    %v5288 = vmul.f32 %v5270, %v5286
    %v5289 = vsub.f32 %v5287, %v5288
    %5291 = vset.pattern.permute.xlu0 0
    %5292 = vperm.xlu0 %5291, %v5286
    %v5293 = vpop.permute.xlu0 %5292
    %v5295 = vmul.f32 %v2788, %v5293
    %5297 = vset.pattern.permute.xlu0 0
    %5298 = vperm.xlu0 %5297, %v5289
    %v5299 = vpop.permute.xlu0 %5298
    %v5301 = vadd.f32 %v5295, %v5299
    %v5302 = vmax.f32 %v5301, 0.0
    %v5303 = vpack.c.bf16 %v5302, %v5302
    %vm5304 = vcmask 123904
    %5305 = vst.msk [vmem:[%s7] sm:$0x3] %vm5304, %v5303
    %v5306 = vmul.f32 %v5265, %v5293
    %v5307 = vadd.f32 %v5306, %v5299
    %v5308 = vmax.f32 %v5307, 0.0
    %v5309 = vpack.c.bf16 %v5308, %v5308
    %s5310 = scalar_lea.vmem %s7, 2
    %5311 = vst.msk [vmem:[%s5310] sm:$0x3] %vm5304, %v5309
    // Predicated region
    $region46: #{_lambda_.4} parent=1 // pred_check
      _
    $region47: #{_lambda_.4} parent=1 // pred_check_branch
      %5313 = sbr.rel (0) target = $region49
    $region48: #{_lambda_.4} parent=1 // pred_region
      _
    $region49: #{_lambda_.4} parent=1 // pred_fallthru
      _
    // Predicated region
    $region50: #{_lambda_.4} parent=1 // pred_check
      _
    $region51: #{_lambda_.4} parent=1 // pred_check_branch
      %5315 = sbr.rel (0) target = $region53
    $region52: #{_lambda_.4} parent=1 // pred_region
      _
    $region53: #{_lambda_.4} parent=1 // pred_fallthru
      _
    %5316 = vsyncpa [#allocation3], 1
    %5317 = vsyncpa [#allocation5], 1
    %5318 = vsyncpa [#allocation8], 1

</llo_original>
